<compile_context>
chip_gen: v6e
topology: v6e:2x2x1
jax: 0.10.0
libtpu: 0.0.40
codegen_flags: <defaults>
</compile_context>

<pallas_src>
import functools

import jax
import jax.numpy as jnp
from jax.experimental import pallas as pl
from jax.experimental.pallas import tpu as pltpu

_OFFSETS = ((0, 0), (0, 1), (1, 0), (1, 1))   # conv tap (cell offset) order
_CIN_PAD = (32, 32, 64)                       # per-layer padded input channels (real: 3, 32, 64)
_COUT = (32, 64, 128)                         # output channels (exact, no padding needed)


def _round_up(x, m):
    return (x + m - 1) // m * m


def _layer_dims(n, h, w):
    """Quad-grid dims for a conv layer on an (n, h, w) input (h, w even)."""
    hq, wq = h // 2 + 1, w // 2 + 1            # 2x2 cells of the zero-padded (h+2, w+2) image
    rows = n * hq * wq                         # real quad rows
    m = _round_up(rows, 16)                    # matmul M (bf16 sublane pack = 16)
    r = _round_up(m + wq + 1, 8)               # quad buffer rows (covers the 4 tap row-shifts)
    return hq, wq, rows, m, r


# --------------------------- the single fused kernel ---------------------------

def _fused_cnn_kernel(q1_ref, w1_ref, b1_ref, w2_ref, b2_ref, w3_ref, b3_ref,
                      fw1_ref, fb1_ref, fw2_ref, fb2_ref, out_ref,
                      p1_ref, q2_ref, p2_ref, q3_ref, p3_ref, fcl_ref, lhs_ref,
                      *, n, dims):
    (hq1, wq1, m1, c1), (hq2, wq2, m2, c2), (hq3, wq3, m3, c3) = dims

    # Scratch that is only partially written must start zeroed (border cells / pad rows).
    q2_ref[...] = jnp.zeros_like(q2_ref)
    q3_ref[...] = jnp.zeros_like(q3_ref)
    fcl_ref[...] = jnp.zeros_like(fcl_ref)

    def conv_relu_pool(qin_ref, w_ref, b_ref, pout_ref, m, wq, cell_w):
        # Build the im2col lhs: 4 taps, each a contiguous row-shifted slice of the quad buffer,
        # placed side by side in lanes (every slice is a 128-multiple wide).
        for t, (di, dj) in enumerate(_OFFSETS):
            off = di * wq + dj
            lhs_ref[0:m, t * cell_w:(t + 1) * cell_w] = qin_ref[off:off + m, :]
        lhs = lhs_ref[0:m, 0:4 * cell_w]
        # One matmul per 2x2 pool-window position, then full-value maxes (the pool),
        # bias add and ReLU:  relu(max_p(z_p) + b) == pool(relu(conv + b)).
        zs = [jnp.dot(lhs, w_ref[p], preferred_element_type=jnp.float32)
              for p in range(4)]
        z = jnp.maximum(jnp.maximum(zs[0], zs[1]), jnp.maximum(zs[2], zs[3]))
        pout_ref[...] = jnp.maximum(z + b_ref[...], 0.0).astype(pout_ref.dtype)

    def repack(p_ref, q_ref, hq_s, wq_s, hq_d, wq_d, c):
        # Pooled pixel (i, j) of this layer goes to the next layer's quad cell
        # ((i+1)//2, (j+1)//2), lane slot 2*((i+1)%2) + (j+1)%2 (the +1 is the SAME padding).
        # All indices are compile-time constants -> tiny static VMEM copies.
        hh, wh = hq_s - 1, wq_s - 1
        for b in range(n):
            for i in range(hh):
                for j in range(wh):
                    src = (b * hq_s + i) * wq_s + j
                    ci, sr = (i + 1) // 2, (i + 1) % 2
                    cj, sc = (j + 1) // 2, (j + 1) % 2
                    dst = (b * hq_d + ci) * wq_d + cj
                    s = 2 * sr + sc
                    q_ref[dst:dst + 1, s * c:(s + 1) * c] = p_ref[src:src + 1, :]

    # conv1 -> conv2 -> conv3, all resident in VMEM.
    conv_relu_pool(q1_ref, w1_ref, b1_ref, p1_ref, m1, wq1, 4 * c1)
    repack(p1_ref, q2_ref, hq1, wq1, hq2, wq2, _COUT[0])
    conv_relu_pool(q2_ref, w2_ref, b2_ref, p2_ref, m2, wq2, 4 * c2)
    repack(p2_ref, q3_ref, hq2, wq2, hq3, wq3, _COUT[1])
    conv_relu_pool(q3_ref, w3_ref, b3_ref, p3_ref, m3, wq3, 4 * c3)

    # Flatten conv3's pooled output in NHWC order (fc1 columns are pre-permuted to match
    # PyTorch's NCHW flatten) into the fc lhs rows.
    hh3, wh3 = hq3 - 1, wq3 - 1
    for b in range(n):
        for i in range(hh3):
            for j in range(wh3):
                src = (b * hq3 + i) * wq3 + j
                d0 = (i * wh3 + j) * _COUT[2]
                fcl_ref[b:b + 1, d0:d0 + _COUT[2]] = p3_ref[src:src + 1, :]

    # fc1 + ReLU (+ dropout, identity in eval mode) + fc2.
    h = jnp.dot(fcl_ref[...], fw1_ref[...], preferred_element_type=jnp.float32)
    h = jnp.maximum(h + fb1_ref[...], 0.0)
    # TODO(synk): nn.Dropout(0.25) is identity in eval mode; training-mode Bernoulli mask not implemented.
    o = jnp.dot(h.astype(jnp.bfloat16), fw2_ref[...], preferred_element_type=jnp.float32)
    out_ref[...] = o + fb2_ref[...]


# --------------------------- layout glue (wrapper side, tiny) ---------------------------

def _to_quad(a, rows_pad):
    """(N, H, W, C) -> quad-merged, spatially zero-padded rows (rows_pad, 4*C) bf16.
    Row = (n, cell_i, cell_j) over the padded image grouped 2x2; lane slot = (row%2)*2 + (col%2)."""
    n, h, w, c = a.shape
    hq, wq = h // 2 + 1, w // 2 + 1
    ap = jnp.pad(a, ((0, 0), (1, 1), (1, 1), (0, 0)))
    aq = ap.reshape(n, hq, 2, wq, 2, c).transpose(0, 1, 3, 2, 4, 5)
    aq = aq.reshape(n * hq * wq, 4 * c)
    return jnp.pad(aq, ((0, rows_pad - n * hq * wq), (0, 0)))


# --------------------------- one-time parameter preprocessing ---------------------------

def _build_conv_w(w_oihw, cin_pad):
    """Torch (Cout, Cin, 3, 3) -> (4, 16*cin_pad, Cout) bf16: one K-stacked block per
    pool-window position p=(dr,dc); k index = (tap di,dj)*4 + slot(sr,sc) -> channel."""
    cout, cin = int(w_oihw.shape[0]), int(w_oihw.shape[1])
    w = jnp.zeros((3, 3, cin_pad, cout), jnp.float32)
    w = w.at[:, :, :cin, :].set(jnp.transpose(w_oihw, (2, 3, 1, 0)).astype(jnp.float32))
    blocks = []
    for dr in (0, 1):
        for dc in (0, 1):
            kblocks = []
            for (di, dj) in _OFFSETS:
                for sr in (0, 1):
                    for sc in (0, 1):
                        kh, kw = 2 * di + sr - dr, 2 * dj + sc - dc
                        if 0 <= kh <= 2 and 0 <= kw <= 2:
                            kblocks.append(w[kh, kw])
                        else:
                            kblocks.append(jnp.zeros((cin_pad, cout), jnp.float32))
            blocks.append(jnp.concatenate(kblocks, axis=0))
    return jnp.stack(blocks, axis=0).astype(jnp.bfloat16)


def prepare_params(params, input_hw=(16, 16)):
    prep = {}
    for idx, l in enumerate((1, 2, 3)):
        prep[f"conv{l}_w"] = _build_conv_w(params[f"conv{l}_w"], _CIN_PAD[idx])
        prep[f"conv{l}_b"] = params[f"conv{l}_b"].reshape(1, -1).astype(jnp.float32)
    # fc1: fold PyTorch's NCHW flatten (c, h, w) into a row permutation so the kernel can
    # consume the NHWC-flattened conv3 output directly.  fc2: pad N (num_classes -> 128).
    hh, wh = input_hw[0] // 8, input_hw[1] // 8
    fc1_w, fc1_b = params["fc1_w"], params["fc1_b"]
    n1 = fc1_w.shape[0]
    w1 = fc1_w.reshape(n1, _COUT[2], hh, wh).transpose(2, 3, 1, 0).reshape(_COUT[2] * hh * wh, n1)
    fc2_w, fc2_b = params["fc2_w"], params["fc2_b"]
    nc = fc2_w.shape[0]
    w2 = jnp.zeros((n1, 128), jnp.float32).at[:, :nc].set(fc2_w.T)
    b2 = jnp.zeros((1, 128), jnp.float32).at[0, :nc].set(fc2_b)
    prep["fc1_w"] = w1.astype(jnp.bfloat16)
    prep["fc1_b"] = fc1_b.reshape(1, n1).astype(jnp.float32)
    prep["fc2_w"] = w2.astype(jnp.bfloat16)
    prep["fc2_b"] = b2
    return prep


# --------------------------- forward ---------------------------

def neurological_cnn_forward(x_nchw, prep, *, num_classes=3):
    n, cin, h, w = x_nchw.shape
    assert n <= 8 and h % 8 == 0 and w % 8 == 0
    hq1, wq1, _, m1, r1 = _layer_dims(n, h, w)
    hq2, wq2, _, m2, r2 = _layer_dims(n, h // 2, w // 2)
    hq3, wq3, _, m3, r3 = _layer_dims(n, h // 4, w // 4)
    dims = ((hq1, wq1, m1, _CIN_PAD[0]),
            (hq2, wq2, m2, _CIN_PAD[1]),
            (hq3, wq3, m3, _CIN_PAD[2]))

    # Only wrapper-side glue: NCHW -> NHWC, pad channels to 32, quad-pack the padded image.
    x = jnp.transpose(x_nchw, (0, 2, 3, 1)).astype(jnp.bfloat16)
    x = jnp.pad(x, ((0, 0), (0, 0), (0, 0), (0, _CIN_PAD[0] - cin)))
    q1 = _to_quad(x, r1)

    args = (q1,
            prep["conv1_w"], prep["conv1_b"],
            prep["conv2_w"], prep["conv2_b"],
            prep["conv3_w"], prep["conv3_b"],
            prep["fc1_w"], prep["fc1_b"], prep["fc2_w"], prep["fc2_b"])
    full2 = lambda i: (0, 0)
    full3 = lambda i: (0, 0, 0)
    in_specs = [pl.BlockSpec(a.shape, full3 if a.ndim == 3 else full2) for a in args]

    kernel = functools.partial(_fused_cnn_kernel, n=n, dims=dims)
    out = pl.pallas_call(
        kernel,
        out_shape=jax.ShapeDtypeStruct((8, 128), jnp.float32),
        grid_spec=pltpu.PrefetchScalarGridSpec(
            num_scalar_prefetch=0,
            grid=(1,),
            in_specs=in_specs,
            out_specs=pl.BlockSpec((8, 128), full2),
            scratch_shapes=[
                pltpu.VMEM((m1, _COUT[0]), jnp.bfloat16),                        # p1 (pooled 1)
                pltpu.VMEM((r2, 4 * _CIN_PAD[1]), jnp.bfloat16),                 # q2 (quad in 2)
                pltpu.VMEM((m2, _COUT[1]), jnp.bfloat16),                        # p2
                pltpu.VMEM((r3, 4 * _CIN_PAD[2]), jnp.bfloat16),                 # q3
                pltpu.VMEM((m3, _COUT[2]), jnp.bfloat16),                        # p3
                pltpu.VMEM((8, _COUT[2] * (h // 8) * (w // 8)), jnp.bfloat16),   # fc lhs
                pltpu.VMEM((m1, 16 * max(_CIN_PAD)), jnp.bfloat16),              # im2col lhs
            ]),
        compiler_params=pltpu.CompilerParams(
            dimension_semantics=("arbitrary",)),
    )(*args)
    return out[:n, :num_classes]


# --------------------------- deterministic params (PyTorch shapes/init) ---------------------------

def init_params(key, num_classes=3, fc_in=128 * 2 * 2):
    ks = jax.random.split(key, 10)

    def u(k, shape, fan_in):
        bound = 1.0 / jnp.sqrt(jnp.float32(fan_in))
        return jax.random.uniform(k, shape, jnp.float32, -bound, bound)

    return {
        "conv1_w": u(ks[0], (32, 3, 3, 3), 3 * 9),
        "conv1_b": u(ks[1], (32,), 3 * 9),
        "conv2_w": u(ks[2], (64, 32, 3, 3), 32 * 9),
        "conv2_b": u(ks[3], (64,), 32 * 9),
        "conv3_w": u(ks[4], (128, 64, 3, 3), 64 * 9),
        "conv3_b": u(ks[5], (128,), 64 * 9),
        # PyTorch module rebuilds fc1 to the flattened size at runtime; 16x16 input -> 128*2*2.
        "fc1_w": u(ks[6], (512, fc_in), fc_in),
        "fc1_b": u(ks[7], (512,), fc_in),
        "fc2_w": u(ks[8], (num_classes, 512), 512),
        "fc2_b": u(ks[9], (num_classes,), 512),
    }


# --------------------------- pure-JAX reference (bf16-rounded operands) ---------------------------

def _bf16_round(a):
    return a.astype(jnp.bfloat16).astype(jnp.float32)


def _reference_forward(x_nchw, params):
    x = _bf16_round(jnp.transpose(x_nchw, (0, 2, 3, 1)))
    for l in (1, 2, 3):
        w = _bf16_round(jnp.transpose(params[f"conv{l}_w"], (2, 3, 1, 0)))
        x = jax.lax.conv_general_dilated(
            x, w, (1, 1), "SAME",
            dimension_numbers=("NHWC", "HWIO", "NHWC")) + params[f"conv{l}_b"]
        x = jnp.maximum(x, 0.0)
        x = jax.lax.reduce_window(x, -jnp.inf, jax.lax.max,
                                  (1, 2, 2, 1), (1, 2, 2, 1), "VALID")
    x = jnp.transpose(x, (0, 3, 1, 2)).reshape(x.shape[0], -1)   # NCHW flatten like PyTorch
    h = jnp.maximum(x @ _bf16_round(params["fc1_w"]).T + params["fc1_b"], 0.0)
    return h @ _bf16_round(params["fc2_w"]).T + params["fc2_b"]


if __name__ == "__main__":
    key = jax.random.PRNGKey(0)
    kx, kp = jax.random.split(key)
    x = jax.random.normal(kx, (2, 3, 16, 16), dtype=jnp.float32)   # NCHW, like PyTorch
    params = init_params(kp, num_classes=3, fc_in=128 * 2 * 2)
    prep = prepare_params(params, input_hw=(16, 16))               # one-time weight re-layout

    fwd = jax.jit(functools.partial(neurological_cnn_forward, num_classes=3))
    out = jax.block_until_ready(fwd(x, prep))
    assert out.shape == (2, 3) and out.dtype == jnp.float32

    ref = _reference_forward(x, params)
    assert jnp.allclose(out, ref, rtol=5e-2, atol=2e-2), (out, ref)
    print("KERNEL_OK")
</pallas_src>

<mosaic_0001>
module attributes {stable_mosaic.version = 11 : i64} {
  func.func @_fused_cnn_kernel(%arg0: i32, %arg1: memref<192x128xbf16, #tpu.memory_space<vmem>>, %arg2: memref<4x512x32xbf16, #tpu.memory_space<vmem>>, %arg3: memref<1x32xf32, #tpu.memory_space<vmem>>, %arg4: memref<4x512x64xbf16, #tpu.memory_space<vmem>>, %arg5: memref<1x64xf32, #tpu.memory_space<vmem>>, %arg6: memref<4x1024x128xbf16, #tpu.memory_space<vmem>>, %arg7: memref<1x128xf32, #tpu.memory_space<vmem>>, %arg8: memref<512x512xbf16, #tpu.memory_space<vmem>>, %arg9: memref<1x512xf32, #tpu.memory_space<vmem>>, %arg10: memref<512x128xbf16, #tpu.memory_space<vmem>>, %arg11: memref<1x128xf32, #tpu.memory_space<vmem>>, %arg12: memref<8x128xf32, #tpu.memory_space<vmem>>, %arg13: memref<176x32xbf16, #tpu.memory_space<vmem>>, %arg14: memref<72x128xbf16, #tpu.memory_space<vmem>>, %arg15: memref<64x64xbf16, #tpu.memory_space<vmem>>, %arg16: memref<40x256xbf16, #tpu.memory_space<vmem>>, %arg17: memref<32x128xbf16, #tpu.memory_space<vmem>>, %arg18: memref<8x512xbf16, #tpu.memory_space<vmem>>, %arg19: memref<176x1024xbf16, #tpu.memory_space<vmem>>) attributes {dimension_semantics = [#tpu.dimension_semantics<arbitrary>], iteration_bounds = array<i64: 1>, scalar_prefetch = 0 : i64, scratch_operands = 7 : i64, tpu.core_type = #tpu.core_type<tc>, window_params = [{pipeline_mode = #tpu.pipeline_mode<synchronous>, transform_indices = @transform_0, window_bounds = array<i64: 192, 128>}, {pipeline_mode = #tpu.pipeline_mode<synchronous>, transform_indices = @transform_1, window_bounds = array<i64: 4, 512, 32>}, {pipeline_mode = #tpu.pipeline_mode<synchronous>, transform_indices = @transform_2, window_bounds = array<i64: 1, 32>}, {pipeline_mode = #tpu.pipeline_mode<synchronous>, transform_indices = @transform_3, window_bounds = array<i64: 4, 512, 64>}, {pipeline_mode = #tpu.pipeline_mode<synchronous>, transform_indices = @transform_4, window_bounds = array<i64: 1, 64>}, {pipeline_mode = #tpu.pipeline_mode<synchronous>, transform_indices = @transform_5, window_bounds = array<i64: 4, 1024, 128>}, {pipeline_mode = #tpu.pipeline_mode<synchronous>, transform_indices = @transform_6, window_bounds = array<i64: 1, 128>}, {pipeline_mode = #tpu.pipeline_mode<synchronous>, transform_indices = @transform_7, window_bounds = array<i64: 512, 512>}, {pipeline_mode = #tpu.pipeline_mode<synchronous>, transform_indices = @transform_8, window_bounds = array<i64: 1, 512>}, {pipeline_mode = #tpu.pipeline_mode<synchronous>, transform_indices = @transform_9, window_bounds = array<i64: 512, 128>}, {pipeline_mode = #tpu.pipeline_mode<synchronous>, transform_indices = @transform_10, window_bounds = array<i64: 1, 128>}, {pipeline_mode = #tpu.pipeline_mode<synchronous>, transform_indices = @transform_11, window_bounds = array<i64: 8, 128>}]} {
    %cst = arith.constant 0.000000e+00 : bf16
    %0 = vector.broadcast %cst : bf16 to vector<72x128xbf16>
    %c0 = arith.constant 0 : index
    %c0_0 = arith.constant 0 : index
    %1 = vector.load %arg14[%c0, %c0_0] : memref<72x128xbf16, #tpu.memory_space<vmem>>, vector<72x128xbf16>
    tpu.vector_store %arg14[%c0, %c0_0], %0 {strides = array<i32>} : memref<72x128xbf16, #tpu.memory_space<vmem>>, vector<72x128xbf16>,
    %cst_1 = arith.constant 0.000000e+00 : bf16
    %2 = vector.broadcast %cst_1 : bf16 to vector<40x256xbf16>
    %c0_2 = arith.constant 0 : index
    %c0_3 = arith.constant 0 : index
    %3 = vector.load %arg16[%c0_2, %c0_3] : memref<40x256xbf16, #tpu.memory_space<vmem>>, vector<40x256xbf16>
    tpu.vector_store %arg16[%c0_2, %c0_3], %2 {strides = array<i32>} : memref<40x256xbf16, #tpu.memory_space<vmem>>, vector<40x256xbf16>,
    %cst_4 = arith.constant 0.000000e+00 : bf16
    %4 = vector.broadcast %cst_4 : bf16 to vector<8x512xbf16>
    %c0_5 = arith.constant 0 : index
    %c0_6 = arith.constant 0 : index
    %5 = vector.load %arg18[%c0_5, %c0_6] : memref<8x512xbf16, #tpu.memory_space<vmem>>, vector<8x512xbf16>
    tpu.vector_store %arg18[%c0_5, %c0_6], %4 {strides = array<i32>} : memref<8x512xbf16, #tpu.memory_space<vmem>>, vector<8x512xbf16>,
    %c0_7 = arith.constant 0 : index
    %c0_8 = arith.constant 0 : index
    %6 = vector.load %arg1[%c0_7, %c0_8] : memref<192x128xbf16, #tpu.memory_space<vmem>>, vector<176x128xbf16>
    %c0_9 = arith.constant 0 : index
    %c0_10 = arith.constant 0 : index
    %7 = vector.load %arg19[%c0_9, %c0_10] : memref<176x1024xbf16, #tpu.memory_space<vmem>>, vector<176x128xbf16>
    tpu.vector_store %arg19[%c0_9, %c0_10], %6 {strides = array<i32>} : memref<176x1024xbf16, #tpu.memory_space<vmem>>, vector<176x128xbf16>,
    %c1 = arith.constant 1 : index
    %c0_11 = arith.constant 0 : index
    %8 = vector.load %arg1[%c1, %c0_11] : memref<192x128xbf16, #tpu.memory_space<vmem>>, vector<176x128xbf16>
    %c0_12 = arith.constant 0 : index
    %c128 = arith.constant 128 : index
    %9 = vector.load %arg19[%c0_12, %c128] : memref<176x1024xbf16, #tpu.memory_space<vmem>>, vector<176x128xbf16>
    tpu.vector_store %arg19[%c0_12, %c128], %8 {strides = array<i32>} : memref<176x1024xbf16, #tpu.memory_space<vmem>>, vector<176x128xbf16>,
    %c9 = arith.constant 9 : index
    %c0_13 = arith.constant 0 : index
    %10 = vector.load %arg1[%c9, %c0_13] : memref<192x128xbf16, #tpu.memory_space<vmem>>, vector<176x128xbf16>
    %c0_14 = arith.constant 0 : index
    %c256 = arith.constant 256 : index
    %11 = vector.load %arg19[%c0_14, %c256] : memref<176x1024xbf16, #tpu.memory_space<vmem>>, vector<176x128xbf16>
    tpu.vector_store %arg19[%c0_14, %c256], %10 {strides = array<i32>} : memref<176x1024xbf16, #tpu.memory_space<vmem>>, vector<176x128xbf16>,
    %c10 = arith.constant 10 : index
    %c0_15 = arith.constant 0 : index
    %12 = vector.load %arg1[%c10, %c0_15] : memref<192x128xbf16, #tpu.memory_space<vmem>>, vector<176x128xbf16>
    %c0_16 = arith.constant 0 : index
    %c384 = arith.constant 384 : index
    %13 = vector.load %arg19[%c0_16, %c384] : memref<176x1024xbf16, #tpu.memory_space<vmem>>, vector<176x128xbf16>
    tpu.vector_store %arg19[%c0_16, %c384], %12 {strides = array<i32>} : memref<176x1024xbf16, #tpu.memory_space<vmem>>, vector<176x128xbf16>,
    %c0_17 = arith.constant 0 : index
    %c0_18 = arith.constant 0 : index
    %14 = vector.load %arg19[%c0_17, %c0_18] : memref<176x1024xbf16, #tpu.memory_space<vmem>>, vector<176x512xbf16>
    %c0_19 = arith.constant 0 : index
    %c0_20 = arith.constant 0 : index
    %c0_21 = arith.constant 0 : index
    %15 = vector.load %arg2[%c0_19, %c0_20, %c0_21] : memref<4x512x32xbf16, #tpu.memory_space<vmem>>, vector<1x512x32xbf16>
    %16 = vector.shape_cast %15 : vector<1x512x32xbf16> to vector<512x32xbf16>
    %cst_22 = arith.constant dense<0.000000e+00> : vector<176x32xf32>
    %17 = tpu.matmul %14, %16, %cst_22 {dimension_numbers = #tpu.dot_dimension_numbers<[1], [0], [0], [1], [0, 0, 1, 1], [], []>} : vector<176x512xbf16>, vector<512x32xbf16>, vector<176x32xf32> -> vector<176x32xf32>
    %c1_23 = arith.constant 1 : index
    %c0_24 = arith.constant 0 : index
    %c0_25 = arith.constant 0 : index
    %18 = vector.load %arg2[%c1_23, %c0_24, %c0_25] : memref<4x512x32xbf16, #tpu.memory_space<vmem>>, vector<1x512x32xbf16>
    %19 = vector.shape_cast %18 : vector<1x512x32xbf16> to vector<512x32xbf16>
    %cst_26 = arith.constant dense<0.000000e+00> : vector<176x32xf32>
    %20 = tpu.matmul %14, %19, %cst_26 {dimension_numbers = #tpu.dot_dimension_numbers<[1], [0], [0], [1], [0, 0, 1, 1], [], []>} : vector<176x512xbf16>, vector<512x32xbf16>, vector<176x32xf32> -> vector<176x32xf32>
    %c2 = arith.constant 2 : index
    %c0_27 = arith.constant 0 : index
    %c0_28 = arith.constant 0 : index
    %21 = vector.load %arg2[%c2, %c0_27, %c0_28] : memref<4x512x32xbf16, #tpu.memory_space<vmem>>, vector<1x512x32xbf16>
    %22 = vector.shape_cast %21 : vector<1x512x32xbf16> to vector<512x32xbf16>
    %cst_29 = arith.constant dense<0.000000e+00> : vector<176x32xf32>
    %23 = tpu.matmul %14, %22, %cst_29 {dimension_numbers = #tpu.dot_dimension_numbers<[1], [0], [0], [1], [0, 0, 1, 1], [], []>} : vector<176x512xbf16>, vector<512x32xbf16>, vector<176x32xf32> -> vector<176x32xf32>
    %c3 = arith.constant 3 : index
    %c0_30 = arith.constant 0 : index
    %c0_31 = arith.constant 0 : index
    %24 = vector.load %arg2[%c3, %c0_30, %c0_31] : memref<4x512x32xbf16, #tpu.memory_space<vmem>>, vector<1x512x32xbf16>
    %25 = vector.shape_cast %24 : vector<1x512x32xbf16> to vector<512x32xbf16>
    %cst_32 = arith.constant dense<0.000000e+00> : vector<176x32xf32>
    %26 = tpu.matmul %14, %25, %cst_32 {dimension_numbers = #tpu.dot_dimension_numbers<[1], [0], [0], [1], [0, 0, 1, 1], [], []>} : vector<176x512xbf16>, vector<512x32xbf16>, vector<176x32xf32> -> vector<176x32xf32>
    %27 = arith.maximumf %17, %20 : vector<176x32xf32>
    %28 = arith.maximumf %23, %26 : vector<176x32xf32>
    %29 = arith.maximumf %27, %28 : vector<176x32xf32>
    %c0_33 = arith.constant 0 : index
    %c0_34 = arith.constant 0 : index
    %30 = vector.load %arg3[%c0_33, %c0_34] : memref<1x32xf32, #tpu.memory_space<vmem>>, vector<1x32xf32>
    %31 = vector.broadcast %30 : vector<1x32xf32> to vector<176x32xf32>
    %32 = arith.addf %29, %31 : vector<176x32xf32>
    %cst_35 = arith.constant 0.000000e+00 : f32
    %33 = vector.broadcast %cst_35 : f32 to vector<176x32xf32>
    %34 = arith.maximumf %32, %33 : vector<176x32xf32>
    %35 = arith.truncf %34 : vector<176x32xf32> to vector<176x32xbf16>
    %c0_36 = arith.constant 0 : index
    %c0_37 = arith.constant 0 : index
    %36 = vector.load %arg13[%c0_36, %c0_37] : memref<176x32xbf16, #tpu.memory_space<vmem>>, vector<176x32xbf16>
    tpu.vector_store %arg13[%c0_36, %c0_37], %35 {strides = array<i32>} : memref<176x32xbf16, #tpu.memory_space<vmem>>, vector<176x32xbf16>,
    %c0_38 = arith.constant 0 : index
    %c0_39 = arith.constant 0 : index
    %37 = vector.load %arg13[%c0_38, %c0_39] : memref<176x32xbf16, #tpu.memory_space<vmem>>, vector<1x32xbf16>
    %c0_40 = arith.constant 0 : index
    %c96 = arith.constant 96 : index
    %38 = vector.load %arg14[%c0_40, %c96] : memref<72x128xbf16, #tpu.memory_space<vmem>>, vector<1x32xbf16>
    tpu.vector_store %arg14[%c0_40, %c96], %37 {strides = array<i32>} : memref<72x128xbf16, #tpu.memory_space<vmem>>, vector<1x32xbf16>,
    %c1_41 = arith.constant 1 : index
    %c0_42 = arith.constant 0 : index
    %39 = vector.load %arg13[%c1_41, %c0_42] : memref<176x32xbf16, #tpu.memory_space<vmem>>, vector<1x32xbf16>
    %c1_43 = arith.constant 1 : index
    %c64 = arith.constant 64 : index
    %40 = vector.load %arg14[%c1_43, %c64] : memref<72x128xbf16, #tpu.memory_space<vmem>>, vector<1x32xbf16>
    tpu.vector_store %arg14[%c1_43, %c64], %39 {strides = array<i32>} : memref<72x128xbf16, #tpu.memory_space<vmem>>, vector<1x32xbf16>,
    %c2_44 = arith.constant 2 : index
    %c0_45 = arith.constant 0 : index
    %41 = vector.load %arg13[%c2_44, %c0_45] : memref<176x32xbf16, #tpu.memory_space<vmem>>, vector<1x32xbf16>
    %c1_46 = arith.constant 1 : index
    %c96_47 = arith.constant 96 : index
    %42 = vector.load %arg14[%c1_46, %c96_47] : memref<72x128xbf16, #tpu.memory_space<vmem>>, vector<1x32xbf16>
    tpu.vector_store %arg14[%c1_46, %c96_47], %41 {strides = array<i32>} : memref<72x128xbf16, #tpu.memory_space<vmem>>, vector<1x32xbf16>,
    %c3_48 = arith.constant 3 : index
    %c0_49 = arith.constant 0 : index
    %43 = vector.load %arg13[%c3_48, %c0_49] : memref<176x32xbf16, #tpu.memory_space<vmem>>, vector<1x32xbf16>
    %c2_50 = arith.constant 2 : index
    %c64_51 = arith.constant 64 : index
    %44 = vector.load %arg14[%c2_50, %c64_51] : memref<72x128xbf16, #tpu.memory_space<vmem>>, vector<1x32xbf16>
    tpu.vector_store %arg14[%c2_50, %c64_51], %43 {strides = array<i32>} : memref<72x128xbf16, #tpu.memory_space<vmem>>, vector<1x32xbf16>,
    %c4 = arith.constant 4 : index
    %c0_52 = arith.constant 0 : index
    %45 = vector.load %arg13[%c4, %c0_52] : memref<176x32xbf16, #tpu.memory_space<vmem>>, vector<1x32xbf16>
    %c2_53 = arith.constant 2 : index
    %c96_54 = arith.constant 96 : index
    %46 = vector.load %arg14[%c2_53, %c96_54] : memref<72x128xbf16, #tpu.memory_space<vmem>>, vector<1x32xbf16>
    tpu.vector_store %arg14[%c2_53, %c96_54], %45 {strides = array<i32>} : memref<72x128xbf16, #tpu.memory_space<vmem>>, vector<1x32xbf16>,
    %c5 = arith.constant 5 : index
    %c0_55 = arith.constant 0 : index
    %47 = vector.load %arg13[%c5, %c0_55] : memref<176x32xbf16, #tpu.memory_space<vmem>>, vector<1x32xbf16>
    %c3_56 = arith.constant 3 : index
    %c64_57 = arith.constant 64 : index
    %48 = vector.load %arg14[%c3_56, %c64_57] : memref<72x128xbf16, #tpu.memory_space<vmem>>, vector<1x32xbf16>
    tpu.vector_store %arg14[%c3_56, %c64_57], %47 {strides = array<i32>} : memref<72x128xbf16, #tpu.memory_space<vmem>>, vector<1x32xbf16>,
    %c6 = arith.constant 6 : index
    %c0_58 = arith.constant 0 : index
    %49 = vector.load %arg13[%c6, %c0_58] : memref<176x32xbf16, #tpu.memory_space<vmem>>, vector<1x32xbf16>
    %c3_59 = arith.constant 3 : index
    %c96_60 = arith.constant 96 : index
    %50 = vector.load %arg14[%c3_59, %c96_60] : memref<72x128xbf16, #tpu.memory_space<vmem>>, vector<1x32xbf16>
    tpu.vector_store %arg14[%c3_59, %c96_60], %49 {strides = array<i32>} : memref<72x128xbf16, #tpu.memory_space<vmem>>, vector<1x32xbf16>,
    %c7 = arith.constant 7 : index
    %c0_61 = arith.constant 0 : index
    %51 = vector.load %arg13[%c7, %c0_61] : memref<176x32xbf16, #tpu.memory_space<vmem>>, vector<1x32xbf16>
    %c4_62 = arith.constant 4 : index
    %c64_63 = arith.constant 64 : index
    %52 = vector.load %arg14[%c4_62, %c64_63] : memref<72x128xbf16, #tpu.memory_space<vmem>>, vector<1x32xbf16>
    tpu.vector_store %arg14[%c4_62, %c64_63], %51 {strides = array<i32>} : memref<72x128xbf16, #tpu.memory_space<vmem>>, vector<1x32xbf16>,
    %c9_64 = arith.constant 9 : index
    %c0_65 = arith.constant 0 : index
    %53 = vector.load %arg13[%c9_64, %c0_65] : memref<176x32xbf16, #tpu.memory_space<vmem>>, vector<1x32xbf16>
    %c5_66 = arith.constant 5 : index
    %c32 = arith.constant 32 : index
    %54 = vector.load %arg14[%c5_66, %c32] : memref<72x128xbf16, #tpu.memory_space<vmem>>, vector<1x32xbf16>
    tpu.vector_store %arg14[%c5_66, %c32], %53 {strides = array<i32>} : memref<72x128xbf16, #tpu.memory_space<vmem>>, vector<1x32xbf16>,
    %c10_67 = arith.constant 10 : index
    %c0_68 = arith.constant 0 : index
    %55 = vector.load %arg13[%c10_67, %c0_68] : memref<176x32xbf16, #tpu.memory_space<vmem>>, vector<1x32xbf16>
    %c6_69 = arith.constant 6 : index
    %c0_70 = arith.constant 0 : index
    %56 = vector.load %arg14[%c6_69, %c0_70] : memref<72x128xbf16, #tpu.memory_space<vmem>>, vector<1x32xbf16>
    tpu.vector_store %arg14[%c6_69, %c0_70], %55 {strides = array<i32>} : memref<72x128xbf16, #tpu.memory_space<vmem>>, vector<1x32xbf16>,
    %c11 = arith.constant 11 : index
    %c0_71 = arith.constant 0 : index
    %57 = vector.load %arg13[%c11, %c0_71] : memref<176x32xbf16, #tpu.memory_space<vmem>>, vector<1x32xbf16>
    %c6_72 = arith.constant 6 : index
    %c32_73 = arith.constant 32 : index
    %58 = vector.load %arg14[%c6_72, %c32_73] : memref<72x128xbf16, #tpu.memory_space<vmem>>, vector<1x32xbf16>
    tpu.vector_store %arg14[%c6_72, %c32_73], %57 {strides = array<i32>} : memref<72x128xbf16, #tpu.memory_space<vmem>>, vector<1x32xbf16>,
    %c12 = arith.constant 12 : index
    %c0_74 = arith.constant 0 : index
    %59 = vector.load %arg13[%c12, %c0_74] : memref<176x32xbf16, #tpu.memory_space<vmem>>, vector<1x32xbf16>
    %c7_75 = arith.constant 7 : index
    %c0_76 = arith.constant 0 : index
    %60 = vector.load %arg14[%c7_75, %c0_76] : memref<72x128xbf16, #tpu.memory_space<vmem>>, vector<1x32xbf16>
    tpu.vector_store %arg14[%c7_75, %c0_76], %59 {strides = array<i32>} : memref<72x128xbf16, #tpu.memory_space<vmem>>, vector<1x32xbf16>,
    %c13 = arith.constant 13 : index
    %c0_77 = arith.constant 0 : index
    %61 = vector.load %arg13[%c13, %c0_77] : memref<176x32xbf16, #tpu.memory_space<vmem>>, vector<1x32xbf16>
    %c7_78 = arith.constant 7 : index
    %c32_79 = arith.constant 32 : index
    %62 = vector.load %arg14[%c7_78, %c32_79] : memref<72x128xbf16, #tpu.memory_space<vmem>>, vector<1x32xbf16>
    tpu.vector_store %arg14[%c7_78, %c32_79], %61 {strides = array<i32>} : memref<72x128xbf16, #tpu.memory_space<vmem>>, vector<1x32xbf16>,
    %c14 = arith.constant 14 : index
    %c0_80 = arith.constant 0 : index
    %63 = vector.load %arg13[%c14, %c0_80] : memref<176x32xbf16, #tpu.memory_space<vmem>>, vector<1x32xbf16>
    %c8 = arith.constant 8 : index
    %c0_81 = arith.constant 0 : index
    %64 = vector.load %arg14[%c8, %c0_81] : memref<72x128xbf16, #tpu.memory_space<vmem>>, vector<1x32xbf16>
    tpu.vector_store %arg14[%c8, %c0_81], %63 {strides = array<i32>} : memref<72x128xbf16, #tpu.memory_space<vmem>>, vector<1x32xbf16>,
    %c15 = arith.constant 15 : index
    %c0_82 = arith.constant 0 : index
    %65 = vector.load %arg13[%c15, %c0_82] : memref<176x32xbf16, #tpu.memory_space<vmem>>, vector<1x32xbf16>
    %c8_83 = arith.constant 8 : index
    %c32_84 = arith.constant 32 : index
    %66 = vector.load %arg14[%c8_83, %c32_84] : memref<72x128xbf16, #tpu.memory_space<vmem>>, vector<1x32xbf16>
    tpu.vector_store %arg14[%c8_83, %c32_84], %65 {strides = array<i32>} : memref<72x128xbf16, #tpu.memory_space<vmem>>, vector<1x32xbf16>,
    %c16 = arith.constant 16 : index
    %c0_85 = arith.constant 0 : index
    %67 = vector.load %arg13[%c16, %c0_85] : memref<176x32xbf16, #tpu.memory_space<vmem>>, vector<1x32xbf16>
    %c9_86 = arith.constant 9 : index
    %c0_87 = arith.constant 0 : index
    %68 = vector.load %arg14[%c9_86, %c0_87] : memref<72x128xbf16, #tpu.memory_space<vmem>>, vector<1x32xbf16>
    tpu.vector_store %arg14[%c9_86, %c0_87], %67 {strides = array<i32>} : memref<72x128xbf16, #tpu.memory_space<vmem>>, vector<1x32xbf16>,
    %c18 = arith.constant 18 : index
    %c0_88 = arith.constant 0 : index
    %69 = vector.load %arg13[%c18, %c0_88] : memref<176x32xbf16, #tpu.memory_space<vmem>>, vector<1x32xbf16>
    %c5_89 = arith.constant 5 : index
    %c96_90 = arith.constant 96 : index
    %70 = vector.load %arg14[%c5_89, %c96_90] : memref<72x128xbf16, #tpu.memory_space<vmem>>, vector<1x32xbf16>
    tpu.vector_store %arg14[%c5_89, %c96_90], %69 {strides = array<i32>} : memref<72x128xbf16, #tpu.memory_space<vmem>>, vector<1x32xbf16>,
    %c19 = arith.constant 19 : index
    %c0_91 = arith.constant 0 : index
    %71 = vector.load %arg13[%c19, %c0_91] : memref<176x32xbf16, #tpu.memory_space<vmem>>, vector<1x32xbf16>
    %c6_92 = arith.constant 6 : index
    %c64_93 = arith.constant 64 : index
    %72 = vector.load %arg14[%c6_92, %c64_93] : memref<72x128xbf16, #tpu.memory_space<vmem>>, vector<1x32xbf16>
    tpu.vector_store %arg14[%c6_92, %c64_93], %71 {strides = array<i32>} : memref<72x128xbf16, #tpu.memory_space<vmem>>, vector<1x32xbf16>,
    %c20 = arith.constant 20 : index
    %c0_94 = arith.constant 0 : index
    %73 = vector.load %arg13[%c20, %c0_94] : memref<176x32xbf16, #tpu.memory_space<vmem>>, vector<1x32xbf16>
    %c6_95 = arith.constant 6 : index
    %c96_96 = arith.constant 96 : index
    %74 = vector.load %arg14[%c6_95, %c96_96] : memref<72x128xbf16, #tpu.memory_space<vmem>>, vector<1x32xbf16>
    tpu.vector_store %arg14[%c6_95, %c96_96], %73 {strides = array<i32>} : memref<72x128xbf16, #tpu.memory_space<vmem>>, vector<1x32xbf16>,
    %c21 = arith.constant 21 : index
    %c0_97 = arith.constant 0 : index
    %75 = vector.load %arg13[%c21, %c0_97] : memref<176x32xbf16, #tpu.memory_space<vmem>>, vector<1x32xbf16>
    %c7_98 = arith.constant 7 : index
    %c64_99 = arith.constant 64 : index
    %76 = vector.load %arg14[%c7_98, %c64_99] : memref<72x128xbf16, #tpu.memory_space<vmem>>, vector<1x32xbf16>
    tpu.vector_store %arg14[%c7_98, %c64_99], %75 {strides = array<i32>} : memref<72x128xbf16, #tpu.memory_space<vmem>>, vector<1x32xbf16>,
    %c22 = arith.constant 22 : index
    %c0_100 = arith.constant 0 : index
    %77 = vector.load %arg13[%c22, %c0_100] : memref<176x32xbf16, #tpu.memory_space<vmem>>, vector<1x32xbf16>
    %c7_101 = arith.constant 7 : index
    %c96_102 = arith.constant 96 : index
    %78 = vector.load %arg14[%c7_101, %c96_102] : memref<72x128xbf16, #tpu.memory_space<vmem>>, vector<1x32xbf16>
    tpu.vector_store %arg14[%c7_101, %c96_102], %77 {strides = array<i32>} : memref<72x128xbf16, #tpu.memory_space<vmem>>, vector<1x32xbf16>,
    %c23 = arith.constant 23 : index
    %c0_103 = arith.constant 0 : index
    %79 = vector.load %arg13[%c23, %c0_103] : memref<176x32xbf16, #tpu.memory_space<vmem>>, vector<1x32xbf16>
    %c8_104 = arith.constant 8 : index
    %c64_105 = arith.constant 64 : index
    %80 = vector.load %arg14[%c8_104, %c64_105] : memref<72x128xbf16, #tpu.memory_space<vmem>>, vector<1x32xbf16>
    tpu.vector_store %arg14[%c8_104, %c64_105], %79 {strides = array<i32>} : memref<72x128xbf16, #tpu.memory_space<vmem>>, vector<1x32xbf16>,
    %c24 = arith.constant 24 : index
    %c0_106 = arith.constant 0 : index
    %81 = vector.load %arg13[%c24, %c0_106] : memref<176x32xbf16, #tpu.memory_space<vmem>>, vector<1x32xbf16>
    %c8_107 = arith.constant 8 : index
    %c96_108 = arith.constant 96 : index
    %82 = vector.load %arg14[%c8_107, %c96_108] : memref<72x128xbf16, #tpu.memory_space<vmem>>, vector<1x32xbf16>
    tpu.vector_store %arg14[%c8_107, %c96_108], %81 {strides = array<i32>} : memref<72x128xbf16, #tpu.memory_space<vmem>>, vector<1x32xbf16>,
    %c25 = arith.constant 25 : index
    %c0_109 = arith.constant 0 : index
    %83 = vector.load %arg13[%c25, %c0_109] : memref<176x32xbf16, #tpu.memory_space<vmem>>, vector<1x32xbf16>
    %c9_110 = arith.constant 9 : index
    %c64_111 = arith.constant 64 : index
    %84 = vector.load %arg14[%c9_110, %c64_111] : memref<72x128xbf16, #tpu.memory_space<vmem>>, vector<1x32xbf16>
    tpu.vector_store %arg14[%c9_110, %c64_111], %83 {strides = array<i32>} : memref<72x128xbf16, #tpu.memory_space<vmem>>, vector<1x32xbf16>,
    %c27 = arith.constant 27 : index
    %c0_112 = arith.constant 0 : index
    %85 = vector.load %arg13[%c27, %c0_112] : memref<176x32xbf16, #tpu.memory_space<vmem>>, vector<1x32xbf16>
    %c10_113 = arith.constant 10 : index
    %c32_114 = arith.constant 32 : index
    %86 = vector.load %arg14[%c10_113, %c32_114] : memref<72x128xbf16, #tpu.memory_space<vmem>>, vector<1x32xbf16>
    tpu.vector_store %arg14[%c10_113, %c32_114], %85 {strides = array<i32>} : memref<72x128xbf16, #tpu.memory_space<vmem>>, vector<1x32xbf16>,
    %c28 = arith.constant 28 : index
    %c0_115 = arith.constant 0 : index
    %87 = vector.load %arg13[%c28, %c0_115] : memref<176x32xbf16, #tpu.memory_space<vmem>>, vector<1x32xbf16>
    %c11_116 = arith.constant 11 : index
    %c0_117 = arith.constant 0 : index
    %88 = vector.load %arg14[%c11_116, %c0_117] : memref<72x128xbf16, #tpu.memory_space<vmem>>, vector<1x32xbf16>
    tpu.vector_store %arg14[%c11_116, %c0_117], %87 {strides = array<i32>} : memref<72x128xbf16, #tpu.memory_space<vmem>>, vector<1x32xbf16>,
    %c29 = arith.constant 29 : index
    %c0_118 = arith.constant 0 : index
    %89 = vector.load %arg13[%c29, %c0_118] : memref<176x32xbf16, #tpu.memory_space<vmem>>, vector<1x32xbf16>
    %c11_119 = arith.constant 11 : index
    %c32_120 = arith.constant 32 : index
    %90 = vector.load %arg14[%c11_119, %c32_120] : memref<72x128xbf16, #tpu.memory_space<vmem>>, vector<1x32xbf16>
    tpu.vector_store %arg14[%c11_119, %c32_120], %89 {strides = array<i32>} : memref<72x128xbf16, #tpu.memory_space<vmem>>, vector<1x32xbf16>,
    %c30 = arith.constant 30 : index
    %c0_121 = arith.constant 0 : index
    %91 = vector.load %arg13[%c30, %c0_121] : memref<176x32xbf16, #tpu.memory_space<vmem>>, vector<1x32xbf16>
    %c12_122 = arith.constant 12 : index
    %c0_123 = arith.constant 0 : index
    %92 = vector.load %arg14[%c12_122, %c0_123] : memref<72x128xbf16, #tpu.memory_space<vmem>>, vector<1x32xbf16>
    tpu.vector_store %arg14[%c12_122, %c0_123], %91 {strides = array<i32>} : memref<72x128xbf16, #tpu.memory_space<vmem>>, vector<1x32xbf16>,
    %c31 = arith.constant 31 : index
    %c0_124 = arith.constant 0 : index
    %93 = vector.load %arg13[%c31, %c0_124] : memref<176x32xbf16, #tpu.memory_space<vmem>>, vector<1x32xbf16>
    %c12_125 = arith.constant 12 : index
    %c32_126 = arith.constant 32 : index
    %94 = vector.load %arg14[%c12_125, %c32_126] : memref<72x128xbf16, #tpu.memory_space<vmem>>, vector<1x32xbf16>
    tpu.vector_store %arg14[%c12_125, %c32_126], %93 {strides = array<i32>} : memref<72x128xbf16, #tpu.memory_space<vmem>>, vector<1x32xbf16>,
    %c32_127 = arith.constant 32 : index
    %c0_128 = arith.constant 0 : index
    %95 = vector.load %arg13[%c32_127, %c0_128] : memref<176x32xbf16, #tpu.memory_space<vmem>>, vector<1x32xbf16>
    %c13_129 = arith.constant 13 : index
    %c0_130 = arith.constant 0 : index
    %96 = vector.load %arg14[%c13_129, %c0_130] : memref<72x128xbf16, #tpu.memory_space<vmem>>, vector<1x32xbf16>
    tpu.vector_store %arg14[%c13_129, %c0_130], %95 {strides = array<i32>} : memref<72x128xbf16, #tpu.memory_space<vmem>>, vector<1x32xbf16>,
    %c33 = arith.constant 33 : index
    %c0_131 = arith.constant 0 : index
    %97 = vector.load %arg13[%c33, %c0_131] : memref<176x32xbf16, #tpu.memory_space<vmem>>, vector<1x32xbf16>
    %c13_132 = arith.constant 13 : index
    %c32_133 = arith.constant 32 : index
    %98 = vector.load %arg14[%c13_132, %c32_133] : memref<72x128xbf16, #tpu.memory_space<vmem>>, vector<1x32xbf16>
    tpu.vector_store %arg14[%c13_132, %c32_133], %97 {strides = array<i32>} : memref<72x128xbf16, #tpu.memory_space<vmem>>, vector<1x32xbf16>,
    %c34 = arith.constant 34 : index
    %c0_134 = arith.constant 0 : index
    %99 = vector.load %arg13[%c34, %c0_134] : memref<176x32xbf16, #tpu.memory_space<vmem>>, vector<1x32xbf16>
    %c14_135 = arith.constant 14 : index
    %c0_136 = arith.constant 0 : index
    %100 = vector.load %arg14[%c14_135, %c0_136] : memref<72x128xbf16, #tpu.memory_space<vmem>>, vector<1x32xbf16>
    tpu.vector_store %arg14[%c14_135, %c0_136], %99 {strides = array<i32>} : memref<72x128xbf16, #tpu.memory_space<vmem>>, vector<1x32xbf16>,
    %c36 = arith.constant 36 : index
    %c0_137 = arith.constant 0 : index
    %101 = vector.load %arg13[%c36, %c0_137] : memref<176x32xbf16, #tpu.memory_space<vmem>>, vector<1x32xbf16>
    %c10_138 = arith.constant 10 : index
    %c96_139 = arith.constant 96 : index
    %102 = vector.load %arg14[%c10_138, %c96_139] : memref<72x128xbf16, #tpu.memory_space<vmem>>, vector<1x32xbf16>
    tpu.vector_store %arg14[%c10_138, %c96_139], %101 {strides = array<i32>} : memref<72x128xbf16, #tpu.memory_space<vmem>>, vector<1x32xbf16>,
    %c37 = arith.constant 37 : index
    %c0_140 = arith.constant 0 : index
    %103 = vector.load %arg13[%c37, %c0_140] : memref<176x32xbf16, #tpu.memory_space<vmem>>, vector<1x32xbf16>
    %c11_141 = arith.constant 11 : index
    %c64_142 = arith.constant 64 : index
    %104 = vector.load %arg14[%c11_141, %c64_142] : memref<72x128xbf16, #tpu.memory_space<vmem>>, vector<1x32xbf16>
    tpu.vector_store %arg14[%c11_141, %c64_142], %103 {strides = array<i32>} : memref<72x128xbf16, #tpu.memory_space<vmem>>, vector<1x32xbf16>,
    %c38 = arith.constant 38 : index
    %c0_143 = arith.constant 0 : index
    %105 = vector.load %arg13[%c38, %c0_143] : memref<176x32xbf16, #tpu.memory_space<vmem>>, vector<1x32xbf16>
    %c11_144 = arith.constant 11 : index
    %c96_145 = arith.constant 96 : index
    %106 = vector.load %arg14[%c11_144, %c96_145] : memref<72x128xbf16, #tpu.memory_space<vmem>>, vector<1x32xbf16>
    tpu.vector_store %arg14[%c11_144, %c96_145], %105 {strides = array<i32>} : memref<72x128xbf16, #tpu.memory_space<vmem>>, vector<1x32xbf16>,
    %c39 = arith.constant 39 : index
    %c0_146 = arith.constant 0 : index
    %107 = vector.load %arg13[%c39, %c0_146] : memref<176x32xbf16, #tpu.memory_space<vmem>>, vector<1x32xbf16>
    %c12_147 = arith.constant 12 : index
    %c64_148 = arith.constant 64 : index
    %108 = vector.load %arg14[%c12_147, %c64_148] : memref<72x128xbf16, #tpu.memory_space<vmem>>, vector<1x32xbf16>
    tpu.vector_store %arg14[%c12_147, %c64_148], %107 {strides = array<i32>} : memref<72x128xbf16, #tpu.memory_space<vmem>>, vector<1x32xbf16>,
    %c40 = arith.constant 40 : index
    %c0_149 = arith.constant 0 : index
    %109 = vector.load %arg13[%c40, %c0_149] : memref<176x32xbf16, #tpu.memory_space<vmem>>, vector<1x32xbf16>
    %c12_150 = arith.constant 12 : index
    %c96_151 = arith.constant 96 : index
    %110 = vector.load %arg14[%c12_150, %c96_151] : memref<72x128xbf16, #tpu.memory_space<vmem>>, vector<1x32xbf16>
    tpu.vector_store %arg14[%c12_150, %c96_151], %109 {strides = array<i32>} : memref<72x128xbf16, #tpu.memory_space<vmem>>, vector<1x32xbf16>,
    %c41 = arith.constant 41 : index
    %c0_152 = arith.constant 0 : index
    %111 = vector.load %arg13[%c41, %c0_152] : memref<176x32xbf16, #tpu.memory_space<vmem>>, vector<1x32xbf16>
    %c13_153 = arith.constant 13 : index
    %c64_154 = arith.constant 64 : index
    %112 = vector.load %arg14[%c13_153, %c64_154] : memref<72x128xbf16, #tpu.memory_space<vmem>>, vector<1x32xbf16>
    tpu.vector_store %arg14[%c13_153, %c64_154], %111 {strides = array<i32>} : memref<72x128xbf16, #tpu.memory_space<vmem>>, vector<1x32xbf16>,
    %c42 = arith.constant 42 : index
    %c0_155 = arith.constant 0 : index
    %113 = vector.load %arg13[%c42, %c0_155] : memref<176x32xbf16, #tpu.memory_space<vmem>>, vector<1x32xbf16>
    %c13_156 = arith.constant 13 : index
    %c96_157 = arith.constant 96 : index
    %114 = vector.load %arg14[%c13_156, %c96_157] : memref<72x128xbf16, #tpu.memory_space<vmem>>, vector<1x32xbf16>
    tpu.vector_store %arg14[%c13_156, %c96_157], %113 {strides = array<i32>} : memref<72x128xbf16, #tpu.memory_space<vmem>>, vector<1x32xbf16>,
    %c43 = arith.constant 43 : index
    %c0_158 = arith.constant 0 : index
    %115 = vector.load %arg13[%c43, %c0_158] : memref<176x32xbf16, #tpu.memory_space<vmem>>, vector<1x32xbf16>
    %c14_159 = arith.constant 14 : index
    %c64_160 = arith.constant 64 : index
    %116 = vector.load %arg14[%c14_159, %c64_160] : memref<72x128xbf16, #tpu.memory_space<vmem>>, vector<1x32xbf16>
    tpu.vector_store %arg14[%c14_159, %c64_160], %115 {strides = array<i32>} : memref<72x128xbf16, #tpu.memory_space<vmem>>, vector<1x32xbf16>,
    %c45 = arith.constant 45 : index
    %c0_161 = arith.constant 0 : index
    %117 = vector.load %arg13[%c45, %c0_161] : memref<176x32xbf16, #tpu.memory_space<vmem>>, vector<1x32xbf16>
    %c15_162 = arith.constant 15 : index
    %c32_163 = arith.constant 32 : index
    %118 = vector.load %arg14[%c15_162, %c32_163] : memref<72x128xbf16, #tpu.memory_space<vmem>>, vector<1x32xbf16>
    tpu.vector_store %arg14[%c15_162, %c32_163], %117 {strides = array<i32>} : memref<72x128xbf16, #tpu.memory_space<vmem>>, vector<1x32xbf16>,
    %c46 = arith.constant 46 : index
    %c0_164 = arith.constant 0 : index
    %119 = vector.load %arg13[%c46, %c0_164] : memref<176x32xbf16, #tpu.memory_space<vmem>>, vector<1x32xbf16>
    %c16_165 = arith.constant 16 : index
    %c0_166 = arith.constant 0 : index
    %120 = vector.load %arg14[%c16_165, %c0_166] : memref<72x128xbf16, #tpu.memory_space<vmem>>, vector<1x32xbf16>
    tpu.vector_store %arg14[%c16_165, %c0_166], %119 {strides = array<i32>} : memref<72x128xbf16, #tpu.memory_space<vmem>>, vector<1x32xbf16>,
    %c47 = arith.constant 47 : index
    %c0_167 = arith.constant 0 : index
    %121 = vector.load %arg13[%c47, %c0_167] : memref<176x32xbf16, #tpu.memory_space<vmem>>, vector<1x32xbf16>
    %c16_168 = arith.constant 16 : index
    %c32_169 = arith.constant 32 : index
    %122 = vector.load %arg14[%c16_168, %c32_169] : memref<72x128xbf16, #tpu.memory_space<vmem>>, vector<1x32xbf16>
    tpu.vector_store %arg14[%c16_168, %c32_169], %121 {strides = array<i32>} : memref<72x128xbf16, #tpu.memory_space<vmem>>, vector<1x32xbf16>,
    %c48 = arith.constant 48 : index
    %c0_170 = arith.constant 0 : index
    %123 = vector.load %arg13[%c48, %c0_170] : memref<176x32xbf16, #tpu.memory_space<vmem>>, vector<1x32xbf16>
    %c17 = arith.constant 17 : index
    %c0_171 = arith.constant 0 : index
    %124 = vector.load %arg14[%c17, %c0_171] : memref<72x128xbf16, #tpu.memory_space<vmem>>, vector<1x32xbf16>
    tpu.vector_store %arg14[%c17, %c0_171], %123 {strides = array<i32>} : memref<72x128xbf16, #tpu.memory_space<vmem>>, vector<1x32xbf16>,
    %c49 = arith.constant 49 : index
    %c0_172 = arith.constant 0 : index
    %125 = vector.load %arg13[%c49, %c0_172] : memref<176x32xbf16, #tpu.memory_space<vmem>>, vector<1x32xbf16>
    %c17_173 = arith.constant 17 : index
    %c32_174 = arith.constant 32 : index
    %126 = vector.load %arg14[%c17_173, %c32_174] : memref<72x128xbf16, #tpu.memory_space<vmem>>, vector<1x32xbf16>
    tpu.vector_store %arg14[%c17_173, %c32_174], %125 {strides = array<i32>} : memref<72x128xbf16, #tpu.memory_space<vmem>>, vector<1x32xbf16>,
    %c50 = arith.constant 50 : index
    %c0_175 = arith.constant 0 : index
    %127 = vector.load %arg13[%c50, %c0_175] : memref<176x32xbf16, #tpu.memory_space<vmem>>, vector<1x32xbf16>
    %c18_176 = arith.constant 18 : index
    %c0_177 = arith.constant 0 : index
    %128 = vector.load %arg14[%c18_176, %c0_177] : memref<72x128xbf16, #tpu.memory_space<vmem>>, vector<1x32xbf16>
    tpu.vector_store %arg14[%c18_176, %c0_177], %127 {strides = array<i32>} : memref<72x128xbf16, #tpu.memory_space<vmem>>, vector<1x32xbf16>,
    %c51 = arith.constant 51 : index
    %c0_178 = arith.constant 0 : index
    %129 = vector.load %arg13[%c51, %c0_178] : memref<176x32xbf16, #tpu.memory_space<vmem>>, vector<1x32xbf16>
    %c18_179 = arith.constant 18 : index
    %c32_180 = arith.constant 32 : index
    %130 = vector.load %arg14[%c18_179, %c32_180] : memref<72x128xbf16, #tpu.memory_space<vmem>>, vector<1x32xbf16>
    tpu.vector_store %arg14[%c18_179, %c32_180], %129 {strides = array<i32>} : memref<72x128xbf16, #tpu.memory_space<vmem>>, vector<1x32xbf16>,
    %c52 = arith.constant 52 : index
    %c0_181 = arith.constant 0 : index
    %131 = vector.load %arg13[%c52, %c0_181] : memref<176x32xbf16, #tpu.memory_space<vmem>>, vector<1x32xbf16>
    %c19_182 = arith.constant 19 : index
    %c0_183 = arith.constant 0 : index
    %132 = vector.load %arg14[%c19_182, %c0_183] : memref<72x128xbf16, #tpu.memory_space<vmem>>, vector<1x32xbf16>
    tpu.vector_store %arg14[%c19_182, %c0_183], %131 {strides = array<i32>} : memref<72x128xbf16, #tpu.memory_space<vmem>>, vector<1x32xbf16>,
    %c54 = arith.constant 54 : index
    %c0_184 = arith.constant 0 : index
    %133 = vector.load %arg13[%c54, %c0_184] : memref<176x32xbf16, #tpu.memory_space<vmem>>, vector<1x32xbf16>
    %c15_185 = arith.constant 15 : index
    %c96_186 = arith.constant 96 : index
    %134 = vector.load %arg14[%c15_185, %c96_186] : memref<72x128xbf16, #tpu.memory_space<vmem>>, vector<1x32xbf16>
    tpu.vector_store %arg14[%c15_185, %c96_186], %133 {strides = array<i32>} : memref<72x128xbf16, #tpu.memory_space<vmem>>, vector<1x32xbf16>,
    %c55 = arith.constant 55 : index
    %c0_187 = arith.constant 0 : index
    %135 = vector.load %arg13[%c55, %c0_187] : memref<176x32xbf16, #tpu.memory_space<vmem>>, vector<1x32xbf16>
    %c16_188 = arith.constant 16 : index
    %c64_189 = arith.constant 64 : index
    %136 = vector.load %arg14[%c16_188, %c64_189] : memref<72x128xbf16, #tpu.memory_space<vmem>>, vector<1x32xbf16>
    tpu.vector_store %arg14[%c16_188, %c64_189], %135 {strides = array<i32>} : memref<72x128xbf16, #tpu.memory_space<vmem>>, vector<1x32xbf16>,
    %c56 = arith.constant 56 : index
    %c0_190 = arith.constant 0 : index
    %137 = vector.load %arg13[%c56, %c0_190] : memref<176x32xbf16, #tpu.memory_space<vmem>>, vector<1x32xbf16>
    %c16_191 = arith.constant 16 : index
    %c96_192 = arith.constant 96 : index
    %138 = vector.load %arg14[%c16_191, %c96_192] : memref<72x128xbf16, #tpu.memory_space<vmem>>, vector<1x32xbf16>
    tpu.vector_store %arg14[%c16_191, %c96_192], %137 {strides = array<i32>} : memref<72x128xbf16, #tpu.memory_space<vmem>>, vector<1x32xbf16>,
    %c57 = arith.constant 57 : index
    %c0_193 = arith.constant 0 : index
    %139 = vector.load %arg13[%c57, %c0_193] : memref<176x32xbf16, #tpu.memory_space<vmem>>, vector<1x32xbf16>
    %c17_194 = arith.constant 17 : index
    %c64_195 = arith.constant 64 : index
    %140 = vector.load %arg14[%c17_194, %c64_195] : memref<72x128xbf16, #tpu.memory_space<vmem>>, vector<1x32xbf16>
    tpu.vector_store %arg14[%c17_194, %c64_195], %139 {strides = array<i32>} : memref<72x128xbf16, #tpu.memory_space<vmem>>, vector<1x32xbf16>,
    %c58 = arith.constant 58 : index
    %c0_196 = arith.constant 0 : index
    %141 = vector.load %arg13[%c58, %c0_196] : memref<176x32xbf16, #tpu.memory_space<vmem>>, vector<1x32xbf16>
    %c17_197 = arith.constant 17 : index
    %c96_198 = arith.constant 96 : index
    %142 = vector.load %arg14[%c17_197, %c96_198] : memref<72x128xbf16, #tpu.memory_space<vmem>>, vector<1x32xbf16>
    tpu.vector_store %arg14[%c17_197, %c96_198], %141 {strides = array<i32>} : memref<72x128xbf16, #tpu.memory_space<vmem>>, vector<1x32xbf16>,
    %c59 = arith.constant 59 : index
    %c0_199 = arith.constant 0 : index
    %143 = vector.load %arg13[%c59, %c0_199] : memref<176x32xbf16, #tpu.memory_space<vmem>>, vector<1x32xbf16>
    %c18_200 = arith.constant 18 : index
    %c64_201 = arith.constant 64 : index
    %144 = vector.load %arg14[%c18_200, %c64_201] : memref<72x128xbf16, #tpu.memory_space<vmem>>, vector<1x32xbf16>
    tpu.vector_store %arg14[%c18_200, %c64_201], %143 {strides = array<i32>} : memref<72x128xbf16, #tpu.memory_space<vmem>>, vector<1x32xbf16>,
    %c60 = arith.constant 60 : index
    %c0_202 = arith.constant 0 : index
    %145 = vector.load %arg13[%c60, %c0_202] : memref<176x32xbf16, #tpu.memory_space<vmem>>, vector<1x32xbf16>
    %c18_203 = arith.constant 18 : index
    %c96_204 = arith.constant 96 : index
    %146 = vector.load %arg14[%c18_203, %c96_204] : memref<72x128xbf16, #tpu.memory_space<vmem>>, vector<1x32xbf16>
    tpu.vector_store %arg14[%c18_203, %c96_204], %145 {strides = array<i32>} : memref<72x128xbf16, #tpu.memory_space<vmem>>, vector<1x32xbf16>,
    %c61 = arith.constant 61 : index
    %c0_205 = arith.constant 0 : index
    %147 = vector.load %arg13[%c61, %c0_205] : memref<176x32xbf16, #tpu.memory_space<vmem>>, vector<1x32xbf16>
    %c19_206 = arith.constant 19 : index
    %c64_207 = arith.constant 64 : index
    %148 = vector.load %arg14[%c19_206, %c64_207] : memref<72x128xbf16, #tpu.memory_space<vmem>>, vector<1x32xbf16>
    tpu.vector_store %arg14[%c19_206, %c64_207], %147 {strides = array<i32>} : memref<72x128xbf16, #tpu.memory_space<vmem>>, vector<1x32xbf16>,
    %c63 = arith.constant 63 : index
    %c0_208 = arith.constant 0 : index
    %149 = vector.load %arg13[%c63, %c0_208] : memref<176x32xbf16, #tpu.memory_space<vmem>>, vector<1x32xbf16>
    %c20_209 = arith.constant 20 : index
    %c32_210 = arith.constant 32 : index
    %150 = vector.load %arg14[%c20_209, %c32_210] : memref<72x128xbf16, #tpu.memory_space<vmem>>, vector<1x32xbf16>
    tpu.vector_store %arg14[%c20_209, %c32_210], %149 {strides = array<i32>} : memref<72x128xbf16, #tpu.memory_space<vmem>>, vector<1x32xbf16>,
    %c64_211 = arith.constant 64 : index
    %c0_212 = arith.constant 0 : index
    %151 = vector.load %arg13[%c64_211, %c0_212] : memref<176x32xbf16, #tpu.memory_space<vmem>>, vector<1x32xbf16>
    %c21_213 = arith.constant 21 : index
    %c0_214 = arith.constant 0 : index
    %152 = vector.load %arg14[%c21_213, %c0_214] : memref<72x128xbf16, #tpu.memory_space<vmem>>, vector<1x32xbf16>
    tpu.vector_store %arg14[%c21_213, %c0_214], %151 {strides = array<i32>} : memref<72x128xbf16, #tpu.memory_space<vmem>>, vector<1x32xbf16>,
    %c65 = arith.constant 65 : index
    %c0_215 = arith.constant 0 : index
    %153 = vector.load %arg13[%c65, %c0_215] : memref<176x32xbf16, #tpu.memory_space<vmem>>, vector<1x32xbf16>
    %c21_216 = arith.constant 21 : index
    %c32_217 = arith.constant 32 : index
    %154 = vector.load %arg14[%c21_216, %c32_217] : memref<72x128xbf16, #tpu.memory_space<vmem>>, vector<1x32xbf16>
    tpu.vector_store %arg14[%c21_216, %c32_217], %153 {strides = array<i32>} : memref<72x128xbf16, #tpu.memory_space<vmem>>, vector<1x32xbf16>,
    %c66 = arith.constant 66 : index
    %c0_218 = arith.constant 0 : index
    %155 = vector.load %arg13[%c66, %c0_218] : memref<176x32xbf16, #tpu.memory_space<vmem>>, vector<1x32xbf16>
    %c22_219 = arith.constant 22 : index
    %c0_220 = arith.constant 0 : index
    %156 = vector.load %arg14[%c22_219, %c0_220] : memref<72x128xbf16, #tpu.memory_space<vmem>>, vector<1x32xbf16>
    tpu.vector_store %arg14[%c22_219, %c0_220], %155 {strides = array<i32>} : memref<72x128xbf16, #tpu.memory_space<vmem>>, vector<1x32xbf16>,
    %c67 = arith.constant 67 : index
    %c0_221 = arith.constant 0 : index
    %157 = vector.load %arg13[%c67, %c0_221] : memref<176x32xbf16, #tpu.memory_space<vmem>>, vector<1x32xbf16>
    %c22_222 = arith.constant 22 : index
    %c32_223 = arith.constant 32 : index
    %158 = vector.load %arg14[%c22_222, %c32_223] : memref<72x128xbf16, #tpu.memory_space<vmem>>, vector<1x32xbf16>
    tpu.vector_store %arg14[%c22_222, %c32_223], %157 {strides = array<i32>} : memref<72x128xbf16, #tpu.memory_space<vmem>>, vector<1x32xbf16>,
    %c68 = arith.constant 68 : index
    %c0_224 = arith.constant 0 : index
    %159 = vector.load %arg13[%c68, %c0_224] : memref<176x32xbf16, #tpu.memory_space<vmem>>, vector<1x32xbf16>
    %c23_225 = arith.constant 23 : index
    %c0_226 = arith.constant 0 : index
    %160 = vector.load %arg14[%c23_225, %c0_226] : memref<72x128xbf16, #tpu.memory_space<vmem>>, vector<1x32xbf16>
    tpu.vector_store %arg14[%c23_225, %c0_226], %159 {strides = array<i32>} : memref<72x128xbf16, #tpu.memory_space<vmem>>, vector<1x32xbf16>,
    %c69 = arith.constant 69 : index
    %c0_227 = arith.constant 0 : index
    %161 = vector.load %arg13[%c69, %c0_227] : memref<176x32xbf16, #tpu.memory_space<vmem>>, vector<1x32xbf16>
    %c23_228 = arith.constant 23 : index
    %c32_229 = arith.constant 32 : index
    %162 = vector.load %arg14[%c23_228, %c32_229] : memref<72x128xbf16, #tpu.memory_space<vmem>>, vector<1x32xbf16>
    tpu.vector_store %arg14[%c23_228, %c32_229], %161 {strides = array<i32>} : memref<72x128xbf16, #tpu.memory_space<vmem>>, vector<1x32xbf16>,
    %c70 = arith.constant 70 : index
    %c0_230 = arith.constant 0 : index
    %163 = vector.load %arg13[%c70, %c0_230] : memref<176x32xbf16, #tpu.memory_space<vmem>>, vector<1x32xbf16>
    %c24_231 = arith.constant 24 : index
    %c0_232 = arith.constant 0 : index
    %164 = vector.load %arg14[%c24_231, %c0_232] : memref<72x128xbf16, #tpu.memory_space<vmem>>, vector<1x32xbf16>
    tpu.vector_store %arg14[%c24_231, %c0_232], %163 {strides = array<i32>} : memref<72x128xbf16, #tpu.memory_space<vmem>>, vector<1x32xbf16>,
    %c81 = arith.constant 81 : index
    %c0_233 = arith.constant 0 : index
    %165 = vector.load %arg13[%c81, %c0_233] : memref<176x32xbf16, #tpu.memory_space<vmem>>, vector<1x32xbf16>
    %c25_234 = arith.constant 25 : index
    %c96_235 = arith.constant 96 : index
    %166 = vector.load %arg14[%c25_234, %c96_235] : memref<72x128xbf16, #tpu.memory_space<vmem>>, vector<1x32xbf16>
    tpu.vector_store %arg14[%c25_234, %c96_235], %165 {strides = array<i32>} : memref<72x128xbf16, #tpu.memory_space<vmem>>, vector<1x32xbf16>,
    %c82 = arith.constant 82 : index
    %c0_236 = arith.constant 0 : index
    %167 = vector.load %arg13[%c82, %c0_236] : memref<176x32xbf16, #tpu.memory_space<vmem>>, vector<1x32xbf16>
    %c26 = arith.constant 26 : index
    %c64_237 = arith.constant 64 : index
    %168 = vector.load %arg14[%c26, %c64_237] : memref<72x128xbf16, #tpu.memory_space<vmem>>, vector<1x32xbf16>
    tpu.vector_store %arg14[%c26, %c64_237], %167 {strides = array<i32>} : memref<72x128xbf16, #tpu.memory_space<vmem>>, vector<1x32xbf16>,
    %c83 = arith.constant 83 : index
    %c0_238 = arith.constant 0 : index
    %169 = vector.load %arg13[%c83, %c0_238] : memref<176x32xbf16, #tpu.memory_space<vmem>>, vector<1x32xbf16>
    %c26_239 = arith.constant 26 : index
    %c96_240 = arith.constant 96 : index
    %170 = vector.load %arg14[%c26_239, %c96_240] : memref<72x128xbf16, #tpu.memory_space<vmem>>, vector<1x32xbf16>
    tpu.vector_store %arg14[%c26_239, %c96_240], %169 {strides = array<i32>} : memref<72x128xbf16, #tpu.memory_space<vmem>>, vector<1x32xbf16>,
    %c84 = arith.constant 84 : index
    %c0_241 = arith.constant 0 : index
    %171 = vector.load %arg13[%c84, %c0_241] : memref<176x32xbf16, #tpu.memory_space<vmem>>, vector<1x32xbf16>
    %c27_242 = arith.constant 27 : index
    %c64_243 = arith.constant 64 : index
    %172 = vector.load %arg14[%c27_242, %c64_243] : memref<72x128xbf16, #tpu.memory_space<vmem>>, vector<1x32xbf16>
    tpu.vector_store %arg14[%c27_242, %c64_243], %171 {strides = array<i32>} : memref<72x128xbf16, #tpu.memory_space<vmem>>, vector<1x32xbf16>,
    %c85 = arith.constant 85 : index
    %c0_244 = arith.constant 0 : index
    %173 = vector.load %arg13[%c85, %c0_244] : memref<176x32xbf16, #tpu.memory_space<vmem>>, vector<1x32xbf16>
    %c27_245 = arith.constant 27 : index
    %c96_246 = arith.constant 96 : index
    %174 = vector.load %arg14[%c27_245, %c96_246] : memref<72x128xbf16, #tpu.memory_space<vmem>>, vector<1x32xbf16>
    tpu.vector_store %arg14[%c27_245, %c96_246], %173 {strides = array<i32>} : memref<72x128xbf16, #tpu.memory_space<vmem>>, vector<1x32xbf16>,
    %c86 = arith.constant 86 : index
    %c0_247 = arith.constant 0 : index
    %175 = vector.load %arg13[%c86, %c0_247] : memref<176x32xbf16, #tpu.memory_space<vmem>>, vector<1x32xbf16>
    %c28_248 = arith.constant 28 : index
    %c64_249 = arith.constant 64 : index
    %176 = vector.load %arg14[%c28_248, %c64_249] : memref<72x128xbf16, #tpu.memory_space<vmem>>, vector<1x32xbf16>
    tpu.vector_store %arg14[%c28_248, %c64_249], %175 {strides = array<i32>} : memref<72x128xbf16, #tpu.memory_space<vmem>>, vector<1x32xbf16>,
    %c87 = arith.constant 87 : index
    %c0_250 = arith.constant 0 : index
    %177 = vector.load %arg13[%c87, %c0_250] : memref<176x32xbf16, #tpu.memory_space<vmem>>, vector<1x32xbf16>
    %c28_251 = arith.constant 28 : index
    %c96_252 = arith.constant 96 : index
    %178 = vector.load %arg14[%c28_251, %c96_252] : memref<72x128xbf16, #tpu.memory_space<vmem>>, vector<1x32xbf16>
    tpu.vector_store %arg14[%c28_251, %c96_252], %177 {strides = array<i32>} : memref<72x128xbf16, #tpu.memory_space<vmem>>, vector<1x32xbf16>,
    %c88 = arith.constant 88 : index
    %c0_253 = arith.constant 0 : index
    %179 = vector.load %arg13[%c88, %c0_253] : memref<176x32xbf16, #tpu.memory_space<vmem>>, vector<1x32xbf16>
    %c29_254 = arith.constant 29 : index
    %c64_255 = arith.constant 64 : index
    %180 = vector.load %arg14[%c29_254, %c64_255] : memref<72x128xbf16, #tpu.memory_space<vmem>>, vector<1x32xbf16>
    tpu.vector_store %arg14[%c29_254, %c64_255], %179 {strides = array<i32>} : memref<72x128xbf16, #tpu.memory_space<vmem>>, vector<1x32xbf16>,
    %c90 = arith.constant 90 : index
    %c0_256 = arith.constant 0 : index
    %181 = vector.load %arg13[%c90, %c0_256] : memref<176x32xbf16, #tpu.memory_space<vmem>>, vector<1x32xbf16>
    %c30_257 = arith.constant 30 : index
    %c32_258 = arith.constant 32 : index
    %182 = vector.load %arg14[%c30_257, %c32_258] : memref<72x128xbf16, #tpu.memory_space<vmem>>, vector<1x32xbf16>
    tpu.vector_store %arg14[%c30_257, %c32_258], %181 {strides = array<i32>} : memref<72x128xbf16, #tpu.memory_space<vmem>>, vector<1x32xbf16>,
    %c91 = arith.constant 91 : index
    %c0_259 = arith.constant 0 : index
    %183 = vector.load %arg13[%c91, %c0_259] : memref<176x32xbf16, #tpu.memory_space<vmem>>, vector<1x32xbf16>
    %c31_260 = arith.constant 31 : index
    %c0_261 = arith.constant 0 : index
    %184 = vector.load %arg14[%c31_260, %c0_261] : memref<72x128xbf16, #tpu.memory_space<vmem>>, vector<1x32xbf16>
    tpu.vector_store %arg14[%c31_260, %c0_261], %183 {strides = array<i32>} : memref<72x128xbf16, #tpu.memory_space<vmem>>, vector<1x32xbf16>,
    %c92 = arith.constant 92 : index
    %c0_262 = arith.constant 0 : index
    %185 = vector.load %arg13[%c92, %c0_262] : memref<176x32xbf16, #tpu.memory_space<vmem>>, vector<1x32xbf16>
    %c31_263 = arith.constant 31 : index
    %c32_264 = arith.constant 32 : index
    %186 = vector.load %arg14[%c31_263, %c32_264] : memref<72x128xbf16, #tpu.memory_space<vmem>>, vector<1x32xbf16>
    tpu.vector_store %arg14[%c31_263, %c32_264], %185 {strides = array<i32>} : memref<72x128xbf16, #tpu.memory_space<vmem>>, vector<1x32xbf16>,
    %c93 = arith.constant 93 : index
    %c0_265 = arith.constant 0 : index
    %187 = vector.load %arg13[%c93, %c0_265] : memref<176x32xbf16, #tpu.memory_space<vmem>>, vector<1x32xbf16>
    %c32_266 = arith.constant 32 : index
    %c0_267 = arith.constant 0 : index
    %188 = vector.load %arg14[%c32_266, %c0_267] : memref<72x128xbf16, #tpu.memory_space<vmem>>, vector<1x32xbf16>
    tpu.vector_store %arg14[%c32_266, %c0_267], %187 {strides = array<i32>} : memref<72x128xbf16, #tpu.memory_space<vmem>>, vector<1x32xbf16>,
    %c94 = arith.constant 94 : index
    %c0_268 = arith.constant 0 : index
    %189 = vector.load %arg13[%c94, %c0_268] : memref<176x32xbf16, #tpu.memory_space<vmem>>, vector<1x32xbf16>
    %c32_269 = arith.constant 32 : index
    %c32_270 = arith.constant 32 : index
    %190 = vector.load %arg14[%c32_269, %c32_270] : memref<72x128xbf16, #tpu.memory_space<vmem>>, vector<1x32xbf16>
    tpu.vector_store %arg14[%c32_269, %c32_270], %189 {strides = array<i32>} : memref<72x128xbf16, #tpu.memory_space<vmem>>, vector<1x32xbf16>,
    %c95 = arith.constant 95 : index
    %c0_271 = arith.constant 0 : index
    %191 = vector.load %arg13[%c95, %c0_271] : memref<176x32xbf16, #tpu.memory_space<vmem>>, vector<1x32xbf16>
    %c33_272 = arith.constant 33 : index
    %c0_273 = arith.constant 0 : index
    %192 = vector.load %arg14[%c33_272, %c0_273] : memref<72x128xbf16, #tpu.memory_space<vmem>>, vector<1x32xbf16>
    tpu.vector_store %arg14[%c33_272, %c0_273], %191 {strides = array<i32>} : memref<72x128xbf16, #tpu.memory_space<vmem>>, vector<1x32xbf16>,
    %c96_274 = arith.constant 96 : index
    %c0_275 = arith.constant 0 : index
    %193 = vector.load %arg13[%c96_274, %c0_275] : memref<176x32xbf16, #tpu.memory_space<vmem>>, vector<1x32xbf16>
    %c33_276 = arith.constant 33 : index
    %c32_277 = arith.constant 32 : index
    %194 = vector.load %arg14[%c33_276, %c32_277] : memref<72x128xbf16, #tpu.memory_space<vmem>>, vector<1x32xbf16>
    tpu.vector_store %arg14[%c33_276, %c32_277], %193 {strides = array<i32>} : memref<72x128xbf16, #tpu.memory_space<vmem>>, vector<1x32xbf16>,
    %c97 = arith.constant 97 : index
    %c0_278 = arith.constant 0 : index
    %195 = vector.load %arg13[%c97, %c0_278] : memref<176x32xbf16, #tpu.memory_space<vmem>>, vector<1x32xbf16>
    %c34_279 = arith.constant 34 : index
    %c0_280 = arith.constant 0 : index
    %196 = vector.load %arg14[%c34_279, %c0_280] : memref<72x128xbf16, #tpu.memory_space<vmem>>, vector<1x32xbf16>
    tpu.vector_store %arg14[%c34_279, %c0_280], %195 {strides = array<i32>} : memref<72x128xbf16, #tpu.memory_space<vmem>>, vector<1x32xbf16>,
    %c99 = arith.constant 99 : index
    %c0_281 = arith.constant 0 : index
    %197 = vector.load %arg13[%c99, %c0_281] : memref<176x32xbf16, #tpu.memory_space<vmem>>, vector<1x32xbf16>
    %c30_282 = arith.constant 30 : index
    %c96_283 = arith.constant 96 : index
    %198 = vector.load %arg14[%c30_282, %c96_283] : memref<72x128xbf16, #tpu.memory_space<vmem>>, vector<1x32xbf16>
    tpu.vector_store %arg14[%c30_282, %c96_283], %197 {strides = array<i32>} : memref<72x128xbf16, #tpu.memory_space<vmem>>, vector<1x32xbf16>,
    %c100 = arith.constant 100 : index
    %c0_284 = arith.constant 0 : index
    %199 = vector.load %arg13[%c100, %c0_284] : memref<176x32xbf16, #tpu.memory_space<vmem>>, vector<1x32xbf16>
    %c31_285 = arith.constant 31 : index
    %c64_286 = arith.constant 64 : index
    %200 = vector.load %arg14[%c31_285, %c64_286] : memref<72x128xbf16, #tpu.memory_space<vmem>>, vector<1x32xbf16>
    tpu.vector_store %arg14[%c31_285, %c64_286], %199 {strides = array<i32>} : memref<72x128xbf16, #tpu.memory_space<vmem>>, vector<1x32xbf16>,
    %c101 = arith.constant 101 : index
    %c0_287 = arith.constant 0 : index
    %201 = vector.load %arg13[%c101, %c0_287] : memref<176x32xbf16, #tpu.memory_space<vmem>>, vector<1x32xbf16>
    %c31_288 = arith.constant 31 : index
    %c96_289 = arith.constant 96 : index
    %202 = vector.load %arg14[%c31_288, %c96_289] : memref<72x128xbf16, #tpu.memory_space<vmem>>, vector<1x32xbf16>
    tpu.vector_store %arg14[%c31_288, %c96_289], %201 {strides = array<i32>} : memref<72x128xbf16, #tpu.memory_space<vmem>>, vector<1x32xbf16>,
    %c102 = arith.constant 102 : index
    %c0_290 = arith.constant 0 : index
    %203 = vector.load %arg13[%c102, %c0_290] : memref<176x32xbf16, #tpu.memory_space<vmem>>, vector<1x32xbf16>
    %c32_291 = arith.constant 32 : index
    %c64_292 = arith.constant 64 : index
    %204 = vector.load %arg14[%c32_291, %c64_292] : memref<72x128xbf16, #tpu.memory_space<vmem>>, vector<1x32xbf16>
    tpu.vector_store %arg14[%c32_291, %c64_292], %203 {strides = array<i32>} : memref<72x128xbf16, #tpu.memory_space<vmem>>, vector<1x32xbf16>,
    %c103 = arith.constant 103 : index
    %c0_293 = arith.constant 0 : index
    %205 = vector.load %arg13[%c103, %c0_293] : memref<176x32xbf16, #tpu.memory_space<vmem>>, vector<1x32xbf16>
    %c32_294 = arith.constant 32 : index
    %c96_295 = arith.constant 96 : index
    %206 = vector.load %arg14[%c32_294, %c96_295] : memref<72x128xbf16, #tpu.memory_space<vmem>>, vector<1x32xbf16>
    tpu.vector_store %arg14[%c32_294, %c96_295], %205 {strides = array<i32>} : memref<72x128xbf16, #tpu.memory_space<vmem>>, vector<1x32xbf16>,
    %c104 = arith.constant 104 : index
    %c0_296 = arith.constant 0 : index
    %207 = vector.load %arg13[%c104, %c0_296] : memref<176x32xbf16, #tpu.memory_space<vmem>>, vector<1x32xbf16>
    %c33_297 = arith.constant 33 : index
    %c64_298 = arith.constant 64 : index
    %208 = vector.load %arg14[%c33_297, %c64_298] : memref<72x128xbf16, #tpu.memory_space<vmem>>, vector<1x32xbf16>
    tpu.vector_store %arg14[%c33_297, %c64_298], %207 {strides = array<i32>} : memref<72x128xbf16, #tpu.memory_space<vmem>>, vector<1x32xbf16>,
    %c105 = arith.constant 105 : index
    %c0_299 = arith.constant 0 : index
    %209 = vector.load %arg13[%c105, %c0_299] : memref<176x32xbf16, #tpu.memory_space<vmem>>, vector<1x32xbf16>
    %c33_300 = arith.constant 33 : index
    %c96_301 = arith.constant 96 : index
    %210 = vector.load %arg14[%c33_300, %c96_301] : memref<72x128xbf16, #tpu.memory_space<vmem>>, vector<1x32xbf16>
    tpu.vector_store %arg14[%c33_300, %c96_301], %209 {strides = array<i32>} : memref<72x128xbf16, #tpu.memory_space<vmem>>, vector<1x32xbf16>,
    %c106 = arith.constant 106 : index
    %c0_302 = arith.constant 0 : index
    %211 = vector.load %arg13[%c106, %c0_302] : memref<176x32xbf16, #tpu.memory_space<vmem>>, vector<1x32xbf16>
    %c34_303 = arith.constant 34 : index
    %c64_304 = arith.constant 64 : index
    %212 = vector.load %arg14[%c34_303, %c64_304] : memref<72x128xbf16, #tpu.memory_space<vmem>>, vector<1x32xbf16>
    tpu.vector_store %arg14[%c34_303, %c64_304], %211 {strides = array<i32>} : memref<72x128xbf16, #tpu.memory_space<vmem>>, vector<1x32xbf16>,
    %c108 = arith.constant 108 : index
    %c0_305 = arith.constant 0 : index
    %213 = vector.load %arg13[%c108, %c0_305] : memref<176x32xbf16, #tpu.memory_space<vmem>>, vector<1x32xbf16>
    %c35 = arith.constant 35 : index
    %c32_306 = arith.constant 32 : index
    %214 = vector.load %arg14[%c35, %c32_306] : memref<72x128xbf16, #tpu.memory_space<vmem>>, vector<1x32xbf16>
    tpu.vector_store %arg14[%c35, %c32_306], %213 {strides = array<i32>} : memref<72x128xbf16, #tpu.memory_space<vmem>>, vector<1x32xbf16>,
    %c109 = arith.constant 109 : index
    %c0_307 = arith.constant 0 : index
    %215 = vector.load %arg13[%c109, %c0_307] : memref<176x32xbf16, #tpu.memory_space<vmem>>, vector<1x32xbf16>
    %c36_308 = arith.constant 36 : index
    %c0_309 = arith.constant 0 : index
    %216 = vector.load %arg14[%c36_308, %c0_309] : memref<72x128xbf16, #tpu.memory_space<vmem>>, vector<1x32xbf16>
    tpu.vector_store %arg14[%c36_308, %c0_309], %215 {strides = array<i32>} : memref<72x128xbf16, #tpu.memory_space<vmem>>, vector<1x32xbf16>,
    %c110 = arith.constant 110 : index
    %c0_310 = arith.constant 0 : index
    %217 = vector.load %arg13[%c110, %c0_310] : memref<176x32xbf16, #tpu.memory_space<vmem>>, vector<1x32xbf16>
    %c36_311 = arith.constant 36 : index
    %c32_312 = arith.constant 32 : index
    %218 = vector.load %arg14[%c36_311, %c32_312] : memref<72x128xbf16, #tpu.memory_space<vmem>>, vector<1x32xbf16>
    tpu.vector_store %arg14[%c36_311, %c32_312], %217 {strides = array<i32>} : memref<72x128xbf16, #tpu.memory_space<vmem>>, vector<1x32xbf16>,
    %c111 = arith.constant 111 : index
    %c0_313 = arith.constant 0 : index
    %219 = vector.load %arg13[%c111, %c0_313] : memref<176x32xbf16, #tpu.memory_space<vmem>>, vector<1x32xbf16>
    %c37_314 = arith.constant 37 : index
    %c0_315 = arith.constant 0 : index
    %220 = vector.load %arg14[%c37_314, %c0_315] : memref<72x128xbf16, #tpu.memory_space<vmem>>, vector<1x32xbf16>
    tpu.vector_store %arg14[%c37_314, %c0_315], %219 {strides = array<i32>} : memref<72x128xbf16, #tpu.memory_space<vmem>>, vector<1x32xbf16>,
    %c112 = arith.constant 112 : index
    %c0_316 = arith.constant 0 : index
    %221 = vector.load %arg13[%c112, %c0_316] : memref<176x32xbf16, #tpu.memory_space<vmem>>, vector<1x32xbf16>
    %c37_317 = arith.constant 37 : index
    %c32_318 = arith.constant 32 : index
    %222 = vector.load %arg14[%c37_317, %c32_318] : memref<72x128xbf16, #tpu.memory_space<vmem>>, vector<1x32xbf16>
    tpu.vector_store %arg14[%c37_317, %c32_318], %221 {strides = array<i32>} : memref<72x128xbf16, #tpu.memory_space<vmem>>, vector<1x32xbf16>,
    %c113 = arith.constant 113 : index
    %c0_319 = arith.constant 0 : index
    %223 = vector.load %arg13[%c113, %c0_319] : memref<176x32xbf16, #tpu.memory_space<vmem>>, vector<1x32xbf16>
    %c38_320 = arith.constant 38 : index
    %c0_321 = arith.constant 0 : index
    %224 = vector.load %arg14[%c38_320, %c0_321] : memref<72x128xbf16, #tpu.memory_space<vmem>>, vector<1x32xbf16>
    tpu.vector_store %arg14[%c38_320, %c0_321], %223 {strides = array<i32>} : memref<72x128xbf16, #tpu.memory_space<vmem>>, vector<1x32xbf16>,
    %c114 = arith.constant 114 : index
    %c0_322 = arith.constant 0 : index
    %225 = vector.load %arg13[%c114, %c0_322] : memref<176x32xbf16, #tpu.memory_space<vmem>>, vector<1x32xbf16>
    %c38_323 = arith.constant 38 : index
    %c32_324 = arith.constant 32 : index
    %226 = vector.load %arg14[%c38_323, %c32_324] : memref<72x128xbf16, #tpu.memory_space<vmem>>, vector<1x32xbf16>
    tpu.vector_store %arg14[%c38_323, %c32_324], %225 {strides = array<i32>} : memref<72x128xbf16, #tpu.memory_space<vmem>>, vector<1x32xbf16>,
    %c115 = arith.constant 115 : index
    %c0_325 = arith.constant 0 : index
    %227 = vector.load %arg13[%c115, %c0_325] : memref<176x32xbf16, #tpu.memory_space<vmem>>, vector<1x32xbf16>
    %c39_326 = arith.constant 39 : index
    %c0_327 = arith.constant 0 : index
    %228 = vector.load %arg14[%c39_326, %c0_327] : memref<72x128xbf16, #tpu.memory_space<vmem>>, vector<1x32xbf16>
    tpu.vector_store %arg14[%c39_326, %c0_327], %227 {strides = array<i32>} : memref<72x128xbf16, #tpu.memory_space<vmem>>, vector<1x32xbf16>,
    %c117 = arith.constant 117 : index
    %c0_328 = arith.constant 0 : index
    %229 = vector.load %arg13[%c117, %c0_328] : memref<176x32xbf16, #tpu.memory_space<vmem>>, vector<1x32xbf16>
    %c35_329 = arith.constant 35 : index
    %c96_330 = arith.constant 96 : index
    %230 = vector.load %arg14[%c35_329, %c96_330] : memref<72x128xbf16, #tpu.memory_space<vmem>>, vector<1x32xbf16>
    tpu.vector_store %arg14[%c35_329, %c96_330], %229 {strides = array<i32>} : memref<72x128xbf16, #tpu.memory_space<vmem>>, vector<1x32xbf16>,
    %c118 = arith.constant 118 : index
    %c0_331 = arith.constant 0 : index
    %231 = vector.load %arg13[%c118, %c0_331] : memref<176x32xbf16, #tpu.memory_space<vmem>>, vector<1x32xbf16>
    %c36_332 = arith.constant 36 : index
    %c64_333 = arith.constant 64 : index
    %232 = vector.load %arg14[%c36_332, %c64_333] : memref<72x128xbf16, #tpu.memory_space<vmem>>, vector<1x32xbf16>
    tpu.vector_store %arg14[%c36_332, %c64_333], %231 {strides = array<i32>} : memref<72x128xbf16, #tpu.memory_space<vmem>>, vector<1x32xbf16>,
    %c119 = arith.constant 119 : index
    %c0_334 = arith.constant 0 : index
    %233 = vector.load %arg13[%c119, %c0_334] : memref<176x32xbf16, #tpu.memory_space<vmem>>, vector<1x32xbf16>
    %c36_335 = arith.constant 36 : index
    %c96_336 = arith.constant 96 : index
    %234 = vector.load %arg14[%c36_335, %c96_336] : memref<72x128xbf16, #tpu.memory_space<vmem>>, vector<1x32xbf16>
    tpu.vector_store %arg14[%c36_335, %c96_336], %233 {strides = array<i32>} : memref<72x128xbf16, #tpu.memory_space<vmem>>, vector<1x32xbf16>,
    %c120 = arith.constant 120 : index
    %c0_337 = arith.constant 0 : index
    %235 = vector.load %arg13[%c120, %c0_337] : memref<176x32xbf16, #tpu.memory_space<vmem>>, vector<1x32xbf16>
    %c37_338 = arith.constant 37 : index
    %c64_339 = arith.constant 64 : index
    %236 = vector.load %arg14[%c37_338, %c64_339] : memref<72x128xbf16, #tpu.memory_space<vmem>>, vector<1x32xbf16>
    tpu.vector_store %arg14[%c37_338, %c64_339], %235 {strides = array<i32>} : memref<72x128xbf16, #tpu.memory_space<vmem>>, vector<1x32xbf16>,
    %c121 = arith.constant 121 : index
    %c0_340 = arith.constant 0 : index
    %237 = vector.load %arg13[%c121, %c0_340] : memref<176x32xbf16, #tpu.memory_space<vmem>>, vector<1x32xbf16>
    %c37_341 = arith.constant 37 : index
    %c96_342 = arith.constant 96 : index
    %238 = vector.load %arg14[%c37_341, %c96_342] : memref<72x128xbf16, #tpu.memory_space<vmem>>, vector<1x32xbf16>
    tpu.vector_store %arg14[%c37_341, %c96_342], %237 {strides = array<i32>} : memref<72x128xbf16, #tpu.memory_space<vmem>>, vector<1x32xbf16>,
    %c122 = arith.constant 122 : index
    %c0_343 = arith.constant 0 : index
    %239 = vector.load %arg13[%c122, %c0_343] : memref<176x32xbf16, #tpu.memory_space<vmem>>, vector<1x32xbf16>
    %c38_344 = arith.constant 38 : index
    %c64_345 = arith.constant 64 : index
    %240 = vector.load %arg14[%c38_344, %c64_345] : memref<72x128xbf16, #tpu.memory_space<vmem>>, vector<1x32xbf16>
    tpu.vector_store %arg14[%c38_344, %c64_345], %239 {strides = array<i32>} : memref<72x128xbf16, #tpu.memory_space<vmem>>, vector<1x32xbf16>,
    %c123 = arith.constant 123 : index
    %c0_346 = arith.constant 0 : index
    %241 = vector.load %arg13[%c123, %c0_346] : memref<176x32xbf16, #tpu.memory_space<vmem>>, vector<1x32xbf16>
    %c38_347 = arith.constant 38 : index
    %c96_348 = arith.constant 96 : index
    %242 = vector.load %arg14[%c38_347, %c96_348] : memref<72x128xbf16, #tpu.memory_space<vmem>>, vector<1x32xbf16>
    tpu.vector_store %arg14[%c38_347, %c96_348], %241 {strides = array<i32>} : memref<72x128xbf16, #tpu.memory_space<vmem>>, vector<1x32xbf16>,
    %c124 = arith.constant 124 : index
    %c0_349 = arith.constant 0 : index
    %243 = vector.load %arg13[%c124, %c0_349] : memref<176x32xbf16, #tpu.memory_space<vmem>>, vector<1x32xbf16>
    %c39_350 = arith.constant 39 : index
    %c64_351 = arith.constant 64 : index
    %244 = vector.load %arg14[%c39_350, %c64_351] : memref<72x128xbf16, #tpu.memory_space<vmem>>, vector<1x32xbf16>
    tpu.vector_store %arg14[%c39_350, %c64_351], %243 {strides = array<i32>} : memref<72x128xbf16, #tpu.memory_space<vmem>>, vector<1x32xbf16>,
    %c126 = arith.constant 126 : index
    %c0_352 = arith.constant 0 : index
    %245 = vector.load %arg13[%c126, %c0_352] : memref<176x32xbf16, #tpu.memory_space<vmem>>, vector<1x32xbf16>
    %c40_353 = arith.constant 40 : index
    %c32_354 = arith.constant 32 : index
    %246 = vector.load %arg14[%c40_353, %c32_354] : memref<72x128xbf16, #tpu.memory_space<vmem>>, vector<1x32xbf16>
    tpu.vector_store %arg14[%c40_353, %c32_354], %245 {strides = array<i32>} : memref<72x128xbf16, #tpu.memory_space<vmem>>, vector<1x32xbf16>,
    %c127 = arith.constant 127 : index
    %c0_355 = arith.constant 0 : index
    %247 = vector.load %arg13[%c127, %c0_355] : memref<176x32xbf16, #tpu.memory_space<vmem>>, vector<1x32xbf16>
    %c41_356 = arith.constant 41 : index
    %c0_357 = arith.constant 0 : index
    %248 = vector.load %arg14[%c41_356, %c0_357] : memref<72x128xbf16, #tpu.memory_space<vmem>>, vector<1x32xbf16>
    tpu.vector_store %arg14[%c41_356, %c0_357], %247 {strides = array<i32>} : memref<72x128xbf16, #tpu.memory_space<vmem>>, vector<1x32xbf16>,
    %c128_358 = arith.constant 128 : index
    %c0_359 = arith.constant 0 : index
    %249 = vector.load %arg13[%c128_358, %c0_359] : memref<176x32xbf16, #tpu.memory_space<vmem>>, vector<1x32xbf16>
    %c41_360 = arith.constant 41 : index
    %c32_361 = arith.constant 32 : index
    %250 = vector.load %arg14[%c41_360, %c32_361] : memref<72x128xbf16, #tpu.memory_space<vmem>>, vector<1x32xbf16>
    tpu.vector_store %arg14[%c41_360, %c32_361], %249 {strides = array<i32>} : memref<72x128xbf16, #tpu.memory_space<vmem>>, vector<1x32xbf16>,
    %c129 = arith.constant 129 : index
    %c0_362 = arith.constant 0 : index
    %251 = vector.load %arg13[%c129, %c0_362] : memref<176x32xbf16, #tpu.memory_space<vmem>>, vector<1x32xbf16>
    %c42_363 = arith.constant 42 : index
    %c0_364 = arith.constant 0 : index
    %252 = vector.load %arg14[%c42_363, %c0_364] : memref<72x128xbf16, #tpu.memory_space<vmem>>, vector<1x32xbf16>
    tpu.vector_store %arg14[%c42_363, %c0_364], %251 {strides = array<i32>} : memref<72x128xbf16, #tpu.memory_space<vmem>>, vector<1x32xbf16>,
    %c130 = arith.constant 130 : index
    %c0_365 = arith.constant 0 : index
    %253 = vector.load %arg13[%c130, %c0_365] : memref<176x32xbf16, #tpu.memory_space<vmem>>, vector<1x32xbf16>
    %c42_366 = arith.constant 42 : index
    %c32_367 = arith.constant 32 : index
    %254 = vector.load %arg14[%c42_366, %c32_367] : memref<72x128xbf16, #tpu.memory_space<vmem>>, vector<1x32xbf16>
    tpu.vector_store %arg14[%c42_366, %c32_367], %253 {strides = array<i32>} : memref<72x128xbf16, #tpu.memory_space<vmem>>, vector<1x32xbf16>,
    %c131 = arith.constant 131 : index
    %c0_368 = arith.constant 0 : index
    %255 = vector.load %arg13[%c131, %c0_368] : memref<176x32xbf16, #tpu.memory_space<vmem>>, vector<1x32xbf16>
    %c43_369 = arith.constant 43 : index
    %c0_370 = arith.constant 0 : index
    %256 = vector.load %arg14[%c43_369, %c0_370] : memref<72x128xbf16, #tpu.memory_space<vmem>>, vector<1x32xbf16>
    tpu.vector_store %arg14[%c43_369, %c0_370], %255 {strides = array<i32>} : memref<72x128xbf16, #tpu.memory_space<vmem>>, vector<1x32xbf16>,
    %c132 = arith.constant 132 : index
    %c0_371 = arith.constant 0 : index
    %257 = vector.load %arg13[%c132, %c0_371] : memref<176x32xbf16, #tpu.memory_space<vmem>>, vector<1x32xbf16>
    %c43_372 = arith.constant 43 : index
    %c32_373 = arith.constant 32 : index
    %258 = vector.load %arg14[%c43_372, %c32_373] : memref<72x128xbf16, #tpu.memory_space<vmem>>, vector<1x32xbf16>
    tpu.vector_store %arg14[%c43_372, %c32_373], %257 {strides = array<i32>} : memref<72x128xbf16, #tpu.memory_space<vmem>>, vector<1x32xbf16>,
    %c133 = arith.constant 133 : index
    %c0_374 = arith.constant 0 : index
    %259 = vector.load %arg13[%c133, %c0_374] : memref<176x32xbf16, #tpu.memory_space<vmem>>, vector<1x32xbf16>
    %c44 = arith.constant 44 : index
    %c0_375 = arith.constant 0 : index
    %260 = vector.load %arg14[%c44, %c0_375] : memref<72x128xbf16, #tpu.memory_space<vmem>>, vector<1x32xbf16>
    tpu.vector_store %arg14[%c44, %c0_375], %259 {strides = array<i32>} : memref<72x128xbf16, #tpu.memory_space<vmem>>, vector<1x32xbf16>,
    %c135 = arith.constant 135 : index
    %c0_376 = arith.constant 0 : index
    %261 = vector.load %arg13[%c135, %c0_376] : memref<176x32xbf16, #tpu.memory_space<vmem>>, vector<1x32xbf16>
    %c40_377 = arith.constant 40 : index
    %c96_378 = arith.constant 96 : index
    %262 = vector.load %arg14[%c40_377, %c96_378] : memref<72x128xbf16, #tpu.memory_space<vmem>>, vector<1x32xbf16>
    tpu.vector_store %arg14[%c40_377, %c96_378], %261 {strides = array<i32>} : memref<72x128xbf16, #tpu.memory_space<vmem>>, vector<1x32xbf16>,
    %c136 = arith.constant 136 : index
    %c0_379 = arith.constant 0 : index
    %263 = vector.load %arg13[%c136, %c0_379] : memref<176x32xbf16, #tpu.memory_space<vmem>>, vector<1x32xbf16>
    %c41_380 = arith.constant 41 : index
    %c64_381 = arith.constant 64 : index
    %264 = vector.load %arg14[%c41_380, %c64_381] : memref<72x128xbf16, #tpu.memory_space<vmem>>, vector<1x32xbf16>
    tpu.vector_store %arg14[%c41_380, %c64_381], %263 {strides = array<i32>} : memref<72x128xbf16, #tpu.memory_space<vmem>>, vector<1x32xbf16>,
    %c137 = arith.constant 137 : index
    %c0_382 = arith.constant 0 : index
    %265 = vector.load %arg13[%c137, %c0_382] : memref<176x32xbf16, #tpu.memory_space<vmem>>, vector<1x32xbf16>
    %c41_383 = arith.constant 41 : index
    %c96_384 = arith.constant 96 : index
    %266 = vector.load %arg14[%c41_383, %c96_384] : memref<72x128xbf16, #tpu.memory_space<vmem>>, vector<1x32xbf16>
    tpu.vector_store %arg14[%c41_383, %c96_384], %265 {strides = array<i32>} : memref<72x128xbf16, #tpu.memory_space<vmem>>, vector<1x32xbf16>,
    %c138 = arith.constant 138 : index
    %c0_385 = arith.constant 0 : index
    %267 = vector.load %arg13[%c138, %c0_385] : memref<176x32xbf16, #tpu.memory_space<vmem>>, vector<1x32xbf16>
    %c42_386 = arith.constant 42 : index
    %c64_387 = arith.constant 64 : index
    %268 = vector.load %arg14[%c42_386, %c64_387] : memref<72x128xbf16, #tpu.memory_space<vmem>>, vector<1x32xbf16>
    tpu.vector_store %arg14[%c42_386, %c64_387], %267 {strides = array<i32>} : memref<72x128xbf16, #tpu.memory_space<vmem>>, vector<1x32xbf16>,
    %c139 = arith.constant 139 : index
    %c0_388 = arith.constant 0 : index
    %269 = vector.load %arg13[%c139, %c0_388] : memref<176x32xbf16, #tpu.memory_space<vmem>>, vector<1x32xbf16>
    %c42_389 = arith.constant 42 : index
    %c96_390 = arith.constant 96 : index
    %270 = vector.load %arg14[%c42_389, %c96_390] : memref<72x128xbf16, #tpu.memory_space<vmem>>, vector<1x32xbf16>
    tpu.vector_store %arg14[%c42_389, %c96_390], %269 {strides = array<i32>} : memref<72x128xbf16, #tpu.memory_space<vmem>>, vector<1x32xbf16>,
    %c140 = arith.constant 140 : index
    %c0_391 = arith.constant 0 : index
    %271 = vector.load %arg13[%c140, %c0_391] : memref<176x32xbf16, #tpu.memory_space<vmem>>, vector<1x32xbf16>
    %c43_392 = arith.constant 43 : index
    %c64_393 = arith.constant 64 : index
    %272 = vector.load %arg14[%c43_392, %c64_393] : memref<72x128xbf16, #tpu.memory_space<vmem>>, vector<1x32xbf16>
    tpu.vector_store %arg14[%c43_392, %c64_393], %271 {strides = array<i32>} : memref<72x128xbf16, #tpu.memory_space<vmem>>, vector<1x32xbf16>,
    %c141 = arith.constant 141 : index
    %c0_394 = arith.constant 0 : index
    %273 = vector.load %arg13[%c141, %c0_394] : memref<176x32xbf16, #tpu.memory_space<vmem>>, vector<1x32xbf16>
    %c43_395 = arith.constant 43 : index
    %c96_396 = arith.constant 96 : index
    %274 = vector.load %arg14[%c43_395, %c96_396] : memref<72x128xbf16, #tpu.memory_space<vmem>>, vector<1x32xbf16>
    tpu.vector_store %arg14[%c43_395, %c96_396], %273 {strides = array<i32>} : memref<72x128xbf16, #tpu.memory_space<vmem>>, vector<1x32xbf16>,
    %c142 = arith.constant 142 : index
    %c0_397 = arith.constant 0 : index
    %275 = vector.load %arg13[%c142, %c0_397] : memref<176x32xbf16, #tpu.memory_space<vmem>>, vector<1x32xbf16>
    %c44_398 = arith.constant 44 : index
    %c64_399 = arith.constant 64 : index
    %276 = vector.load %arg14[%c44_398, %c64_399] : memref<72x128xbf16, #tpu.memory_space<vmem>>, vector<1x32xbf16>
    tpu.vector_store %arg14[%c44_398, %c64_399], %275 {strides = array<i32>} : memref<72x128xbf16, #tpu.memory_space<vmem>>, vector<1x32xbf16>,
    %c144 = arith.constant 144 : index
    %c0_400 = arith.constant 0 : index
    %277 = vector.load %arg13[%c144, %c0_400] : memref<176x32xbf16, #tpu.memory_space<vmem>>, vector<1x32xbf16>
    %c45_401 = arith.constant 45 : index
    %c32_402 = arith.constant 32 : index
    %278 = vector.load %arg14[%c45_401, %c32_402] : memref<72x128xbf16, #tpu.memory_space<vmem>>, vector<1x32xbf16>
    tpu.vector_store %arg14[%c45_401, %c32_402], %277 {strides = array<i32>} : memref<72x128xbf16, #tpu.memory_space<vmem>>, vector<1x32xbf16>,
    %c145 = arith.constant 145 : index
    %c0_403 = arith.constant 0 : index
    %279 = vector.load %arg13[%c145, %c0_403] : memref<176x32xbf16, #tpu.memory_space<vmem>>, vector<1x32xbf16>
    %c46_404 = arith.constant 46 : index
    %c0_405 = arith.constant 0 : index
    %280 = vector.load %arg14[%c46_404, %c0_405] : memref<72x128xbf16, #tpu.memory_space<vmem>>, vector<1x32xbf16>
    tpu.vector_store %arg14[%c46_404, %c0_405], %279 {strides = array<i32>} : memref<72x128xbf16, #tpu.memory_space<vmem>>, vector<1x32xbf16>,
    %c146 = arith.constant 146 : index
    %c0_406 = arith.constant 0 : index
    %281 = vector.load %arg13[%c146, %c0_406] : memref<176x32xbf16, #tpu.memory_space<vmem>>, vector<1x32xbf16>
    %c46_407 = arith.constant 46 : index
    %c32_408 = arith.constant 32 : index
    %282 = vector.load %arg14[%c46_407, %c32_408] : memref<72x128xbf16, #tpu.memory_space<vmem>>, vector<1x32xbf16>
    tpu.vector_store %arg14[%c46_407, %c32_408], %281 {strides = array<i32>} : memref<72x128xbf16, #tpu.memory_space<vmem>>, vector<1x32xbf16>,
    %c147 = arith.constant 147 : index
    %c0_409 = arith.constant 0 : index
    %283 = vector.load %arg13[%c147, %c0_409] : memref<176x32xbf16, #tpu.memory_space<vmem>>, vector<1x32xbf16>
    %c47_410 = arith.constant 47 : index
    %c0_411 = arith.constant 0 : index
    %284 = vector.load %arg14[%c47_410, %c0_411] : memref<72x128xbf16, #tpu.memory_space<vmem>>, vector<1x32xbf16>
    tpu.vector_store %arg14[%c47_410, %c0_411], %283 {strides = array<i32>} : memref<72x128xbf16, #tpu.memory_space<vmem>>, vector<1x32xbf16>,
    %c148 = arith.constant 148 : index
    %c0_412 = arith.constant 0 : index
    %285 = vector.load %arg13[%c148, %c0_412] : memref<176x32xbf16, #tpu.memory_space<vmem>>, vector<1x32xbf16>
    %c47_413 = arith.constant 47 : index
    %c32_414 = arith.constant 32 : index
    %286 = vector.load %arg14[%c47_413, %c32_414] : memref<72x128xbf16, #tpu.memory_space<vmem>>, vector<1x32xbf16>
    tpu.vector_store %arg14[%c47_413, %c32_414], %285 {strides = array<i32>} : memref<72x128xbf16, #tpu.memory_space<vmem>>, vector<1x32xbf16>,
    %c149 = arith.constant 149 : index
    %c0_415 = arith.constant 0 : index
    %287 = vector.load %arg13[%c149, %c0_415] : memref<176x32xbf16, #tpu.memory_space<vmem>>, vector<1x32xbf16>
    %c48_416 = arith.constant 48 : index
    %c0_417 = arith.constant 0 : index
    %288 = vector.load %arg14[%c48_416, %c0_417] : memref<72x128xbf16, #tpu.memory_space<vmem>>, vector<1x32xbf16>
    tpu.vector_store %arg14[%c48_416, %c0_417], %287 {strides = array<i32>} : memref<72x128xbf16, #tpu.memory_space<vmem>>, vector<1x32xbf16>,
    %c150 = arith.constant 150 : index
    %c0_418 = arith.constant 0 : index
    %289 = vector.load %arg13[%c150, %c0_418] : memref<176x32xbf16, #tpu.memory_space<vmem>>, vector<1x32xbf16>
    %c48_419 = arith.constant 48 : index
    %c32_420 = arith.constant 32 : index
    %290 = vector.load %arg14[%c48_419, %c32_420] : memref<72x128xbf16, #tpu.memory_space<vmem>>, vector<1x32xbf16>
    tpu.vector_store %arg14[%c48_419, %c32_420], %289 {strides = array<i32>} : memref<72x128xbf16, #tpu.memory_space<vmem>>, vector<1x32xbf16>,
    %c151 = arith.constant 151 : index
    %c0_421 = arith.constant 0 : index
    %291 = vector.load %arg13[%c151, %c0_421] : memref<176x32xbf16, #tpu.memory_space<vmem>>, vector<1x32xbf16>
    %c49_422 = arith.constant 49 : index
    %c0_423 = arith.constant 0 : index
    %292 = vector.load %arg14[%c49_422, %c0_423] : memref<72x128xbf16, #tpu.memory_space<vmem>>, vector<1x32xbf16>
    tpu.vector_store %arg14[%c49_422, %c0_423], %291 {strides = array<i32>} : memref<72x128xbf16, #tpu.memory_space<vmem>>, vector<1x32xbf16>,
    %c0_424 = arith.constant 0 : index
    %c0_425 = arith.constant 0 : index
    %293 = vector.load %arg14[%c0_424, %c0_425] : memref<72x128xbf16, #tpu.memory_space<vmem>>, vector<64x128xbf16>
    %c0_426 = arith.constant 0 : index
    %c0_427 = arith.constant 0 : index
    %294 = vector.load %arg19[%c0_426, %c0_427] : memref<176x1024xbf16, #tpu.memory_space<vmem>>, vector<64x128xbf16>
    tpu.vector_store %arg19[%c0_426, %c0_427], %293 {strides = array<i32>} : memref<176x1024xbf16, #tpu.memory_space<vmem>>, vector<64x128xbf16>,
    %c1_428 = arith.constant 1 : index
    %c0_429 = arith.constant 0 : index
    %295 = vector.load %arg14[%c1_428, %c0_429] : memref<72x128xbf16, #tpu.memory_space<vmem>>, vector<64x128xbf16>
    %c0_430 = arith.constant 0 : index
    %c128_431 = arith.constant 128 : index
    %296 = vector.load %arg19[%c0_430, %c128_431] : memref<176x1024xbf16, #tpu.memory_space<vmem>>, vector<64x128xbf16>
    tpu.vector_store %arg19[%c0_430, %c128_431], %295 {strides = array<i32>} : memref<176x1024xbf16, #tpu.memory_space<vmem>>, vector<64x128xbf16>,
    %c5_432 = arith.constant 5 : index
    %c0_433 = arith.constant 0 : index
    %297 = vector.load %arg14[%c5_432, %c0_433] : memref<72x128xbf16, #tpu.memory_space<vmem>>, vector<64x128xbf16>
    %c0_434 = arith.constant 0 : index
    %c256_435 = arith.constant 256 : index
    %298 = vector.load %arg19[%c0_434, %c256_435] : memref<176x1024xbf16, #tpu.memory_space<vmem>>, vector<64x128xbf16>
    tpu.vector_store %arg19[%c0_434, %c256_435], %297 {strides = array<i32>} : memref<176x1024xbf16, #tpu.memory_space<vmem>>, vector<64x128xbf16>,
    %c6_436 = arith.constant 6 : index
    %c0_437 = arith.constant 0 : index
    %299 = vector.load %arg14[%c6_436, %c0_437] : memref<72x128xbf16, #tpu.memory_space<vmem>>, vector<64x128xbf16>
    %c0_438 = arith.constant 0 : index
    %c384_439 = arith.constant 384 : index
    %300 = vector.load %arg19[%c0_438, %c384_439] : memref<176x1024xbf16, #tpu.memory_space<vmem>>, vector<64x128xbf16>
    tpu.vector_store %arg19[%c0_438, %c384_439], %299 {strides = array<i32>} : memref<176x1024xbf16, #tpu.memory_space<vmem>>, vector<64x128xbf16>,
    %c0_440 = arith.constant 0 : index
    %c0_441 = arith.constant 0 : index
    %301 = vector.load %arg19[%c0_440, %c0_441] : memref<176x1024xbf16, #tpu.memory_space<vmem>>, vector<64x512xbf16>
    %c0_442 = arith.constant 0 : index
    %c0_443 = arith.constant 0 : index
    %c0_444 = arith.constant 0 : index
    %302 = vector.load %arg4[%c0_442, %c0_443, %c0_444] : memref<4x512x64xbf16, #tpu.memory_space<vmem>>, vector<1x512x64xbf16>
    %303 = vector.shape_cast %302 : vector<1x512x64xbf16> to vector<512x64xbf16>
    %cst_445 = arith.constant dense<0.000000e+00> : vector<64x64xf32>
    %304 = tpu.matmul %301, %303, %cst_445 {dimension_numbers = #tpu.dot_dimension_numbers<[1], [0], [0], [1], [0, 0, 1, 1], [], []>} : vector<64x512xbf16>, vector<512x64xbf16>, vector<64x64xf32> -> vector<64x64xf32>
    %c1_446 = arith.constant 1 : index
    %c0_447 = arith.constant 0 : index
    %c0_448 = arith.constant 0 : index
    %305 = vector.load %arg4[%c1_446, %c0_447, %c0_448] : memref<4x512x64xbf16, #tpu.memory_space<vmem>>, vector<1x512x64xbf16>
    %306 = vector.shape_cast %305 : vector<1x512x64xbf16> to vector<512x64xbf16>
    %cst_449 = arith.constant dense<0.000000e+00> : vector<64x64xf32>
    %307 = tpu.matmul %301, %306, %cst_449 {dimension_numbers = #tpu.dot_dimension_numbers<[1], [0], [0], [1], [0, 0, 1, 1], [], []>} : vector<64x512xbf16>, vector<512x64xbf16>, vector<64x64xf32> -> vector<64x64xf32>
    %c2_450 = arith.constant 2 : index
    %c0_451 = arith.constant 0 : index
    %c0_452 = arith.constant 0 : index
    %308 = vector.load %arg4[%c2_450, %c0_451, %c0_452] : memref<4x512x64xbf16, #tpu.memory_space<vmem>>, vector<1x512x64xbf16>
    %309 = vector.shape_cast %308 : vector<1x512x64xbf16> to vector<512x64xbf16>
    %cst_453 = arith.constant dense<0.000000e+00> : vector<64x64xf32>
    %310 = tpu.matmul %301, %309, %cst_453 {dimension_numbers = #tpu.dot_dimension_numbers<[1], [0], [0], [1], [0, 0, 1, 1], [], []>} : vector<64x512xbf16>, vector<512x64xbf16>, vector<64x64xf32> -> vector<64x64xf32>
    %c3_454 = arith.constant 3 : index
    %c0_455 = arith.constant 0 : index
    %c0_456 = arith.constant 0 : index
    %311 = vector.load %arg4[%c3_454, %c0_455, %c0_456] : memref<4x512x64xbf16, #tpu.memory_space<vmem>>, vector<1x512x64xbf16>
    %312 = vector.shape_cast %311 : vector<1x512x64xbf16> to vector<512x64xbf16>
    %cst_457 = arith.constant dense<0.000000e+00> : vector<64x64xf32>
    %313 = tpu.matmul %301, %312, %cst_457 {dimension_numbers = #tpu.dot_dimension_numbers<[1], [0], [0], [1], [0, 0, 1, 1], [], []>} : vector<64x512xbf16>, vector<512x64xbf16>, vector<64x64xf32> -> vector<64x64xf32>
    %314 = arith.maximumf %304, %307 : vector<64x64xf32>
    %315 = arith.maximumf %310, %313 : vector<64x64xf32>
    %316 = arith.maximumf %314, %315 : vector<64x64xf32>
    %c0_458 = arith.constant 0 : index
    %c0_459 = arith.constant 0 : index
    %317 = vector.load %arg5[%c0_458, %c0_459] : memref<1x64xf32, #tpu.memory_space<vmem>>, vector<1x64xf32>
    %318 = vector.broadcast %317 : vector<1x64xf32> to vector<64x64xf32>
    %319 = arith.addf %316, %318 : vector<64x64xf32>
    %cst_460 = arith.constant 0.000000e+00 : f32
    %320 = vector.broadcast %cst_460 : f32 to vector<64x64xf32>
    %321 = arith.maximumf %319, %320 : vector<64x64xf32>
    %322 = arith.truncf %321 : vector<64x64xf32> to vector<64x64xbf16>
    %c0_461 = arith.constant 0 : index
    %c0_462 = arith.constant 0 : index
    %323 = vector.load %arg15[%c0_461, %c0_462] : memref<64x64xbf16, #tpu.memory_space<vmem>>, vector<64x64xbf16>
    tpu.vector_store %arg15[%c0_461, %c0_462], %322 {strides = array<i32>} : memref<64x64xbf16, #tpu.memory_space<vmem>>, vector<64x64xbf16>,
    %c0_463 = arith.constant 0 : index
    %c0_464 = arith.constant 0 : index
    %324 = vector.load %arg15[%c0_463, %c0_464] : memref<64x64xbf16, #tpu.memory_space<vmem>>, vector<1x64xbf16>
    %c0_465 = arith.constant 0 : index
    %c192 = arith.constant 192 : index
    %325 = vector.load %arg16[%c0_465, %c192] : memref<40x256xbf16, #tpu.memory_space<vmem>>, vector<1x64xbf16>
    tpu.vector_store %arg16[%c0_465, %c192], %324 {strides = array<i32>} : memref<40x256xbf16, #tpu.memory_space<vmem>>, vector<1x64xbf16>,
    %c1_466 = arith.constant 1 : index
    %c0_467 = arith.constant 0 : index
    %326 = vector.load %arg15[%c1_466, %c0_467] : memref<64x64xbf16, #tpu.memory_space<vmem>>, vector<1x64xbf16>
    %c1_468 = arith.constant 1 : index
    %c128_469 = arith.constant 128 : index
    %327 = vector.load %arg16[%c1_468, %c128_469] : memref<40x256xbf16, #tpu.memory_space<vmem>>, vector<1x64xbf16>
    tpu.vector_store %arg16[%c1_468, %c128_469], %326 {strides = array<i32>} : memref<40x256xbf16, #tpu.memory_space<vmem>>, vector<1x64xbf16>,
    %c2_470 = arith.constant 2 : index
    %c0_471 = arith.constant 0 : index
    %328 = vector.load %arg15[%c2_470, %c0_471] : memref<64x64xbf16, #tpu.memory_space<vmem>>, vector<1x64xbf16>
    %c1_472 = arith.constant 1 : index
    %c192_473 = arith.constant 192 : index
    %329 = vector.load %arg16[%c1_472, %c192_473] : memref<40x256xbf16, #tpu.memory_space<vmem>>, vector<1x64xbf16>
    tpu.vector_store %arg16[%c1_472, %c192_473], %328 {strides = array<i32>} : memref<40x256xbf16, #tpu.memory_space<vmem>>, vector<1x64xbf16>,
    %c3_474 = arith.constant 3 : index
    %c0_475 = arith.constant 0 : index
    %330 = vector.load %arg15[%c3_474, %c0_475] : memref<64x64xbf16, #tpu.memory_space<vmem>>, vector<1x64xbf16>
    %c2_476 = arith.constant 2 : index
    %c128_477 = arith.constant 128 : index
    %331 = vector.load %arg16[%c2_476, %c128_477] : memref<40x256xbf16, #tpu.memory_space<vmem>>, vector<1x64xbf16>
    tpu.vector_store %arg16[%c2_476, %c128_477], %330 {strides = array<i32>} : memref<40x256xbf16, #tpu.memory_space<vmem>>, vector<1x64xbf16>,
    %c5_478 = arith.constant 5 : index
    %c0_479 = arith.constant 0 : index
    %332 = vector.load %arg15[%c5_478, %c0_479] : memref<64x64xbf16, #tpu.memory_space<vmem>>, vector<1x64xbf16>
    %c3_480 = arith.constant 3 : index
    %c64_481 = arith.constant 64 : index
    %333 = vector.load %arg16[%c3_480, %c64_481] : memref<40x256xbf16, #tpu.memory_space<vmem>>, vector<1x64xbf16>
    tpu.vector_store %arg16[%c3_480, %c64_481], %332 {strides = array<i32>} : memref<40x256xbf16, #tpu.memory_space<vmem>>, vector<1x64xbf16>,
    %c6_482 = arith.constant 6 : index
    %c0_483 = arith.constant 0 : index
    %334 = vector.load %arg15[%c6_482, %c0_483] : memref<64x64xbf16, #tpu.memory_space<vmem>>, vector<1x64xbf16>
    %c4_484 = arith.constant 4 : index
    %c0_485 = arith.constant 0 : index
    %335 = vector.load %arg16[%c4_484, %c0_485] : memref<40x256xbf16, #tpu.memory_space<vmem>>, vector<1x64xbf16>
    tpu.vector_store %arg16[%c4_484, %c0_485], %334 {strides = array<i32>} : memref<40x256xbf16, #tpu.memory_space<vmem>>, vector<1x64xbf16>,
    %c7_486 = arith.constant 7 : index
    %c0_487 = arith.constant 0 : index
    %336 = vector.load %arg15[%c7_486, %c0_487] : memref<64x64xbf16, #tpu.memory_space<vmem>>, vector<1x64xbf16>
    %c4_488 = arith.constant 4 : index
    %c64_489 = arith.constant 64 : index
    %337 = vector.load %arg16[%c4_488, %c64_489] : memref<40x256xbf16, #tpu.memory_space<vmem>>, vector<1x64xbf16>
    tpu.vector_store %arg16[%c4_488, %c64_489], %336 {strides = array<i32>} : memref<40x256xbf16, #tpu.memory_space<vmem>>, vector<1x64xbf16>,
    %c8_490 = arith.constant 8 : index
    %c0_491 = arith.constant 0 : index
    %338 = vector.load %arg15[%c8_490, %c0_491] : memref<64x64xbf16, #tpu.memory_space<vmem>>, vector<1x64xbf16>
    %c5_492 = arith.constant 5 : index
    %c0_493 = arith.constant 0 : index
    %339 = vector.load %arg16[%c5_492, %c0_493] : memref<40x256xbf16, #tpu.memory_space<vmem>>, vector<1x64xbf16>
    tpu.vector_store %arg16[%c5_492, %c0_493], %338 {strides = array<i32>} : memref<40x256xbf16, #tpu.memory_space<vmem>>, vector<1x64xbf16>,
    %c10_494 = arith.constant 10 : index
    %c0_495 = arith.constant 0 : index
    %340 = vector.load %arg15[%c10_494, %c0_495] : memref<64x64xbf16, #tpu.memory_space<vmem>>, vector<1x64xbf16>
    %c3_496 = arith.constant 3 : index
    %c192_497 = arith.constant 192 : index
    %341 = vector.load %arg16[%c3_496, %c192_497] : memref<40x256xbf16, #tpu.memory_space<vmem>>, vector<1x64xbf16>
    tpu.vector_store %arg16[%c3_496, %c192_497], %340 {strides = array<i32>} : memref<40x256xbf16, #tpu.memory_space<vmem>>, vector<1x64xbf16>,
    %c11_498 = arith.constant 11 : index
    %c0_499 = arith.constant 0 : index
    %342 = vector.load %arg15[%c11_498, %c0_499] : memref<64x64xbf16, #tpu.memory_space<vmem>>, vector<1x64xbf16>
    %c4_500 = arith.constant 4 : index
    %c128_501 = arith.constant 128 : index
    %343 = vector.load %arg16[%c4_500, %c128_501] : memref<40x256xbf16, #tpu.memory_space<vmem>>, vector<1x64xbf16>
    tpu.vector_store %arg16[%c4_500, %c128_501], %342 {strides = array<i32>} : memref<40x256xbf16, #tpu.memory_space<vmem>>, vector<1x64xbf16>,
    %c12_502 = arith.constant 12 : index
    %c0_503 = arith.constant 0 : index
    %344 = vector.load %arg15[%c12_502, %c0_503] : memref<64x64xbf16, #tpu.memory_space<vmem>>, vector<1x64xbf16>
    %c4_504 = arith.constant 4 : index
    %c192_505 = arith.constant 192 : index
    %345 = vector.load %arg16[%c4_504, %c192_505] : memref<40x256xbf16, #tpu.memory_space<vmem>>, vector<1x64xbf16>
    tpu.vector_store %arg16[%c4_504, %c192_505], %344 {strides = array<i32>} : memref<40x256xbf16, #tpu.memory_space<vmem>>, vector<1x64xbf16>,
    %c13_506 = arith.constant 13 : index
    %c0_507 = arith.constant 0 : index
    %346 = vector.load %arg15[%c13_506, %c0_507] : memref<64x64xbf16, #tpu.memory_space<vmem>>, vector<1x64xbf16>
    %c5_508 = arith.constant 5 : index
    %c128_509 = arith.constant 128 : index
    %347 = vector.load %arg16[%c5_508, %c128_509] : memref<40x256xbf16, #tpu.memory_space<vmem>>, vector<1x64xbf16>
    tpu.vector_store %arg16[%c5_508, %c128_509], %346 {strides = array<i32>} : memref<40x256xbf16, #tpu.memory_space<vmem>>, vector<1x64xbf16>,
    %c15_510 = arith.constant 15 : index
    %c0_511 = arith.constant 0 : index
    %348 = vector.load %arg15[%c15_510, %c0_511] : memref<64x64xbf16, #tpu.memory_space<vmem>>, vector<1x64xbf16>
    %c6_512 = arith.constant 6 : index
    %c64_513 = arith.constant 64 : index
    %349 = vector.load %arg16[%c6_512, %c64_513] : memref<40x256xbf16, #tpu.memory_space<vmem>>, vector<1x64xbf16>
    tpu.vector_store %arg16[%c6_512, %c64_513], %348 {strides = array<i32>} : memref<40x256xbf16, #tpu.memory_space<vmem>>, vector<1x64xbf16>,
    %c16_514 = arith.constant 16 : index
    %c0_515 = arith.constant 0 : index
    %350 = vector.load %arg15[%c16_514, %c0_515] : memref<64x64xbf16, #tpu.memory_space<vmem>>, vector<1x64xbf16>
    %c7_516 = arith.constant 7 : index
    %c0_517 = arith.constant 0 : index
    %351 = vector.load %arg16[%c7_516, %c0_517] : memref<40x256xbf16, #tpu.memory_space<vmem>>, vector<1x64xbf16>
    tpu.vector_store %arg16[%c7_516, %c0_517], %350 {strides = array<i32>} : memref<40x256xbf16, #tpu.memory_space<vmem>>, vector<1x64xbf16>,
    %c17_518 = arith.constant 17 : index
    %c0_519 = arith.constant 0 : index
    %352 = vector.load %arg15[%c17_518, %c0_519] : memref<64x64xbf16, #tpu.memory_space<vmem>>, vector<1x64xbf16>
    %c7_520 = arith.constant 7 : index
    %c64_521 = arith.constant 64 : index
    %353 = vector.load %arg16[%c7_520, %c64_521] : memref<40x256xbf16, #tpu.memory_space<vmem>>, vector<1x64xbf16>
    tpu.vector_store %arg16[%c7_520, %c64_521], %352 {strides = array<i32>} : memref<40x256xbf16, #tpu.memory_space<vmem>>, vector<1x64xbf16>,
    %c18_522 = arith.constant 18 : index
    %c0_523 = arith.constant 0 : index
    %354 = vector.load %arg15[%c18_522, %c0_523] : memref<64x64xbf16, #tpu.memory_space<vmem>>, vector<1x64xbf16>
    %c8_524 = arith.constant 8 : index
    %c0_525 = arith.constant 0 : index
    %355 = vector.load %arg16[%c8_524, %c0_525] : memref<40x256xbf16, #tpu.memory_space<vmem>>, vector<1x64xbf16>
    tpu.vector_store %arg16[%c8_524, %c0_525], %354 {strides = array<i32>} : memref<40x256xbf16, #tpu.memory_space<vmem>>, vector<1x64xbf16>,
    %c25_526 = arith.constant 25 : index
    %c0_527 = arith.constant 0 : index
    %356 = vector.load %arg15[%c25_526, %c0_527] : memref<64x64xbf16, #tpu.memory_space<vmem>>, vector<1x64xbf16>
    %c9_528 = arith.constant 9 : index
    %c192_529 = arith.constant 192 : index
    %357 = vector.load %arg16[%c9_528, %c192_529] : memref<40x256xbf16, #tpu.memory_space<vmem>>, vector<1x64xbf16>
    tpu.vector_store %arg16[%c9_528, %c192_529], %356 {strides = array<i32>} : memref<40x256xbf16, #tpu.memory_space<vmem>>, vector<1x64xbf16>,
    %c26_530 = arith.constant 26 : index
    %c0_531 = arith.constant 0 : index
    %358 = vector.load %arg15[%c26_530, %c0_531] : memref<64x64xbf16, #tpu.memory_space<vmem>>, vector<1x64xbf16>
    %c10_532 = arith.constant 10 : index
    %c128_533 = arith.constant 128 : index
    %359 = vector.load %arg16[%c10_532, %c128_533] : memref<40x256xbf16, #tpu.memory_space<vmem>>, vector<1x64xbf16>
    tpu.vector_store %arg16[%c10_532, %c128_533], %358 {strides = array<i32>} : memref<40x256xbf16, #tpu.memory_space<vmem>>, vector<1x64xbf16>,
    %c27_534 = arith.constant 27 : index
    %c0_535 = arith.constant 0 : index
    %360 = vector.load %arg15[%c27_534, %c0_535] : memref<64x64xbf16, #tpu.memory_space<vmem>>, vector<1x64xbf16>
    %c10_536 = arith.constant 10 : index
    %c192_537 = arith.constant 192 : index
    %361 = vector.load %arg16[%c10_536, %c192_537] : memref<40x256xbf16, #tpu.memory_space<vmem>>, vector<1x64xbf16>
    tpu.vector_store %arg16[%c10_536, %c192_537], %360 {strides = array<i32>} : memref<40x256xbf16, #tpu.memory_space<vmem>>, vector<1x64xbf16>,
    %c28_538 = arith.constant 28 : index
    %c0_539 = arith.constant 0 : index
    %362 = vector.load %arg15[%c28_538, %c0_539] : memref<64x64xbf16, #tpu.memory_space<vmem>>, vector<1x64xbf16>
    %c11_540 = arith.constant 11 : index
    %c128_541 = arith.constant 128 : index
    %363 = vector.load %arg16[%c11_540, %c128_541] : memref<40x256xbf16, #tpu.memory_space<vmem>>, vector<1x64xbf16>
    tpu.vector_store %arg16[%c11_540, %c128_541], %362 {strides = array<i32>} : memref<40x256xbf16, #tpu.memory_space<vmem>>, vector<1x64xbf16>,
    %c30_542 = arith.constant 30 : index
    %c0_543 = arith.constant 0 : index
    %364 = vector.load %arg15[%c30_542, %c0_543] : memref<64x64xbf16, #tpu.memory_space<vmem>>, vector<1x64xbf16>
    %c12_544 = arith.constant 12 : index
    %c64_545 = arith.constant 64 : index
    %365 = vector.load %arg16[%c12_544, %c64_545] : memref<40x256xbf16, #tpu.memory_space<vmem>>, vector<1x64xbf16>
    tpu.vector_store %arg16[%c12_544, %c64_545], %364 {strides = array<i32>} : memref<40x256xbf16, #tpu.memory_space<vmem>>, vector<1x64xbf16>,
    %c31_546 = arith.constant 31 : index
    %c0_547 = arith.constant 0 : index
    %366 = vector.load %arg15[%c31_546, %c0_547] : memref<64x64xbf16, #tpu.memory_space<vmem>>, vector<1x64xbf16>
    %c13_548 = arith.constant 13 : index
    %c0_549 = arith.constant 0 : index
    %367 = vector.load %arg16[%c13_548, %c0_549] : memref<40x256xbf16, #tpu.memory_space<vmem>>, vector<1x64xbf16>
    tpu.vector_store %arg16[%c13_548, %c0_549], %366 {strides = array<i32>} : memref<40x256xbf16, #tpu.memory_space<vmem>>, vector<1x64xbf16>,
    %c32_550 = arith.constant 32 : index
    %c0_551 = arith.constant 0 : index
    %368 = vector.load %arg15[%c32_550, %c0_551] : memref<64x64xbf16, #tpu.memory_space<vmem>>, vector<1x64xbf16>
    %c13_552 = arith.constant 13 : index
    %c64_553 = arith.constant 64 : index
    %369 = vector.load %arg16[%c13_552, %c64_553] : memref<40x256xbf16, #tpu.memory_space<vmem>>, vector<1x64xbf16>
    tpu.vector_store %arg16[%c13_552, %c64_553], %368 {strides = array<i32>} : memref<40x256xbf16, #tpu.memory_space<vmem>>, vector<1x64xbf16>,
    %c33_554 = arith.constant 33 : index
    %c0_555 = arith.constant 0 : index
    %370 = vector.load %arg15[%c33_554, %c0_555] : memref<64x64xbf16, #tpu.memory_space<vmem>>, vector<1x64xbf16>
    %c14_556 = arith.constant 14 : index
    %c0_557 = arith.constant 0 : index
    %371 = vector.load %arg16[%c14_556, %c0_557] : memref<40x256xbf16, #tpu.memory_space<vmem>>, vector<1x64xbf16>
    tpu.vector_store %arg16[%c14_556, %c0_557], %370 {strides = array<i32>} : memref<40x256xbf16, #tpu.memory_space<vmem>>, vector<1x64xbf16>,
    %c35_558 = arith.constant 35 : index
    %c0_559 = arith.constant 0 : index
    %372 = vector.load %arg15[%c35_558, %c0_559] : memref<64x64xbf16, #tpu.memory_space<vmem>>, vector<1x64xbf16>
    %c12_560 = arith.constant 12 : index
    %c192_561 = arith.constant 192 : index
    %373 = vector.load %arg16[%c12_560, %c192_561] : memref<40x256xbf16, #tpu.memory_space<vmem>>, vector<1x64xbf16>
    tpu.vector_store %arg16[%c12_560, %c192_561], %372 {strides = array<i32>} : memref<40x256xbf16, #tpu.memory_space<vmem>>, vector<1x64xbf16>,
    %c36_562 = arith.constant 36 : index
    %c0_563 = arith.constant 0 : index
    %374 = vector.load %arg15[%c36_562, %c0_563] : memref<64x64xbf16, #tpu.memory_space<vmem>>, vector<1x64xbf16>
    %c13_564 = arith.constant 13 : index
    %c128_565 = arith.constant 128 : index
    %375 = vector.load %arg16[%c13_564, %c128_565] : memref<40x256xbf16, #tpu.memory_space<vmem>>, vector<1x64xbf16>
    tpu.vector_store %arg16[%c13_564, %c128_565], %374 {strides = array<i32>} : memref<40x256xbf16, #tpu.memory_space<vmem>>, vector<1x64xbf16>,
    %c37_566 = arith.constant 37 : index
    %c0_567 = arith.constant 0 : index
    %376 = vector.load %arg15[%c37_566, %c0_567] : memref<64x64xbf16, #tpu.memory_space<vmem>>, vector<1x64xbf16>
    %c13_568 = arith.constant 13 : index
    %c192_569 = arith.constant 192 : index
    %377 = vector.load %arg16[%c13_568, %c192_569] : memref<40x256xbf16, #tpu.memory_space<vmem>>, vector<1x64xbf16>
    tpu.vector_store %arg16[%c13_568, %c192_569], %376 {strides = array<i32>} : memref<40x256xbf16, #tpu.memory_space<vmem>>, vector<1x64xbf16>,
    %c38_570 = arith.constant 38 : index
    %c0_571 = arith.constant 0 : index
    %378 = vector.load %arg15[%c38_570, %c0_571] : memref<64x64xbf16, #tpu.memory_space<vmem>>, vector<1x64xbf16>
    %c14_572 = arith.constant 14 : index
    %c128_573 = arith.constant 128 : index
    %379 = vector.load %arg16[%c14_572, %c128_573] : memref<40x256xbf16, #tpu.memory_space<vmem>>, vector<1x64xbf16>
    tpu.vector_store %arg16[%c14_572, %c128_573], %378 {strides = array<i32>} : memref<40x256xbf16, #tpu.memory_space<vmem>>, vector<1x64xbf16>,
    %c40_574 = arith.constant 40 : index
    %c0_575 = arith.constant 0 : index
    %380 = vector.load %arg15[%c40_574, %c0_575] : memref<64x64xbf16, #tpu.memory_space<vmem>>, vector<1x64xbf16>
    %c15_576 = arith.constant 15 : index
    %c64_577 = arith.constant 64 : index
    %381 = vector.load %arg16[%c15_576, %c64_577] : memref<40x256xbf16, #tpu.memory_space<vmem>>, vector<1x64xbf16>
    tpu.vector_store %arg16[%c15_576, %c64_577], %380 {strides = array<i32>} : memref<40x256xbf16, #tpu.memory_space<vmem>>, vector<1x64xbf16>,
    %c41_578 = arith.constant 41 : index
    %c0_579 = arith.constant 0 : index
    %382 = vector.load %arg15[%c41_578, %c0_579] : memref<64x64xbf16, #tpu.memory_space<vmem>>, vector<1x64xbf16>
    %c16_580 = arith.constant 16 : index
    %c0_581 = arith.constant 0 : index
    %383 = vector.load %arg16[%c16_580, %c0_581] : memref<40x256xbf16, #tpu.memory_space<vmem>>, vector<1x64xbf16>
    tpu.vector_store %arg16[%c16_580, %c0_581], %382 {strides = array<i32>} : memref<40x256xbf16, #tpu.memory_space<vmem>>, vector<1x64xbf16>,
    %c42_582 = arith.constant 42 : index
    %c0_583 = arith.constant 0 : index
    %384 = vector.load %arg15[%c42_582, %c0_583] : memref<64x64xbf16, #tpu.memory_space<vmem>>, vector<1x64xbf16>
    %c16_584 = arith.constant 16 : index
    %c64_585 = arith.constant 64 : index
    %385 = vector.load %arg16[%c16_584, %c64_585] : memref<40x256xbf16, #tpu.memory_space<vmem>>, vector<1x64xbf16>
    tpu.vector_store %arg16[%c16_584, %c64_585], %384 {strides = array<i32>} : memref<40x256xbf16, #tpu.memory_space<vmem>>, vector<1x64xbf16>,
    %c43_586 = arith.constant 43 : index
    %c0_587 = arith.constant 0 : index
    %386 = vector.load %arg15[%c43_586, %c0_587] : memref<64x64xbf16, #tpu.memory_space<vmem>>, vector<1x64xbf16>
    %c17_588 = arith.constant 17 : index
    %c0_589 = arith.constant 0 : index
    %387 = vector.load %arg16[%c17_588, %c0_589] : memref<40x256xbf16, #tpu.memory_space<vmem>>, vector<1x64xbf16>
    tpu.vector_store %arg16[%c17_588, %c0_589], %386 {strides = array<i32>} : memref<40x256xbf16, #tpu.memory_space<vmem>>, vector<1x64xbf16>,
    %c0_590 = arith.constant 0 : index
    %c0_591 = arith.constant 0 : index
    %388 = vector.load %arg16[%c0_590, %c0_591] : memref<40x256xbf16, #tpu.memory_space<vmem>>, vector<32x256xbf16>
    %c0_592 = arith.constant 0 : index
    %c0_593 = arith.constant 0 : index
    %389 = vector.load %arg19[%c0_592, %c0_593] : memref<176x1024xbf16, #tpu.memory_space<vmem>>, vector<32x256xbf16>
    tpu.vector_store %arg19[%c0_592, %c0_593], %388 {strides = array<i32>} : memref<176x1024xbf16, #tpu.memory_space<vmem>>, vector<32x256xbf16>,
    %c1_594 = arith.constant 1 : index
    %c0_595 = arith.constant 0 : index
    %390 = vector.load %arg16[%c1_594, %c0_595] : memref<40x256xbf16, #tpu.memory_space<vmem>>, vector<32x256xbf16>
    %c0_596 = arith.constant 0 : index
    %c256_597 = arith.constant 256 : index
    %391 = vector.load %arg19[%c0_596, %c256_597] : memref<176x1024xbf16, #tpu.memory_space<vmem>>, vector<32x256xbf16>
    tpu.vector_store %arg19[%c0_596, %c256_597], %390 {strides = array<i32>} : memref<176x1024xbf16, #tpu.memory_space<vmem>>, vector<32x256xbf16>,
    %c3_598 = arith.constant 3 : index
    %c0_599 = arith.constant 0 : index
    %392 = vector.load %arg16[%c3_598, %c0_599] : memref<40x256xbf16, #tpu.memory_space<vmem>>, vector<32x256xbf16>
    %c0_600 = arith.constant 0 : index
    %c512 = arith.constant 512 : index
    %393 = vector.load %arg19[%c0_600, %c512] : memref<176x1024xbf16, #tpu.memory_space<vmem>>, vector<32x256xbf16>
    tpu.vector_store %arg19[%c0_600, %c512], %392 {strides = array<i32>} : memref<176x1024xbf16, #tpu.memory_space<vmem>>, vector<32x256xbf16>,
    %c4_601 = arith.constant 4 : index
    %c0_602 = arith.constant 0 : index
    %394 = vector.load %arg16[%c4_601, %c0_602] : memref<40x256xbf16, #tpu.memory_space<vmem>>, vector<32x256xbf16>
    %c0_603 = arith.constant 0 : index
    %c768 = arith.constant 768 : index
    %395 = vector.load %arg19[%c0_603, %c768] : memref<176x1024xbf16, #tpu.memory_space<vmem>>, vector<32x256xbf16>
    tpu.vector_store %arg19[%c0_603, %c768], %394 {strides = array<i32>} : memref<176x1024xbf16, #tpu.memory_space<vmem>>, vector<32x256xbf16>,
    %c0_604 = arith.constant 0 : index
    %c0_605 = arith.constant 0 : index
    %396 = vector.load %arg19[%c0_604, %c0_605] : memref<176x1024xbf16, #tpu.memory_space<vmem>>, vector<32x1024xbf16>
    %c0_606 = arith.constant 0 : index
    %c0_607 = arith.constant 0 : index
    %c0_608 = arith.constant 0 : index
    %397 = vector.load %arg6[%c0_606, %c0_607, %c0_608] : memref<4x1024x128xbf16, #tpu.memory_space<vmem>>, vector<1x1024x128xbf16>
    %398 = vector.shape_cast %397 : vector<1x1024x128xbf16> to vector<1024x128xbf16>
    %cst_609 = arith.constant dense<0.000000e+00> : vector<32x128xf32>
    %399 = tpu.matmul %396, %398, %cst_609 {dimension_numbers = #tpu.dot_dimension_numbers<[1], [0], [0], [1], [0, 0, 1, 1], [], []>} : vector<32x1024xbf16>, vector<1024x128xbf16>, vector<32x128xf32> -> vector<32x128xf32>
    %c1_610 = arith.constant 1 : index
    %c0_611 = arith.constant 0 : index
    %c0_612 = arith.constant 0 : index
    %400 = vector.load %arg6[%c1_610, %c0_611, %c0_612] : memref<4x1024x128xbf16, #tpu.memory_space<vmem>>, vector<1x1024x128xbf16>
    %401 = vector.shape_cast %400 : vector<1x1024x128xbf16> to vector<1024x128xbf16>
    %cst_613 = arith.constant dense<0.000000e+00> : vector<32x128xf32>
    %402 = tpu.matmul %396, %401, %cst_613 {dimension_numbers = #tpu.dot_dimension_numbers<[1], [0], [0], [1], [0, 0, 1, 1], [], []>} : vector<32x1024xbf16>, vector<1024x128xbf16>, vector<32x128xf32> -> vector<32x128xf32>
    %c2_614 = arith.constant 2 : index
    %c0_615 = arith.constant 0 : index
    %c0_616 = arith.constant 0 : index
    %403 = vector.load %arg6[%c2_614, %c0_615, %c0_616] : memref<4x1024x128xbf16, #tpu.memory_space<vmem>>, vector<1x1024x128xbf16>
    %404 = vector.shape_cast %403 : vector<1x1024x128xbf16> to vector<1024x128xbf16>
    %cst_617 = arith.constant dense<0.000000e+00> : vector<32x128xf32>
    %405 = tpu.matmul %396, %404, %cst_617 {dimension_numbers = #tpu.dot_dimension_numbers<[1], [0], [0], [1], [0, 0, 1, 1], [], []>} : vector<32x1024xbf16>, vector<1024x128xbf16>, vector<32x128xf32> -> vector<32x128xf32>
    %c3_618 = arith.constant 3 : index
    %c0_619 = arith.constant 0 : index
    %c0_620 = arith.constant 0 : index
    %406 = vector.load %arg6[%c3_618, %c0_619, %c0_620] : memref<4x1024x128xbf16, #tpu.memory_space<vmem>>, vector<1x1024x128xbf16>
    %407 = vector.shape_cast %406 : vector<1x1024x128xbf16> to vector<1024x128xbf16>
    %cst_621 = arith.constant dense<0.000000e+00> : vector<32x128xf32>
    %408 = tpu.matmul %396, %407, %cst_621 {dimension_numbers = #tpu.dot_dimension_numbers<[1], [0], [0], [1], [0, 0, 1, 1], [], []>} : vector<32x1024xbf16>, vector<1024x128xbf16>, vector<32x128xf32> -> vector<32x128xf32>
    %409 = arith.maximumf %399, %402 : vector<32x128xf32>
    %410 = arith.maximumf %405, %408 : vector<32x128xf32>
    %411 = arith.maximumf %409, %410 : vector<32x128xf32>
    %c0_622 = arith.constant 0 : index
    %c0_623 = arith.constant 0 : index
    %412 = vector.load %arg7[%c0_622, %c0_623] : memref<1x128xf32, #tpu.memory_space<vmem>>, vector<1x128xf32>
    %413 = vector.broadcast %412 : vector<1x128xf32> to vector<32x128xf32>
    %414 = arith.addf %411, %413 : vector<32x128xf32>
    %cst_624 = arith.constant 0.000000e+00 : f32
    %415 = vector.broadcast %cst_624 : f32 to vector<32x128xf32>
    %416 = arith.maximumf %414, %415 : vector<32x128xf32>
    %417 = arith.truncf %416 : vector<32x128xf32> to vector<32x128xbf16>
    %c0_625 = arith.constant 0 : index
    %c0_626 = arith.constant 0 : index
    %418 = vector.load %arg17[%c0_625, %c0_626] : memref<32x128xbf16, #tpu.memory_space<vmem>>, vector<32x128xbf16>
    tpu.vector_store %arg17[%c0_625, %c0_626], %417 {strides = array<i32>} : memref<32x128xbf16, #tpu.memory_space<vmem>>, vector<32x128xbf16>,
    %c0_627 = arith.constant 0 : index
    %c0_628 = arith.constant 0 : index
    %419 = vector.load %arg17[%c0_627, %c0_628] : memref<32x128xbf16, #tpu.memory_space<vmem>>, vector<1x128xbf16>
    %c0_629 = arith.constant 0 : index
    %c0_630 = arith.constant 0 : index
    %420 = vector.load %arg18[%c0_629, %c0_630] : memref<8x512xbf16, #tpu.memory_space<vmem>>, vector<1x128xbf16>
    tpu.vector_store %arg18[%c0_629, %c0_630], %419 {strides = array<i32>} : memref<8x512xbf16, #tpu.memory_space<vmem>>, vector<1x128xbf16>,
    %c1_631 = arith.constant 1 : index
    %c0_632 = arith.constant 0 : index
    %421 = vector.load %arg17[%c1_631, %c0_632] : memref<32x128xbf16, #tpu.memory_space<vmem>>, vector<1x128xbf16>
    %c0_633 = arith.constant 0 : index
    %c128_634 = arith.constant 128 : index
    %422 = vector.load %arg18[%c0_633, %c128_634] : memref<8x512xbf16, #tpu.memory_space<vmem>>, vector<1x128xbf16>
    tpu.vector_store %arg18[%c0_633, %c128_634], %421 {strides = array<i32>} : memref<8x512xbf16, #tpu.memory_space<vmem>>, vector<1x128xbf16>,
    %c3_635 = arith.constant 3 : index
    %c0_636 = arith.constant 0 : index
    %423 = vector.load %arg17[%c3_635, %c0_636] : memref<32x128xbf16, #tpu.memory_space<vmem>>, vector<1x128xbf16>
    %c0_637 = arith.constant 0 : index
    %c256_638 = arith.constant 256 : index
    %424 = vector.load %arg18[%c0_637, %c256_638] : memref<8x512xbf16, #tpu.memory_space<vmem>>, vector<1x128xbf16>
    tpu.vector_store %arg18[%c0_637, %c256_638], %423 {strides = array<i32>} : memref<8x512xbf16, #tpu.memory_space<vmem>>, vector<1x128xbf16>,
    %c4_639 = arith.constant 4 : index
    %c0_640 = arith.constant 0 : index
    %425 = vector.load %arg17[%c4_639, %c0_640] : memref<32x128xbf16, #tpu.memory_space<vmem>>, vector<1x128xbf16>
    %c0_641 = arith.constant 0 : index
    %c384_642 = arith.constant 384 : index
    %426 = vector.load %arg18[%c0_641, %c384_642] : memref<8x512xbf16, #tpu.memory_space<vmem>>, vector<1x128xbf16>
    tpu.vector_store %arg18[%c0_641, %c384_642], %425 {strides = array<i32>} : memref<8x512xbf16, #tpu.memory_space<vmem>>, vector<1x128xbf16>,
    %c9_643 = arith.constant 9 : index
    %c0_644 = arith.constant 0 : index
    %427 = vector.load %arg17[%c9_643, %c0_644] : memref<32x128xbf16, #tpu.memory_space<vmem>>, vector<1x128xbf16>
    %c1_645 = arith.constant 1 : index
    %c0_646 = arith.constant 0 : index
    %428 = vector.load %arg18[%c1_645, %c0_646] : memref<8x512xbf16, #tpu.memory_space<vmem>>, vector<1x128xbf16>
    tpu.vector_store %arg18[%c1_645, %c0_646], %427 {strides = array<i32>} : memref<8x512xbf16, #tpu.memory_space<vmem>>, vector<1x128xbf16>,
    %c10_647 = arith.constant 10 : index
    %c0_648 = arith.constant 0 : index
    %429 = vector.load %arg17[%c10_647, %c0_648] : memref<32x128xbf16, #tpu.memory_space<vmem>>, vector<1x128xbf16>
    %c1_649 = arith.constant 1 : index
    %c128_650 = arith.constant 128 : index
    %430 = vector.load %arg18[%c1_649, %c128_650] : memref<8x512xbf16, #tpu.memory_space<vmem>>, vector<1x128xbf16>
    tpu.vector_store %arg18[%c1_649, %c128_650], %429 {strides = array<i32>} : memref<8x512xbf16, #tpu.memory_space<vmem>>, vector<1x128xbf16>,
    %c12_651 = arith.constant 12 : index
    %c0_652 = arith.constant 0 : index
    %431 = vector.load %arg17[%c12_651, %c0_652] : memref<32x128xbf16, #tpu.memory_space<vmem>>, vector<1x128xbf16>
    %c1_653 = arith.constant 1 : index
    %c256_654 = arith.constant 256 : index
    %432 = vector.load %arg18[%c1_653, %c256_654] : memref<8x512xbf16, #tpu.memory_space<vmem>>, vector<1x128xbf16>
    tpu.vector_store %arg18[%c1_653, %c256_654], %431 {strides = array<i32>} : memref<8x512xbf16, #tpu.memory_space<vmem>>, vector<1x128xbf16>,
    %c13_655 = arith.constant 13 : index
    %c0_656 = arith.constant 0 : index
    %433 = vector.load %arg17[%c13_655, %c0_656] : memref<32x128xbf16, #tpu.memory_space<vmem>>, vector<1x128xbf16>
    %c1_657 = arith.constant 1 : index
    %c384_658 = arith.constant 384 : index
    %434 = vector.load %arg18[%c1_657, %c384_658] : memref<8x512xbf16, #tpu.memory_space<vmem>>, vector<1x128xbf16>
    tpu.vector_store %arg18[%c1_657, %c384_658], %433 {strides = array<i32>} : memref<8x512xbf16, #tpu.memory_space<vmem>>, vector<1x128xbf16>,
    %c0_659 = arith.constant 0 : index
    %c0_660 = arith.constant 0 : index
    %435 = vector.load %arg18[%c0_659, %c0_660] : memref<8x512xbf16, #tpu.memory_space<vmem>>, vector<8x512xbf16>
    %c0_661 = arith.constant 0 : index
    %c0_662 = arith.constant 0 : index
    %436 = vector.load %arg8[%c0_661, %c0_662] : memref<512x512xbf16, #tpu.memory_space<vmem>>, vector<512x512xbf16>
    %cst_663 = arith.constant dense<0.000000e+00> : vector<8x512xf32>
    %437 = tpu.matmul %435, %436, %cst_663 {dimension_numbers = #tpu.dot_dimension_numbers<[1], [0], [0], [1], [0, 0, 1, 1], [], []>} : vector<8x512xbf16>, vector<512x512xbf16>, vector<8x512xf32> -> vector<8x512xf32>
    %c0_664 = arith.constant 0 : index
    %c0_665 = arith.constant 0 : index
    %438 = vector.load %arg9[%c0_664, %c0_665] : memref<1x512xf32, #tpu.memory_space<vmem>>, vector<1x512xf32>
    %439 = vector.broadcast %438 : vector<1x512xf32> to vector<8x512xf32>
    %440 = arith.addf %437, %439 : vector<8x512xf32>
    %cst_666 = arith.constant 0.000000e+00 : f32
    %441 = vector.broadcast %cst_666 : f32 to vector<8x512xf32>
    %442 = arith.maximumf %440, %441 : vector<8x512xf32>
    %443 = arith.truncf %442 : vector<8x512xf32> to vector<8x512xbf16>
    %c0_667 = arith.constant 0 : index
    %c0_668 = arith.constant 0 : index
    %444 = vector.load %arg10[%c0_667, %c0_668] : memref<512x128xbf16, #tpu.memory_space<vmem>>, vector<512x128xbf16>
    %cst_669 = arith.constant dense<0.000000e+00> : vector<8x128xf32>
    %445 = tpu.matmul %443, %444, %cst_669 {dimension_numbers = #tpu.dot_dimension_numbers<[1], [0], [0], [1], [0, 0, 1, 1], [], []>} : vector<8x512xbf16>, vector<512x128xbf16>, vector<8x128xf32> -> vector<8x128xf32>
    %c0_670 = arith.constant 0 : index
    %c0_671 = arith.constant 0 : index
    %446 = vector.load %arg11[%c0_670, %c0_671] : memref<1x128xf32, #tpu.memory_space<vmem>>, vector<1x128xf32>
    %447 = vector.broadcast %446 : vector<1x128xf32> to vector<8x128xf32>
    %448 = arith.addf %445, %447 : vector<8x128xf32>
    %c0_672 = arith.constant 0 : index
    %c0_673 = arith.constant 0 : index
    %449 = vector.load %arg12[%c0_672, %c0_673] : memref<8x128xf32, #tpu.memory_space<vmem>>, vector<8x128xf32>
    tpu.vector_store %arg12[%c0_672, %c0_673], %448 {strides = array<i32>} : memref<8x128xf32, #tpu.memory_space<vmem>>, vector<8x128xf32>,
    return
  }
  func.func @transform_0(%arg0: i32) -> (i32, i32) {
    %c0_i32 = arith.constant 0 : i32
    %c0_i32_0 = arith.constant 0 : i32
    %c0_i32_1 = arith.constant 0 : i32
    return %c0_i32, %c0_i32_0 : i32, i32
  }
  func.func @transform_1(%arg0: i32) -> (i32, i32, i32) {
    %c0_i32 = arith.constant 0 : i32
    %c0_i32_0 = arith.constant 0 : i32
    %c0_i32_1 = arith.constant 0 : i32
    %c0_i32_2 = arith.constant 0 : i32
    return %c0_i32, %c0_i32_0, %c0_i32_1 : i32, i32, i32
  }
  func.func @transform_2(%arg0: i32) -> (i32, i32) {
    %c0_i32 = arith.constant 0 : i32
    %c0_i32_0 = arith.constant 0 : i32
    %c0_i32_1 = arith.constant 0 : i32
    return %c0_i32, %c0_i32_0 : i32, i32
  }
  func.func @transform_3(%arg0: i32) -> (i32, i32, i32) {
    %c0_i32 = arith.constant 0 : i32
    %c0_i32_0 = arith.constant 0 : i32
    %c0_i32_1 = arith.constant 0 : i32
    %c0_i32_2 = arith.constant 0 : i32
    return %c0_i32, %c0_i32_0, %c0_i32_1 : i32, i32, i32
  }
  func.func @transform_4(%arg0: i32) -> (i32, i32) {
    %c0_i32 = arith.constant 0 : i32
    %c0_i32_0 = arith.constant 0 : i32
    %c0_i32_1 = arith.constant 0 : i32
    return %c0_i32, %c0_i32_0 : i32, i32
  }
  func.func @transform_5(%arg0: i32) -> (i32, i32, i32) {
    %c0_i32 = arith.constant 0 : i32
    %c0_i32_0 = arith.constant 0 : i32
    %c0_i32_1 = arith.constant 0 : i32
    %c0_i32_2 = arith.constant 0 : i32
    return %c0_i32, %c0_i32_0, %c0_i32_1 : i32, i32, i32
  }
  func.func @transform_6(%arg0: i32) -> (i32, i32) {
    %c0_i32 = arith.constant 0 : i32
    %c0_i32_0 = arith.constant 0 : i32
    %c0_i32_1 = arith.constant 0 : i32
    return %c0_i32, %c0_i32_0 : i32, i32
  }
  func.func @transform_7(%arg0: i32) -> (i32, i32) {
    %c0_i32 = arith.constant 0 : i32
    %c0_i32_0 = arith.constant 0 : i32
    %c0_i32_1 = arith.constant 0 : i32
    return %c0_i32, %c0_i32_0 : i32, i32
  }
  func.func @transform_8(%arg0: i32) -> (i32, i32) {
    %c0_i32 = arith.constant 0 : i32
    %c0_i32_0 = arith.constant 0 : i32
    %c0_i32_1 = arith.constant 0 : i32
    return %c0_i32, %c0_i32_0 : i32, i32
  }
  func.func @transform_9(%arg0: i32) -> (i32, i32) {
    %c0_i32 = arith.constant 0 : i32
    %c0_i32_0 = arith.constant 0 : i32
    %c0_i32_1 = arith.constant 0 : i32
    return %c0_i32, %c0_i32_0 : i32, i32
  }
  func.func @transform_10(%arg0: i32) -> (i32, i32) {
    %c0_i32 = arith.constant 0 : i32
    %c0_i32_0 = arith.constant 0 : i32
    %c0_i32_1 = arith.constant 0 : i32
    return %c0_i32, %c0_i32_0 : i32, i32
  }
  func.func @transform_11(%arg0: i32) -> (i32, i32) {
    %c0_i32 = arith.constant 0 : i32
    %c0_i32_0 = arith.constant 0 : i32
    %c0_i32_1 = arith.constant 0 : i32
    return %c0_i32, %c0_i32_0 : i32, i32
  }
}

</mosaic_0001>

<llo_original>
// kernel: neurological_cnn_forward.1
$region0: #{neurological_cnn_forward.1}
  #allocation0 [shape = 'u32[]', space=smem, size = 0x4, offset = 0x4, fixed_abs, tag = 'smem constant byte address 0x4 - core index']
  #allocation1 [shape = 'u32[144,128]{1,0:T(1,128)}', space=vmem, size = 0x12000, scoped, tag = 'internal scratch']
  #allocation2 [shape = 'bf16[176,32]{1,0:T(8,128)(2,1)}', space=vmem, size = 0xb000, scoped, tag = 'scratch operand']
  #allocation3 [shape = 'bf16[72,128]{1,0:T(8,128)(2,1)}', space=vmem, size = 0x4800, scoped, tag = 'scratch operand']
  #allocation4 [shape = 'bf16[64,64]{1,0:T(8,128)(2,1)}', space=vmem, size = 0x4000, scoped, tag = 'scratch operand']
  #allocation5 [shape = 'bf16[40,256]{1,0:T(8,128)(2,1)}', space=vmem, size = 0x5000, scoped, tag = 'scratch operand']
  #allocation6 [shape = 'bf16[32,128]{1,0:T(8,128)(2,1)}', space=vmem, size = 0x2000, scoped, tag = 'scratch operand']
  #allocation7 [shape = 'bf16[8,512]{1,0:T(8,128)(2,1)}', space=vmem, size = 0x2000, scoped, tag = 'scratch operand']
  #allocation8 [shape = 'bf16[176,1024]{1,0:T(8,128)(2,1)}', space=vmem, size = 0x58000, scoped, tag = 'scratch operand']
  %s0 = inlined_call_operand.vmem [shape: bf16[192,128], index: 0, kind: input, shape index: {}]
  %s1 = inlined_call_operand.vmem [shape: bf16[4,512,32], index: 1, kind: input, shape index: {}]
  %s2 = inlined_call_operand.vmem [shape: f32[1,32], index: 2, kind: input, shape index: {}]
  %s3 = inlined_call_operand.vmem [shape: bf16[4,512,64], index: 3, kind: input, shape index: {}]
  %s4 = inlined_call_operand.vmem [shape: f32[1,64], index: 4, kind: input, shape index: {}]
  %s5 = inlined_call_operand.vmem [shape: bf16[4,1024,128], index: 5, kind: input, shape index: {}]
  %s6 = inlined_call_operand.vmem [shape: f32[1,128], index: 6, kind: input, shape index: {}]
  %s7 = inlined_call_operand.vmem [shape: bf16[512,512], index: 7, kind: input, shape index: {}]
  %s8 = inlined_call_operand.vmem [shape: f32[1,512], index: 8, kind: input, shape index: {}]
  %s9 = inlined_call_operand.vmem [shape: bf16[512,128], index: 9, kind: input, shape index: {}]
  %s10 = inlined_call_operand.vmem [shape: f32[1,128], index: 10, kind: input, shape index: {}]
  %s11 = inlined_call_operand.vmem [shape: f32[8,128], index: 11, kind: output, shape index: {}]
  %s12 = sld [smem:[#allocation0]]
  $region54: #{neurological_cnn_forward.1} parent=0
    _
  %s14 = ssub.s32 1, %s12
  %s15 = scalar_select 0, %s14, %s12
  // Predicated region
  $region2: #{neurological_cnn_forward.1} parent=0 // pred_check
    _
  $region3: #{neurological_cnn_forward.1} parent=0 // pred_check_branch
    %17 = sbr.rel (0) target = $region5
  $region4: #{neurological_cnn_forward.1} parent=0 // pred_region
    _
  $region5: #{neurological_cnn_forward.1} parent=0 // pred_fallthru
    _
  // Predicated region
  $region6: #{neurological_cnn_forward.1} parent=0 // pred_check
    _
  $region7: #{neurological_cnn_forward.1} parent=0 // pred_check_branch
    %19 = sbr.rel (0) target = $region9
  $region8: #{neurological_cnn_forward.1} parent=0 // pred_region
    _
  $region9: #{neurological_cnn_forward.1} parent=0 // pred_fallthru
    _
  // Predicated region
  $region10: #{neurological_cnn_forward.1} parent=0 // pred_check
    _
  $region11: #{neurological_cnn_forward.1} parent=0 // pred_check_branch
    %21 = sbr.rel (0) target = $region13
  $region12: #{neurological_cnn_forward.1} parent=0 // pred_region
    _
  $region13: #{neurological_cnn_forward.1} parent=0 // pred_fallthru
    _
  // Predicated region
  $region14: #{neurological_cnn_forward.1} parent=0 // pred_check
    _
  $region15: #{neurological_cnn_forward.1} parent=0 // pred_check_branch
    %23 = sbr.rel (0) target = $region17
  $region16: #{neurological_cnn_forward.1} parent=0 // pred_region
    _
  $region17: #{neurological_cnn_forward.1} parent=0 // pred_fallthru
    _
  // Predicated region
  $region18: #{neurological_cnn_forward.1} parent=0 // pred_check
    _
  $region19: #{neurological_cnn_forward.1} parent=0 // pred_check_branch
    %25 = sbr.rel (0) target = $region21
  $region20: #{neurological_cnn_forward.1} parent=0 // pred_region
    _
  $region21: #{neurological_cnn_forward.1} parent=0 // pred_fallthru
    _
  // Predicated region
  $region22: #{neurological_cnn_forward.1} parent=0 // pred_check
    _
  $region23: #{neurological_cnn_forward.1} parent=0 // pred_check_branch
    %27 = sbr.rel (0) target = $region25
  $region24: #{neurological_cnn_forward.1} parent=0 // pred_region
    _
  $region25: #{neurological_cnn_forward.1} parent=0 // pred_fallthru
    _
  // Predicated region
  $region26: #{neurological_cnn_forward.1} parent=0 // pred_check
    _
  $region27: #{neurological_cnn_forward.1} parent=0 // pred_check_branch
    %29 = sbr.rel (0) target = $region29
  $region28: #{neurological_cnn_forward.1} parent=0 // pred_region
    _
  $region29: #{neurological_cnn_forward.1} parent=0 // pred_fallthru
    _
  // Predicated region
  $region30: #{neurological_cnn_forward.1} parent=0 // pred_check
    _
  $region31: #{neurological_cnn_forward.1} parent=0 // pred_check_branch
    %31 = sbr.rel (0) target = $region33
  $region32: #{neurological_cnn_forward.1} parent=0 // pred_region
    _
  $region33: #{neurological_cnn_forward.1} parent=0 // pred_fallthru
    _
  // Predicated region
  $region34: #{neurological_cnn_forward.1} parent=0 // pred_check
    _
  $region35: #{neurological_cnn_forward.1} parent=0 // pred_check_branch
    %33 = sbr.rel (0) target = $region37
  $region36: #{neurological_cnn_forward.1} parent=0 // pred_region
    _
  $region37: #{neurological_cnn_forward.1} parent=0 // pred_fallthru
    _
  // Predicated region
  $region38: #{neurological_cnn_forward.1} parent=0 // pred_check
    _
  $region39: #{neurological_cnn_forward.1} parent=0 // pred_check_branch
    %35 = sbr.rel (0) target = $region41
  $region40: #{neurological_cnn_forward.1} parent=0 // pred_region
    _
  $region41: #{neurological_cnn_forward.1} parent=0 // pred_fallthru
    _
  // Predicated region
  $region42: #{neurological_cnn_forward.1} parent=0 // pred_check
    _
  $region43: #{neurological_cnn_forward.1} parent=0 // pred_check_branch
    %37 = sbr.rel (0) target = $region45
  $region44: #{neurological_cnn_forward.1} parent=0 // pred_region
    _
  $region45: #{neurological_cnn_forward.1} parent=0 // pred_fallthru
    _
  %39 = vst [vmem:[#allocation3] sm:$0xf] 0
  %40 = vst [vmem:[#allocation3 + $0x4] sm:$0xf] 0
  %41 = vst [vmem:[#allocation3 + $0x8] sm:$0xf] 0
  %42 = vst [vmem:[#allocation3 + $0xc] sm:$0xf] 0
  %43 = vst [vmem:[#allocation3 + $0x10] sm:$0xf] 0
  %44 = vst [vmem:[#allocation3 + $0x14] sm:$0xf] 0
  %45 = vst [vmem:[#allocation3 + $0x18] sm:$0xf] 0
  %46 = vst [vmem:[#allocation3 + $0x1c] sm:$0xf] 0
  %47 = vst [vmem:[#allocation3 + $0x20] sm:$0xf] 0
  %48 = vst [vmem:[#allocation5] sm:$0xff] 0
  %49 = vst [vmem:[#allocation5 + $0x8] sm:$0xff] 0
  %50 = vst [vmem:[#allocation5 + $0x10] sm:$0xff] 0
  %51 = vst [vmem:[#allocation5 + $0x18] sm:$0xff] 0
  %52 = vst [vmem:[#allocation5 + $0x20] sm:$0xff] 0
  %53 = vst [vmem:[#allocation7] sm:$0xff] 0
  %54 = vst [vmem:[#allocation7 + $0x8] sm:$0xff] 0
  %v55 = vld [vmem:[%s0] sm:$0xf]
  %v56 = vld [vmem:[%s0 + $0x4] sm:$0xf]
  %v57 = vld [vmem:[%s0 + $0x8] sm:$0xf]
  %v58 = vld [vmem:[%s0 + $0xc] sm:$0xf]
  %v59 = vld [vmem:[%s0 + $0x10] sm:$0xf]
  %v60 = vld [vmem:[%s0 + $0x14] sm:$0xf]
  %v61 = vld [vmem:[%s0 + $0x18] sm:$0xf]
  %v62 = vld [vmem:[%s0 + $0x1c] sm:$0xf]
  %v63 = vld [vmem:[%s0 + $0x20] sm:$0xf]
  %v64 = vld [vmem:[%s0 + $0x24] sm:$0xf]
  %v65 = vld [vmem:[%s0 + $0x28] sm:$0xf]
  %v66 = vld [vmem:[%s0 + $0x2c] sm:$0xf]
  %v67 = vld [vmem:[%s0 + $0x30] sm:$0xf]
  %v68 = vld [vmem:[%s0 + $0x34] sm:$0xf]
  %v69 = vld [vmem:[%s0 + $0x38] sm:$0xf]
  %v70 = vld [vmem:[%s0 + $0x3c] sm:$0xf]
  %v71 = vld [vmem:[%s0 + $0x40] sm:$0xf]
  %v72 = vld [vmem:[%s0 + $0x44] sm:$0xf]
  %v73 = vld [vmem:[%s0 + $0x48] sm:$0xf]
  %v74 = vld [vmem:[%s0 + $0x4c] sm:$0xf]
  %v75 = vld [vmem:[%s0 + $0x50] sm:$0xf]
  %v76 = vld [vmem:[%s0 + $0x54] sm:$0xf]
  %77 = vst [vmem:[#allocation8] sm:$0xf] %v55
  %78 = vst [vmem:[#allocation8 + $0x20] sm:$0xf] %v56
  %79 = vst [vmem:[#allocation8 + $0x40] sm:$0xf] %v57
  %80 = vst [vmem:[#allocation8 + $0x60] sm:$0xf] %v58
  %81 = vst [vmem:[#allocation8 + $0x80] sm:$0xf] %v59
  %82 = vst [vmem:[#allocation8 + $0xa0] sm:$0xf] %v60
  %83 = vst [vmem:[#allocation8 + $0xc0] sm:$0xf] %v61
  %84 = vst [vmem:[#allocation8 + $0xe0] sm:$0xf] %v62
  %85 = vst [vmem:[#allocation8 + $0x100] sm:$0xf] %v63
  %86 = vst [vmem:[#allocation8 + $0x120] sm:$0xf] %v64
  %87 = vst [vmem:[#allocation8 + $0x140] sm:$0xf] %v65
  %88 = vst [vmem:[#allocation8 + $0x160] sm:$0xf] %v66
  %89 = vst [vmem:[#allocation8 + $0x180] sm:$0xf] %v67
  %90 = vst [vmem:[#allocation8 + $0x1a0] sm:$0xf] %v68
  %91 = vst [vmem:[#allocation8 + $0x1c0] sm:$0xf] %v69
  %92 = vst [vmem:[#allocation8 + $0x1e0] sm:$0xf] %v70
  %93 = vst [vmem:[#allocation8 + $0x200] sm:$0xf] %v71
  %94 = vst [vmem:[#allocation8 + $0x220] sm:$0xf] %v72
  %95 = vst [vmem:[#allocation8 + $0x240] sm:$0xf] %v73
  %96 = vst [vmem:[#allocation8 + $0x260] sm:$0xf] %v74
  %97 = vst [vmem:[#allocation8 + $0x280] sm:$0xf] %v75
  %98 = vst [vmem:[#allocation8 + $0x2a0] sm:$0xf] %v76
  %v99 = vld [vmem:[%s0] sm:$0xf]
  %v100 = vld [vmem:[%s0 + $0x4] sm:$0xf]
  %v101 = vld [vmem:[%s0 + $0x8] sm:$0xf]
  %v102 = vld [vmem:[%s0 + $0xc] sm:$0xf]
  %v103 = vld [vmem:[%s0 + $0x10] sm:$0xf]
  %v104 = vld [vmem:[%s0 + $0x14] sm:$0xf]
  %v105 = vld [vmem:[%s0 + $0x18] sm:$0xf]
  %v106 = vld [vmem:[%s0 + $0x1c] sm:$0xf]
  %v107 = vld [vmem:[%s0 + $0x20] sm:$0xf]
  %v108 = vld [vmem:[%s0 + $0x24] sm:$0xf]
  %v109 = vld [vmem:[%s0 + $0x28] sm:$0xf]
  %v110 = vld [vmem:[%s0 + $0x2c] sm:$0xf]
  %v111 = vld [vmem:[%s0 + $0x30] sm:$0xf]
  %v112 = vld [vmem:[%s0 + $0x34] sm:$0xf]
  %v113 = vld [vmem:[%s0 + $0x38] sm:$0xf]
  %v114 = vld [vmem:[%s0 + $0x3c] sm:$0xf]
  %v115 = vld [vmem:[%s0 + $0x40] sm:$0xf]
  %v116 = vld [vmem:[%s0 + $0x44] sm:$0xf]
  %v117 = vld [vmem:[%s0 + $0x48] sm:$0xf]
  %v118 = vld [vmem:[%s0 + $0x4c] sm:$0xf]
  %v119 = vld [vmem:[%s0 + $0x50] sm:$0xf]
  %v120 = vld [vmem:[%s0 + $0x54] sm:$0xf]
  %v121 = vld [vmem:[%s0 + $0x58] sm:$0x1]
  %vm122 = vsmask.f32 3328
  %vm123 = vsmask.f32 7440
  %vm124 = vmor %vm122, %vm123
  %v126 = vshrl.u32 %v99, 16
  %v128 = vrot.slane %v126, 4
  %v129 = vshll.u32 %v99, 16
  %v131 = vrot.slane %v129, 5
  %v132 = vor.u32 %v128, %v131
  %v133 = vrot.slane %v132, 4
  %v135 = vshll.u32 %v100, 16
  %v137 = vrot.slane %v135, 5
  %v138 = vsel %vm124, %v133, %v137
  %v139 = vshrl.u32 %v100, 16
  %v141 = vrot.slane %v139, 4
  %v142 = vor.u32 %v141, %v137
  %v143 = vrot.slane %v142, 4
  %v145 = vshll.u32 %v101, 16
  %v147 = vrot.slane %v145, 5
  %v148 = vsel %vm124, %v143, %v147
  %v149 = vshrl.u32 %v101, 16
  %v151 = vrot.slane %v149, 4
  %v152 = vor.u32 %v151, %v147
  %v153 = vrot.slane %v152, 4
  %v155 = vshll.u32 %v102, 16
  %v157 = vrot.slane %v155, 5
  %v158 = vsel %vm124, %v153, %v157
  %v159 = vshrl.u32 %v102, 16
  %v161 = vrot.slane %v159, 4
  %v162 = vor.u32 %v161, %v157
  %v163 = vrot.slane %v162, 4
  %v165 = vshll.u32 %v103, 16
  %v167 = vrot.slane %v165, 5
  %v168 = vsel %vm124, %v163, %v167
  %v169 = vshrl.u32 %v103, 16
  %v171 = vrot.slane %v169, 4
  %v172 = vor.u32 %v171, %v167
  %v173 = vrot.slane %v172, 4
  %v175 = vshll.u32 %v104, 16
  %v177 = vrot.slane %v175, 5
  %v178 = vsel %vm124, %v173, %v177
  %v179 = vshrl.u32 %v104, 16
  %v181 = vrot.slane %v179, 4
  %v182 = vor.u32 %v181, %v177
  %v183 = vrot.slane %v182, 4
  %v185 = vshll.u32 %v105, 16
  %v187 = vrot.slane %v185, 5
  %v188 = vsel %vm124, %v183, %v187
  %v189 = vshrl.u32 %v105, 16
  %v191 = vrot.slane %v189, 4
  %v192 = vor.u32 %v191, %v187
  %v193 = vrot.slane %v192, 4
  %v195 = vshll.u32 %v106, 16
  %v197 = vrot.slane %v195, 5
  %v198 = vsel %vm124, %v193, %v197
  %v199 = vshrl.u32 %v106, 16
  %v201 = vrot.slane %v199, 4
  %v202 = vor.u32 %v201, %v197
  %v203 = vrot.slane %v202, 4
  %v205 = vshll.u32 %v107, 16
  %v207 = vrot.slane %v205, 5
  %v208 = vsel %vm124, %v203, %v207
  %v209 = vshrl.u32 %v107, 16
  %v211 = vrot.slane %v209, 4
  %v212 = vor.u32 %v211, %v207
  %v213 = vrot.slane %v212, 4
  %v215 = vshll.u32 %v108, 16
  %v217 = vrot.slane %v215, 5
  %v218 = vsel %vm124, %v213, %v217
  %v219 = vshrl.u32 %v108, 16
  %v221 = vrot.slane %v219, 4
  %v222 = vor.u32 %v221, %v217
  %v223 = vrot.slane %v222, 4
  %v225 = vshll.u32 %v109, 16
  %v227 = vrot.slane %v225, 5
  %v228 = vsel %vm124, %v223, %v227
  %v229 = vshrl.u32 %v109, 16
  %v231 = vrot.slane %v229, 4
  %v232 = vor.u32 %v231, %v227
  %v233 = vrot.slane %v232, 4
  %v235 = vshll.u32 %v110, 16
  %v237 = vrot.slane %v235, 5
  %v238 = vsel %vm124, %v233, %v237
  %v239 = vshrl.u32 %v110, 16
  %v241 = vrot.slane %v239, 4
  %v242 = vor.u32 %v241, %v237
  %v243 = vrot.slane %v242, 4
  %v245 = vshll.u32 %v111, 16
  %v247 = vrot.slane %v245, 5
  %v248 = vsel %vm124, %v243, %v247
  %v249 = vshrl.u32 %v111, 16
  %v251 = vrot.slane %v249, 4
  %v252 = vor.u32 %v251, %v247
  %v253 = vrot.slane %v252, 4
  %v255 = vshll.u32 %v112, 16
  %v257 = vrot.slane %v255, 5
  %v258 = vsel %vm124, %v253, %v257
  %v259 = vshrl.u32 %v112, 16
  %v261 = vrot.slane %v259, 4
  %v262 = vor.u32 %v261, %v257
  %v263 = vrot.slane %v262, 4
  %v265 = vshll.u32 %v113, 16
  %v267 = vrot.slane %v265, 5
  %v268 = vsel %vm124, %v263, %v267
  %v269 = vshrl.u32 %v113, 16
  %v271 = vrot.slane %v269, 4
  %v272 = vor.u32 %v271, %v267
  %v273 = vrot.slane %v272, 4
  %v275 = vshll.u32 %v114, 16
  %v277 = vrot.slane %v275, 5
  %v278 = vsel %vm124, %v273, %v277
  %v279 = vshrl.u32 %v114, 16
  %v281 = vrot.slane %v279, 4
  %v282 = vor.u32 %v281, %v277
  %v283 = vrot.slane %v282, 4
  %v285 = vshll.u32 %v115, 16
  %v287 = vrot.slane %v285, 5
  %v288 = vsel %vm124, %v283, %v287
  %v289 = vshrl.u32 %v115, 16
  %v291 = vrot.slane %v289, 4
  %v292 = vor.u32 %v291, %v287
  %v293 = vrot.slane %v292, 4
  %v295 = vshll.u32 %v116, 16
  %v297 = vrot.slane %v295, 5
  %v298 = vsel %vm124, %v293, %v297
  %v299 = vshrl.u32 %v116, 16
  %v301 = vrot.slane %v299, 4
  %v302 = vor.u32 %v301, %v297
  %v303 = vrot.slane %v302, 4
  %v305 = vshll.u32 %v117, 16
  %v307 = vrot.slane %v305, 5
  %v308 = vsel %vm124, %v303, %v307
  %v309 = vshrl.u32 %v117, 16
  %v311 = vrot.slane %v309, 4
  %v312 = vor.u32 %v311, %v307
  %v313 = vrot.slane %v312, 4
  %v315 = vshll.u32 %v118, 16
  %v317 = vrot.slane %v315, 5
  %v318 = vsel %vm124, %v313, %v317
  %v319 = vshrl.u32 %v118, 16
  %v321 = vrot.slane %v319, 4
  %v322 = vor.u32 %v321, %v317
  %v323 = vrot.slane %v322, 4
  %v325 = vshll.u32 %v119, 16
  %v327 = vrot.slane %v325, 5
  %v328 = vsel %vm124, %v323, %v327
  %v329 = vshrl.u32 %v119, 16
  %v331 = vrot.slane %v329, 4
  %v332 = vor.u32 %v331, %v327
  %v333 = vrot.slane %v332, 4
  %v335 = vshll.u32 %v120, 16
  %v337 = vrot.slane %v335, 5
  %v338 = vsel %vm124, %v333, %v337
  %v339 = vshrl.u32 %v120, 16
  %v341 = vrot.slane %v339, 4
  %v342 = vor.u32 %v341, %v337
  %v343 = vrot.slane %v342, 4
  %v345 = vshll.u32 %v121, 16
  %v347 = vrot.slane %v345, 5
  %v348 = vsel %vm124, %v343, %v347
  %371 = vst [vmem:[#allocation8 + $0x4] sm:$0xf] %v138
  %372 = vst [vmem:[#allocation8 + $0x24] sm:$0xf] %v148
  %373 = vst [vmem:[#allocation8 + $0x44] sm:$0xf] %v158
  %374 = vst [vmem:[#allocation8 + $0x64] sm:$0xf] %v168
  %375 = vst [vmem:[#allocation8 + $0x84] sm:$0xf] %v178
  %376 = vst [vmem:[#allocation8 + $0xa4] sm:$0xf] %v188
  %377 = vst [vmem:[#allocation8 + $0xc4] sm:$0xf] %v198
  %378 = vst [vmem:[#allocation8 + $0xe4] sm:$0xf] %v208
  %379 = vst [vmem:[#allocation8 + $0x104] sm:$0xf] %v218
  %380 = vst [vmem:[#allocation8 + $0x124] sm:$0xf] %v228
  %381 = vst [vmem:[#allocation8 + $0x144] sm:$0xf] %v238
  %382 = vst [vmem:[#allocation8 + $0x164] sm:$0xf] %v248
  %383 = vst [vmem:[#allocation8 + $0x184] sm:$0xf] %v258
  %384 = vst [vmem:[#allocation8 + $0x1a4] sm:$0xf] %v268
  %385 = vst [vmem:[#allocation8 + $0x1c4] sm:$0xf] %v278
  %386 = vst [vmem:[#allocation8 + $0x1e4] sm:$0xf] %v288
  %387 = vst [vmem:[#allocation8 + $0x204] sm:$0xf] %v298
  %388 = vst [vmem:[#allocation8 + $0x224] sm:$0xf] %v308
  %389 = vst [vmem:[#allocation8 + $0x244] sm:$0xf] %v318
  %390 = vst [vmem:[#allocation8 + $0x264] sm:$0xf] %v328
  %391 = vst [vmem:[#allocation8 + $0x284] sm:$0xf] %v338
  %392 = vst [vmem:[#allocation8 + $0x2a4] sm:$0xf] %v348
  %v393 = vld [vmem:[%s0 + $0x4] sm:$0xf]
  %v394 = vld [vmem:[%s0 + $0x8] sm:$0xf]
  %v395 = vld [vmem:[%s0 + $0xc] sm:$0xf]
  %v396 = vld [vmem:[%s0 + $0x10] sm:$0xf]
  %v397 = vld [vmem:[%s0 + $0x14] sm:$0xf]
  %v398 = vld [vmem:[%s0 + $0x18] sm:$0xf]
  %v399 = vld [vmem:[%s0 + $0x1c] sm:$0xf]
  %v400 = vld [vmem:[%s0 + $0x20] sm:$0xf]
  %v401 = vld [vmem:[%s0 + $0x24] sm:$0xf]
  %v402 = vld [vmem:[%s0 + $0x28] sm:$0xf]
  %v403 = vld [vmem:[%s0 + $0x2c] sm:$0xf]
  %v404 = vld [vmem:[%s0 + $0x30] sm:$0xf]
  %v405 = vld [vmem:[%s0 + $0x34] sm:$0xf]
  %v406 = vld [vmem:[%s0 + $0x38] sm:$0xf]
  %v407 = vld [vmem:[%s0 + $0x3c] sm:$0xf]
  %v408 = vld [vmem:[%s0 + $0x40] sm:$0xf]
  %v409 = vld [vmem:[%s0 + $0x44] sm:$0xf]
  %v410 = vld [vmem:[%s0 + $0x48] sm:$0xf]
  %v411 = vld [vmem:[%s0 + $0x4c] sm:$0xf]
  %v412 = vld [vmem:[%s0 + $0x50] sm:$0xf]
  %v413 = vld [vmem:[%s0 + $0x54] sm:$0xf]
  %v414 = vld [vmem:[%s0 + $0x58] sm:$0xf]
  %v415 = vld [vmem:[%s0 + $0x5c] sm:$0x1]
  %v417 = vshrl.u32 %v393, 16
  %v419 = vrot.slane %v417, 4
  %v420 = vshll.u32 %v393, 16
  %v422 = vrot.slane %v420, 5
  %v423 = vor.u32 %v419, %v422
  %v424 = vrot.slane %v423, 4
  %v426 = vshll.u32 %v394, 16
  %v428 = vrot.slane %v426, 5
  %v429 = vsel %vm124, %v424, %v428
  %v430 = vshrl.u32 %v394, 16
  %v432 = vrot.slane %v430, 4
  %v433 = vor.u32 %v432, %v428
  %v434 = vrot.slane %v433, 4
  %v436 = vshll.u32 %v395, 16
  %v438 = vrot.slane %v436, 5
  %v439 = vsel %vm124, %v434, %v438
  %v440 = vshrl.u32 %v395, 16
  %v442 = vrot.slane %v440, 4
  %v443 = vor.u32 %v442, %v438
  %v444 = vrot.slane %v443, 4
  %v446 = vshll.u32 %v396, 16
  %v448 = vrot.slane %v446, 5
  %v449 = vsel %vm124, %v444, %v448
  %v450 = vshrl.u32 %v396, 16
  %v452 = vrot.slane %v450, 4
  %v453 = vor.u32 %v452, %v448
  %v454 = vrot.slane %v453, 4
  %v456 = vshll.u32 %v397, 16
  %v458 = vrot.slane %v456, 5
  %v459 = vsel %vm124, %v454, %v458
  %v460 = vshrl.u32 %v397, 16
  %v462 = vrot.slane %v460, 4
  %v463 = vor.u32 %v462, %v458
  %v464 = vrot.slane %v463, 4
  %v466 = vshll.u32 %v398, 16
  %v468 = vrot.slane %v466, 5
  %v469 = vsel %vm124, %v464, %v468
  %v470 = vshrl.u32 %v398, 16
  %v472 = vrot.slane %v470, 4
  %v473 = vor.u32 %v472, %v468
  %v474 = vrot.slane %v473, 4
  %v476 = vshll.u32 %v399, 16
  %v478 = vrot.slane %v476, 5
  %v479 = vsel %vm124, %v474, %v478
  %v480 = vshrl.u32 %v399, 16
  %v482 = vrot.slane %v480, 4
  %v483 = vor.u32 %v482, %v478
  %v484 = vrot.slane %v483, 4
  %v486 = vshll.u32 %v400, 16
  %v488 = vrot.slane %v486, 5
  %v489 = vsel %vm124, %v484, %v488
  %v490 = vshrl.u32 %v400, 16
  %v492 = vrot.slane %v490, 4
  %v493 = vor.u32 %v492, %v488
  %v494 = vrot.slane %v493, 4
  %v496 = vshll.u32 %v401, 16
  %v498 = vrot.slane %v496, 5
  %v499 = vsel %vm124, %v494, %v498
  %v500 = vshrl.u32 %v401, 16
  %v502 = vrot.slane %v500, 4
  %v503 = vor.u32 %v502, %v498
  %v504 = vrot.slane %v503, 4
  %v506 = vshll.u32 %v402, 16
  %v508 = vrot.slane %v506, 5
  %v509 = vsel %vm124, %v504, %v508
  %v510 = vshrl.u32 %v402, 16
  %v512 = vrot.slane %v510, 4
  %v513 = vor.u32 %v512, %v508
  %v514 = vrot.slane %v513, 4
  %v516 = vshll.u32 %v403, 16
  %v518 = vrot.slane %v516, 5
  %v519 = vsel %vm124, %v514, %v518
  %v520 = vshrl.u32 %v403, 16
  %v522 = vrot.slane %v520, 4
  %v523 = vor.u32 %v522, %v518
  %v524 = vrot.slane %v523, 4
  %v526 = vshll.u32 %v404, 16
  %v528 = vrot.slane %v526, 5
  %v529 = vsel %vm124, %v524, %v528
  %v530 = vshrl.u32 %v404, 16
  %v532 = vrot.slane %v530, 4
  %v533 = vor.u32 %v532, %v528
  %v534 = vrot.slane %v533, 4
  %v536 = vshll.u32 %v405, 16
  %v538 = vrot.slane %v536, 5
  %v539 = vsel %vm124, %v534, %v538
  %v540 = vshrl.u32 %v405, 16
  %v542 = vrot.slane %v540, 4
  %v543 = vor.u32 %v542, %v538
  %v544 = vrot.slane %v543, 4
  %v546 = vshll.u32 %v406, 16
  %v548 = vrot.slane %v546, 5
  %v549 = vsel %vm124, %v544, %v548
  %v550 = vshrl.u32 %v406, 16
  %v552 = vrot.slane %v550, 4
  %v553 = vor.u32 %v552, %v548
  %v554 = vrot.slane %v553, 4
  %v556 = vshll.u32 %v407, 16
  %v558 = vrot.slane %v556, 5
  %v559 = vsel %vm124, %v554, %v558
  %v560 = vshrl.u32 %v407, 16
  %v562 = vrot.slane %v560, 4
  %v563 = vor.u32 %v562, %v558
  %v564 = vrot.slane %v563, 4
  %v566 = vshll.u32 %v408, 16
  %v568 = vrot.slane %v566, 5
  %v569 = vsel %vm124, %v564, %v568
  %v570 = vshrl.u32 %v408, 16
  %v572 = vrot.slane %v570, 4
  %v573 = vor.u32 %v572, %v568
  %v574 = vrot.slane %v573, 4
  %v576 = vshll.u32 %v409, 16
  %v578 = vrot.slane %v576, 5
  %v579 = vsel %vm124, %v574, %v578
  %v580 = vshrl.u32 %v409, 16
  %v582 = vrot.slane %v580, 4
  %v583 = vor.u32 %v582, %v578
  %v584 = vrot.slane %v583, 4
  %v586 = vshll.u32 %v410, 16
  %v588 = vrot.slane %v586, 5
  %v589 = vsel %vm124, %v584, %v588
  %v590 = vshrl.u32 %v410, 16
  %v592 = vrot.slane %v590, 4
  %v593 = vor.u32 %v592, %v588
  %v594 = vrot.slane %v593, 4
  %v596 = vshll.u32 %v411, 16
  %v598 = vrot.slane %v596, 5
  %v599 = vsel %vm124, %v594, %v598
  %v600 = vshrl.u32 %v411, 16
  %v602 = vrot.slane %v600, 4
  %v603 = vor.u32 %v602, %v598
  %v604 = vrot.slane %v603, 4
  %v606 = vshll.u32 %v412, 16
  %v608 = vrot.slane %v606, 5
  %v609 = vsel %vm124, %v604, %v608
  %v610 = vshrl.u32 %v412, 16
  %v612 = vrot.slane %v610, 4
  %v613 = vor.u32 %v612, %v608
  %v614 = vrot.slane %v613, 4
  %v616 = vshll.u32 %v413, 16
  %v618 = vrot.slane %v616, 5
  %v619 = vsel %vm124, %v614, %v618
  %v620 = vshrl.u32 %v413, 16
  %v622 = vrot.slane %v620, 4
  %v623 = vor.u32 %v622, %v618
  %v624 = vrot.slane %v623, 4
  %v626 = vshll.u32 %v414, 16
  %v628 = vrot.slane %v626, 5
  %v629 = vsel %vm124, %v624, %v628
  %v630 = vshrl.u32 %v414, 16
  %v632 = vrot.slane %v630, 4
  %v633 = vor.u32 %v632, %v628
  %v634 = vrot.slane %v633, 4
  %v636 = vshll.u32 %v415, 16
  %v638 = vrot.slane %v636, 5
  %v639 = vsel %vm124, %v634, %v638
  %662 = vst [vmem:[#allocation8 + $0x8] sm:$0xf] %v429
  %663 = vst [vmem:[#allocation8 + $0x28] sm:$0xf] %v439
  %664 = vst [vmem:[#allocation8 + $0x48] sm:$0xf] %v449
  %665 = vst [vmem:[#allocation8 + $0x68] sm:$0xf] %v459
  %666 = vst [vmem:[#allocation8 + $0x88] sm:$0xf] %v469
  %667 = vst [vmem:[#allocation8 + $0xa8] sm:$0xf] %v479
  %668 = vst [vmem:[#allocation8 + $0xc8] sm:$0xf] %v489
  %669 = vst [vmem:[#allocation8 + $0xe8] sm:$0xf] %v499
  %670 = vst [vmem:[#allocation8 + $0x108] sm:$0xf] %v509
  %671 = vst [vmem:[#allocation8 + $0x128] sm:$0xf] %v519
  %672 = vst [vmem:[#allocation8 + $0x148] sm:$0xf] %v529
  %673 = vst [vmem:[#allocation8 + $0x168] sm:$0xf] %v539
  %674 = vst [vmem:[#allocation8 + $0x188] sm:$0xf] %v549
  %675 = vst [vmem:[#allocation8 + $0x1a8] sm:$0xf] %v559
  %676 = vst [vmem:[#allocation8 + $0x1c8] sm:$0xf] %v569
  %677 = vst [vmem:[#allocation8 + $0x1e8] sm:$0xf] %v579
  %678 = vst [vmem:[#allocation8 + $0x208] sm:$0xf] %v589
  %679 = vst [vmem:[#allocation8 + $0x228] sm:$0xf] %v599
  %680 = vst [vmem:[#allocation8 + $0x248] sm:$0xf] %v609
  %681 = vst [vmem:[#allocation8 + $0x268] sm:$0xf] %v619
  %682 = vst [vmem:[#allocation8 + $0x288] sm:$0xf] %v629
  %683 = vst [vmem:[#allocation8 + $0x2a8] sm:$0xf] %v639
  %v684 = vld [vmem:[%s0 + $0x4] sm:$0xe]
  %v685 = vld [vmem:[%s0 + $0x8] sm:$0xf]
  %v686 = vld [vmem:[%s0 + $0xc] sm:$0xf]
  %v687 = vld [vmem:[%s0 + $0x10] sm:$0xf]
  %v688 = vld [vmem:[%s0 + $0x14] sm:$0xf]
  %v689 = vld [vmem:[%s0 + $0x18] sm:$0xf]
  %v690 = vld [vmem:[%s0 + $0x1c] sm:$0xf]
  %v691 = vld [vmem:[%s0 + $0x20] sm:$0xf]
  %v692 = vld [vmem:[%s0 + $0x24] sm:$0xf]
  %v693 = vld [vmem:[%s0 + $0x28] sm:$0xf]
  %v694 = vld [vmem:[%s0 + $0x2c] sm:$0xf]
  %v695 = vld [vmem:[%s0 + $0x30] sm:$0xf]
  %v696 = vld [vmem:[%s0 + $0x34] sm:$0xf]
  %v697 = vld [vmem:[%s0 + $0x38] sm:$0xf]
  %v698 = vld [vmem:[%s0 + $0x3c] sm:$0xf]
  %v699 = vld [vmem:[%s0 + $0x40] sm:$0xf]
  %v700 = vld [vmem:[%s0 + $0x44] sm:$0xf]
  %v701 = vld [vmem:[%s0 + $0x48] sm:$0xf]
  %v702 = vld [vmem:[%s0 + $0x4c] sm:$0xf]
  %v703 = vld [vmem:[%s0 + $0x50] sm:$0xf]
  %v704 = vld [vmem:[%s0 + $0x54] sm:$0xf]
  %v705 = vld [vmem:[%s0 + $0x58] sm:$0xf]
  %v706 = vld [vmem:[%s0 + $0x5c] sm:$0x1]
  %vm730 = vcmask 1042432
  %vm731 = vcmask 1046532
  %vm732 = vmor %vm730, %vm731
  %v733 = vrot.slane %v684, 5
  %v734 = vrot.slane %v733, 4
  %v735 = vrot.slane %v685, 5
  %v736 = vsel %vm732, %v734, %v735
  %v737 = vrot.slane %v735, 4
  %v738 = vrot.slane %v686, 5
  %v739 = vsel %vm732, %v737, %v738
  %v740 = vrot.slane %v738, 4
  %v741 = vrot.slane %v687, 5
  %v742 = vsel %vm732, %v740, %v741
  %v743 = vrot.slane %v741, 4
  %v744 = vrot.slane %v688, 5
  %v745 = vsel %vm732, %v743, %v744
  %v746 = vrot.slane %v744, 4
  %v747 = vrot.slane %v689, 5
  %v748 = vsel %vm732, %v746, %v747
  %v749 = vrot.slane %v747, 4
  %v750 = vrot.slane %v690, 5
  %v751 = vsel %vm732, %v749, %v750
  %v752 = vrot.slane %v750, 4
  %v753 = vrot.slane %v691, 5
  %v754 = vsel %vm732, %v752, %v753
  %v755 = vrot.slane %v753, 4
  %v756 = vrot.slane %v692, 5
  %v757 = vsel %vm732, %v755, %v756
  %v758 = vrot.slane %v756, 4
  %v759 = vrot.slane %v693, 5
  %v760 = vsel %vm732, %v758, %v759
  %v761 = vrot.slane %v759, 4
  %v762 = vrot.slane %v694, 5
  %v763 = vsel %vm732, %v761, %v762
  %v764 = vrot.slane %v762, 4
  %v765 = vrot.slane %v695, 5
  %v766 = vsel %vm732, %v764, %v765
  %v767 = vrot.slane %v765, 4
  %v768 = vrot.slane %v696, 5
  %v769 = vsel %vm732, %v767, %v768
  %v770 = vrot.slane %v768, 4
  %v771 = vrot.slane %v697, 5
  %v772 = vsel %vm732, %v770, %v771
  %v773 = vrot.slane %v771, 4
  %v774 = vrot.slane %v698, 5
  %v775 = vsel %vm732, %v773, %v774
  %v776 = vrot.slane %v774, 4
  %v777 = vrot.slane %v699, 5
  %v778 = vsel %vm732, %v776, %v777
  %v779 = vrot.slane %v777, 4
  %v780 = vrot.slane %v700, 5
  %v781 = vsel %vm732, %v779, %v780
  %v782 = vrot.slane %v780, 4
  %v783 = vrot.slane %v701, 5
  %v784 = vsel %vm732, %v782, %v783
  %v785 = vrot.slane %v783, 4
  %v786 = vrot.slane %v702, 5
  %v787 = vsel %vm732, %v785, %v786
  %v788 = vrot.slane %v786, 4
  %v789 = vrot.slane %v703, 5
  %v790 = vsel %vm732, %v788, %v789
  %v791 = vrot.slane %v789, 4
  %v792 = vrot.slane %v704, 5
  %v793 = vsel %vm732, %v791, %v792
  %v794 = vrot.slane %v792, 4
  %v795 = vrot.slane %v705, 5
  %v796 = vsel %vm732, %v794, %v795
  %v797 = vrot.slane %v795, 4
  %v798 = vrot.slane %v706, 5
  %v799 = vsel %vm732, %v797, %v798
  %822 = vst [vmem:[#allocation8 + $0xc] sm:$0xf] %v736
  %823 = vst [vmem:[#allocation8 + $0x2c] sm:$0xf] %v739
  %824 = vst [vmem:[#allocation8 + $0x4c] sm:$0xf] %v742
  %825 = vst [vmem:[#allocation8 + $0x6c] sm:$0xf] %v745
  %826 = vst [vmem:[#allocation8 + $0x8c] sm:$0xf] %v748
  %827 = vst [vmem:[#allocation8 + $0xac] sm:$0xf] %v751
  %828 = vst [vmem:[#allocation8 + $0xcc] sm:$0xf] %v754
  %829 = vst [vmem:[#allocation8 + $0xec] sm:$0xf] %v757
  %830 = vst [vmem:[#allocation8 + $0x10c] sm:$0xf] %v760
  %831 = vst [vmem:[#allocation8 + $0x12c] sm:$0xf] %v763
  %832 = vst [vmem:[#allocation8 + $0x14c] sm:$0xf] %v766
  %833 = vst [vmem:[#allocation8 + $0x16c] sm:$0xf] %v769
  %834 = vst [vmem:[#allocation8 + $0x18c] sm:$0xf] %v772
  %835 = vst [vmem:[#allocation8 + $0x1ac] sm:$0xf] %v775
  %836 = vst [vmem:[#allocation8 + $0x1cc] sm:$0xf] %v778
  %837 = vst [vmem:[#allocation8 + $0x1ec] sm:$0xf] %v781
  %838 = vst [vmem:[#allocation8 + $0x20c] sm:$0xf] %v784
  %839 = vst [vmem:[#allocation8 + $0x22c] sm:$0xf] %v787
  %840 = vst [vmem:[#allocation8 + $0x24c] sm:$0xf] %v790
  %841 = vst [vmem:[#allocation8 + $0x26c] sm:$0xf] %v793
  %842 = vst [vmem:[#allocation8 + $0x28c] sm:$0xf] %v796
  %843 = vst [vmem:[#allocation8 + $0x2ac] sm:$0xf] %v799
  %v844 = vld [vmem:[#allocation8] sm:$0xff]
  %v845 = vld [vmem:[#allocation8 + $0x8] sm:$0xff]
  %v846 = vld [vmem:[#allocation8 + $0x20] sm:$0xff]
  %v847 = vld [vmem:[#allocation8 + $0x28] sm:$0xff]
  %v848 = vld [vmem:[#allocation8 + $0x40] sm:$0xff]
  %v849 = vld [vmem:[#allocation8 + $0x48] sm:$0xff]
  %v850 = vld [vmem:[#allocation8 + $0x60] sm:$0xff]
  %v851 = vld [vmem:[#allocation8 + $0x68] sm:$0xff]
  %v852 = vld [vmem:[#allocation8 + $0x80] sm:$0xff]
  %v853 = vld [vmem:[#allocation8 + $0x88] sm:$0xff]
  %v854 = vld [vmem:[#allocation8 + $0xa0] sm:$0xff]
  %v855 = vld [vmem:[#allocation8 + $0xa8] sm:$0xff]
  %v856 = vld [vmem:[#allocation8 + $0xc0] sm:$0xff]
  %v857 = vld [vmem:[#allocation8 + $0xc8] sm:$0xff]
  %v858 = vld [vmem:[#allocation8 + $0xe0] sm:$0xff]
  %v859 = vld [vmem:[#allocation8 + $0xe8] sm:$0xff]
  %v860 = vld [vmem:[#allocation8 + $0x100] sm:$0xff]
  %v861 = vld [vmem:[#allocation8 + $0x108] sm:$0xff]
  %v862 = vld [vmem:[#allocation8 + $0x120] sm:$0xff]
  %v863 = vld [vmem:[#allocation8 + $0x128] sm:$0xff]
  %v864 = vld [vmem:[#allocation8 + $0x140] sm:$0xff]
  %v865 = vld [vmem:[#allocation8 + $0x148] sm:$0xff]
  %v866 = vld [vmem:[#allocation8 + $0x160] sm:$0xff]
  %v867 = vld [vmem:[#allocation8 + $0x168] sm:$0xff]
  %v868 = vld [vmem:[#allocation8 + $0x180] sm:$0xff]
  %v869 = vld [vmem:[#allocation8 + $0x188] sm:$0xff]
  %v870 = vld [vmem:[#allocation8 + $0x1a0] sm:$0xff]
  %v871 = vld [vmem:[#allocation8 + $0x1a8] sm:$0xff]
  %v872 = vld [vmem:[#allocation8 + $0x1c0] sm:$0xff]
  %v873 = vld [vmem:[#allocation8 + $0x1c8] sm:$0xff]
  %v874 = vld [vmem:[#allocation8 + $0x1e0] sm:$0xff]
  %v875 = vld [vmem:[#allocation8 + $0x1e8] sm:$0xff]
  %v876 = vld [vmem:[#allocation8 + $0x200] sm:$0xff]
  %v877 = vld [vmem:[#allocation8 + $0x208] sm:$0xff]
  %v878 = vld [vmem:[#allocation8 + $0x220] sm:$0xff]
  %v879 = vld [vmem:[#allocation8 + $0x228] sm:$0xff]
  %v880 = vld [vmem:[#allocation8 + $0x240] sm:$0xff]
  %v881 = vld [vmem:[#allocation8 + $0x248] sm:$0xff]
  %v882 = vld [vmem:[#allocation8 + $0x260] sm:$0xff]
  %v883 = vld [vmem:[#allocation8 + $0x268] sm:$0xff]
  %v884 = vld [vmem:[#allocation8 + $0x280] sm:$0xff]
  %v885 = vld [vmem:[#allocation8 + $0x288] sm:$0xff]
  %v886 = vld [vmem:[#allocation8 + $0x2a0] sm:$0xff]
  %v887 = vld [vmem:[#allocation8 + $0x2a8] sm:$0xff]
  %v888 = vld [vmem:[%s1] sm:$0xf]
  %v889 = vld [vmem:[%s1 + $0x4] sm:$0xf]
  %v890 = vld [vmem:[%s1 + $0x8] sm:$0xf]
  %v891 = vld [vmem:[%s1 + $0xc] sm:$0xf]
  %v892 = vld [vmem:[%s1 + $0x10] sm:$0xf]
  %v893 = vld [vmem:[%s1 + $0x14] sm:$0xf]
  %v894 = vld [vmem:[%s1 + $0x18] sm:$0xf]
  %v895 = vld [vmem:[%s1 + $0x1c] sm:$0xf]
  %v896 = vld [vmem:[%s1 + $0x20] sm:$0xf]
  %v897 = vld [vmem:[%s1 + $0x24] sm:$0xf]
  %v898 = vld [vmem:[%s1 + $0x28] sm:$0xf]
  %v899 = vld [vmem:[%s1 + $0x2c] sm:$0xf]
  %v900 = vld [vmem:[%s1 + $0x30] sm:$0xf]
  %v901 = vld [vmem:[%s1 + $0x34] sm:$0xf]
  %v902 = vld [vmem:[%s1 + $0x38] sm:$0xf]
  %v903 = vld [vmem:[%s1 + $0x3c] sm:$0xf]
  %v904 = vld [vmem:[%s1 + $0x40] sm:$0xf]
  %v905 = vld [vmem:[%s1 + $0x44] sm:$0xf]
  %v906 = vld [vmem:[%s1 + $0x48] sm:$0xf]
  %v907 = vld [vmem:[%s1 + $0x4c] sm:$0xf]
  %v908 = vld [vmem:[%s1 + $0x50] sm:$0xf]
  %v909 = vld [vmem:[%s1 + $0x54] sm:$0xf]
  %v910 = vld [vmem:[%s1 + $0x58] sm:$0xf]
  %v911 = vld [vmem:[%s1 + $0x5c] sm:$0xf]
  %v912 = vld [vmem:[%s1 + $0x60] sm:$0xf]
  %v913 = vld [vmem:[%s1 + $0x64] sm:$0xf]
  %v914 = vld [vmem:[%s1 + $0x68] sm:$0xf]
  %v915 = vld [vmem:[%s1 + $0x6c] sm:$0xf]
  %v916 = vld [vmem:[%s1 + $0x70] sm:$0xf]
  %v917 = vld [vmem:[%s1 + $0x74] sm:$0xf]
  %v918 = vld [vmem:[%s1 + $0x78] sm:$0xf]
  %v919 = vld [vmem:[%s1 + $0x7c] sm:$0xf]
  %v920 = vld [vmem:[%s1 + $0x80] sm:$0xf]
  %v921 = vld [vmem:[%s1 + $0x84] sm:$0xf]
  %v922 = vld [vmem:[%s1 + $0x88] sm:$0xf]
  %v923 = vld [vmem:[%s1 + $0x8c] sm:$0xf]
  %v924 = vld [vmem:[%s1 + $0x90] sm:$0xf]
  %v925 = vld [vmem:[%s1 + $0x94] sm:$0xf]
  %v926 = vld [vmem:[%s1 + $0x98] sm:$0xf]
  %v927 = vld [vmem:[%s1 + $0x9c] sm:$0xf]
  %v928 = vld [vmem:[%s1 + $0xa0] sm:$0xf]
  %v929 = vld [vmem:[%s1 + $0xa4] sm:$0xf]
  %v930 = vld [vmem:[%s1 + $0xa8] sm:$0xf]
  %v931 = vld [vmem:[%s1 + $0xac] sm:$0xf]
  %v932 = vld [vmem:[%s1 + $0xb0] sm:$0xf]
  %v933 = vld [vmem:[%s1 + $0xb4] sm:$0xf]
  %v934 = vld [vmem:[%s1 + $0xb8] sm:$0xf]
  %v935 = vld [vmem:[%s1 + $0xbc] sm:$0xf]
  %v936 = vld [vmem:[%s1 + $0xc0] sm:$0xf]
  %v937 = vld [vmem:[%s1 + $0xc4] sm:$0xf]
  %v938 = vld [vmem:[%s1 + $0xc8] sm:$0xf]
  %v939 = vld [vmem:[%s1 + $0xcc] sm:$0xf]
  %v940 = vld [vmem:[%s1 + $0xd0] sm:$0xf]
  %v941 = vld [vmem:[%s1 + $0xd4] sm:$0xf]
  %v942 = vld [vmem:[%s1 + $0xd8] sm:$0xf]
  %v943 = vld [vmem:[%s1 + $0xdc] sm:$0xf]
  %v944 = vld [vmem:[%s1 + $0xe0] sm:$0xf]
  %v945 = vld [vmem:[%s1 + $0xe4] sm:$0xf]
  %v946 = vld [vmem:[%s1 + $0xe8] sm:$0xf]
  %v947 = vld [vmem:[%s1 + $0xec] sm:$0xf]
  %v948 = vld [vmem:[%s1 + $0xf0] sm:$0xf]
  %v949 = vld [vmem:[%s1 + $0xf4] sm:$0xf]
  %v950 = vld [vmem:[%s1 + $0xf8] sm:$0xf]
  %v951 = vld [vmem:[%s1 + $0xfc] sm:$0xf]
  %v996 = vunpack.c.l.b16 %v844
  %v997 = vunpack.c.h.b16 %v844
  %v998 = vunpack.c.l.b16 %v845
  %v999 = vunpack.c.h.b16 %v845
  %v1000 = vunpack.c.l.b16 %v846
  %v1001 = vunpack.c.h.b16 %v846
  %v1002 = vunpack.c.l.b16 %v847
  %v1003 = vunpack.c.h.b16 %v847
  %v1004 = vunpack.c.l.b16 %v848
  %v1005 = vunpack.c.h.b16 %v848
  %v1006 = vunpack.c.l.b16 %v849
  %v1007 = vunpack.c.h.b16 %v849
  %v1008 = vunpack.c.l.b16 %v850
  %v1009 = vunpack.c.h.b16 %v850
  %v1010 = vunpack.c.l.b16 %v851
  %v1011 = vunpack.c.h.b16 %v851
  %v1012 = vunpack.c.l.b16 %v852
  %v1013 = vunpack.c.h.b16 %v852
  %v1014 = vunpack.c.l.b16 %v853
  %v1015 = vunpack.c.h.b16 %v853
  %v1016 = vunpack.c.l.b16 %v854
  %v1017 = vunpack.c.h.b16 %v854
  %v1018 = vunpack.c.l.b16 %v855
  %v1019 = vunpack.c.h.b16 %v855
  %v1020 = vunpack.c.l.b16 %v856
  %v1021 = vunpack.c.h.b16 %v856
  %v1022 = vunpack.c.l.b16 %v857
  %v1023 = vunpack.c.h.b16 %v857
  %v1024 = vunpack.c.l.b16 %v858
  %v1025 = vunpack.c.h.b16 %v858
  %v1026 = vunpack.c.l.b16 %v859
  %v1027 = vunpack.c.h.b16 %v859
  %v1028 = vunpack.c.l.b16 %v860
  %v1029 = vunpack.c.h.b16 %v860
  %v1030 = vunpack.c.l.b16 %v861
  %v1031 = vunpack.c.h.b16 %v861
  %v1032 = vunpack.c.l.b16 %v862
  %v1033 = vunpack.c.h.b16 %v862
  %v1034 = vunpack.c.l.b16 %v863
  %v1035 = vunpack.c.h.b16 %v863
  %v1036 = vunpack.c.l.b16 %v864
  %v1037 = vunpack.c.h.b16 %v864
  %v1038 = vunpack.c.l.b16 %v865
  %v1039 = vunpack.c.h.b16 %v865
  %v1040 = vunpack.c.l.b16 %v866
  %v1041 = vunpack.c.h.b16 %v866
  %v1042 = vunpack.c.l.b16 %v867
  %v1043 = vunpack.c.h.b16 %v867
  %v1044 = vunpack.c.l.b16 %v868
  %v1045 = vunpack.c.h.b16 %v868
  %v1046 = vunpack.c.l.b16 %v869
  %v1047 = vunpack.c.h.b16 %v869
  %v1048 = vunpack.c.l.b16 %v870
  %v1049 = vunpack.c.h.b16 %v870
  %v1050 = vunpack.c.l.b16 %v871
  %v1051 = vunpack.c.h.b16 %v871
  %v1052 = vunpack.c.l.b16 %v872
  %v1053 = vunpack.c.h.b16 %v872
  %v1054 = vunpack.c.l.b16 %v873
  %v1055 = vunpack.c.h.b16 %v873
  %v1056 = vunpack.c.l.b16 %v874
  %v1057 = vunpack.c.h.b16 %v874
  %v1058 = vunpack.c.l.b16 %v875
  %v1059 = vunpack.c.h.b16 %v875
  %v1060 = vunpack.c.l.b16 %v876
  %v1061 = vunpack.c.h.b16 %v876
  %v1062 = vunpack.c.l.b16 %v877
  %v1063 = vunpack.c.h.b16 %v877
  %v1064 = vunpack.c.l.b16 %v878
  %v1065 = vunpack.c.h.b16 %v878
  %v1066 = vunpack.c.l.b16 %v879
  %v1067 = vunpack.c.h.b16 %v879
  %v1068 = vunpack.c.l.b16 %v880
  %v1069 = vunpack.c.h.b16 %v880
  %v1070 = vunpack.c.l.b16 %v881
  %v1071 = vunpack.c.h.b16 %v881
  %v1072 = vunpack.c.l.b16 %v882
  %v1073 = vunpack.c.h.b16 %v882
  %v1074 = vunpack.c.l.b16 %v883
  %v1075 = vunpack.c.h.b16 %v883
  %v1076 = vunpack.c.l.b16 %v884
  %v1077 = vunpack.c.h.b16 %v884
  %v1078 = vunpack.c.l.b16 %v885
  %v1079 = vunpack.c.h.b16 %v885
  %v1080 = vunpack.c.l.b16 %v886
  %v1081 = vunpack.c.h.b16 %v886
  %v1082 = vunpack.c.l.b16 %v887
  %v1083 = vunpack.c.h.b16 %v887
  %v1084 = vpack.c.b16 %v1000, %v996
  %v1085 = vpack.c.b16 %v1001, %v997
  %v1086 = vpack.c.b16 %v1002, %v998
  %v1087 = vpack.c.b16 %v1003, %v999
  %v1088 = vpack.c.b16 %v1008, %v1004
  %v1089 = vpack.c.b16 %v1009, %v1005
  %v1090 = vpack.c.b16 %v1010, %v1006
  %v1091 = vpack.c.b16 %v1011, %v1007
  %v1092 = vpack.c.b16 %v1016, %v1012
  %v1093 = vpack.c.b16 %v1017, %v1013
  %v1094 = vpack.c.b16 %v1018, %v1014
  %v1095 = vpack.c.b16 %v1019, %v1015
  %v1096 = vpack.c.b16 %v1024, %v1020
  %v1097 = vpack.c.b16 %v1025, %v1021
  %v1098 = vpack.c.b16 %v1026, %v1022
  %v1099 = vpack.c.b16 %v1027, %v1023
  %v1100 = vpack.c.b16 %v1032, %v1028
  %v1101 = vpack.c.b16 %v1033, %v1029
  %v1102 = vpack.c.b16 %v1034, %v1030
  %v1103 = vpack.c.b16 %v1035, %v1031
  %v1104 = vpack.c.b16 %v1040, %v1036
  %v1105 = vpack.c.b16 %v1041, %v1037
  %v1106 = vpack.c.b16 %v1042, %v1038
  %v1107 = vpack.c.b16 %v1043, %v1039
  %v1108 = vpack.c.b16 %v1048, %v1044
  %v1109 = vpack.c.b16 %v1049, %v1045
  %v1110 = vpack.c.b16 %v1050, %v1046
  %v1111 = vpack.c.b16 %v1051, %v1047
  %v1112 = vpack.c.b16 %v1056, %v1052
  %v1113 = vpack.c.b16 %v1057, %v1053
  %v1114 = vpack.c.b16 %v1058, %v1054
  %v1115 = vpack.c.b16 %v1059, %v1055
  %v1116 = vpack.c.b16 %v1064, %v1060
  %v1117 = vpack.c.b16 %v1065, %v1061
  %v1118 = vpack.c.b16 %v1066, %v1062
  %v1119 = vpack.c.b16 %v1067, %v1063
  %v1120 = vpack.c.b16 %v1072, %v1068
  %v1121 = vpack.c.b16 %v1073, %v1069
  %v1122 = vpack.c.b16 %v1074, %v1070
  %v1123 = vpack.c.b16 %v1075, %v1071
  %v1124 = vpack.c.b16 %v1080, %v1076
  %v1125 = vpack.c.b16 %v1081, %v1077
  %v1126 = vpack.c.b16 %v1082, %v1078
  %v1127 = vpack.c.b16 %v1083, %v1079
  %v1236 = vunpack.c.l.b16 %v888
  %v1237 = vunpack.c.l.b16 %v889
  %v1238 = vunpack.c.l.b16 %v890
  %v1239 = vunpack.c.l.b16 %v891
  %v1240 = vunpack.c.l.b16 %v892
  %v1241 = vunpack.c.l.b16 %v893
  %v1242 = vunpack.c.l.b16 %v894
  %v1243 = vunpack.c.l.b16 %v895
  %v1244 = vunpack.c.l.b16 %v896
  %v1245 = vunpack.c.l.b16 %v897
  %v1246 = vunpack.c.l.b16 %v898
  %v1247 = vunpack.c.l.b16 %v899
  %v1248 = vunpack.c.l.b16 %v900
  %v1249 = vunpack.c.l.b16 %v901
  %v1250 = vunpack.c.l.b16 %v902
  %v1251 = vunpack.c.l.b16 %v903
  %v1252 = vunpack.c.l.b16 %v904
  %v1253 = vunpack.c.l.b16 %v905
  %v1254 = vunpack.c.l.b16 %v906
  %v1255 = vunpack.c.l.b16 %v907
  %v1256 = vunpack.c.l.b16 %v908
  %v1257 = vunpack.c.l.b16 %v909
  %v1258 = vunpack.c.l.b16 %v910
  %v1259 = vunpack.c.l.b16 %v911
  %v1260 = vunpack.c.l.b16 %v912
  %v1261 = vunpack.c.l.b16 %v913
  %v1262 = vunpack.c.l.b16 %v914
  %v1263 = vunpack.c.l.b16 %v915
  %v1264 = vunpack.c.l.b16 %v916
  %v1265 = vunpack.c.l.b16 %v917
  %v1266 = vunpack.c.l.b16 %v918
  %v1267 = vunpack.c.l.b16 %v919
  %v1268 = vunpack.c.l.b16 %v920
  %v1269 = vunpack.c.l.b16 %v921
  %v1270 = vunpack.c.l.b16 %v922
  %v1271 = vunpack.c.l.b16 %v923
  %v1272 = vunpack.c.l.b16 %v924
  %v1273 = vunpack.c.l.b16 %v925
  %v1274 = vunpack.c.l.b16 %v926
  %v1275 = vunpack.c.l.b16 %v927
  %v1276 = vunpack.c.l.b16 %v928
  %v1277 = vunpack.c.l.b16 %v929
  %v1278 = vunpack.c.l.b16 %v930
  %v1279 = vunpack.c.l.b16 %v931
  %v1280 = vunpack.c.l.b16 %v932
  %v1281 = vunpack.c.l.b16 %v933
  %v1282 = vunpack.c.l.b16 %v934
  %v1283 = vunpack.c.l.b16 %v935
  %v1284 = vunpack.c.l.b16 %v936
  %v1285 = vunpack.c.l.b16 %v937
  %v1286 = vunpack.c.l.b16 %v938
  %v1287 = vunpack.c.l.b16 %v939
  %v1288 = vunpack.c.l.b16 %v940
  %v1289 = vunpack.c.l.b16 %v941
  %v1290 = vunpack.c.l.b16 %v942
  %v1291 = vunpack.c.l.b16 %v943
  %v1292 = vunpack.c.l.b16 %v944
  %v1293 = vunpack.c.l.b16 %v945
  %v1294 = vunpack.c.l.b16 %v946
  %v1295 = vunpack.c.l.b16 %v947
  %v1296 = vunpack.c.l.b16 %v948
  %v1297 = vunpack.c.l.b16 %v949
  %v1298 = vunpack.c.l.b16 %v950
  %v1299 = vunpack.c.l.b16 %v951
  %v1300 = vpack.c.b16 %v1237, %v1236
  %v1301 = vpack.c.b16 %v1239, %v1238
  %v1302 = vpack.c.b16 %v1241, %v1240
  %v1303 = vpack.c.b16 %v1243, %v1242
  %v1304 = vpack.c.b16 %v1245, %v1244
  %v1305 = vpack.c.b16 %v1247, %v1246
  %v1306 = vpack.c.b16 %v1249, %v1248
  %v1307 = vpack.c.b16 %v1251, %v1250
  %v1308 = vpack.c.b16 %v1253, %v1252
  %v1309 = vpack.c.b16 %v1255, %v1254
  %v1310 = vpack.c.b16 %v1257, %v1256
  %v1311 = vpack.c.b16 %v1259, %v1258
  %v1312 = vpack.c.b16 %v1261, %v1260
  %v1313 = vpack.c.b16 %v1263, %v1262
  %v1314 = vpack.c.b16 %v1265, %v1264
  %v1315 = vpack.c.b16 %v1267, %v1266
  %v1316 = vpack.c.b16 %v1269, %v1268
  %v1317 = vpack.c.b16 %v1271, %v1270
  %v1318 = vpack.c.b16 %v1273, %v1272
  %v1319 = vpack.c.b16 %v1275, %v1274
  %v1320 = vpack.c.b16 %v1277, %v1276
  %v1321 = vpack.c.b16 %v1279, %v1278
  %v1322 = vpack.c.b16 %v1281, %v1280
  %v1323 = vpack.c.b16 %v1283, %v1282
  %v1324 = vpack.c.b16 %v1285, %v1284
  %v1325 = vpack.c.b16 %v1287, %v1286
  %v1326 = vpack.c.b16 %v1289, %v1288
  %v1327 = vpack.c.b16 %v1291, %v1290
  %v1328 = vpack.c.b16 %v1293, %v1292
  %v1329 = vpack.c.b16 %v1295, %v1294
  %v1330 = vpack.c.b16 %v1297, %v1296
  %v1331 = vpack.c.b16 %v1299, %v1298
  %1364 = vmatprep.subr.bf16.mxu0 0
  %1365 = vmatpush1.bf16.msra.mxu0 %v1307
  %1366 = vmatprep.subr.bf16.mxu0 0
  %1367 = vmatpush1.bf16.msra.mxu0 %v1306
  %1368 = vmatprep.subr.bf16.mxu0 0
  %1369 = vmatpush1.bf16.msra.mxu0 %v1305
  %1370 = vmatprep.subr.bf16.mxu0 0
  %1371 = vmatpush1.bf16.msra.mxu0 %v1304
  %1372 = vmatprep.subr.bf16.mxu0 0
  %1373 = vmatpush1.bf16.msra.mxu0 %v1303
  %1374 = vmatprep.subr.bf16.mxu0 0
  %1375 = vmatpush1.bf16.msra.mxu0 %v1302
  %1376 = vmatprep.subr.bf16.mxu0 0
  %1377 = vmatpush1.bf16.msra.mxu0 %v1301
  %1378 = vmatprep.subr.bf16.mxu0 0
  %1379 = vmatpush1.bf16.msra.mxu0 %v1300
  %1380 = vmatprep.subr.bf16.mxu0 0
  %1381 = vmatpush2.bf16.msra.mxu0 %v1315
  %1382 = vmatprep.subr.bf16.mxu0 0
  %1383 = vmatpush2.bf16.msra.mxu0 %v1314
  %1384 = vmatprep.subr.bf16.mxu0 0
  %1385 = vmatpush2.bf16.msra.mxu0 %v1313
  %1386 = vmatprep.subr.bf16.mxu0 0
  %1387 = vmatpush2.bf16.msra.mxu0 %v1312
  %1388 = vmatprep.subr.bf16.mxu0 0
  %1389 = vmatpush2.bf16.msra.mxu0 %v1311
  %1390 = vmatprep.subr.bf16.mxu0 0
  %1391 = vmatpush2.bf16.msra.mxu0 %v1310
  %1392 = vmatprep.subr.bf16.mxu0 0
  %1393 = vmatpush2.bf16.msra.mxu0 %v1309
  %1394 = vmatprep.subr.bf16.mxu0 0
  %1395 = vmatpush2.bf16.msra.mxu0 %v1308
  %1396 = vmatprep.mubr.bf16.mxu0 %v1085
  %1397 = vmatmul.mubr.bf16.gmra.mxu0 %v1084
  %v1398 = vpop.f32.mrf.mxu0
  %v1399 = vadd.f32 0.0, %v1398
  %v1400 = vpop.f32.mrf.mxu0
  %v1401 = vpop.f32.mrf.mxu0
  %v1402 = vadd.f32 0.0, %v1401
  %v1403 = vpop.f32.mrf.mxu0
  %1404 = vmatprep.mubr.bf16.mxu0 %v1089
  %1405 = vmatmul.mubr.bf16.gmra.mxu0 %v1088
  %v1406 = vpop.f32.mrf.mxu0
  %v1407 = vadd.f32 0.0, %v1406
  %v1408 = vpop.f32.mrf.mxu0
  %v1409 = vpop.f32.mrf.mxu0
  %v1410 = vadd.f32 0.0, %v1409
  %v1411 = vpop.f32.mrf.mxu0
  %1412 = vmatprep.mubr.bf16.mxu0 %v1093
  %1413 = vmatmul.mubr.bf16.gmra.mxu0 %v1092
  %v1414 = vpop.f32.mrf.mxu0
  %v1415 = vadd.f32 0.0, %v1414
  %v1416 = vpop.f32.mrf.mxu0
  %v1417 = vpop.f32.mrf.mxu0
  %v1418 = vadd.f32 0.0, %v1417
  %v1419 = vpop.f32.mrf.mxu0
  %1420 = vmatprep.mubr.bf16.mxu0 %v1097
  %1421 = vmatmul.mubr.bf16.gmra.mxu0 %v1096
  %v1422 = vpop.f32.mrf.mxu0
  %v1423 = vadd.f32 0.0, %v1422
  %v1424 = vpop.f32.mrf.mxu0
  %v1425 = vpop.f32.mrf.mxu0
  %v1426 = vadd.f32 0.0, %v1425
  %v1427 = vpop.f32.mrf.mxu0
  %1428 = vmatprep.mubr.bf16.mxu0 %v1101
  %1429 = vmatmul.mubr.bf16.gmra.mxu0 %v1100
  %v1430 = vpop.f32.mrf.mxu0
  %v1431 = vadd.f32 0.0, %v1430
  %v1432 = vpop.f32.mrf.mxu0
  %v1433 = vpop.f32.mrf.mxu0
  %v1434 = vadd.f32 0.0, %v1433
  %v1435 = vpop.f32.mrf.mxu0
  %1436 = vmatprep.mubr.bf16.mxu0 %v1105
  %1437 = vmatmul.mubr.bf16.gmra.mxu0 %v1104
  %v1438 = vpop.f32.mrf.mxu0
  %v1439 = vadd.f32 0.0, %v1438
  %v1440 = vpop.f32.mrf.mxu0
  %v1441 = vpop.f32.mrf.mxu0
  %v1442 = vadd.f32 0.0, %v1441
  %v1443 = vpop.f32.mrf.mxu0
  %1444 = vmatprep.mubr.bf16.mxu0 %v1109
  %1445 = vmatmul.mubr.bf16.gmra.mxu0 %v1108
  %v1446 = vpop.f32.mrf.mxu0
  %v1447 = vadd.f32 0.0, %v1446
  %v1448 = vpop.f32.mrf.mxu0
  %v1449 = vpop.f32.mrf.mxu0
  %v1450 = vadd.f32 0.0, %v1449
  %v1451 = vpop.f32.mrf.mxu0
  %1452 = vmatprep.mubr.bf16.mxu0 %v1113
  %1453 = vmatmul.mubr.bf16.gmra.mxu0 %v1112
  %v1454 = vpop.f32.mrf.mxu0
  %v1455 = vadd.f32 0.0, %v1454
  %v1456 = vpop.f32.mrf.mxu0
  %v1457 = vpop.f32.mrf.mxu0
  %v1458 = vadd.f32 0.0, %v1457
  %v1459 = vpop.f32.mrf.mxu0
  %1460 = vmatprep.mubr.bf16.mxu0 %v1117
  %1461 = vmatmul.mubr.bf16.gmra.mxu0 %v1116
  %v1462 = vpop.f32.mrf.mxu0
  %v1463 = vadd.f32 0.0, %v1462
  %v1464 = vpop.f32.mrf.mxu0
  %v1465 = vpop.f32.mrf.mxu0
  %v1466 = vadd.f32 0.0, %v1465
  %v1467 = vpop.f32.mrf.mxu0
  %1468 = vmatprep.mubr.bf16.mxu0 %v1121
  %1469 = vmatmul.mubr.bf16.gmra.mxu0 %v1120
  %v1470 = vpop.f32.mrf.mxu0
  %v1471 = vadd.f32 0.0, %v1470
  %v1472 = vpop.f32.mrf.mxu0
  %v1473 = vpop.f32.mrf.mxu0
  %v1474 = vadd.f32 0.0, %v1473
  %v1475 = vpop.f32.mrf.mxu0
  %1476 = vmatprep.mubr.bf16.mxu0 %v1125
  %1477 = vmatmul.mubr.bf16.gmra.mxu0 %v1124
  %v1478 = vpop.f32.mrf.mxu0
  %v1479 = vadd.f32 0.0, %v1478
  %v1480 = vpop.f32.mrf.mxu0
  %v1481 = vpop.f32.mrf.mxu0
  %v1482 = vadd.f32 0.0, %v1481
  %v1483 = vpop.f32.mrf.mxu0
  %1484 = vdwg.mxu0
  %1485 = vmatprep.subr.bf16.mxu0 0
  %1486 = vmatpush1.bf16.msra.mxu0 %v1323
  %1487 = vmatprep.subr.bf16.mxu0 0
  %1488 = vmatpush1.bf16.msra.mxu0 %v1322
  %1489 = vmatprep.subr.bf16.mxu0 0
  %1490 = vmatpush1.bf16.msra.mxu0 %v1321
  %1491 = vmatprep.subr.bf16.mxu0 0
  %1492 = vmatpush1.bf16.msra.mxu0 %v1320
  %1493 = vmatprep.subr.bf16.mxu0 0
  %1494 = vmatpush1.bf16.msra.mxu0 %v1319
  %1495 = vmatprep.subr.bf16.mxu0 0
  %1496 = vmatpush1.bf16.msra.mxu0 %v1318
  %1497 = vmatprep.subr.bf16.mxu0 0
  %1498 = vmatpush1.bf16.msra.mxu0 %v1317
  %1499 = vmatprep.subr.bf16.mxu0 0
  %1500 = vmatpush1.bf16.msra.mxu0 %v1316
  %1501 = vmatprep.subr.bf16.mxu0 0
  %1502 = vmatpush2.bf16.msra.mxu0 %v1331
  %1503 = vmatprep.subr.bf16.mxu0 0
  %1504 = vmatpush2.bf16.msra.mxu0 %v1330
  %1505 = vmatprep.subr.bf16.mxu0 0
  %1506 = vmatpush2.bf16.msra.mxu0 %v1329
  %1507 = vmatprep.subr.bf16.mxu0 0
  %1508 = vmatpush2.bf16.msra.mxu0 %v1328
  %1509 = vmatprep.subr.bf16.mxu0 0
  %1510 = vmatpush2.bf16.msra.mxu0 %v1327
  %1511 = vmatprep.subr.bf16.mxu0 0
  %1512 = vmatpush2.bf16.msra.mxu0 %v1326
  %1513 = vmatprep.subr.bf16.mxu0 0
  %1514 = vmatpush2.bf16.msra.mxu0 %v1325
  %1515 = vmatprep.subr.bf16.mxu0 0
  %1516 = vmatpush2.bf16.msra.mxu0 %v1324
  %1517 = vmatprep.mubr.bf16.mxu0 %v1087
  %1518 = vmatmul.mubr.bf16.gmra.mxu0 %v1086
  %v1519 = vpop.f32.mrf.mxu0
  %v1520 = vadd.f32 %v1399, %v1519
  %v1521 = vpop.f32.mrf.mxu0
  %v1522 = vpop.f32.mrf.mxu0
  %v1523 = vadd.f32 %v1402, %v1522
  %v1524 = vpop.f32.mrf.mxu0
  %1525 = vmatprep.mubr.bf16.mxu0 %v1091
  %1526 = vmatmul.mubr.bf16.gmra.mxu0 %v1090
  %v1527 = vpop.f32.mrf.mxu0
  %v1528 = vadd.f32 %v1407, %v1527
  %v1529 = vpop.f32.mrf.mxu0
  %v1530 = vpop.f32.mrf.mxu0
  %v1531 = vadd.f32 %v1410, %v1530
  %v1532 = vpop.f32.mrf.mxu0
  %1533 = vmatprep.mubr.bf16.mxu0 %v1095
  %1534 = vmatmul.mubr.bf16.gmra.mxu0 %v1094
  %v1535 = vpop.f32.mrf.mxu0
  %v1536 = vadd.f32 %v1415, %v1535
  %v1537 = vpop.f32.mrf.mxu0
  %v1538 = vpop.f32.mrf.mxu0
  %v1539 = vadd.f32 %v1418, %v1538
  %v1540 = vpop.f32.mrf.mxu0
  %1541 = vmatprep.mubr.bf16.mxu0 %v1099
  %1542 = vmatmul.mubr.bf16.gmra.mxu0 %v1098
  %v1543 = vpop.f32.mrf.mxu0
  %v1544 = vadd.f32 %v1423, %v1543
  %v1545 = vpop.f32.mrf.mxu0
  %v1546 = vpop.f32.mrf.mxu0
  %v1547 = vadd.f32 %v1426, %v1546
  %v1548 = vpop.f32.mrf.mxu0
  %1549 = vmatprep.mubr.bf16.mxu0 %v1103
  %1550 = vmatmul.mubr.bf16.gmra.mxu0 %v1102
  %v1551 = vpop.f32.mrf.mxu0
  %v1552 = vadd.f32 %v1431, %v1551
  %v1553 = vpop.f32.mrf.mxu0
  %v1554 = vpop.f32.mrf.mxu0
  %v1555 = vadd.f32 %v1434, %v1554
  %v1556 = vpop.f32.mrf.mxu0
  %1557 = vmatprep.mubr.bf16.mxu0 %v1107
  %1558 = vmatmul.mubr.bf16.gmra.mxu0 %v1106
  %v1559 = vpop.f32.mrf.mxu0
  %v1560 = vadd.f32 %v1439, %v1559
  %v1561 = vpop.f32.mrf.mxu0
  %v1562 = vpop.f32.mrf.mxu0
  %v1563 = vadd.f32 %v1442, %v1562
  %v1564 = vpop.f32.mrf.mxu0
  %1565 = vmatprep.mubr.bf16.mxu0 %v1111
  %1566 = vmatmul.mubr.bf16.gmra.mxu0 %v1110
  %v1567 = vpop.f32.mrf.mxu0
  %v1568 = vadd.f32 %v1447, %v1567
  %v1569 = vpop.f32.mrf.mxu0
  %v1570 = vpop.f32.mrf.mxu0
  %v1571 = vadd.f32 %v1450, %v1570
  %v1572 = vpop.f32.mrf.mxu0
  %1573 = vmatprep.mubr.bf16.mxu0 %v1115
  %1574 = vmatmul.mubr.bf16.gmra.mxu0 %v1114
  %v1575 = vpop.f32.mrf.mxu0
  %v1576 = vadd.f32 %v1455, %v1575
  %v1577 = vpop.f32.mrf.mxu0
  %v1578 = vpop.f32.mrf.mxu0
  %v1579 = vadd.f32 %v1458, %v1578
  %v1580 = vpop.f32.mrf.mxu0
  %1581 = vmatprep.mubr.bf16.mxu0 %v1119
  %1582 = vmatmul.mubr.bf16.gmra.mxu0 %v1118
  %v1583 = vpop.f32.mrf.mxu0
  %v1584 = vadd.f32 %v1463, %v1583
  %v1585 = vpop.f32.mrf.mxu0
  %v1586 = vpop.f32.mrf.mxu0
  %v1587 = vadd.f32 %v1466, %v1586
  %v1588 = vpop.f32.mrf.mxu0
  %1589 = vmatprep.mubr.bf16.mxu0 %v1123
  %1590 = vmatmul.mubr.bf16.gmra.mxu0 %v1122
  %v1591 = vpop.f32.mrf.mxu0
  %v1592 = vadd.f32 %v1471, %v1591
  %v1593 = vpop.f32.mrf.mxu0
  %v1594 = vpop.f32.mrf.mxu0
  %v1595 = vadd.f32 %v1474, %v1594
  %v1596 = vpop.f32.mrf.mxu0
  %1597 = vmatprep.mubr.bf16.mxu0 %v1127
  %1598 = vmatmul.mubr.bf16.gmra.mxu0 %v1126
  %v1599 = vpop.f32.mrf.mxu0
  %v1600 = vadd.f32 %v1479, %v1599
  %v1601 = vpop.f32.mrf.mxu0
  %v1602 = vpop.f32.mrf.mxu0
  %v1603 = vadd.f32 %v1482, %v1602
  %v1604 = vpop.f32.mrf.mxu0
  %1605 = vdwg.mxu0
  %s1606 = scalar_lea.vmem %s1, 256
  %v1607 = vld [vmem:[%s1606] sm:$0xf]
  %v1608 = vld [vmem:[%s1606 + $0x4] sm:$0xf]
  %v1609 = vld [vmem:[%s1606 + $0x8] sm:$0xf]
  %v1610 = vld [vmem:[%s1606 + $0xc] sm:$0xf]
  %v1611 = vld [vmem:[%s1606 + $0x10] sm:$0xf]
  %v1612 = vld [vmem:[%s1606 + $0x14] sm:$0xf]
  %v1613 = vld [vmem:[%s1606 + $0x18] sm:$0xf]
  %v1614 = vld [vmem:[%s1606 + $0x1c] sm:$0xf]
  %v1615 = vld [vmem:[%s1606 + $0x20] sm:$0xf]
  %v1616 = vld [vmem:[%s1606 + $0x24] sm:$0xf]
  %v1617 = vld [vmem:[%s1606 + $0x28] sm:$0xf]
  %v1618 = vld [vmem:[%s1606 + $0x2c] sm:$0xf]
  %v1619 = vld [vmem:[%s1606 + $0x30] sm:$0xf]
  %v1620 = vld [vmem:[%s1606 + $0x34] sm:$0xf]
  %v1621 = vld [vmem:[%s1606 + $0x38] sm:$0xf]
  %v1622 = vld [vmem:[%s1606 + $0x3c] sm:$0xf]
  %v1623 = vld [vmem:[%s1606 + $0x40] sm:$0xf]
  %v1624 = vld [vmem:[%s1606 + $0x44] sm:$0xf]
  %v1625 = vld [vmem:[%s1606 + $0x48] sm:$0xf]
  %v1626 = vld [vmem:[%s1606 + $0x4c] sm:$0xf]
  %v1627 = vld [vmem:[%s1606 + $0x50] sm:$0xf]
  %v1628 = vld [vmem:[%s1606 + $0x54] sm:$0xf]
  %v1629 = vld [vmem:[%s1606 + $0x58] sm:$0xf]
  %v1630 = vld [vmem:[%s1606 + $0x5c] sm:$0xf]
  %v1631 = vld [vmem:[%s1606 + $0x60] sm:$0xf]
  %v1632 = vld [vmem:[%s1606 + $0x64] sm:$0xf]
  %v1633 = vld [vmem:[%s1606 + $0x68] sm:$0xf]
  %v1634 = vld [vmem:[%s1606 + $0x6c] sm:$0xf]
  %v1635 = vld [vmem:[%s1606 + $0x70] sm:$0xf]
  %v1636 = vld [vmem:[%s1606 + $0x74] sm:$0xf]
  %v1637 = vld [vmem:[%s1606 + $0x78] sm:$0xf]
  %v1638 = vld [vmem:[%s1606 + $0x7c] sm:$0xf]
  %v1639 = vld [vmem:[%s1606 + $0x80] sm:$0xf]
  %v1640 = vld [vmem:[%s1606 + $0x84] sm:$0xf]
  %v1641 = vld [vmem:[%s1606 + $0x88] sm:$0xf]
  %v1642 = vld [vmem:[%s1606 + $0x8c] sm:$0xf]
  %v1643 = vld [vmem:[%s1606 + $0x90] sm:$0xf]
  %v1644 = vld [vmem:[%s1606 + $0x94] sm:$0xf]
  %v1645 = vld [vmem:[%s1606 + $0x98] sm:$0xf]
  %v1646 = vld [vmem:[%s1606 + $0x9c] sm:$0xf]
  %v1647 = vld [vmem:[%s1606 + $0xa0] sm:$0xf]
  %v1648 = vld [vmem:[%s1606 + $0xa4] sm:$0xf]
  %v1649 = vld [vmem:[%s1606 + $0xa8] sm:$0xf]
  %v1650 = vld [vmem:[%s1606 + $0xac] sm:$0xf]
  %v1651 = vld [vmem:[%s1606 + $0xb0] sm:$0xf]
  %v1652 = vld [vmem:[%s1606 + $0xb4] sm:$0xf]
  %v1653 = vld [vmem:[%s1606 + $0xb8] sm:$0xf]
  %v1654 = vld [vmem:[%s1606 + $0xbc] sm:$0xf]
  %v1655 = vld [vmem:[%s1606 + $0xc0] sm:$0xf]
  %v1656 = vld [vmem:[%s1606 + $0xc4] sm:$0xf]
  %v1657 = vld [vmem:[%s1606 + $0xc8] sm:$0xf]
  %v1658 = vld [vmem:[%s1606 + $0xcc] sm:$0xf]
  %v1659 = vld [vmem:[%s1606 + $0xd0] sm:$0xf]
  %v1660 = vld [vmem:[%s1606 + $0xd4] sm:$0xf]
  %v1661 = vld [vmem:[%s1606 + $0xd8] sm:$0xf]
  %v1662 = vld [vmem:[%s1606 + $0xdc] sm:$0xf]
  %v1663 = vld [vmem:[%s1606 + $0xe0] sm:$0xf]
  %v1664 = vld [vmem:[%s1606 + $0xe4] sm:$0xf]
  %v1665 = vld [vmem:[%s1606 + $0xe8] sm:$0xf]
  %v1666 = vld [vmem:[%s1606 + $0xec] sm:$0xf]
  %v1667 = vld [vmem:[%s1606 + $0xf0] sm:$0xf]
  %v1668 = vld [vmem:[%s1606 + $0xf4] sm:$0xf]
  %v1669 = vld [vmem:[%s1606 + $0xf8] sm:$0xf]
  %v1670 = vld [vmem:[%s1606 + $0xfc] sm:$0xf]
  %v1735 = vunpack.c.l.b16 %v1607
  %v1736 = vunpack.c.l.b16 %v1608
  %v1737 = vunpack.c.l.b16 %v1609
  %v1738 = vunpack.c.l.b16 %v1610
  %v1739 = vunpack.c.l.b16 %v1611
  %v1740 = vunpack.c.l.b16 %v1612
  %v1741 = vunpack.c.l.b16 %v1613
  %v1742 = vunpack.c.l.b16 %v1614
  %v1743 = vunpack.c.l.b16 %v1615
  %v1744 = vunpack.c.l.b16 %v1616
  %v1745 = vunpack.c.l.b16 %v1617
  %v1746 = vunpack.c.l.b16 %v1618
  %v1747 = vunpack.c.l.b16 %v1619
  %v1748 = vunpack.c.l.b16 %v1620
  %v1749 = vunpack.c.l.b16 %v1621
  %v1750 = vunpack.c.l.b16 %v1622
  %v1751 = vunpack.c.l.b16 %v1623
  %v1752 = vunpack.c.l.b16 %v1624
  %v1753 = vunpack.c.l.b16 %v1625
  %v1754 = vunpack.c.l.b16 %v1626
  %v1755 = vunpack.c.l.b16 %v1627
  %v1756 = vunpack.c.l.b16 %v1628
  %v1757 = vunpack.c.l.b16 %v1629
  %v1758 = vunpack.c.l.b16 %v1630
  %v1759 = vunpack.c.l.b16 %v1631
  %v1760 = vunpack.c.l.b16 %v1632
  %v1761 = vunpack.c.l.b16 %v1633
  %v1762 = vunpack.c.l.b16 %v1634
  %v1763 = vunpack.c.l.b16 %v1635
  %v1764 = vunpack.c.l.b16 %v1636
  %v1765 = vunpack.c.l.b16 %v1637
  %v1766 = vunpack.c.l.b16 %v1638
  %v1767 = vunpack.c.l.b16 %v1639
  %v1768 = vunpack.c.l.b16 %v1640
  %v1769 = vunpack.c.l.b16 %v1641
  %v1770 = vunpack.c.l.b16 %v1642
  %v1771 = vunpack.c.l.b16 %v1643
  %v1772 = vunpack.c.l.b16 %v1644
  %v1773 = vunpack.c.l.b16 %v1645
  %v1774 = vunpack.c.l.b16 %v1646
  %v1775 = vunpack.c.l.b16 %v1647
  %v1776 = vunpack.c.l.b16 %v1648
  %v1777 = vunpack.c.l.b16 %v1649
  %v1778 = vunpack.c.l.b16 %v1650
  %v1779 = vunpack.c.l.b16 %v1651
  %v1780 = vunpack.c.l.b16 %v1652
  %v1781 = vunpack.c.l.b16 %v1653
  %v1782 = vunpack.c.l.b16 %v1654
  %v1783 = vunpack.c.l.b16 %v1655
  %v1784 = vunpack.c.l.b16 %v1656
  %v1785 = vunpack.c.l.b16 %v1657
  %v1786 = vunpack.c.l.b16 %v1658
  %v1787 = vunpack.c.l.b16 %v1659
  %v1788 = vunpack.c.l.b16 %v1660
  %v1789 = vunpack.c.l.b16 %v1661
  %v1790 = vunpack.c.l.b16 %v1662
  %v1791 = vunpack.c.l.b16 %v1663
  %v1792 = vunpack.c.l.b16 %v1664
  %v1793 = vunpack.c.l.b16 %v1665
  %v1794 = vunpack.c.l.b16 %v1666
  %v1795 = vunpack.c.l.b16 %v1667
  %v1796 = vunpack.c.l.b16 %v1668
  %v1797 = vunpack.c.l.b16 %v1669
  %v1798 = vunpack.c.l.b16 %v1670
  %v1799 = vpack.c.b16 %v1736, %v1735
  %v1800 = vpack.c.b16 %v1738, %v1737
  %v1801 = vpack.c.b16 %v1740, %v1739
  %v1802 = vpack.c.b16 %v1742, %v1741
  %v1803 = vpack.c.b16 %v1744, %v1743
  %v1804 = vpack.c.b16 %v1746, %v1745
  %v1805 = vpack.c.b16 %v1748, %v1747
  %v1806 = vpack.c.b16 %v1750, %v1749
  %v1807 = vpack.c.b16 %v1752, %v1751
  %v1808 = vpack.c.b16 %v1754, %v1753
  %v1809 = vpack.c.b16 %v1756, %v1755
  %v1810 = vpack.c.b16 %v1758, %v1757
  %v1811 = vpack.c.b16 %v1760, %v1759
  %v1812 = vpack.c.b16 %v1762, %v1761
  %v1813 = vpack.c.b16 %v1764, %v1763
  %v1814 = vpack.c.b16 %v1766, %v1765
  %v1815 = vpack.c.b16 %v1768, %v1767
  %v1816 = vpack.c.b16 %v1770, %v1769
  %v1817 = vpack.c.b16 %v1772, %v1771
  %v1818 = vpack.c.b16 %v1774, %v1773
  %v1819 = vpack.c.b16 %v1776, %v1775
  %v1820 = vpack.c.b16 %v1778, %v1777
  %v1821 = vpack.c.b16 %v1780, %v1779
  %v1822 = vpack.c.b16 %v1782, %v1781
  %v1823 = vpack.c.b16 %v1784, %v1783
  %v1824 = vpack.c.b16 %v1786, %v1785
  %v1825 = vpack.c.b16 %v1788, %v1787
  %v1826 = vpack.c.b16 %v1790, %v1789
  %v1827 = vpack.c.b16 %v1792, %v1791
  %v1828 = vpack.c.b16 %v1794, %v1793
  %v1829 = vpack.c.b16 %v1796, %v1795
  %v1830 = vpack.c.b16 %v1798, %v1797
  %1863 = vmatprep.subr.bf16.mxu0 0
  %1864 = vmatpush1.bf16.msra.mxu0 %v1806
  %1865 = vmatprep.subr.bf16.mxu0 0
  %1866 = vmatpush1.bf16.msra.mxu0 %v1805
  %1867 = vmatprep.subr.bf16.mxu0 0
  %1868 = vmatpush1.bf16.msra.mxu0 %v1804
  %1869 = vmatprep.subr.bf16.mxu0 0
  %1870 = vmatpush1.bf16.msra.mxu0 %v1803
  %1871 = vmatprep.subr.bf16.mxu0 0
  %1872 = vmatpush1.bf16.msra.mxu0 %v1802
  %1873 = vmatprep.subr.bf16.mxu0 0
  %1874 = vmatpush1.bf16.msra.mxu0 %v1801
  %1875 = vmatprep.subr.bf16.mxu0 0
  %1876 = vmatpush1.bf16.msra.mxu0 %v1800
  %1877 = vmatprep.subr.bf16.mxu0 0
  %1878 = vmatpush1.bf16.msra.mxu0 %v1799
  %1879 = vmatprep.subr.bf16.mxu0 0
  %1880 = vmatpush2.bf16.msra.mxu0 %v1814
  %1881 = vmatprep.subr.bf16.mxu0 0
  %1882 = vmatpush2.bf16.msra.mxu0 %v1813
  %1883 = vmatprep.subr.bf16.mxu0 0
  %1884 = vmatpush2.bf16.msra.mxu0 %v1812
  %1885 = vmatprep.subr.bf16.mxu0 0
  %1886 = vmatpush2.bf16.msra.mxu0 %v1811
  %1887 = vmatprep.subr.bf16.mxu0 0
  %1888 = vmatpush2.bf16.msra.mxu0 %v1810
  %1889 = vmatprep.subr.bf16.mxu0 0
  %1890 = vmatpush2.bf16.msra.mxu0 %v1809
  %1891 = vmatprep.subr.bf16.mxu0 0
  %1892 = vmatpush2.bf16.msra.mxu0 %v1808
  %1893 = vmatprep.subr.bf16.mxu0 0
  %1894 = vmatpush2.bf16.msra.mxu0 %v1807
  %1895 = vmatprep.mubr.bf16.mxu0 %v1085
  %1896 = vmatmul.mubr.bf16.gmra.mxu0 %v1084
  %v1897 = vpop.f32.mrf.mxu0
  %v1898 = vadd.f32 0.0, %v1897
  %v1899 = vpop.f32.mrf.mxu0
  %v1900 = vpop.f32.mrf.mxu0
  %v1901 = vadd.f32 0.0, %v1900
  %v1902 = vpop.f32.mrf.mxu0
  %1903 = vmatprep.mubr.bf16.mxu0 %v1089
  %1904 = vmatmul.mubr.bf16.gmra.mxu0 %v1088
  %v1905 = vpop.f32.mrf.mxu0
  %v1906 = vadd.f32 0.0, %v1905
  %v1907 = vpop.f32.mrf.mxu0
  %v1908 = vpop.f32.mrf.mxu0
  %v1909 = vadd.f32 0.0, %v1908
  %v1910 = vpop.f32.mrf.mxu0
  %1911 = vmatprep.mubr.bf16.mxu0 %v1093
  %1912 = vmatmul.mubr.bf16.gmra.mxu0 %v1092
  %v1913 = vpop.f32.mrf.mxu0
  %v1914 = vadd.f32 0.0, %v1913
  %v1915 = vpop.f32.mrf.mxu0
  %v1916 = vpop.f32.mrf.mxu0
  %v1917 = vadd.f32 0.0, %v1916
  %v1918 = vpop.f32.mrf.mxu0
  %1919 = vmatprep.mubr.bf16.mxu0 %v1097
  %1920 = vmatmul.mubr.bf16.gmra.mxu0 %v1096
  %v1921 = vpop.f32.mrf.mxu0
  %v1922 = vadd.f32 0.0, %v1921
  %v1923 = vpop.f32.mrf.mxu0
  %v1924 = vpop.f32.mrf.mxu0
  %v1925 = vadd.f32 0.0, %v1924
  %v1926 = vpop.f32.mrf.mxu0
  %1927 = vmatprep.mubr.bf16.mxu0 %v1101
  %1928 = vmatmul.mubr.bf16.gmra.mxu0 %v1100
  %v1929 = vpop.f32.mrf.mxu0
  %v1930 = vadd.f32 0.0, %v1929
  %v1931 = vpop.f32.mrf.mxu0
  %v1932 = vpop.f32.mrf.mxu0
  %v1933 = vadd.f32 0.0, %v1932
  %v1934 = vpop.f32.mrf.mxu0
  %1935 = vmatprep.mubr.bf16.mxu0 %v1105
  %1936 = vmatmul.mubr.bf16.gmra.mxu0 %v1104
  %v1937 = vpop.f32.mrf.mxu0
  %v1938 = vadd.f32 0.0, %v1937
  %v1939 = vpop.f32.mrf.mxu0
  %v1940 = vpop.f32.mrf.mxu0
  %v1941 = vadd.f32 0.0, %v1940
  %v1942 = vpop.f32.mrf.mxu0
  %1943 = vmatprep.mubr.bf16.mxu0 %v1109
  %1944 = vmatmul.mubr.bf16.gmra.mxu0 %v1108
  %v1945 = vpop.f32.mrf.mxu0
  %v1946 = vadd.f32 0.0, %v1945
  %v1947 = vpop.f32.mrf.mxu0
  %v1948 = vpop.f32.mrf.mxu0
  %v1949 = vadd.f32 0.0, %v1948
  %v1950 = vpop.f32.mrf.mxu0
  %1951 = vmatprep.mubr.bf16.mxu0 %v1113
  %1952 = vmatmul.mubr.bf16.gmra.mxu0 %v1112
  %v1953 = vpop.f32.mrf.mxu0
  %v1954 = vadd.f32 0.0, %v1953
  %v1955 = vpop.f32.mrf.mxu0
  %v1956 = vpop.f32.mrf.mxu0
  %v1957 = vadd.f32 0.0, %v1956
  %v1958 = vpop.f32.mrf.mxu0
  %1959 = vmatprep.mubr.bf16.mxu0 %v1117
  %1960 = vmatmul.mubr.bf16.gmra.mxu0 %v1116
  %v1961 = vpop.f32.mrf.mxu0
  %v1962 = vadd.f32 0.0, %v1961
  %v1963 = vpop.f32.mrf.mxu0
  %v1964 = vpop.f32.mrf.mxu0
  %v1965 = vadd.f32 0.0, %v1964
  %v1966 = vpop.f32.mrf.mxu0
  %1967 = vmatprep.mubr.bf16.mxu0 %v1121
  %1968 = vmatmul.mubr.bf16.gmra.mxu0 %v1120
  %v1969 = vpop.f32.mrf.mxu0
  %v1970 = vadd.f32 0.0, %v1969
  %v1971 = vpop.f32.mrf.mxu0
  %v1972 = vpop.f32.mrf.mxu0
  %v1973 = vadd.f32 0.0, %v1972
  %v1974 = vpop.f32.mrf.mxu0
  %1975 = vmatprep.mubr.bf16.mxu0 %v1125
  %1976 = vmatmul.mubr.bf16.gmra.mxu0 %v1124
  %v1977 = vpop.f32.mrf.mxu0
  %v1978 = vadd.f32 0.0, %v1977
  %v1979 = vpop.f32.mrf.mxu0
  %v1980 = vpop.f32.mrf.mxu0
  %v1981 = vadd.f32 0.0, %v1980
  %v1982 = vpop.f32.mrf.mxu0
  %1983 = vdwg.mxu0
  %1984 = vmatprep.subr.bf16.mxu0 0
  %1985 = vmatpush1.bf16.msra.mxu0 %v1822
  %1986 = vmatprep.subr.bf16.mxu0 0
  %1987 = vmatpush1.bf16.msra.mxu0 %v1821
  %1988 = vmatprep.subr.bf16.mxu0 0
  %1989 = vmatpush1.bf16.msra.mxu0 %v1820
  %1990 = vmatprep.subr.bf16.mxu0 0
  %1991 = vmatpush1.bf16.msra.mxu0 %v1819
  %1992 = vmatprep.subr.bf16.mxu0 0
  %1993 = vmatpush1.bf16.msra.mxu0 %v1818
  %1994 = vmatprep.subr.bf16.mxu0 0
  %1995 = vmatpush1.bf16.msra.mxu0 %v1817
  %1996 = vmatprep.subr.bf16.mxu0 0
  %1997 = vmatpush1.bf16.msra.mxu0 %v1816
  %1998 = vmatprep.subr.bf16.mxu0 0
  %1999 = vmatpush1.bf16.msra.mxu0 %v1815
  %2000 = vmatprep.subr.bf16.mxu0 0
  %2001 = vmatpush2.bf16.msra.mxu0 %v1830
  %2002 = vmatprep.subr.bf16.mxu0 0
  %2003 = vmatpush2.bf16.msra.mxu0 %v1829
  %2004 = vmatprep.subr.bf16.mxu0 0
  %2005 = vmatpush2.bf16.msra.mxu0 %v1828
  %2006 = vmatprep.subr.bf16.mxu0 0
  %2007 = vmatpush2.bf16.msra.mxu0 %v1827
  %2008 = vmatprep.subr.bf16.mxu0 0
  %2009 = vmatpush2.bf16.msra.mxu0 %v1826
  %2010 = vmatprep.subr.bf16.mxu0 0
  %2011 = vmatpush2.bf16.msra.mxu0 %v1825
  %2012 = vmatprep.subr.bf16.mxu0 0
  %2013 = vmatpush2.bf16.msra.mxu0 %v1824
  %2014 = vmatprep.subr.bf16.mxu0 0
  %2015 = vmatpush2.bf16.msra.mxu0 %v1823
  %2016 = vmatprep.mubr.bf16.mxu0 %v1087
  %2017 = vmatmul.mubr.bf16.gmra.mxu0 %v1086
  %v2018 = vpop.f32.mrf.mxu0
  %v2019 = vadd.f32 %v1898, %v2018
  %v2020 = vpop.f32.mrf.mxu0
  %v2021 = vpop.f32.mrf.mxu0
  %v2022 = vadd.f32 %v1901, %v2021
  %v2023 = vpop.f32.mrf.mxu0
  %2024 = vmatprep.mubr.bf16.mxu0 %v1091
  %2025 = vmatmul.mubr.bf16.gmra.mxu0 %v1090
  %v2026 = vpop.f32.mrf.mxu0
  %v2027 = vadd.f32 %v1906, %v2026
  %v2028 = vpop.f32.mrf.mxu0
  %v2029 = vpop.f32.mrf.mxu0
  %v2030 = vadd.f32 %v1909, %v2029
  %v2031 = vpop.f32.mrf.mxu0
  %2032 = vmatprep.mubr.bf16.mxu0 %v1095
  %2033 = vmatmul.mubr.bf16.gmra.mxu0 %v1094
  %v2034 = vpop.f32.mrf.mxu0
  %v2035 = vadd.f32 %v1914, %v2034
  %v2036 = vpop.f32.mrf.mxu0
  %v2037 = vpop.f32.mrf.mxu0
  %v2038 = vadd.f32 %v1917, %v2037
  %v2039 = vpop.f32.mrf.mxu0
  %2040 = vmatprep.mubr.bf16.mxu0 %v1099
  %2041 = vmatmul.mubr.bf16.gmra.mxu0 %v1098
  %v2042 = vpop.f32.mrf.mxu0
  %v2043 = vadd.f32 %v1922, %v2042
  %v2044 = vpop.f32.mrf.mxu0
  %v2045 = vpop.f32.mrf.mxu0
  %v2046 = vadd.f32 %v1925, %v2045
  %v2047 = vpop.f32.mrf.mxu0
  %2048 = vmatprep.mubr.bf16.mxu0 %v1103
  %2049 = vmatmul.mubr.bf16.gmra.mxu0 %v1102
  %v2050 = vpop.f32.mrf.mxu0
  %v2051 = vadd.f32 %v1930, %v2050
  %v2052 = vpop.f32.mrf.mxu0
  %v2053 = vpop.f32.mrf.mxu0
  %v2054 = vadd.f32 %v1933, %v2053
  %v2055 = vpop.f32.mrf.mxu0
  %2056 = vmatprep.mubr.bf16.mxu0 %v1107
  %2057 = vmatmul.mubr.bf16.gmra.mxu0 %v1106
  %v2058 = vpop.f32.mrf.mxu0
  %v2059 = vadd.f32 %v1938, %v2058
  %v2060 = vpop.f32.mrf.mxu0
  %v2061 = vpop.f32.mrf.mxu0
  %v2062 = vadd.f32 %v1941, %v2061
  %v2063 = vpop.f32.mrf.mxu0
  %2064 = vmatprep.mubr.bf16.mxu0 %v1111
  %2065 = vmatmul.mubr.bf16.gmra.mxu0 %v1110
  %v2066 = vpop.f32.mrf.mxu0
  %v2067 = vadd.f32 %v1946, %v2066
  %v2068 = vpop.f32.mrf.mxu0
  %v2069 = vpop.f32.mrf.mxu0
  %v2070 = vadd.f32 %v1949, %v2069
  %v2071 = vpop.f32.mrf.mxu0
  %2072 = vmatprep.mubr.bf16.mxu0 %v1115
  %2073 = vmatmul.mubr.bf16.gmra.mxu0 %v1114
  %v2074 = vpop.f32.mrf.mxu0
  %v2075 = vadd.f32 %v1954, %v2074
  %v2076 = vpop.f32.mrf.mxu0
  %v2077 = vpop.f32.mrf.mxu0
  %v2078 = vadd.f32 %v1957, %v2077
  %v2079 = vpop.f32.mrf.mxu0
  %2080 = vmatprep.mubr.bf16.mxu0 %v1119
  %2081 = vmatmul.mubr.bf16.gmra.mxu0 %v1118
  %v2082 = vpop.f32.mrf.mxu0
  %v2083 = vadd.f32 %v1962, %v2082
  %v2084 = vpop.f32.mrf.mxu0
  %v2085 = vpop.f32.mrf.mxu0
  %v2086 = vadd.f32 %v1965, %v2085
  %v2087 = vpop.f32.mrf.mxu0
  %2088 = vmatprep.mubr.bf16.mxu0 %v1123
  %2089 = vmatmul.mubr.bf16.gmra.mxu0 %v1122
  %v2090 = vpop.f32.mrf.mxu0
  %v2091 = vadd.f32 %v1970, %v2090
  %v2092 = vpop.f32.mrf.mxu0
  %v2093 = vpop.f32.mrf.mxu0
  %v2094 = vadd.f32 %v1973, %v2093
  %v2095 = vpop.f32.mrf.mxu0
  %2096 = vmatprep.mubr.bf16.mxu0 %v1127
  %2097 = vmatmul.mubr.bf16.gmra.mxu0 %v1126
  %v2098 = vpop.f32.mrf.mxu0
  %v2099 = vadd.f32 %v1978, %v2098
  %v2100 = vpop.f32.mrf.mxu0
  %v2101 = vpop.f32.mrf.mxu0
  %v2102 = vadd.f32 %v1981, %v2101
  %v2103 = vpop.f32.mrf.mxu0
  %2104 = vdwg.mxu0
  %s2105 = scalar_lea.vmem %s1, 512
  %v2106 = vld [vmem:[%s2105] sm:$0xf]
  %v2107 = vld [vmem:[%s2105 + $0x4] sm:$0xf]
  %v2108 = vld [vmem:[%s2105 + $0x8] sm:$0xf]
  %v2109 = vld [vmem:[%s2105 + $0xc] sm:$0xf]
  %v2110 = vld [vmem:[%s2105 + $0x10] sm:$0xf]
  %v2111 = vld [vmem:[%s2105 + $0x14] sm:$0xf]
  %v2112 = vld [vmem:[%s2105 + $0x18] sm:$0xf]
  %v2113 = vld [vmem:[%s2105 + $0x1c] sm:$0xf]
  %v2114 = vld [vmem:[%s2105 + $0x20] sm:$0xf]
  %v2115 = vld [vmem:[%s2105 + $0x24] sm:$0xf]
  %v2116 = vld [vmem:[%s2105 + $0x28] sm:$0xf]
  %v2117 = vld [vmem:[%s2105 + $0x2c] sm:$0xf]
  %v2118 = vld [vmem:[%s2105 + $0x30] sm:$0xf]
  %v2119 = vld [vmem:[%s2105 + $0x34] sm:$0xf]
  %v2120 = vld [vmem:[%s2105 + $0x38] sm:$0xf]
  %v2121 = vld [vmem:[%s2105 + $0x3c] sm:$0xf]
  %v2122 = vld [vmem:[%s2105 + $0x40] sm:$0xf]
  %v2123 = vld [vmem:[%s2105 + $0x44] sm:$0xf]
  %v2124 = vld [vmem:[%s2105 + $0x48] sm:$0xf]
  %v2125 = vld [vmem:[%s2105 + $0x4c] sm:$0xf]
  %v2126 = vld [vmem:[%s2105 + $0x50] sm:$0xf]
  %v2127 = vld [vmem:[%s2105 + $0x54] sm:$0xf]
  %v2128 = vld [vmem:[%s2105 + $0x58] sm:$0xf]
  %v2129 = vld [vmem:[%s2105 + $0x5c] sm:$0xf]
  %v2130 = vld [vmem:[%s2105 + $0x60] sm:$0xf]
  %v2131 = vld [vmem:[%s2105 + $0x64] sm:$0xf]
  %v2132 = vld [vmem:[%s2105 + $0x68] sm:$0xf]
  %v2133 = vld [vmem:[%s2105 + $0x6c] sm:$0xf]
  %v2134 = vld [vmem:[%s2105 + $0x70] sm:$0xf]
  %v2135 = vld [vmem:[%s2105 + $0x74] sm:$0xf]
  %v2136 = vld [vmem:[%s2105 + $0x78] sm:$0xf]
  %v2137 = vld [vmem:[%s2105 + $0x7c] sm:$0xf]
  %v2138 = vld [vmem:[%s2105 + $0x80] sm:$0xf]
  %v2139 = vld [vmem:[%s2105 + $0x84] sm:$0xf]
  %v2140 = vld [vmem:[%s2105 + $0x88] sm:$0xf]
  %v2141 = vld [vmem:[%s2105 + $0x8c] sm:$0xf]
  %v2142 = vld [vmem:[%s2105 + $0x90] sm:$0xf]
  %v2143 = vld [vmem:[%s2105 + $0x94] sm:$0xf]
  %v2144 = vld [vmem:[%s2105 + $0x98] sm:$0xf]
  %v2145 = vld [vmem:[%s2105 + $0x9c] sm:$0xf]
  %v2146 = vld [vmem:[%s2105 + $0xa0] sm:$0xf]
  %v2147 = vld [vmem:[%s2105 + $0xa4] sm:$0xf]
  %v2148 = vld [vmem:[%s2105 + $0xa8] sm:$0xf]
  %v2149 = vld [vmem:[%s2105 + $0xac] sm:$0xf]
  %v2150 = vld [vmem:[%s2105 + $0xb0] sm:$0xf]
  %v2151 = vld [vmem:[%s2105 + $0xb4] sm:$0xf]
  %v2152 = vld [vmem:[%s2105 + $0xb8] sm:$0xf]
  %v2153 = vld [vmem:[%s2105 + $0xbc] sm:$0xf]
  %v2154 = vld [vmem:[%s2105 + $0xc0] sm:$0xf]
  %v2155 = vld [vmem:[%s2105 + $0xc4] sm:$0xf]
  %v2156 = vld [vmem:[%s2105 + $0xc8] sm:$0xf]
  %v2157 = vld [vmem:[%s2105 + $0xcc] sm:$0xf]
  %v2158 = vld [vmem:[%s2105 + $0xd0] sm:$0xf]
  %v2159 = vld [vmem:[%s2105 + $0xd4] sm:$0xf]
  %v2160 = vld [vmem:[%s2105 + $0xd8] sm:$0xf]
  %v2161 = vld [vmem:[%s2105 + $0xdc] sm:$0xf]
  %v2162 = vld [vmem:[%s2105 + $0xe0] sm:$0xf]
  %v2163 = vld [vmem:[%s2105 + $0xe4] sm:$0xf]
  %v2164 = vld [vmem:[%s2105 + $0xe8] sm:$0xf]
  %v2165 = vld [vmem:[%s2105 + $0xec] sm:$0xf]
  %v2166 = vld [vmem:[%s2105 + $0xf0] sm:$0xf]
  %v2167 = vld [vmem:[%s2105 + $0xf4] sm:$0xf]
  %v2168 = vld [vmem:[%s2105 + $0xf8] sm:$0xf]
  %v2169 = vld [vmem:[%s2105 + $0xfc] sm:$0xf]
  %v2234 = vunpack.c.l.b16 %v2106
  %v2235 = vunpack.c.l.b16 %v2107
  %v2236 = vunpack.c.l.b16 %v2108
  %v2237 = vunpack.c.l.b16 %v2109
  %v2238 = vunpack.c.l.b16 %v2110
  %v2239 = vunpack.c.l.b16 %v2111
  %v2240 = vunpack.c.l.b16 %v2112
  %v2241 = vunpack.c.l.b16 %v2113
  %v2242 = vunpack.c.l.b16 %v2114
  %v2243 = vunpack.c.l.b16 %v2115
  %v2244 = vunpack.c.l.b16 %v2116
  %v2245 = vunpack.c.l.b16 %v2117
  %v2246 = vunpack.c.l.b16 %v2118
  %v2247 = vunpack.c.l.b16 %v2119
  %v2248 = vunpack.c.l.b16 %v2120
  %v2249 = vunpack.c.l.b16 %v2121
  %v2250 = vunpack.c.l.b16 %v2122
  %v2251 = vunpack.c.l.b16 %v2123
  %v2252 = vunpack.c.l.b16 %v2124
  %v2253 = vunpack.c.l.b16 %v2125
  %v2254 = vunpack.c.l.b16 %v2126
  %v2255 = vunpack.c.l.b16 %v2127
  %v2256 = vunpack.c.l.b16 %v2128
  %v2257 = vunpack.c.l.b16 %v2129
  %v2258 = vunpack.c.l.b16 %v2130
  %v2259 = vunpack.c.l.b16 %v2131
  %v2260 = vunpack.c.l.b16 %v2132
  %v2261 = vunpack.c.l.b16 %v2133
  %v2262 = vunpack.c.l.b16 %v2134
  %v2263 = vunpack.c.l.b16 %v2135
  %v2264 = vunpack.c.l.b16 %v2136
  %v2265 = vunpack.c.l.b16 %v2137
  %v2266 = vunpack.c.l.b16 %v2138
  %v2267 = vunpack.c.l.b16 %v2139
  %v2268 = vunpack.c.l.b16 %v2140
  %v2269 = vunpack.c.l.b16 %v2141
  %v2270 = vunpack.c.l.b16 %v2142
  %v2271 = vunpack.c.l.b16 %v2143
  %v2272 = vunpack.c.l.b16 %v2144
  %v2273 = vunpack.c.l.b16 %v2145
  %v2274 = vunpack.c.l.b16 %v2146
  %v2275 = vunpack.c.l.b16 %v2147
  %v2276 = vunpack.c.l.b16 %v2148
  %v2277 = vunpack.c.l.b16 %v2149
  %v2278 = vunpack.c.l.b16 %v2150
  %v2279 = vunpack.c.l.b16 %v2151
  %v2280 = vunpack.c.l.b16 %v2152
  %v2281 = vunpack.c.l.b16 %v2153
  %v2282 = vunpack.c.l.b16 %v2154
  %v2283 = vunpack.c.l.b16 %v2155
  %v2284 = vunpack.c.l.b16 %v2156
  %v2285 = vunpack.c.l.b16 %v2157
  %v2286 = vunpack.c.l.b16 %v2158
  %v2287 = vunpack.c.l.b16 %v2159
  %v2288 = vunpack.c.l.b16 %v2160
  %v2289 = vunpack.c.l.b16 %v2161
  %v2290 = vunpack.c.l.b16 %v2162
  %v2291 = vunpack.c.l.b16 %v2163
  %v2292 = vunpack.c.l.b16 %v2164
  %v2293 = vunpack.c.l.b16 %v2165
  %v2294 = vunpack.c.l.b16 %v2166
  %v2295 = vunpack.c.l.b16 %v2167
  %v2296 = vunpack.c.l.b16 %v2168
  %v2297 = vunpack.c.l.b16 %v2169
  %v2298 = vpack.c.b16 %v2235, %v2234
  %v2299 = vpack.c.b16 %v2237, %v2236
  %v2300 = vpack.c.b16 %v2239, %v2238
  %v2301 = vpack.c.b16 %v2241, %v2240
  %v2302 = vpack.c.b16 %v2243, %v2242
  %v2303 = vpack.c.b16 %v2245, %v2244
  %v2304 = vpack.c.b16 %v2247, %v2246
  %v2305 = vpack.c.b16 %v2249, %v2248
  %v2306 = vpack.c.b16 %v2251, %v2250
  %v2307 = vpack.c.b16 %v2253, %v2252
  %v2308 = vpack.c.b16 %v2255, %v2254
  %v2309 = vpack.c.b16 %v2257, %v2256
  %v2310 = vpack.c.b16 %v2259, %v2258
  %v2311 = vpack.c.b16 %v2261, %v2260
  %v2312 = vpack.c.b16 %v2263, %v2262
  %v2313 = vpack.c.b16 %v2265, %v2264
  %v2314 = vpack.c.b16 %v2267, %v2266
  %v2315 = vpack.c.b16 %v2269, %v2268
  %v2316 = vpack.c.b16 %v2271, %v2270
  %v2317 = vpack.c.b16 %v2273, %v2272
  %v2318 = vpack.c.b16 %v2275, %v2274
  %v2319 = vpack.c.b16 %v2277, %v2276
  %v2320 = vpack.c.b16 %v2279, %v2278
  %v2321 = vpack.c.b16 %v2281, %v2280
  %v2322 = vpack.c.b16 %v2283, %v2282
  %v2323 = vpack.c.b16 %v2285, %v2284
  %v2324 = vpack.c.b16 %v2287, %v2286
  %v2325 = vpack.c.b16 %v2289, %v2288
  %v2326 = vpack.c.b16 %v2291, %v2290
  %v2327 = vpack.c.b16 %v2293, %v2292
  %v2328 = vpack.c.b16 %v2295, %v2294
  %v2329 = vpack.c.b16 %v2297, %v2296
  %2362 = vmatprep.subr.bf16.mxu0 0
  %2363 = vmatpush1.bf16.msra.mxu0 %v2305
  %2364 = vmatprep.subr.bf16.mxu0 0
  %2365 = vmatpush1.bf16.msra.mxu0 %v2304
  %2366 = vmatprep.subr.bf16.mxu0 0
  %2367 = vmatpush1.bf16.msra.mxu0 %v2303
  %2368 = vmatprep.subr.bf16.mxu0 0
  %2369 = vmatpush1.bf16.msra.mxu0 %v2302
  %2370 = vmatprep.subr.bf16.mxu0 0
  %2371 = vmatpush1.bf16.msra.mxu0 %v2301
  %2372 = vmatprep.subr.bf16.mxu0 0
  %2373 = vmatpush1.bf16.msra.mxu0 %v2300
  %2374 = vmatprep.subr.bf16.mxu0 0
  %2375 = vmatpush1.bf16.msra.mxu0 %v2299
  %2376 = vmatprep.subr.bf16.mxu0 0
  %2377 = vmatpush1.bf16.msra.mxu0 %v2298
  %2378 = vmatprep.subr.bf16.mxu0 0
  %2379 = vmatpush2.bf16.msra.mxu0 %v2313
  %2380 = vmatprep.subr.bf16.mxu0 0
  %2381 = vmatpush2.bf16.msra.mxu0 %v2312
  %2382 = vmatprep.subr.bf16.mxu0 0
  %2383 = vmatpush2.bf16.msra.mxu0 %v2311
  %2384 = vmatprep.subr.bf16.mxu0 0
  %2385 = vmatpush2.bf16.msra.mxu0 %v2310
  %2386 = vmatprep.subr.bf16.mxu0 0
  %2387 = vmatpush2.bf16.msra.mxu0 %v2309
  %2388 = vmatprep.subr.bf16.mxu0 0
  %2389 = vmatpush2.bf16.msra.mxu0 %v2308
  %2390 = vmatprep.subr.bf16.mxu0 0
  %2391 = vmatpush2.bf16.msra.mxu0 %v2307
  %2392 = vmatprep.subr.bf16.mxu0 0
  %2393 = vmatpush2.bf16.msra.mxu0 %v2306
  %2394 = vmatprep.mubr.bf16.mxu0 %v1085
  %2395 = vmatmul.mubr.bf16.gmra.mxu0 %v1084
  %v2396 = vpop.f32.mrf.mxu0
  %v2397 = vadd.f32 0.0, %v2396
  %v2398 = vpop.f32.mrf.mxu0
  %v2399 = vpop.f32.mrf.mxu0
  %v2400 = vadd.f32 0.0, %v2399
  %v2401 = vpop.f32.mrf.mxu0
  %2402 = vmatprep.mubr.bf16.mxu0 %v1089
  %2403 = vmatmul.mubr.bf16.gmra.mxu0 %v1088
  %v2404 = vpop.f32.mrf.mxu0
  %v2405 = vadd.f32 0.0, %v2404
  %v2406 = vpop.f32.mrf.mxu0
  %v2407 = vpop.f32.mrf.mxu0
  %v2408 = vadd.f32 0.0, %v2407
  %v2409 = vpop.f32.mrf.mxu0
  %2410 = vmatprep.mubr.bf16.mxu0 %v1093
  %2411 = vmatmul.mubr.bf16.gmra.mxu0 %v1092
  %v2412 = vpop.f32.mrf.mxu0
  %v2413 = vadd.f32 0.0, %v2412
  %v2414 = vpop.f32.mrf.mxu0
  %v2415 = vpop.f32.mrf.mxu0
  %v2416 = vadd.f32 0.0, %v2415
  %v2417 = vpop.f32.mrf.mxu0
  %2418 = vmatprep.mubr.bf16.mxu0 %v1097
  %2419 = vmatmul.mubr.bf16.gmra.mxu0 %v1096
  %v2420 = vpop.f32.mrf.mxu0
  %v2421 = vadd.f32 0.0, %v2420
  %v2422 = vpop.f32.mrf.mxu0
  %v2423 = vpop.f32.mrf.mxu0
  %v2424 = vadd.f32 0.0, %v2423
  %v2425 = vpop.f32.mrf.mxu0
  %2426 = vmatprep.mubr.bf16.mxu0 %v1101
  %2427 = vmatmul.mubr.bf16.gmra.mxu0 %v1100
  %v2428 = vpop.f32.mrf.mxu0
  %v2429 = vadd.f32 0.0, %v2428
  %v2430 = vpop.f32.mrf.mxu0
  %v2431 = vpop.f32.mrf.mxu0
  %v2432 = vadd.f32 0.0, %v2431
  %v2433 = vpop.f32.mrf.mxu0
  %2434 = vmatprep.mubr.bf16.mxu0 %v1105
  %2435 = vmatmul.mubr.bf16.gmra.mxu0 %v1104
  %v2436 = vpop.f32.mrf.mxu0
  %v2437 = vadd.f32 0.0, %v2436
  %v2438 = vpop.f32.mrf.mxu0
  %v2439 = vpop.f32.mrf.mxu0
  %v2440 = vadd.f32 0.0, %v2439
  %v2441 = vpop.f32.mrf.mxu0
  %2442 = vmatprep.mubr.bf16.mxu0 %v1109
  %2443 = vmatmul.mubr.bf16.gmra.mxu0 %v1108
  %v2444 = vpop.f32.mrf.mxu0
  %v2445 = vadd.f32 0.0, %v2444
  %v2446 = vpop.f32.mrf.mxu0
  %v2447 = vpop.f32.mrf.mxu0
  %v2448 = vadd.f32 0.0, %v2447
  %v2449 = vpop.f32.mrf.mxu0
  %2450 = vmatprep.mubr.bf16.mxu0 %v1113
  %2451 = vmatmul.mubr.bf16.gmra.mxu0 %v1112
  %v2452 = vpop.f32.mrf.mxu0
  %v2453 = vadd.f32 0.0, %v2452
  %v2454 = vpop.f32.mrf.mxu0
  %v2455 = vpop.f32.mrf.mxu0
  %v2456 = vadd.f32 0.0, %v2455
  %v2457 = vpop.f32.mrf.mxu0
  %2458 = vmatprep.mubr.bf16.mxu0 %v1117
  %2459 = vmatmul.mubr.bf16.gmra.mxu0 %v1116
  %v2460 = vpop.f32.mrf.mxu0
  %v2461 = vadd.f32 0.0, %v2460
  %v2462 = vpop.f32.mrf.mxu0
  %v2463 = vpop.f32.mrf.mxu0
  %v2464 = vadd.f32 0.0, %v2463
  %v2465 = vpop.f32.mrf.mxu0
  %2466 = vmatprep.mubr.bf16.mxu0 %v1121
  %2467 = vmatmul.mubr.bf16.gmra.mxu0 %v1120
  %v2468 = vpop.f32.mrf.mxu0
  %v2469 = vadd.f32 0.0, %v2468
  %v2470 = vpop.f32.mrf.mxu0
  %v2471 = vpop.f32.mrf.mxu0
  %v2472 = vadd.f32 0.0, %v2471
  %v2473 = vpop.f32.mrf.mxu0
  %2474 = vmatprep.mubr.bf16.mxu0 %v1125
  %2475 = vmatmul.mubr.bf16.gmra.mxu0 %v1124
  %v2476 = vpop.f32.mrf.mxu0
  %v2477 = vadd.f32 0.0, %v2476
  %v2478 = vpop.f32.mrf.mxu0
  %v2479 = vpop.f32.mrf.mxu0
  %v2480 = vadd.f32 0.0, %v2479
  %v2481 = vpop.f32.mrf.mxu0
  %2482 = vdwg.mxu0
  %2483 = vmatprep.subr.bf16.mxu0 0
  %2484 = vmatpush1.bf16.msra.mxu0 %v2321
  %2485 = vmatprep.subr.bf16.mxu0 0
  %2486 = vmatpush1.bf16.msra.mxu0 %v2320
  %2487 = vmatprep.subr.bf16.mxu0 0
  %2488 = vmatpush1.bf16.msra.mxu0 %v2319
  %2489 = vmatprep.subr.bf16.mxu0 0
  %2490 = vmatpush1.bf16.msra.mxu0 %v2318
  %2491 = vmatprep.subr.bf16.mxu0 0
  %2492 = vmatpush1.bf16.msra.mxu0 %v2317
  %2493 = vmatprep.subr.bf16.mxu0 0
  %2494 = vmatpush1.bf16.msra.mxu0 %v2316
  %2495 = vmatprep.subr.bf16.mxu0 0
  %2496 = vmatpush1.bf16.msra.mxu0 %v2315
  %2497 = vmatprep.subr.bf16.mxu0 0
  %2498 = vmatpush1.bf16.msra.mxu0 %v2314
  %2499 = vmatprep.subr.bf16.mxu0 0
  %2500 = vmatpush2.bf16.msra.mxu0 %v2329
  %2501 = vmatprep.subr.bf16.mxu0 0
  %2502 = vmatpush2.bf16.msra.mxu0 %v2328
  %2503 = vmatprep.subr.bf16.mxu0 0
  %2504 = vmatpush2.bf16.msra.mxu0 %v2327
  %2505 = vmatprep.subr.bf16.mxu0 0
  %2506 = vmatpush2.bf16.msra.mxu0 %v2326
  %2507 = vmatprep.subr.bf16.mxu0 0
  %2508 = vmatpush2.bf16.msra.mxu0 %v2325
  %2509 = vmatprep.subr.bf16.mxu0 0
  %2510 = vmatpush2.bf16.msra.mxu0 %v2324
  %2511 = vmatprep.subr.bf16.mxu0 0
  %2512 = vmatpush2.bf16.msra.mxu0 %v2323
  %2513 = vmatprep.subr.bf16.mxu0 0
  %2514 = vmatpush2.bf16.msra.mxu0 %v2322
  %2515 = vmatprep.mubr.bf16.mxu0 %v1087
  %2516 = vmatmul.mubr.bf16.gmra.mxu0 %v1086
  %v2517 = vpop.f32.mrf.mxu0
  %v2518 = vadd.f32 %v2397, %v2517
  %v2519 = vpop.f32.mrf.mxu0
  %v2520 = vpop.f32.mrf.mxu0
  %v2521 = vadd.f32 %v2400, %v2520
  %v2522 = vpop.f32.mrf.mxu0
  %2523 = vmatprep.mubr.bf16.mxu0 %v1091
  %2524 = vmatmul.mubr.bf16.gmra.mxu0 %v1090
  %v2525 = vpop.f32.mrf.mxu0
  %v2526 = vadd.f32 %v2405, %v2525
  %v2527 = vpop.f32.mrf.mxu0
  %v2528 = vpop.f32.mrf.mxu0
  %v2529 = vadd.f32 %v2408, %v2528
  %v2530 = vpop.f32.mrf.mxu0
  %2531 = vmatprep.mubr.bf16.mxu0 %v1095
  %2532 = vmatmul.mubr.bf16.gmra.mxu0 %v1094
  %v2533 = vpop.f32.mrf.mxu0
  %v2534 = vadd.f32 %v2413, %v2533
  %v2535 = vpop.f32.mrf.mxu0
  %v2536 = vpop.f32.mrf.mxu0
  %v2537 = vadd.f32 %v2416, %v2536
  %v2538 = vpop.f32.mrf.mxu0
  %2539 = vmatprep.mubr.bf16.mxu0 %v1099
  %2540 = vmatmul.mubr.bf16.gmra.mxu0 %v1098
  %v2541 = vpop.f32.mrf.mxu0
  %v2542 = vadd.f32 %v2421, %v2541
  %v2543 = vpop.f32.mrf.mxu0
  %v2544 = vpop.f32.mrf.mxu0
  %v2545 = vadd.f32 %v2424, %v2544
  %v2546 = vpop.f32.mrf.mxu0
  %2547 = vmatprep.mubr.bf16.mxu0 %v1103
  %2548 = vmatmul.mubr.bf16.gmra.mxu0 %v1102
  %v2549 = vpop.f32.mrf.mxu0
  %v2550 = vadd.f32 %v2429, %v2549
  %v2551 = vpop.f32.mrf.mxu0
  %v2552 = vpop.f32.mrf.mxu0
  %v2553 = vadd.f32 %v2432, %v2552
  %v2554 = vpop.f32.mrf.mxu0
  %2555 = vmatprep.mubr.bf16.mxu0 %v1107
  %2556 = vmatmul.mubr.bf16.gmra.mxu0 %v1106
  %v2557 = vpop.f32.mrf.mxu0
  %v2558 = vadd.f32 %v2437, %v2557
  %v2559 = vpop.f32.mrf.mxu0
  %v2560 = vpop.f32.mrf.mxu0
  %v2561 = vadd.f32 %v2440, %v2560
  %v2562 = vpop.f32.mrf.mxu0
  %2563 = vmatprep.mubr.bf16.mxu0 %v1111
  %2564 = vmatmul.mubr.bf16.gmra.mxu0 %v1110
  %v2565 = vpop.f32.mrf.mxu0
  %v2566 = vadd.f32 %v2445, %v2565
  %v2567 = vpop.f32.mrf.mxu0
  %v2568 = vpop.f32.mrf.mxu0
  %v2569 = vadd.f32 %v2448, %v2568
  %v2570 = vpop.f32.mrf.mxu0
  %2571 = vmatprep.mubr.bf16.mxu0 %v1115
  %2572 = vmatmul.mubr.bf16.gmra.mxu0 %v1114
  %v2573 = vpop.f32.mrf.mxu0
  %v2574 = vadd.f32 %v2453, %v2573
  %v2575 = vpop.f32.mrf.mxu0
  %v2576 = vpop.f32.mrf.mxu0
  %v2577 = vadd.f32 %v2456, %v2576
  %v2578 = vpop.f32.mrf.mxu0
  %2579 = vmatprep.mubr.bf16.mxu0 %v1119
  %2580 = vmatmul.mubr.bf16.gmra.mxu0 %v1118
  %v2581 = vpop.f32.mrf.mxu0
  %v2582 = vadd.f32 %v2461, %v2581
  %v2583 = vpop.f32.mrf.mxu0
  %v2584 = vpop.f32.mrf.mxu0
  %v2585 = vadd.f32 %v2464, %v2584
  %v2586 = vpop.f32.mrf.mxu0
  %2587 = vmatprep.mubr.bf16.mxu0 %v1123
  %2588 = vmatmul.mubr.bf16.gmra.mxu0 %v1122
  %v2589 = vpop.f32.mrf.mxu0
  %v2590 = vadd.f32 %v2469, %v2589
  %v2591 = vpop.f32.mrf.mxu0
  %v2592 = vpop.f32.mrf.mxu0
  %v2593 = vadd.f32 %v2472, %v2592
  %v2594 = vpop.f32.mrf.mxu0
  %2595 = vmatprep.mubr.bf16.mxu0 %v1127
  %2596 = vmatmul.mubr.bf16.gmra.mxu0 %v1126
  %v2597 = vpop.f32.mrf.mxu0
  %v2598 = vadd.f32 %v2477, %v2597
  %v2599 = vpop.f32.mrf.mxu0
  %v2600 = vpop.f32.mrf.mxu0
  %v2601 = vadd.f32 %v2480, %v2600
  %v2602 = vpop.f32.mrf.mxu0
  %2603 = vdwg.mxu0
  %s2604 = scalar_lea.vmem %s1, 768
  %v2605 = vld [vmem:[%s2604] sm:$0xf]
  %v2606 = vld [vmem:[%s2604 + $0x4] sm:$0xf]
  %v2607 = vld [vmem:[%s2604 + $0x8] sm:$0xf]
  %v2608 = vld [vmem:[%s2604 + $0xc] sm:$0xf]
  %v2609 = vld [vmem:[%s2604 + $0x10] sm:$0xf]
  %v2610 = vld [vmem:[%s2604 + $0x14] sm:$0xf]
  %v2611 = vld [vmem:[%s2604 + $0x18] sm:$0xf]
  %v2612 = vld [vmem:[%s2604 + $0x1c] sm:$0xf]
  %v2613 = vld [vmem:[%s2604 + $0x20] sm:$0xf]
  %v2614 = vld [vmem:[%s2604 + $0x24] sm:$0xf]
  %v2615 = vld [vmem:[%s2604 + $0x28] sm:$0xf]
  %v2616 = vld [vmem:[%s2604 + $0x2c] sm:$0xf]
  %v2617 = vld [vmem:[%s2604 + $0x30] sm:$0xf]
  %v2618 = vld [vmem:[%s2604 + $0x34] sm:$0xf]
  %v2619 = vld [vmem:[%s2604 + $0x38] sm:$0xf]
  %v2620 = vld [vmem:[%s2604 + $0x3c] sm:$0xf]
  %v2621 = vld [vmem:[%s2604 + $0x40] sm:$0xf]
  %v2622 = vld [vmem:[%s2604 + $0x44] sm:$0xf]
  %v2623 = vld [vmem:[%s2604 + $0x48] sm:$0xf]
  %v2624 = vld [vmem:[%s2604 + $0x4c] sm:$0xf]
  %v2625 = vld [vmem:[%s2604 + $0x50] sm:$0xf]
  %v2626 = vld [vmem:[%s2604 + $0x54] sm:$0xf]
  %v2627 = vld [vmem:[%s2604 + $0x58] sm:$0xf]
  %v2628 = vld [vmem:[%s2604 + $0x5c] sm:$0xf]
  %v2629 = vld [vmem:[%s2604 + $0x60] sm:$0xf]
  %v2630 = vld [vmem:[%s2604 + $0x64] sm:$0xf]
  %v2631 = vld [vmem:[%s2604 + $0x68] sm:$0xf]
  %v2632 = vld [vmem:[%s2604 + $0x6c] sm:$0xf]
  %v2633 = vld [vmem:[%s2604 + $0x70] sm:$0xf]
  %v2634 = vld [vmem:[%s2604 + $0x74] sm:$0xf]
  %v2635 = vld [vmem:[%s2604 + $0x78] sm:$0xf]
  %v2636 = vld [vmem:[%s2604 + $0x7c] sm:$0xf]
  %v2637 = vld [vmem:[%s2604 + $0x80] sm:$0xf]
  %v2638 = vld [vmem:[%s2604 + $0x84] sm:$0xf]
  %v2639 = vld [vmem:[%s2604 + $0x88] sm:$0xf]
  %v2640 = vld [vmem:[%s2604 + $0x8c] sm:$0xf]
  %v2641 = vld [vmem:[%s2604 + $0x90] sm:$0xf]
  %v2642 = vld [vmem:[%s2604 + $0x94] sm:$0xf]
  %v2643 = vld [vmem:[%s2604 + $0x98] sm:$0xf]
  %v2644 = vld [vmem:[%s2604 + $0x9c] sm:$0xf]
  %v2645 = vld [vmem:[%s2604 + $0xa0] sm:$0xf]
  %v2646 = vld [vmem:[%s2604 + $0xa4] sm:$0xf]
  %v2647 = vld [vmem:[%s2604 + $0xa8] sm:$0xf]
  %v2648 = vld [vmem:[%s2604 + $0xac] sm:$0xf]
  %v2649 = vld [vmem:[%s2604 + $0xb0] sm:$0xf]
  %v2650 = vld [vmem:[%s2604 + $0xb4] sm:$0xf]
  %v2651 = vld [vmem:[%s2604 + $0xb8] sm:$0xf]
  %v2652 = vld [vmem:[%s2604 + $0xbc] sm:$0xf]
  %v2653 = vld [vmem:[%s2604 + $0xc0] sm:$0xf]
  %v2654 = vld [vmem:[%s2604 + $0xc4] sm:$0xf]
  %v2655 = vld [vmem:[%s2604 + $0xc8] sm:$0xf]
  %v2656 = vld [vmem:[%s2604 + $0xcc] sm:$0xf]
  %v2657 = vld [vmem:[%s2604 + $0xd0] sm:$0xf]
  %v2658 = vld [vmem:[%s2604 + $0xd4] sm:$0xf]
  %v2659 = vld [vmem:[%s2604 + $0xd8] sm:$0xf]
  %v2660 = vld [vmem:[%s2604 + $0xdc] sm:$0xf]
  %v2661 = vld [vmem:[%s2604 + $0xe0] sm:$0xf]
  %v2662 = vld [vmem:[%s2604 + $0xe4] sm:$0xf]
  %v2663 = vld [vmem:[%s2604 + $0xe8] sm:$0xf]
  %v2664 = vld [vmem:[%s2604 + $0xec] sm:$0xf]
  %v2665 = vld [vmem:[%s2604 + $0xf0] sm:$0xf]
  %v2666 = vld [vmem:[%s2604 + $0xf4] sm:$0xf]
  %v2667 = vld [vmem:[%s2604 + $0xf8] sm:$0xf]
  %v2668 = vld [vmem:[%s2604 + $0xfc] sm:$0xf]
  %v2733 = vunpack.c.l.b16 %v2605
  %v2734 = vunpack.c.l.b16 %v2606
  %v2735 = vunpack.c.l.b16 %v2607
  %v2736 = vunpack.c.l.b16 %v2608
  %v2737 = vunpack.c.l.b16 %v2609
  %v2738 = vunpack.c.l.b16 %v2610
  %v2739 = vunpack.c.l.b16 %v2611
  %v2740 = vunpack.c.l.b16 %v2612
  %v2741 = vunpack.c.l.b16 %v2613
  %v2742 = vunpack.c.l.b16 %v2614
  %v2743 = vunpack.c.l.b16 %v2615
  %v2744 = vunpack.c.l.b16 %v2616
  %v2745 = vunpack.c.l.b16 %v2617
  %v2746 = vunpack.c.l.b16 %v2618
  %v2747 = vunpack.c.l.b16 %v2619
  %v2748 = vunpack.c.l.b16 %v2620
  %v2749 = vunpack.c.l.b16 %v2621
  %v2750 = vunpack.c.l.b16 %v2622
  %v2751 = vunpack.c.l.b16 %v2623
  %v2752 = vunpack.c.l.b16 %v2624
  %v2753 = vunpack.c.l.b16 %v2625
  %v2754 = vunpack.c.l.b16 %v2626
  %v2755 = vunpack.c.l.b16 %v2627
  %v2756 = vunpack.c.l.b16 %v2628
  %v2757 = vunpack.c.l.b16 %v2629
  %v2758 = vunpack.c.l.b16 %v2630
  %v2759 = vunpack.c.l.b16 %v2631
  %v2760 = vunpack.c.l.b16 %v2632
  %v2761 = vunpack.c.l.b16 %v2633
  %v2762 = vunpack.c.l.b16 %v2634
  %v2763 = vunpack.c.l.b16 %v2635
  %v2764 = vunpack.c.l.b16 %v2636
  %v2765 = vunpack.c.l.b16 %v2637
  %v2766 = vunpack.c.l.b16 %v2638
  %v2767 = vunpack.c.l.b16 %v2639
  %v2768 = vunpack.c.l.b16 %v2640
  %v2769 = vunpack.c.l.b16 %v2641
  %v2770 = vunpack.c.l.b16 %v2642
  %v2771 = vunpack.c.l.b16 %v2643
  %v2772 = vunpack.c.l.b16 %v2644
  %v2773 = vunpack.c.l.b16 %v2645
  %v2774 = vunpack.c.l.b16 %v2646
  %v2775 = vunpack.c.l.b16 %v2647
  %v2776 = vunpack.c.l.b16 %v2648
  %v2777 = vunpack.c.l.b16 %v2649
  %v2778 = vunpack.c.l.b16 %v2650
  %v2779 = vunpack.c.l.b16 %v2651
  %v2780 = vunpack.c.l.b16 %v2652
  %v2781 = vunpack.c.l.b16 %v2653
  %v2782 = vunpack.c.l.b16 %v2654
  %v2783 = vunpack.c.l.b16 %v2655
  %v2784 = vunpack.c.l.b16 %v2656
  %v2785 = vunpack.c.l.b16 %v2657
  %v2786 = vunpack.c.l.b16 %v2658
  %v2787 = vunpack.c.l.b16 %v2659
  %v2788 = vunpack.c.l.b16 %v2660
  %v2789 = vunpack.c.l.b16 %v2661
  %v2790 = vunpack.c.l.b16 %v2662
  %v2791 = vunpack.c.l.b16 %v2663
  %v2792 = vunpack.c.l.b16 %v2664
  %v2793 = vunpack.c.l.b16 %v2665
  %v2794 = vunpack.c.l.b16 %v2666
  %v2795 = vunpack.c.l.b16 %v2667
  %v2796 = vunpack.c.l.b16 %v2668
  %v2797 = vpack.c.b16 %v2734, %v2733
  %v2798 = vpack.c.b16 %v2736, %v2735
  %v2799 = vpack.c.b16 %v2738, %v2737
  %v2800 = vpack.c.b16 %v2740, %v2739
  %v2801 = vpack.c.b16 %v2742, %v2741
  %v2802 = vpack.c.b16 %v2744, %v2743
  %v2803 = vpack.c.b16 %v2746, %v2745
  %v2804 = vpack.c.b16 %v2748, %v2747
  %v2805 = vpack.c.b16 %v2750, %v2749
  %v2806 = vpack.c.b16 %v2752, %v2751
  %v2807 = vpack.c.b16 %v2754, %v2753
  %v2808 = vpack.c.b16 %v2756, %v2755
  %v2809 = vpack.c.b16 %v2758, %v2757
  %v2810 = vpack.c.b16 %v2760, %v2759
  %v2811 = vpack.c.b16 %v2762, %v2761
  %v2812 = vpack.c.b16 %v2764, %v2763
  %v2813 = vpack.c.b16 %v2766, %v2765
  %v2814 = vpack.c.b16 %v2768, %v2767
  %v2815 = vpack.c.b16 %v2770, %v2769
  %v2816 = vpack.c.b16 %v2772, %v2771
  %v2817 = vpack.c.b16 %v2774, %v2773
  %v2818 = vpack.c.b16 %v2776, %v2775
  %v2819 = vpack.c.b16 %v2778, %v2777
  %v2820 = vpack.c.b16 %v2780, %v2779
  %v2821 = vpack.c.b16 %v2782, %v2781
  %v2822 = vpack.c.b16 %v2784, %v2783
  %v2823 = vpack.c.b16 %v2786, %v2785
  %v2824 = vpack.c.b16 %v2788, %v2787
  %v2825 = vpack.c.b16 %v2790, %v2789
  %v2826 = vpack.c.b16 %v2792, %v2791
  %v2827 = vpack.c.b16 %v2794, %v2793
  %v2828 = vpack.c.b16 %v2796, %v2795
  %2861 = vmatprep.subr.bf16.mxu0 0
  %2862 = vmatpush1.bf16.msra.mxu0 %v2804
  %2863 = vmatprep.subr.bf16.mxu0 0
  %2864 = vmatpush1.bf16.msra.mxu0 %v2803
  %2865 = vmatprep.subr.bf16.mxu0 0
  %2866 = vmatpush1.bf16.msra.mxu0 %v2802
  %2867 = vmatprep.subr.bf16.mxu0 0
  %2868 = vmatpush1.bf16.msra.mxu0 %v2801
  %2869 = vmatprep.subr.bf16.mxu0 0
  %2870 = vmatpush1.bf16.msra.mxu0 %v2800
  %2871 = vmatprep.subr.bf16.mxu0 0
  %2872 = vmatpush1.bf16.msra.mxu0 %v2799
  %2873 = vmatprep.subr.bf16.mxu0 0
  %2874 = vmatpush1.bf16.msra.mxu0 %v2798
  %2875 = vmatprep.subr.bf16.mxu0 0
  %2876 = vmatpush1.bf16.msra.mxu0 %v2797
  %2877 = vmatprep.subr.bf16.mxu0 0
  %2878 = vmatpush2.bf16.msra.mxu0 %v2812
  %2879 = vmatprep.subr.bf16.mxu0 0
  %2880 = vmatpush2.bf16.msra.mxu0 %v2811
  %2881 = vmatprep.subr.bf16.mxu0 0
  %2882 = vmatpush2.bf16.msra.mxu0 %v2810
  %2883 = vmatprep.subr.bf16.mxu0 0
  %2884 = vmatpush2.bf16.msra.mxu0 %v2809
  %2885 = vmatprep.subr.bf16.mxu0 0
  %2886 = vmatpush2.bf16.msra.mxu0 %v2808
  %2887 = vmatprep.subr.bf16.mxu0 0
  %2888 = vmatpush2.bf16.msra.mxu0 %v2807
  %2889 = vmatprep.subr.bf16.mxu0 0
  %2890 = vmatpush2.bf16.msra.mxu0 %v2806
  %2891 = vmatprep.subr.bf16.mxu0 0
  %2892 = vmatpush2.bf16.msra.mxu0 %v2805
  %2893 = vmatprep.mubr.bf16.mxu0 %v1085
  %2894 = vmatmul.mubr.bf16.gmra.mxu0 %v1084
  %v2895 = vpop.f32.mrf.mxu0
  %v2896 = vadd.f32 0.0, %v2895
  %v2897 = vpop.f32.mrf.mxu0
  %v2898 = vpop.f32.mrf.mxu0
  %v2899 = vadd.f32 0.0, %v2898
  %v2900 = vpop.f32.mrf.mxu0
  %2901 = vmatprep.mubr.bf16.mxu0 %v1089
  %2902 = vmatmul.mubr.bf16.gmra.mxu0 %v1088
  %v2903 = vpop.f32.mrf.mxu0
  %v2904 = vadd.f32 0.0, %v2903
  %v2905 = vpop.f32.mrf.mxu0
  %v2906 = vpop.f32.mrf.mxu0
  %v2907 = vadd.f32 0.0, %v2906
  %v2908 = vpop.f32.mrf.mxu0
  %2909 = vmatprep.mubr.bf16.mxu0 %v1093
  %2910 = vmatmul.mubr.bf16.gmra.mxu0 %v1092
  %v2911 = vpop.f32.mrf.mxu0
  %v2912 = vadd.f32 0.0, %v2911
  %v2913 = vpop.f32.mrf.mxu0
  %v2914 = vpop.f32.mrf.mxu0
  %v2915 = vadd.f32 0.0, %v2914
  %v2916 = vpop.f32.mrf.mxu0
  %2917 = vmatprep.mubr.bf16.mxu0 %v1097
  %2918 = vmatmul.mubr.bf16.gmra.mxu0 %v1096
  %v2919 = vpop.f32.mrf.mxu0
  %v2920 = vadd.f32 0.0, %v2919
  %v2921 = vpop.f32.mrf.mxu0
  %v2922 = vpop.f32.mrf.mxu0
  %v2923 = vadd.f32 0.0, %v2922
  %v2924 = vpop.f32.mrf.mxu0
  %2925 = vmatprep.mubr.bf16.mxu0 %v1101
  %2926 = vmatmul.mubr.bf16.gmra.mxu0 %v1100
  %v2927 = vpop.f32.mrf.mxu0
  %v2928 = vadd.f32 0.0, %v2927
  %v2929 = vpop.f32.mrf.mxu0
  %v2930 = vpop.f32.mrf.mxu0
  %v2931 = vadd.f32 0.0, %v2930
  %v2932 = vpop.f32.mrf.mxu0
  %2933 = vmatprep.mubr.bf16.mxu0 %v1105
  %2934 = vmatmul.mubr.bf16.gmra.mxu0 %v1104
  %v2935 = vpop.f32.mrf.mxu0
  %v2936 = vadd.f32 0.0, %v2935
  %v2937 = vpop.f32.mrf.mxu0
  %v2938 = vpop.f32.mrf.mxu0
  %v2939 = vadd.f32 0.0, %v2938
  %v2940 = vpop.f32.mrf.mxu0
  %2941 = vmatprep.mubr.bf16.mxu0 %v1109
  %2942 = vmatmul.mubr.bf16.gmra.mxu0 %v1108
  %v2943 = vpop.f32.mrf.mxu0
  %v2944 = vadd.f32 0.0, %v2943
  %v2945 = vpop.f32.mrf.mxu0
  %v2946 = vpop.f32.mrf.mxu0
  %v2947 = vadd.f32 0.0, %v2946
  %v2948 = vpop.f32.mrf.mxu0
  %2949 = vmatprep.mubr.bf16.mxu0 %v1113
  %2950 = vmatmul.mubr.bf16.gmra.mxu0 %v1112
  %v2951 = vpop.f32.mrf.mxu0
  %v2952 = vadd.f32 0.0, %v2951
  %v2953 = vpop.f32.mrf.mxu0
  %v2954 = vpop.f32.mrf.mxu0
  %v2955 = vadd.f32 0.0, %v2954
  %v2956 = vpop.f32.mrf.mxu0
  %2957 = vmatprep.mubr.bf16.mxu0 %v1117
  %2958 = vmatmul.mubr.bf16.gmra.mxu0 %v1116
  %v2959 = vpop.f32.mrf.mxu0
  %v2960 = vadd.f32 0.0, %v2959
  %v2961 = vpop.f32.mrf.mxu0
  %v2962 = vpop.f32.mrf.mxu0
  %v2963 = vadd.f32 0.0, %v2962
  %v2964 = vpop.f32.mrf.mxu0
  %2965 = vmatprep.mubr.bf16.mxu0 %v1121
  %2966 = vmatmul.mubr.bf16.gmra.mxu0 %v1120
  %v2967 = vpop.f32.mrf.mxu0
  %v2968 = vadd.f32 0.0, %v2967
  %v2969 = vpop.f32.mrf.mxu0
  %v2970 = vpop.f32.mrf.mxu0
  %v2971 = vadd.f32 0.0, %v2970
  %v2972 = vpop.f32.mrf.mxu0
  %2973 = vmatprep.mubr.bf16.mxu0 %v1125
  %2974 = vmatmul.mubr.bf16.gmra.mxu0 %v1124
  %v2975 = vpop.f32.mrf.mxu0
  %v2976 = vadd.f32 0.0, %v2975
  %v2977 = vpop.f32.mrf.mxu0
  %v2978 = vpop.f32.mrf.mxu0
  %v2979 = vadd.f32 0.0, %v2978
  %v2980 = vpop.f32.mrf.mxu0
  %2981 = vdwg.mxu0
  %2982 = vmatprep.subr.bf16.mxu0 0
  %2983 = vmatpush1.bf16.msra.mxu0 %v2820
  %2984 = vmatprep.subr.bf16.mxu0 0
  %2985 = vmatpush1.bf16.msra.mxu0 %v2819
  %2986 = vmatprep.subr.bf16.mxu0 0
  %2987 = vmatpush1.bf16.msra.mxu0 %v2818
  %2988 = vmatprep.subr.bf16.mxu0 0
  %2989 = vmatpush1.bf16.msra.mxu0 %v2817
  %2990 = vmatprep.subr.bf16.mxu0 0
  %2991 = vmatpush1.bf16.msra.mxu0 %v2816
  %2992 = vmatprep.subr.bf16.mxu0 0
  %2993 = vmatpush1.bf16.msra.mxu0 %v2815
  %2994 = vmatprep.subr.bf16.mxu0 0
  %2995 = vmatpush1.bf16.msra.mxu0 %v2814
  %2996 = vmatprep.subr.bf16.mxu0 0
  %2997 = vmatpush1.bf16.msra.mxu0 %v2813
  %2998 = vmatprep.subr.bf16.mxu0 0
  %2999 = vmatpush2.bf16.msra.mxu0 %v2828
  %3000 = vmatprep.subr.bf16.mxu0 0
  %3001 = vmatpush2.bf16.msra.mxu0 %v2827
  %3002 = vmatprep.subr.bf16.mxu0 0
  %3003 = vmatpush2.bf16.msra.mxu0 %v2826
  %3004 = vmatprep.subr.bf16.mxu0 0
  %3005 = vmatpush2.bf16.msra.mxu0 %v2825
  %3006 = vmatprep.subr.bf16.mxu0 0
  %3007 = vmatpush2.bf16.msra.mxu0 %v2824
  %3008 = vmatprep.subr.bf16.mxu0 0
  %3009 = vmatpush2.bf16.msra.mxu0 %v2823
  %3010 = vmatprep.subr.bf16.mxu0 0
  %3011 = vmatpush2.bf16.msra.mxu0 %v2822
  %3012 = vmatprep.subr.bf16.mxu0 0
  %3013 = vmatpush2.bf16.msra.mxu0 %v2821
  %3014 = vmatprep.mubr.bf16.mxu0 %v1087
  %3015 = vmatmul.mubr.bf16.gmra.mxu0 %v1086
  %v3016 = vpop.f32.mrf.mxu0
  %v3017 = vadd.f32 %v2896, %v3016
  %v3018 = vpop.f32.mrf.mxu0
  %v3019 = vpop.f32.mrf.mxu0
  %v3020 = vadd.f32 %v2899, %v3019
  %v3021 = vpop.f32.mrf.mxu0
  %3022 = vmatprep.mubr.bf16.mxu0 %v1091
  %3023 = vmatmul.mubr.bf16.gmra.mxu0 %v1090
  %v3024 = vpop.f32.mrf.mxu0
  %v3025 = vadd.f32 %v2904, %v3024
  %v3026 = vpop.f32.mrf.mxu0
  %v3027 = vpop.f32.mrf.mxu0
  %v3028 = vadd.f32 %v2907, %v3027
  %v3029 = vpop.f32.mrf.mxu0
  %3030 = vmatprep.mubr.bf16.mxu0 %v1095
  %3031 = vmatmul.mubr.bf16.gmra.mxu0 %v1094
  %v3032 = vpop.f32.mrf.mxu0
  %v3033 = vadd.f32 %v2912, %v3032
  %v3034 = vpop.f32.mrf.mxu0
  %v3035 = vpop.f32.mrf.mxu0
  %v3036 = vadd.f32 %v2915, %v3035
  %v3037 = vpop.f32.mrf.mxu0
  %3038 = vmatprep.mubr.bf16.mxu0 %v1099
  %3039 = vmatmul.mubr.bf16.gmra.mxu0 %v1098
  %v3040 = vpop.f32.mrf.mxu0
  %v3041 = vadd.f32 %v2920, %v3040
  %v3042 = vpop.f32.mrf.mxu0
  %v3043 = vpop.f32.mrf.mxu0
  %v3044 = vadd.f32 %v2923, %v3043
  %v3045 = vpop.f32.mrf.mxu0
  %3046 = vmatprep.mubr.bf16.mxu0 %v1103
  %3047 = vmatmul.mubr.bf16.gmra.mxu0 %v1102
  %v3048 = vpop.f32.mrf.mxu0
  %v3049 = vadd.f32 %v2928, %v3048
  %v3050 = vpop.f32.mrf.mxu0
  %v3051 = vpop.f32.mrf.mxu0
  %v3052 = vadd.f32 %v2931, %v3051
  %v3053 = vpop.f32.mrf.mxu0
  %3054 = vmatprep.mubr.bf16.mxu0 %v1107
  %3055 = vmatmul.mubr.bf16.gmra.mxu0 %v1106
  %v3056 = vpop.f32.mrf.mxu0
  %v3057 = vadd.f32 %v2936, %v3056
  %v3058 = vpop.f32.mrf.mxu0
  %v3059 = vpop.f32.mrf.mxu0
  %v3060 = vadd.f32 %v2939, %v3059
  %v3061 = vpop.f32.mrf.mxu0
  %3062 = vmatprep.mubr.bf16.mxu0 %v1111
  %3063 = vmatmul.mubr.bf16.gmra.mxu0 %v1110
  %v3064 = vpop.f32.mrf.mxu0
  %v3065 = vadd.f32 %v2944, %v3064
  %v3066 = vpop.f32.mrf.mxu0
  %v3067 = vpop.f32.mrf.mxu0
  %v3068 = vadd.f32 %v2947, %v3067
  %v3069 = vpop.f32.mrf.mxu0
  %3070 = vmatprep.mubr.bf16.mxu0 %v1115
  %3071 = vmatmul.mubr.bf16.gmra.mxu0 %v1114
  %v3072 = vpop.f32.mrf.mxu0
  %v3073 = vadd.f32 %v2952, %v3072
  %v3074 = vpop.f32.mrf.mxu0
  %v3075 = vpop.f32.mrf.mxu0
  %v3076 = vadd.f32 %v2955, %v3075
  %v3077 = vpop.f32.mrf.mxu0
  %3078 = vmatprep.mubr.bf16.mxu0 %v1119
  %3079 = vmatmul.mubr.bf16.gmra.mxu0 %v1118
  %v3080 = vpop.f32.mrf.mxu0
  %v3081 = vadd.f32 %v2960, %v3080
  %v3082 = vpop.f32.mrf.mxu0
  %v3083 = vpop.f32.mrf.mxu0
  %v3084 = vadd.f32 %v2963, %v3083
  %v3085 = vpop.f32.mrf.mxu0
  %3086 = vmatprep.mubr.bf16.mxu0 %v1123
  %3087 = vmatmul.mubr.bf16.gmra.mxu0 %v1122
  %v3088 = vpop.f32.mrf.mxu0
  %v3089 = vadd.f32 %v2968, %v3088
  %v3090 = vpop.f32.mrf.mxu0
  %v3091 = vpop.f32.mrf.mxu0
  %v3092 = vadd.f32 %v2971, %v3091
  %v3093 = vpop.f32.mrf.mxu0
  %3094 = vmatprep.mubr.bf16.mxu0 %v1127
  %3095 = vmatmul.mubr.bf16.gmra.mxu0 %v1126
  %v3096 = vpop.f32.mrf.mxu0
  %v3097 = vadd.f32 %v2976, %v3096
  %v3098 = vpop.f32.mrf.mxu0
  %v3099 = vpop.f32.mrf.mxu0
  %v3100 = vadd.f32 %v2979, %v3099
  %v3101 = vpop.f32.mrf.mxu0
  %3102 = vdwg.mxu0
  %v3103 = vmax.f32 %v1520, %v2019
  %v3104 = vmax.f32 %v1523, %v2022
  %v3105 = vmax.f32 %v1528, %v2027
  %v3106 = vmax.f32 %v1531, %v2030
  %v3107 = vmax.f32 %v1536, %v2035
  %v3108 = vmax.f32 %v1539, %v2038
  %v3109 = vmax.f32 %v1544, %v2043
  %v3110 = vmax.f32 %v1547, %v2046
  %v3111 = vmax.f32 %v1552, %v2051
  %v3112 = vmax.f32 %v1555, %v2054
  %v3113 = vmax.f32 %v1560, %v2059
  %v3114 = vmax.f32 %v1563, %v2062
  %v3115 = vmax.f32 %v1568, %v2067
  %v3116 = vmax.f32 %v1571, %v2070
  %v3117 = vmax.f32 %v1576, %v2075
  %v3118 = vmax.f32 %v1579, %v2078
  %v3119 = vmax.f32 %v1584, %v2083
  %v3120 = vmax.f32 %v1587, %v2086
  %v3121 = vmax.f32 %v1592, %v2091
  %v3122 = vmax.f32 %v1595, %v2094
  %v3123 = vmax.f32 %v1600, %v2099
  %v3124 = vmax.f32 %v1603, %v2102
  %v3125 = vmax.f32 %v2518, %v3017
  %v3126 = vmax.f32 %v2521, %v3020
  %v3127 = vmax.f32 %v2526, %v3025
  %v3128 = vmax.f32 %v2529, %v3028
  %v3129 = vmax.f32 %v2534, %v3033
  %v3130 = vmax.f32 %v2537, %v3036
  %v3131 = vmax.f32 %v2542, %v3041
  %v3132 = vmax.f32 %v2545, %v3044
  %v3133 = vmax.f32 %v2550, %v3049
  %v3134 = vmax.f32 %v2553, %v3052
  %v3135 = vmax.f32 %v2558, %v3057
  %v3136 = vmax.f32 %v2561, %v3060
  %v3137 = vmax.f32 %v2566, %v3065
  %v3138 = vmax.f32 %v2569, %v3068
  %v3139 = vmax.f32 %v2574, %v3073
  %v3140 = vmax.f32 %v2577, %v3076
  %v3141 = vmax.f32 %v2582, %v3081
  %v3142 = vmax.f32 %v2585, %v3084
  %v3143 = vmax.f32 %v2590, %v3089
  %v3144 = vmax.f32 %v2593, %v3092
  %v3145 = vmax.f32 %v2598, %v3097
  %v3146 = vmax.f32 %v2601, %v3100
  %v3147 = vmax.f32 %v3103, %v3125
  %v3148 = vmax.f32 %v3104, %v3126
  %v3149 = vmax.f32 %v3105, %v3127
  %v3150 = vmax.f32 %v3106, %v3128
  %v3151 = vmax.f32 %v3107, %v3129
  %v3152 = vmax.f32 %v3108, %v3130
  %v3153 = vmax.f32 %v3109, %v3131
  %v3154 = vmax.f32 %v3110, %v3132
  %v3155 = vmax.f32 %v3111, %v3133
  %v3156 = vmax.f32 %v3112, %v3134
  %v3157 = vmax.f32 %v3113, %v3135
  %v3158 = vmax.f32 %v3114, %v3136
  %v3159 = vmax.f32 %v3115, %v3137
  %v3160 = vmax.f32 %v3116, %v3138
  %v3161 = vmax.f32 %v3117, %v3139
  %v3162 = vmax.f32 %v3118, %v3140
  %v3163 = vmax.f32 %v3119, %v3141
  %v3164 = vmax.f32 %v3120, %v3142
  %v3165 = vmax.f32 %v3121, %v3143
  %v3166 = vmax.f32 %v3122, %v3144
  %v3167 = vmax.f32 %v3123, %v3145
  %v3168 = vmax.f32 %v3124, %v3146
  %v3169 = vld [vmem:[%s2] sm:$0x1]
  %v3171 = vlaneseq
  %v3172 = vshrl.u32 %v3171, 7
  %v3173 = vsub.s32 0, %v3172
  %v3174 = vrot.slane %v3169, %v3173
  %v3176 = vadd.f32 %v3147, %v3174
  %v3177 = vadd.f32 %v3148, %v3174
  %v3178 = vadd.f32 %v3149, %v3174
  %v3179 = vadd.f32 %v3150, %v3174
  %v3180 = vadd.f32 %v3151, %v3174
  %v3181 = vadd.f32 %v3152, %v3174
  %v3182 = vadd.f32 %v3153, %v3174
  %v3183 = vadd.f32 %v3154, %v3174
  %v3184 = vadd.f32 %v3155, %v3174
  %v3185 = vadd.f32 %v3156, %v3174
  %v3186 = vadd.f32 %v3157, %v3174
  %v3187 = vadd.f32 %v3158, %v3174
  %v3188 = vadd.f32 %v3159, %v3174
  %v3189 = vadd.f32 %v3160, %v3174
  %v3190 = vadd.f32 %v3161, %v3174
  %v3191 = vadd.f32 %v3162, %v3174
  %v3192 = vadd.f32 %v3163, %v3174
  %v3193 = vadd.f32 %v3164, %v3174
  %v3194 = vadd.f32 %v3165, %v3174
  %v3195 = vadd.f32 %v3166, %v3174
  %v3196 = vadd.f32 %v3167, %v3174
  %v3197 = vadd.f32 %v3168, %v3174
  %v3198 = vmax.f32 %v3176, 0.0
  %v3199 = vmax.f32 %v3177, 0.0
  %v3200 = vmax.f32 %v3178, 0.0
  %v3201 = vmax.f32 %v3179, 0.0
  %v3202 = vmax.f32 %v3180, 0.0
  %v3203 = vmax.f32 %v3181, 0.0
  %v3204 = vmax.f32 %v3182, 0.0
  %v3205 = vmax.f32 %v3183, 0.0
  %v3206 = vmax.f32 %v3184, 0.0
  %v3207 = vmax.f32 %v3185, 0.0
  %v3208 = vmax.f32 %v3186, 0.0
  %v3209 = vmax.f32 %v3187, 0.0
  %v3210 = vmax.f32 %v3188, 0.0
  %v3211 = vmax.f32 %v3189, 0.0
  %v3212 = vmax.f32 %v3190, 0.0
  %v3213 = vmax.f32 %v3191, 0.0
  %v3214 = vmax.f32 %v3192, 0.0
  %v3215 = vmax.f32 %v3193, 0.0
  %v3216 = vmax.f32 %v3194, 0.0
  %v3217 = vmax.f32 %v3195, 0.0
  %v3218 = vmax.f32 %v3196, 0.0
  %v3219 = vmax.f32 %v3197, 0.0
  %v3220 = vpack.c.bf16 %v3199, %v3198
  %v3221 = vpack.c.bf16 %v3201, %v3200
  %v3222 = vpack.c.bf16 %v3203, %v3202
  %v3223 = vpack.c.bf16 %v3205, %v3204
  %v3224 = vpack.c.bf16 %v3207, %v3206
  %v3225 = vpack.c.bf16 %v3209, %v3208
  %v3226 = vpack.c.bf16 %v3211, %v3210
  %v3227 = vpack.c.bf16 %v3213, %v3212
  %v3228 = vpack.c.bf16 %v3215, %v3214
  %v3229 = vpack.c.bf16 %v3217, %v3216
  %v3230 = vpack.c.bf16 %v3219, %v3218
  %v3242 = vunpack.c.l.b16 %v3220
  %v3243 = vunpack.c.h.b16 %v3220
  %v3244 = vunpack.c.l.b16 %v3221
  %v3245 = vunpack.c.h.b16 %v3221
  %v3246 = vunpack.c.l.b16 %v3222
  %v3247 = vunpack.c.h.b16 %v3222
  %v3248 = vunpack.c.l.b16 %v3223
  %v3249 = vunpack.c.h.b16 %v3223
  %v3250 = vunpack.c.l.b16 %v3224
  %v3251 = vunpack.c.h.b16 %v3224
  %v3252 = vunpack.c.l.b16 %v3225
  %v3253 = vunpack.c.h.b16 %v3225
  %v3254 = vunpack.c.l.b16 %v3226
  %v3255 = vunpack.c.h.b16 %v3226
  %v3256 = vunpack.c.l.b16 %v3227
  %v3257 = vunpack.c.h.b16 %v3227
  %v3258 = vunpack.c.l.b16 %v3228
  %v3259 = vunpack.c.h.b16 %v3228
  %v3260 = vunpack.c.l.b16 %v3229
  %v3261 = vunpack.c.h.b16 %v3229
  %v3262 = vunpack.c.l.b16 %v3230
  %v3263 = vunpack.c.h.b16 %v3230
  %v3264 = vpack.c.b16 %v3242, %v3242
  %v3265 = vpack.c.b16 %v3243, %v3243
  %v3266 = vpack.c.b16 %v3244, %v3244
  %v3267 = vpack.c.b16 %v3245, %v3245
  %v3268 = vpack.c.b16 %v3246, %v3246
  %v3269 = vpack.c.b16 %v3247, %v3247
  %v3270 = vpack.c.b16 %v3248, %v3248
  %v3271 = vpack.c.b16 %v3249, %v3249
  %v3272 = vpack.c.b16 %v3250, %v3250
  %v3273 = vpack.c.b16 %v3251, %v3251
  %v3274 = vpack.c.b16 %v3252, %v3252
  %v3275 = vpack.c.b16 %v3253, %v3253
  %v3276 = vpack.c.b16 %v3254, %v3254
  %v3277 = vpack.c.b16 %v3255, %v3255
  %v3278 = vpack.c.b16 %v3256, %v3256
  %v3279 = vpack.c.b16 %v3257, %v3257
  %v3280 = vpack.c.b16 %v3258, %v3258
  %v3281 = vpack.c.b16 %v3259, %v3259
  %v3282 = vpack.c.b16 %v3260, %v3260
  %v3283 = vpack.c.b16 %v3261, %v3261
  %v3284 = vpack.c.b16 %v3262, %v3262
  %v3285 = vpack.c.b16 %v3263, %v3263
  %vm3308 = vcmask 257024
  %3309 = vst.msk [vmem:[#allocation2] sm:$0xf] %vm3308, %v3264
  %3310 = vst.msk [vmem:[#allocation2 + $0x4] sm:$0xf] %vm3308, %v3265
  %3311 = vst.msk [vmem:[#allocation2 + $0x8] sm:$0xf] %vm3308, %v3266
  %3312 = vst.msk [vmem:[#allocation2 + $0xc] sm:$0xf] %vm3308, %v3267
  %3313 = vst.msk [vmem:[#allocation2 + $0x10] sm:$0xf] %vm3308, %v3268
  %3314 = vst.msk [vmem:[#allocation2 + $0x14] sm:$0xf] %vm3308, %v3269
  %3315 = vst.msk [vmem:[#allocation2 + $0x18] sm:$0xf] %vm3308, %v3270
  %3316 = vst.msk [vmem:[#allocation2 + $0x1c] sm:$0xf] %vm3308, %v3271
  %3317 = vst.msk [vmem:[#allocation2 + $0x20] sm:$0xf] %vm3308, %v3272
  %3318 = vst.msk [vmem:[#allocation2 + $0x24] sm:$0xf] %vm3308, %v3273
  %3319 = vst.msk [vmem:[#allocation2 + $0x28] sm:$0xf] %vm3308, %v3274
  %3320 = vst.msk [vmem:[#allocation2 + $0x2c] sm:$0xf] %vm3308, %v3275
  %3321 = vst.msk [vmem:[#allocation2 + $0x30] sm:$0xf] %vm3308, %v3276
  %3322 = vst.msk [vmem:[#allocation2 + $0x34] sm:$0xf] %vm3308, %v3277
  %3323 = vst.msk [vmem:[#allocation2 + $0x38] sm:$0xf] %vm3308, %v3278
  %3324 = vst.msk [vmem:[#allocation2 + $0x3c] sm:$0xf] %vm3308, %v3279
  %3325 = vst.msk [vmem:[#allocation2 + $0x40] sm:$0xf] %vm3308, %v3280
  %3326 = vst.msk [vmem:[#allocation2 + $0x44] sm:$0xf] %vm3308, %v3281
  %3327 = vst.msk [vmem:[#allocation2 + $0x48] sm:$0xf] %vm3308, %v3282
  %3328 = vst.msk [vmem:[#allocation2 + $0x4c] sm:$0xf] %vm3308, %v3283
  %3329 = vst.msk [vmem:[#allocation2 + $0x50] sm:$0xf] %vm3308, %v3284
  %3330 = vst.msk [vmem:[#allocation2 + $0x54] sm:$0xf] %vm3308, %v3285
  %v3331 = vld [vmem:[#allocation2] sm:$0x1]
  %3333 = vrot.lane.b32.xlu0 %v3331, 96
  %v3334 = vpop.permute.xlu0 %3333
  %vm3336 = vcmask 1041152
  %vm3337 = vsmask.f32 256
  %vm3338 = vmand %vm3336, %vm3337
  %v3339 = vld [vmem:[#allocation3] sm:$0x1]
  %v3340 = vsel %vm3338, %v3334, %v3339
  %3341 = vst [vmem:[#allocation3] sm:$0x1] %v3340
  %v3342 = vld [vmem:[#allocation2] sm:$0x1]
  %3344 = vrot.lane.b32.xlu0 %v3342, 64
  %v3345 = vpop.permute.xlu0 %3344
  %vm3347 = vcmask 778752
  %vm3348 = vsmask.f32 7938
  %vm3349 = vmand %vm3347, %vm3348
  %v3350 = vld [vmem:[#allocation3] sm:$0x1]
  %v3351 = vsel %vm3349, %v3345, %v3350
  %3352 = vst [vmem:[#allocation3] sm:$0x1] %v3351
  %v3353 = vld [vmem:[#allocation2] sm:$0x2]
  %v3355 = vshll.u32 %v3353, 16
  %v3357 = vrot.slane %v3355, 5
  %v3358 = vrot.slane %v3357, 4
  %3359 = vrot.lane.b32.xlu0 %v3358, 96
  %v3360 = vpop.permute.xlu0 %3359
  %vm3362 = vmand %vm3336, %vm3348
  %v3363 = vld [vmem:[#allocation3] sm:$0x1]
  %v3364 = vsel %vm3362, %v3360, %v3363
  %3365 = vst [vmem:[#allocation3] sm:$0x1] %v3364
  %v3366 = vld [vmem:[#allocation2] sm:$0x2]
  %v3368 = vshrl.u32 %v3366, 16
  %v3370 = vrot.slane %v3368, 4
  %v3371 = vrot.slane %v3370, 4
  %3372 = vrot.lane.b32.xlu0 %v3371, 64
  %v3373 = vpop.permute.xlu0 %3372
  %vm3375 = vcmask 779777
  %vm3376 = vsmask.f32 1280
  %vm3377 = vmand %vm3375, %vm3376
  %v3378 = vld [vmem:[#allocation3] sm:$0x2]
  %v3379 = vsel %vm3377, %v3373, %v3378
  %3380 = vst [vmem:[#allocation3] sm:$0x2] %v3379
  %v3381 = vld [vmem:[#allocation2] sm:$0x4]
  %v3383 = vrot.slane %v3381, 5
  %v3384 = vrot.slane %v3383, 4
  %3385 = vrot.lane.b32.xlu0 %v3384, 96
  %v3386 = vpop.permute.xlu0 %3385
  %vm3388 = vcmask 1042177
  %vm3389 = vmand %vm3388, %vm3376
  %v3390 = vld [vmem:[#allocation3] sm:$0x2]
  %v3391 = vsel %vm3389, %v3386, %v3390
  %3392 = vst [vmem:[#allocation3] sm:$0x2] %v3391
  %v3393 = vld [vmem:[#allocation2] sm:$0x4]
  %v3395 = vrot.slane %v3393, 5
  %v3396 = vrot.slane %v3395, 4
  %3397 = vrot.lane.b32.xlu0 %v3396, 64
  %v3398 = vpop.permute.xlu0 %3397
  %vm3400 = vsmask.f32 7942
  %vm3401 = vmand %vm3375, %vm3400
  %v3402 = vld [vmem:[#allocation3] sm:$0x2]
  %v3403 = vsel %vm3401, %v3398, %v3402
  %3404 = vst [vmem:[#allocation3] sm:$0x2] %v3403
  %v3405 = vld [vmem:[#allocation2] sm:$0x8]
  %v3407 = vshll.u32 %v3405, 16
  %v3409 = vrot.slane %v3407, 6
  %v3410 = vrot.slane %v3409, 4
  %3411 = vrot.lane.b32.xlu0 %v3410, 96
  %v3412 = vpop.permute.xlu0 %3411
  %vm3414 = vmand %vm3388, %vm3400
  %v3415 = vld [vmem:[#allocation3] sm:$0x2]
  %v3416 = vsel %vm3414, %v3412, %v3415
  %3417 = vst [vmem:[#allocation3] sm:$0x2] %v3416
  %v3418 = vld [vmem:[#allocation2] sm:$0x8]
  %v3420 = vshrl.u32 %v3418, 16
  %v3422 = vrot.slane %v3420, 5
  %v3423 = vrot.slane %v3422, 4
  %3424 = vrot.lane.b32.xlu0 %v3423, 64
  %v3425 = vpop.permute.xlu0 %3424
  %vm3427 = vcmask 780802
  %vm3428 = vsmask.f32 2304
  %vm3429 = vmand %vm3427, %vm3428
  %v3430 = vld [vmem:[#allocation3] sm:$0x4]
  %v3431 = vsel %vm3429, %v3425, %v3430
  %3432 = vst [vmem:[#allocation3] sm:$0x4] %v3431
  %v3433 = vld [vmem:[#allocation2 + $0x4] sm:$0x1]
  %v3435 = vrot.slane %v3433, 6
  %3436 = vrot.lane.b32.xlu0 %v3435, 32
  %v3437 = vpop.permute.xlu0 %3436
  %vm3439 = vcmask 518402
  %vm3440 = vsmask.f32 7946
  %vm3441 = vmand %vm3439, %vm3440
  %v3442 = vld [vmem:[#allocation3] sm:$0x4]
  %v3443 = vsel %vm3441, %v3437, %v3442
  %3444 = vst [vmem:[#allocation3] sm:$0x4] %v3443
  %v3445 = vld [vmem:[#allocation2 + $0x4] sm:$0x2]
  %v3447 = vrot.slane %v3445, 6
  %vm3449 = vcmask 257027
  %vm3450 = vmand %vm3449, %vm122
  %v3451 = vld [vmem:[#allocation3] sm:$0x8]
  %v3452 = vsel %vm3450, %v3447, %v3451
  %3453 = vst [vmem:[#allocation3] sm:$0x8] %v3452
  %v3454 = vld [vmem:[#allocation2 + $0x4] sm:$0x2]
  %v3456 = vshrl.u32 %v3454, 16
  %v3458 = vrot.slane %v3456, 6
  %3459 = vrot.lane.b32.xlu0 %v3458, 32
  %v3460 = vpop.permute.xlu0 %3459
  %vm3462 = vcmask 519427
  %vm3463 = vmand %vm3462, %vm122
  %v3464 = vld [vmem:[#allocation3] sm:$0x8]
  %v3465 = vsel %vm3463, %v3460, %v3464
  %3466 = vst [vmem:[#allocation3] sm:$0x8] %v3465
  %v3467 = vld [vmem:[#allocation2 + $0x4] sm:$0x4]
  %v3469 = vshll.u32 %v3467, 16
  %v3471 = vrot.slane %v3469, 7
  %vm3473 = vsmask.f32 7950
  %vm3474 = vmand %vm3449, %vm3473
  %v3475 = vld [vmem:[#allocation3] sm:$0x8]
  %v3476 = vsel %vm3474, %v3471, %v3475
  %3477 = vst [vmem:[#allocation3] sm:$0x8] %v3476
  %v3478 = vld [vmem:[#allocation2 + $0x4] sm:$0x4]
  %v3480 = vrot.slane %v3478, 7
  %3481 = vrot.lane.b32.xlu0 %v3480, 32
  %v3482 = vpop.permute.xlu0 %3481
  %vm3484 = vmand %vm3462, %vm3473
  %v3485 = vld [vmem:[#allocation3] sm:$0x8]
  %v3486 = vsel %vm3484, %v3482, %v3485
  %3487 = vst [vmem:[#allocation3] sm:$0x8] %v3486
  %v3488 = vld [vmem:[#allocation2 + $0x4] sm:$0x8]
  %v3490 = vrot.slane %v3488, 7
  %v3491 = vrot.slane %v3490, 4
  %vm3493 = vcmask 253952
  %vm3494 = vmand %vm3493, %vm3337
  %v3495 = vld [vmem:[#allocation3 + $0x4] sm:$0x1]
  %v3496 = vsel %vm3494, %v3491, %v3495
  %3497 = vst [vmem:[#allocation3 + $0x4] sm:$0x1] %v3496
  %v3498 = vld [vmem:[#allocation2 + $0x4] sm:$0x8]
  %v3500 = vshrl.u32 %v3498, 16
  %v3502 = vrot.slane %v3500, 7
  %v3503 = vrot.slane %v3502, 4
  %3504 = vrot.lane.b32.xlu0 %v3503, 32
  %v3505 = vpop.permute.xlu0 %3504
  %vm3507 = vcmask 516352
  %vm3508 = vmand %vm3507, %vm3337
  %v3509 = vld [vmem:[#allocation3 + $0x4] sm:$0x1]
  %v3510 = vsel %vm3508, %v3505, %v3509
  %3511 = vst [vmem:[#allocation3 + $0x4] sm:$0x1] %v3510
  %v3512 = vld [vmem:[#allocation2 + $0x8] sm:$0x1]
  %v3514 = vshll.u32 %v3512, 16
  %vm3517 = vmand %vm3493, %vm3348
  %v3518 = vld [vmem:[#allocation3 + $0x4] sm:$0x1]
  %v3519 = vsel %vm3517, %v3514, %v3518
  %3520 = vst [vmem:[#allocation3 + $0x4] sm:$0x1] %v3519
  %v3521 = vld [vmem:[#allocation2 + $0x8] sm:$0x2]
  %v3523 = vshll.u32 %v3521, 16
  %v3525 = vrot.slane %v3523, 7
  %3526 = vrot.lane.b32.xlu0 %v3525, 96
  %v3527 = vpop.permute.xlu0 %3526
  %vm3529 = vcmask 1043202
  %vm3530 = vmand %vm3529, %vm3440
  %v3531 = vld [vmem:[#allocation3] sm:$0x4]
  %v3532 = vsel %vm3530, %v3527, %v3531
  %3533 = vst [vmem:[#allocation3] sm:$0x4] %v3532
  %v3534 = vld [vmem:[#allocation2 + $0x8] sm:$0x2]
  %v3536 = vshrl.u32 %v3534, 16
  %v3538 = vrot.slane %v3536, 6
  %3539 = vrot.lane.b32.xlu0 %v3538, 64
  %v3540 = vpop.permute.xlu0 %3539
  %vm3542 = vcmask 781827
  %vm3543 = vmand %vm3542, %vm122
  %v3544 = vld [vmem:[#allocation3] sm:$0x8]
  %v3545 = vsel %vm3543, %v3540, %v3544
  %3546 = vst [vmem:[#allocation3] sm:$0x8] %v3545
  %v3547 = vld [vmem:[#allocation2 + $0x8] sm:$0x4]
  %v3549 = vrot.slane %v3547, 7
  %3550 = vrot.lane.b32.xlu0 %v3549, 96
  %v3551 = vpop.permute.xlu0 %3550
  %vm3553 = vcmask 1044227
  %vm3554 = vmand %vm3553, %vm122
  %v3555 = vld [vmem:[#allocation3] sm:$0x8]
  %v3556 = vsel %vm3554, %v3551, %v3555
  %3557 = vst [vmem:[#allocation3] sm:$0x8] %v3556
  %v3558 = vld [vmem:[#allocation2 + $0x8] sm:$0x4]
  %v3560 = vrot.slane %v3558, 7
  %3561 = vrot.lane.b32.xlu0 %v3560, 64
  %v3562 = vpop.permute.xlu0 %3561
  %vm3564 = vmand %vm3542, %vm3473
  %v3565 = vld [vmem:[#allocation3] sm:$0x8]
  %v3566 = vsel %vm3564, %v3562, %v3565
  %3567 = vst [vmem:[#allocation3] sm:$0x8] %v3566
  %v3568 = vld [vmem:[#allocation2 + $0x8] sm:$0x8]
  %v3570 = vshll.u32 %v3568, 16
  %3572 = vrot.lane.b32.xlu0 %v3570, 96
  %v3573 = vpop.permute.xlu0 %3572
  %vm3575 = vmand %vm3553, %vm3473
  %v3576 = vld [vmem:[#allocation3] sm:$0x8]
  %v3577 = vsel %vm3575, %v3573, %v3576
  %3578 = vst [vmem:[#allocation3] sm:$0x8] %v3577
  %v3579 = vld [vmem:[#allocation2 + $0x8] sm:$0x8]
  %v3581 = vshrl.u32 %v3579, 16
  %v3583 = vrot.slane %v3581, 7
  %v3584 = vrot.slane %v3583, 4
  %3585 = vrot.lane.b32.xlu0 %v3584, 64
  %v3586 = vpop.permute.xlu0 %3585
  %vm3588 = vmand %vm3347, %vm3337
  %v3589 = vld [vmem:[#allocation3 + $0x4] sm:$0x1]
  %v3590 = vsel %vm3588, %v3586, %v3589
  %3591 = vst [vmem:[#allocation3 + $0x4] sm:$0x1] %v3590
  %v3592 = vld [vmem:[#allocation2 + $0xc] sm:$0x1]
  %3594 = vrot.lane.b32.xlu0 %v3592, 96
  %v3595 = vpop.permute.xlu0 %3594
  %v3597 = vld [vmem:[#allocation3 + $0x4] sm:$0x1]
  %v3598 = vsel %vm3338, %v3595, %v3597
  %3599 = vst [vmem:[#allocation3 + $0x4] sm:$0x1] %v3598
  %v3600 = vld [vmem:[#allocation2 + $0xc] sm:$0x1]
  %3602 = vrot.lane.b32.xlu0 %v3600, 64
  %v3603 = vpop.permute.xlu0 %3602
  %v3605 = vld [vmem:[#allocation3 + $0x4] sm:$0x1]
  %v3606 = vsel %vm3349, %v3603, %v3605
  %3607 = vst [vmem:[#allocation3 + $0x4] sm:$0x1] %v3606
  %v3608 = vld [vmem:[#allocation2 + $0xc] sm:$0x2]
  %v3610 = vshrl.u32 %v3608, 16
  %v3612 = vrot.slane %v3610, 4
  %v3613 = vrot.slane %v3612, 4
  %3614 = vrot.lane.b32.xlu0 %v3613, 32
  %v3615 = vpop.permute.xlu0 %3614
  %vm3617 = vcmask 517377
  %vm3618 = vmand %vm3617, %vm3376
  %v3619 = vld [vmem:[#allocation3 + $0x4] sm:$0x2]
  %v3620 = vsel %vm3618, %v3615, %v3619
  %3621 = vst [vmem:[#allocation3 + $0x4] sm:$0x2] %v3620
  %v3622 = vld [vmem:[#allocation2 + $0xc] sm:$0x4]
  %v3624 = vshll.u32 %v3622, 16
  %v3626 = vrot.slane %v3624, 5
  %v3627 = vrot.slane %v3626, 4
  %vm3629 = vcmask 254977
  %vm3630 = vmand %vm3629, %vm3400
  %v3631 = vld [vmem:[#allocation3 + $0x4] sm:$0x2]
  %v3632 = vsel %vm3630, %v3627, %v3631
  %3633 = vst [vmem:[#allocation3 + $0x4] sm:$0x2] %v3632
  %v3634 = vld [vmem:[#allocation2 + $0xc] sm:$0x4]
  %v3636 = vrot.slane %v3634, 5
  %v3637 = vrot.slane %v3636, 4
  %3638 = vrot.lane.b32.xlu0 %v3637, 32
  %v3639 = vpop.permute.xlu0 %3638
  %vm3641 = vmand %vm3617, %vm3400
  %v3642 = vld [vmem:[#allocation3 + $0x4] sm:$0x2]
  %v3643 = vsel %vm3641, %v3639, %v3642
  %3644 = vst [vmem:[#allocation3 + $0x4] sm:$0x2] %v3643
  %v3645 = vld [vmem:[#allocation2 + $0xc] sm:$0x8]
  %v3647 = vrot.slane %v3645, 5
  %v3648 = vrot.slane %v3647, 4
  %vm3650 = vcmask 256002
  %vm3651 = vmand %vm3650, %vm3428
  %v3652 = vld [vmem:[#allocation3 + $0x4] sm:$0x4]
  %v3653 = vsel %vm3651, %v3648, %v3652
  %3654 = vst [vmem:[#allocation3 + $0x4] sm:$0x4] %v3653
  %v3655 = vld [vmem:[#allocation2 + $0xc] sm:$0x8]
  %v3657 = vshrl.u32 %v3655, 16
  %v3659 = vrot.slane %v3657, 5
  %v3660 = vrot.slane %v3659, 4
  %3661 = vrot.lane.b32.xlu0 %v3660, 32
  %v3662 = vpop.permute.xlu0 %3661
  %vm3664 = vmand %vm3439, %vm3428
  %v3665 = vld [vmem:[#allocation3 + $0x4] sm:$0x4]
  %v3666 = vsel %vm3664, %v3662, %v3665
  %3667 = vst [vmem:[#allocation3 + $0x4] sm:$0x4] %v3666
  %v3668 = vld [vmem:[#allocation2 + $0x10] sm:$0x1]
  %v3670 = vshll.u32 %v3668, 16
  %v3672 = vrot.slane %v3670, 6
  %vm3674 = vmand %vm3650, %vm3440
  %v3675 = vld [vmem:[#allocation3 + $0x4] sm:$0x4]
  %v3676 = vsel %vm3674, %v3672, %v3675
  %3677 = vst [vmem:[#allocation3 + $0x4] sm:$0x4] %v3676
  %v3678 = vld [vmem:[#allocation2 + $0x10] sm:$0x1]
  %v3680 = vrot.slane %v3678, 6
  %3681 = vrot.lane.b32.xlu0 %v3680, 32
  %v3682 = vpop.permute.xlu0 %3681
  %v3684 = vld [vmem:[#allocation3 + $0x4] sm:$0x4]
  %v3685 = vsel %vm3441, %v3682, %v3684
  %3686 = vst [vmem:[#allocation3 + $0x4] sm:$0x4] %v3685
  %v3687 = vld [vmem:[#allocation2 + $0x10] sm:$0x2]
  %v3689 = vrot.slane %v3687, 6
  %v3691 = vld [vmem:[#allocation3 + $0x4] sm:$0x8]
  %v3692 = vsel %vm3450, %v3689, %v3691
  %3693 = vst [vmem:[#allocation3 + $0x4] sm:$0x8] %v3692
  %v3694 = vld [vmem:[#allocation2 + $0x10] sm:$0x4]
  %v3696 = vrot.slane %v3694, 5
  %v3697 = vrot.slane %v3696, 4
  %3698 = vrot.lane.b32.xlu0 %v3697, 96
  %v3699 = vpop.permute.xlu0 %3698
  %v3701 = vld [vmem:[#allocation3 + $0x4] sm:$0x2]
  %v3702 = vsel %vm3389, %v3699, %v3701
  %3703 = vst [vmem:[#allocation3 + $0x4] sm:$0x2] %v3702
  %v3704 = vld [vmem:[#allocation2 + $0x10] sm:$0x4]
  %v3706 = vrot.slane %v3704, 5
  %v3707 = vrot.slane %v3706, 4
  %3708 = vrot.lane.b32.xlu0 %v3707, 64
  %v3709 = vpop.permute.xlu0 %3708
  %v3711 = vld [vmem:[#allocation3 + $0x4] sm:$0x2]
  %v3712 = vsel %vm3401, %v3709, %v3711
  %3713 = vst [vmem:[#allocation3 + $0x4] sm:$0x2] %v3712
  %v3714 = vld [vmem:[#allocation2 + $0x10] sm:$0x8]
  %v3716 = vshll.u32 %v3714, 16
  %v3718 = vrot.slane %v3716, 6
  %v3719 = vrot.slane %v3718, 4
  %3720 = vrot.lane.b32.xlu0 %v3719, 96
  %v3721 = vpop.permute.xlu0 %3720
  %v3723 = vld [vmem:[#allocation3 + $0x4] sm:$0x2]
  %v3724 = vsel %vm3414, %v3721, %v3723
  %3725 = vst [vmem:[#allocation3 + $0x4] sm:$0x2] %v3724
  %v3726 = vld [vmem:[#allocation2 + $0x10] sm:$0x8]
  %v3728 = vshrl.u32 %v3726, 16
  %v3730 = vrot.slane %v3728, 5
  %v3731 = vrot.slane %v3730, 4
  %3732 = vrot.lane.b32.xlu0 %v3731, 64
  %v3733 = vpop.permute.xlu0 %3732
  %v3735 = vld [vmem:[#allocation3 + $0x4] sm:$0x4]
  %v3736 = vsel %vm3429, %v3733, %v3735
  %3737 = vst [vmem:[#allocation3 + $0x4] sm:$0x4] %v3736
  %v3738 = vld [vmem:[#allocation2 + $0x14] sm:$0x1]
  %v3740 = vrot.slane %v3738, 6
  %3741 = vrot.lane.b32.xlu0 %v3740, 96
  %v3742 = vpop.permute.xlu0 %3741
  %vm3744 = vmand %vm3529, %vm3428
  %v3745 = vld [vmem:[#allocation3 + $0x4] sm:$0x4]
  %v3746 = vsel %vm3744, %v3742, %v3745
  %3747 = vst [vmem:[#allocation3 + $0x4] sm:$0x4] %v3746
  %v3748 = vld [vmem:[#allocation2 + $0x14] sm:$0x1]
  %v3750 = vrot.slane %v3748, 6
  %3751 = vrot.lane.b32.xlu0 %v3750, 64
  %v3752 = vpop.permute.xlu0 %3751
  %vm3754 = vmand %vm3427, %vm3440
  %v3755 = vld [vmem:[#allocation3 + $0x4] sm:$0x4]
  %v3756 = vsel %vm3754, %v3752, %v3755
  %3757 = vst [vmem:[#allocation3 + $0x4] sm:$0x4] %v3756
  %v3758 = vld [vmem:[#allocation2 + $0x14] sm:$0x2]
  %v3760 = vshll.u32 %v3758, 16
  %v3762 = vrot.slane %v3760, 7
  %3763 = vrot.lane.b32.xlu0 %v3762, 96
  %v3764 = vpop.permute.xlu0 %3763
  %v3766 = vld [vmem:[#allocation3 + $0x4] sm:$0x4]
  %v3767 = vsel %vm3530, %v3764, %v3766
  %3768 = vst [vmem:[#allocation3 + $0x4] sm:$0x4] %v3767
  %v3769 = vld [vmem:[#allocation2 + $0x14] sm:$0x2]
  %v3771 = vshrl.u32 %v3769, 16
  %v3773 = vrot.slane %v3771, 6
  %3774 = vrot.lane.b32.xlu0 %v3773, 64
  %v3775 = vpop.permute.xlu0 %3774
  %v3777 = vld [vmem:[#allocation3 + $0x4] sm:$0x8]
  %v3778 = vsel %vm3543, %v3775, %v3777
  %3779 = vst [vmem:[#allocation3 + $0x4] sm:$0x8] %v3778
  %v3780 = vld [vmem:[#allocation2 + $0x14] sm:$0x4]
  %v3782 = vrot.slane %v3780, 7
  %3783 = vrot.lane.b32.xlu0 %v3782, 32
  %v3784 = vpop.permute.xlu0 %3783
  %v3786 = vld [vmem:[#allocation3 + $0x4] sm:$0x8]
  %v3787 = vsel %vm3484, %v3784, %v3786
  %3788 = vst [vmem:[#allocation3 + $0x4] sm:$0x8] %v3787
  %v3789 = vld [vmem:[#allocation2 + $0x14] sm:$0x8]
  %v3791 = vrot.slane %v3789, 7
  %v3792 = vrot.slane %v3791, 4
  %v3794 = vld [vmem:[#allocation3 + $0x8] sm:$0x1]
  %v3795 = vsel %vm3494, %v3792, %v3794
  %3796 = vst [vmem:[#allocation3 + $0x8] sm:$0x1] %v3795
  %v3797 = vld [vmem:[#allocation2 + $0x14] sm:$0x8]
  %v3799 = vshrl.u32 %v3797, 16
  %v3801 = vrot.slane %v3799, 7
  %v3802 = vrot.slane %v3801, 4
  %3803 = vrot.lane.b32.xlu0 %v3802, 32
  %v3804 = vpop.permute.xlu0 %3803
  %v3806 = vld [vmem:[#allocation3 + $0x8] sm:$0x1]
  %v3807 = vsel %vm3508, %v3804, %v3806
  %3808 = vst [vmem:[#allocation3 + $0x8] sm:$0x1] %v3807
  %v3809 = vld [vmem:[#allocation2 + $0x18] sm:$0x1]
  %v3811 = vshll.u32 %v3809, 16
  %v3814 = vld [vmem:[#allocation3 + $0x8] sm:$0x1]
  %v3815 = vsel %vm3517, %v3811, %v3814
  %3816 = vst [vmem:[#allocation3 + $0x8] sm:$0x1] %v3815
  %v3817 = vld [vmem:[#allocation2 + $0x18] sm:$0x1]
  %3819 = vrot.lane.b32.xlu0 %v3817, 32
  %v3820 = vpop.permute.xlu0 %3819
  %vm3822 = vmand %vm3507, %vm3348
  %v3823 = vld [vmem:[#allocation3 + $0x8] sm:$0x1]
  %v3824 = vsel %vm3822, %v3820, %v3823
  %3825 = vst [vmem:[#allocation3 + $0x8] sm:$0x1] %v3824
  %v3826 = vld [vmem:[#allocation2 + $0x18] sm:$0x2]
  %vm3827 = vmand %vm3629, %vm3376
  %v3828 = vld [vmem:[#allocation3 + $0x8] sm:$0x2]
  %v3829 = vsel %vm3827, %v3826, %v3828
  %3830 = vst [vmem:[#allocation3 + $0x8] sm:$0x2] %v3829
  %v3831 = vld [vmem:[#allocation2 + $0x18] sm:$0x2]
  %v3833 = vshrl.u32 %v3831, 16
  %v3835 = vrot.slane %v3833, 4
  %v3836 = vrot.slane %v3835, 4
  %3837 = vrot.lane.b32.xlu0 %v3836, 32
  %v3838 = vpop.permute.xlu0 %3837
  %v3840 = vld [vmem:[#allocation3 + $0x8] sm:$0x2]
  %v3841 = vsel %vm3618, %v3838, %v3840
  %3842 = vst [vmem:[#allocation3 + $0x8] sm:$0x2] %v3841
  %v3843 = vld [vmem:[#allocation2 + $0x18] sm:$0x4]
  %v3845 = vshll.u32 %v3843, 16
  %v3847 = vrot.slane %v3845, 5
  %v3848 = vrot.slane %v3847, 4
  %v3850 = vld [vmem:[#allocation3 + $0x8] sm:$0x2]
  %v3851 = vsel %vm3630, %v3848, %v3850
  %3852 = vst [vmem:[#allocation3 + $0x8] sm:$0x2] %v3851
  %v3853 = vld [vmem:[#allocation2 + $0x18] sm:$0x8]
  %v3855 = vshll.u32 %v3853, 16
  %3857 = vrot.lane.b32.xlu0 %v3855, 96
  %v3858 = vpop.permute.xlu0 %3857
  %v3860 = vld [vmem:[#allocation3 + $0x4] sm:$0x8]
  %v3861 = vsel %vm3575, %v3858, %v3860
  %3862 = vst [vmem:[#allocation3 + $0x4] sm:$0x8] %v3861
  %v3863 = vld [vmem:[#allocation2 + $0x18] sm:$0x8]
  %v3865 = vshrl.u32 %v3863, 16
  %v3867 = vrot.slane %v3865, 7
  %v3868 = vrot.slane %v3867, 4
  %3869 = vrot.lane.b32.xlu0 %v3868, 64
  %v3870 = vpop.permute.xlu0 %3869
  %v3872 = vld [vmem:[#allocation3 + $0x8] sm:$0x1]
  %v3873 = vsel %vm3588, %v3870, %v3872
  %3874 = vst [vmem:[#allocation3 + $0x8] sm:$0x1] %v3873
  %v3875 = vld [vmem:[#allocation2 + $0x1c] sm:$0x1]
  %3877 = vrot.lane.b32.xlu0 %v3875, 96
  %v3878 = vpop.permute.xlu0 %3877
  %v3880 = vld [vmem:[#allocation3 + $0x8] sm:$0x1]
  %v3881 = vsel %vm3338, %v3878, %v3880
  %3882 = vst [vmem:[#allocation3 + $0x8] sm:$0x1] %v3881
  %v3883 = vld [vmem:[#allocation2 + $0x1c] sm:$0x1]
  %3885 = vrot.lane.b32.xlu0 %v3883, 64
  %v3886 = vpop.permute.xlu0 %3885
  %v3888 = vld [vmem:[#allocation3 + $0x8] sm:$0x1]
  %v3889 = vsel %vm3349, %v3886, %v3888
  %3890 = vst [vmem:[#allocation3 + $0x8] sm:$0x1] %v3889
  %v3891 = vld [vmem:[#allocation2 + $0x1c] sm:$0x2]
  %v3893 = vshll.u32 %v3891, 16
  %v3895 = vrot.slane %v3893, 5
  %v3896 = vrot.slane %v3895, 4
  %3897 = vrot.lane.b32.xlu0 %v3896, 96
  %v3898 = vpop.permute.xlu0 %3897
  %v3900 = vld [vmem:[#allocation3 + $0x8] sm:$0x1]
  %v3901 = vsel %vm3362, %v3898, %v3900
  %3902 = vst [vmem:[#allocation3 + $0x8] sm:$0x1] %v3901
  %v3903 = vld [vmem:[#allocation2 + $0x1c] sm:$0x2]
  %v3905 = vshrl.u32 %v3903, 16
  %v3907 = vrot.slane %v3905, 4
  %v3908 = vrot.slane %v3907, 4
  %3909 = vrot.lane.b32.xlu0 %v3908, 64
  %v3910 = vpop.permute.xlu0 %3909
  %v3912 = vld [vmem:[#allocation3 + $0x8] sm:$0x2]
  %v3913 = vsel %vm3377, %v3910, %v3912
  %3914 = vst [vmem:[#allocation3 + $0x8] sm:$0x2] %v3913
  %v3915 = vld [vmem:[#allocation2 + $0x1c] sm:$0x4]
  %v3917 = vrot.slane %v3915, 5
  %v3918 = vrot.slane %v3917, 4
  %3919 = vrot.lane.b32.xlu0 %v3918, 96
  %v3920 = vpop.permute.xlu0 %3919
  %v3922 = vld [vmem:[#allocation3 + $0x8] sm:$0x2]
  %v3923 = vsel %vm3389, %v3920, %v3922
  %3924 = vst [vmem:[#allocation3 + $0x8] sm:$0x2] %v3923
  %v3925 = vld [vmem:[#allocation2 + $0x1c] sm:$0x4]
  %v3927 = vrot.slane %v3925, 5
  %v3928 = vrot.slane %v3927, 4
  %3929 = vrot.lane.b32.xlu0 %v3928, 64
  %v3930 = vpop.permute.xlu0 %3929
  %v3932 = vld [vmem:[#allocation3 + $0x8] sm:$0x2]
  %v3933 = vsel %vm3401, %v3930, %v3932
  %3934 = vst [vmem:[#allocation3 + $0x8] sm:$0x2] %v3933
  %v3935 = vld [vmem:[#allocation2 + $0x1c] sm:$0x8]
  %v3937 = vshrl.u32 %v3935, 16
  %v3939 = vrot.slane %v3937, 5
  %v3940 = vrot.slane %v3939, 4
  %3941 = vrot.lane.b32.xlu0 %v3940, 32
  %v3942 = vpop.permute.xlu0 %3941
  %v3944 = vld [vmem:[#allocation3 + $0x8] sm:$0x4]
  %v3945 = vsel %vm3664, %v3942, %v3944
  %3946 = vst [vmem:[#allocation3 + $0x8] sm:$0x4] %v3945
  %v3947 = vld [vmem:[#allocation2 + $0x20] sm:$0x1]
  %v3949 = vshll.u32 %v3947, 16
  %v3951 = vrot.slane %v3949, 6
  %v3953 = vld [vmem:[#allocation3 + $0x8] sm:$0x4]
  %v3954 = vsel %vm3674, %v3951, %v3953
  %3955 = vst [vmem:[#allocation3 + $0x8] sm:$0x4] %v3954
  %v3956 = vld [vmem:[#allocation2 + $0x20] sm:$0x1]
  %v3958 = vrot.slane %v3956, 6
  %3959 = vrot.lane.b32.xlu0 %v3958, 32
  %v3960 = vpop.permute.xlu0 %3959
  %v3962 = vld [vmem:[#allocation3 + $0x8] sm:$0x4]
  %v3963 = vsel %vm3441, %v3960, %v3962
  %3964 = vst [vmem:[#allocation3 + $0x8] sm:$0x4] %v3963
  %v3965 = vld [vmem:[#allocation2 + $0x20] sm:$0x2]
  %v3967 = vrot.slane %v3965, 6
  %v3969 = vld [vmem:[#allocation3 + $0x8] sm:$0x8]
  %v3970 = vsel %vm3450, %v3967, %v3969
  %3971 = vst [vmem:[#allocation3 + $0x8] sm:$0x8] %v3970
  %v3972 = vld [vmem:[#allocation2 + $0x20] sm:$0x2]
  %v3974 = vshrl.u32 %v3972, 16
  %v3976 = vrot.slane %v3974, 6
  %3977 = vrot.lane.b32.xlu0 %v3976, 32
  %v3978 = vpop.permute.xlu0 %3977
  %v3980 = vld [vmem:[#allocation3 + $0x8] sm:$0x8]
  %v3981 = vsel %vm3463, %v3978, %v3980
  %3982 = vst [vmem:[#allocation3 + $0x8] sm:$0x8] %v3981
  %v3983 = vld [vmem:[#allocation2 + $0x20] sm:$0x4]
  %v3985 = vshll.u32 %v3983, 16
  %v3987 = vrot.slane %v3985, 7
  %v3989 = vld [vmem:[#allocation3 + $0x8] sm:$0x8]
  %v3990 = vsel %vm3474, %v3987, %v3989
  %3991 = vst [vmem:[#allocation3 + $0x8] sm:$0x8] %v3990
  %v3992 = vld [vmem:[#allocation2 + $0x20] sm:$0x4]
  %v3994 = vrot.slane %v3992, 7
  %3995 = vrot.lane.b32.xlu0 %v3994, 32
  %v3996 = vpop.permute.xlu0 %3995
  %v3998 = vld [vmem:[#allocation3 + $0x8] sm:$0x8]
  %v3999 = vsel %vm3484, %v3996, %v3998
  %4000 = vst [vmem:[#allocation3 + $0x8] sm:$0x8] %v3999
  %v4001 = vld [vmem:[#allocation2 + $0x20] sm:$0x8]
  %v4003 = vrot.slane %v4001, 7
  %v4004 = vrot.slane %v4003, 4
  %v4006 = vld [vmem:[#allocation3 + $0xc] sm:$0x1]
  %v4007 = vsel %vm3494, %v4004, %v4006
  %4008 = vst [vmem:[#allocation3 + $0xc] sm:$0x1] %v4007
  %v4009 = vld [vmem:[#allocation2 + $0x28] sm:$0x1]
  %4011 = vrot.lane.b32.xlu0 %v4009, 96
  %v4012 = vpop.permute.xlu0 %4011
  %v4014 = vld [vmem:[#allocation3 + $0xc] sm:$0x1]
  %v4015 = vsel %vm3362, %v4012, %v4014
  %4016 = vst [vmem:[#allocation3 + $0xc] sm:$0x1] %v4015
  %v4017 = vld [vmem:[#allocation2 + $0x28] sm:$0x2]
  %4019 = vrot.lane.b32.xlu0 %v4017, 64
  %v4020 = vpop.permute.xlu0 %4019
  %v4022 = vld [vmem:[#allocation3 + $0xc] sm:$0x2]
  %v4023 = vsel %vm3377, %v4020, %v4022
  %4024 = vst [vmem:[#allocation3 + $0xc] sm:$0x2] %v4023
  %v4025 = vld [vmem:[#allocation2 + $0x28] sm:$0x2]
  %v4027 = vshrl.u32 %v4025, 16
  %v4029 = vrot.slane %v4027, 4
  %v4030 = vrot.slane %v4029, 4
  %4031 = vrot.lane.b32.xlu0 %v4030, 96
  %v4032 = vpop.permute.xlu0 %4031
  %v4034 = vld [vmem:[#allocation3 + $0xc] sm:$0x2]
  %v4035 = vsel %vm3389, %v4032, %v4034
  %4036 = vst [vmem:[#allocation3 + $0xc] sm:$0x2] %v4035
  %v4037 = vld [vmem:[#allocation2 + $0x28] sm:$0x4]
  %v4039 = vshll.u32 %v4037, 16
  %v4041 = vrot.slane %v4039, 5
  %v4042 = vrot.slane %v4041, 4
  %4043 = vrot.lane.b32.xlu0 %v4042, 64
  %v4044 = vpop.permute.xlu0 %4043
  %v4046 = vld [vmem:[#allocation3 + $0xc] sm:$0x2]
  %v4047 = vsel %vm3401, %v4044, %v4046
  %4048 = vst [vmem:[#allocation3 + $0xc] sm:$0x2] %v4047
  %v4049 = vld [vmem:[#allocation2 + $0x28] sm:$0x4]
  %v4051 = vrot.slane %v4049, 5
  %v4052 = vrot.slane %v4051, 4
  %4053 = vrot.lane.b32.xlu0 %v4052, 96
  %v4054 = vpop.permute.xlu0 %4053
  %v4056 = vld [vmem:[#allocation3 + $0xc] sm:$0x2]
  %v4057 = vsel %vm3414, %v4054, %v4056
  %4058 = vst [vmem:[#allocation3 + $0xc] sm:$0x2] %v4057
  %v4059 = vld [vmem:[#allocation2 + $0x28] sm:$0x8]
  %v4061 = vrot.slane %v4059, 5
  %v4062 = vrot.slane %v4061, 4
  %4063 = vrot.lane.b32.xlu0 %v4062, 64
  %v4064 = vpop.permute.xlu0 %4063
  %v4066 = vld [vmem:[#allocation3 + $0xc] sm:$0x4]
  %v4067 = vsel %vm3429, %v4064, %v4066
  %4068 = vst [vmem:[#allocation3 + $0xc] sm:$0x4] %v4067
  %v4069 = vld [vmem:[#allocation2 + $0x28] sm:$0x8]
  %v4071 = vshrl.u32 %v4069, 16
  %v4073 = vrot.slane %v4071, 5
  %v4074 = vrot.slane %v4073, 4
  %4075 = vrot.lane.b32.xlu0 %v4074, 96
  %v4076 = vpop.permute.xlu0 %4075
  %v4078 = vld [vmem:[#allocation3 + $0xc] sm:$0x4]
  %v4079 = vsel %vm3744, %v4076, %v4078
  %4080 = vst [vmem:[#allocation3 + $0xc] sm:$0x4] %v4079
  %v4081 = vld [vmem:[#allocation2 + $0x2c] sm:$0x1]
  %v4083 = vshll.u32 %v4081, 16
  %v4085 = vrot.slane %v4083, 6
  %4086 = vrot.lane.b32.xlu0 %v4085, 64
  %v4087 = vpop.permute.xlu0 %4086
  %v4089 = vld [vmem:[#allocation3 + $0xc] sm:$0x4]
  %v4090 = vsel %vm3754, %v4087, %v4089
  %4091 = vst [vmem:[#allocation3 + $0xc] sm:$0x4] %v4090
  %v4092 = vld [vmem:[#allocation2 + $0x2c] sm:$0x2]
  %v4094 = vrot.slane %v4092, 6
  %4095 = vrot.lane.b32.xlu0 %v4094, 32
  %v4096 = vpop.permute.xlu0 %4095
  %v4098 = vld [vmem:[#allocation3 + $0xc] sm:$0x8]
  %v4099 = vsel %vm3463, %v4096, %v4098
  %4100 = vst [vmem:[#allocation3 + $0xc] sm:$0x8] %v4099
  %v4101 = vld [vmem:[#allocation2 + $0x2c] sm:$0x2]
  %v4103 = vrot.slane %v4101, 6
  %v4105 = vld [vmem:[#allocation3 + $0xc] sm:$0x8]
  %v4106 = vsel %vm3474, %v4103, %v4105
  %4107 = vst [vmem:[#allocation3 + $0xc] sm:$0x8] %v4106
  %v4108 = vld [vmem:[#allocation2 + $0x2c] sm:$0x4]
  %v4110 = vshll.u32 %v4108, 16
  %v4112 = vrot.slane %v4110, 7
  %4113 = vrot.lane.b32.xlu0 %v4112, 32
  %v4114 = vpop.permute.xlu0 %4113
  %v4116 = vld [vmem:[#allocation3 + $0xc] sm:$0x8]
  %v4117 = vsel %vm3484, %v4114, %v4116
  %4118 = vst [vmem:[#allocation3 + $0xc] sm:$0x8] %v4117
  %v4119 = vld [vmem:[#allocation2 + $0x2c] sm:$0x4]
  %v4121 = vshrl.u32 %v4119, 16
  %v4123 = vrot.slane %v4121, 6
  %v4124 = vrot.slane %v4123, 4
  %v4126 = vld [vmem:[#allocation3 + $0x10] sm:$0x1]
  %v4127 = vsel %vm3494, %v4124, %v4126
  %4128 = vst [vmem:[#allocation3 + $0x10] sm:$0x1] %v4127
  %v4129 = vld [vmem:[#allocation2 + $0x2c] sm:$0x8]
  %v4131 = vrot.slane %v4129, 7
  %v4132 = vrot.slane %v4131, 4
  %4133 = vrot.lane.b32.xlu0 %v4132, 32
  %v4134 = vpop.permute.xlu0 %4133
  %v4136 = vld [vmem:[#allocation3 + $0x10] sm:$0x1]
  %v4137 = vsel %vm3508, %v4134, %v4136
  %4138 = vst [vmem:[#allocation3 + $0x10] sm:$0x1] %v4137
  %v4139 = vld [vmem:[#allocation2 + $0x2c] sm:$0x8]
  %v4141 = vrot.slane %v4139, 7
  %v4142 = vrot.slane %v4141, 4
  %v4144 = vld [vmem:[#allocation3 + $0x10] sm:$0x1]
  %v4145 = vsel %vm3517, %v4142, %v4144
  %4146 = vst [vmem:[#allocation3 + $0x10] sm:$0x1] %v4145
  %v4147 = vld [vmem:[#allocation2 + $0x30] sm:$0x1]
  %v4149 = vshll.u32 %v4147, 16
  %4151 = vrot.lane.b32.xlu0 %v4149, 32
  %v4152 = vpop.permute.xlu0 %4151
  %v4154 = vld [vmem:[#allocation3 + $0x10] sm:$0x1]
  %v4155 = vsel %vm3822, %v4152, %v4154
  %4156 = vst [vmem:[#allocation3 + $0x10] sm:$0x1] %v4155
  %v4157 = vld [vmem:[#allocation2 + $0x30] sm:$0x1]
  %v4159 = vshrl.u32 %v4157, 16
  %v4161 = vrot.slane %v4159, 7
  %v4163 = vld [vmem:[#allocation3 + $0x10] sm:$0x2]
  %v4164 = vsel %vm3827, %v4161, %v4163
  %4165 = vst [vmem:[#allocation3 + $0x10] sm:$0x2] %v4164
  %v4166 = vld [vmem:[#allocation2 + $0x30] sm:$0x2]
  %v4168 = vshrl.u32 %v4166, 16
  %v4170 = vrot.slane %v4168, 6
  %4171 = vrot.lane.b32.xlu0 %v4170, 96
  %v4172 = vpop.permute.xlu0 %4171
  %v4174 = vld [vmem:[#allocation3 + $0xc] sm:$0x8]
  %v4175 = vsel %vm3554, %v4172, %v4174
  %4176 = vst [vmem:[#allocation3 + $0xc] sm:$0x8] %v4175
  %v4177 = vld [vmem:[#allocation2 + $0x30] sm:$0x4]
  %v4179 = vshll.u32 %v4177, 16
  %v4181 = vrot.slane %v4179, 7
  %4182 = vrot.lane.b32.xlu0 %v4181, 64
  %v4183 = vpop.permute.xlu0 %4182
  %v4185 = vld [vmem:[#allocation3 + $0xc] sm:$0x8]
  %v4186 = vsel %vm3564, %v4183, %v4185
  %4187 = vst [vmem:[#allocation3 + $0xc] sm:$0x8] %v4186
  %v4188 = vld [vmem:[#allocation2 + $0x30] sm:$0x4]
  %v4190 = vrot.slane %v4188, 7
  %4191 = vrot.lane.b32.xlu0 %v4190, 96
  %v4192 = vpop.permute.xlu0 %4191
  %v4194 = vld [vmem:[#allocation3 + $0xc] sm:$0x8]
  %v4195 = vsel %vm3575, %v4192, %v4194
  %4196 = vst [vmem:[#allocation3 + $0xc] sm:$0x8] %v4195
  %v4197 = vld [vmem:[#allocation2 + $0x30] sm:$0x8]
  %v4199 = vrot.slane %v4197, 7
  %v4200 = vrot.slane %v4199, 4
  %4201 = vrot.lane.b32.xlu0 %v4200, 64
  %v4202 = vpop.permute.xlu0 %4201
  %v4204 = vld [vmem:[#allocation3 + $0x10] sm:$0x1]
  %v4205 = vsel %vm3588, %v4202, %v4204
  %4206 = vst [vmem:[#allocation3 + $0x10] sm:$0x1] %v4205
  %v4207 = vld [vmem:[#allocation2 + $0x30] sm:$0x8]
  %v4209 = vshrl.u32 %v4207, 16
  %v4211 = vrot.slane %v4209, 7
  %v4212 = vrot.slane %v4211, 4
  %4213 = vrot.lane.b32.xlu0 %v4212, 96
  %v4214 = vpop.permute.xlu0 %4213
  %v4216 = vld [vmem:[#allocation3 + $0x10] sm:$0x1]
  %v4217 = vsel %vm3338, %v4214, %v4216
  %4218 = vst [vmem:[#allocation3 + $0x10] sm:$0x1] %v4217
  %v4219 = vld [vmem:[#allocation2 + $0x34] sm:$0x1]
  %v4221 = vshll.u32 %v4219, 16
  %4223 = vrot.lane.b32.xlu0 %v4221, 64
  %v4224 = vpop.permute.xlu0 %4223
  %v4226 = vld [vmem:[#allocation3 + $0x10] sm:$0x1]
  %v4227 = vsel %vm3349, %v4224, %v4226
  %4228 = vst [vmem:[#allocation3 + $0x10] sm:$0x1] %v4227
  %v4229 = vld [vmem:[#allocation2 + $0x34] sm:$0x1]
  %4231 = vrot.lane.b32.xlu0 %v4229, 96
  %v4232 = vpop.permute.xlu0 %4231
  %v4234 = vld [vmem:[#allocation3 + $0x10] sm:$0x1]
  %v4235 = vsel %vm3362, %v4232, %v4234
  %4236 = vst [vmem:[#allocation3 + $0x10] sm:$0x1] %v4235
  %v4237 = vld [vmem:[#allocation2 + $0x34] sm:$0x2]
  %4239 = vrot.lane.b32.xlu0 %v4237, 64
  %v4240 = vpop.permute.xlu0 %4239
  %v4242 = vld [vmem:[#allocation3 + $0x10] sm:$0x2]
  %v4243 = vsel %vm3377, %v4240, %v4242
  %4244 = vst [vmem:[#allocation3 + $0x10] sm:$0x2] %v4243
  %v4245 = vld [vmem:[#allocation2 + $0x34] sm:$0x4]
  %v4247 = vshll.u32 %v4245, 16
  %v4249 = vrot.slane %v4247, 5
  %v4250 = vrot.slane %v4249, 4
  %4251 = vrot.lane.b32.xlu0 %v4250, 32
  %v4252 = vpop.permute.xlu0 %4251
  %v4254 = vld [vmem:[#allocation3 + $0x10] sm:$0x2]
  %v4255 = vsel %vm3641, %v4252, %v4254
  %4256 = vst [vmem:[#allocation3 + $0x10] sm:$0x2] %v4255
  %v4257 = vld [vmem:[#allocation2 + $0x34] sm:$0x4]
  %v4259 = vshrl.u32 %v4257, 16
  %v4261 = vrot.slane %v4259, 4
  %v4262 = vrot.slane %v4261, 4
  %v4264 = vld [vmem:[#allocation3 + $0x10] sm:$0x4]
  %v4265 = vsel %vm3651, %v4262, %v4264
  %4266 = vst [vmem:[#allocation3 + $0x10] sm:$0x4] %v4265
  %v4267 = vld [vmem:[#allocation2 + $0x34] sm:$0x8]
  %v4269 = vrot.slane %v4267, 5
  %v4270 = vrot.slane %v4269, 4
  %4271 = vrot.lane.b32.xlu0 %v4270, 32
  %v4272 = vpop.permute.xlu0 %4271
  %v4274 = vld [vmem:[#allocation3 + $0x10] sm:$0x4]
  %v4275 = vsel %vm3664, %v4272, %v4274
  %4276 = vst [vmem:[#allocation3 + $0x10] sm:$0x4] %v4275
  %v4277 = vld [vmem:[#allocation2 + $0x34] sm:$0x8]
  %v4279 = vrot.slane %v4277, 5
  %v4280 = vrot.slane %v4279, 4
  %v4282 = vld [vmem:[#allocation3 + $0x10] sm:$0x4]
  %v4283 = vsel %vm3674, %v4280, %v4282
  %4284 = vst [vmem:[#allocation3 + $0x10] sm:$0x4] %v4283
  %v4285 = vld [vmem:[#allocation2 + $0x38] sm:$0x1]
  %v4287 = vshll.u32 %v4285, 16
  %v4289 = vrot.slane %v4287, 6
  %4290 = vrot.lane.b32.xlu0 %v4289, 32
  %v4291 = vpop.permute.xlu0 %4290
  %v4293 = vld [vmem:[#allocation3 + $0x10] sm:$0x4]
  %v4294 = vsel %vm3441, %v4291, %v4293
  %4295 = vst [vmem:[#allocation3 + $0x10] sm:$0x4] %v4294
  %v4296 = vld [vmem:[#allocation2 + $0x38] sm:$0x1]
  %v4298 = vshrl.u32 %v4296, 16
  %v4300 = vrot.slane %v4298, 5
  %v4302 = vld [vmem:[#allocation3 + $0x10] sm:$0x8]
  %v4303 = vsel %vm3450, %v4300, %v4302
  %4304 = vst [vmem:[#allocation3 + $0x10] sm:$0x8] %v4303
  %v4305 = vld [vmem:[#allocation2 + $0x38] sm:$0x2]
  %v4307 = vrot.slane %v4305, 6
  %4308 = vrot.lane.b32.xlu0 %v4307, 32
  %v4309 = vpop.permute.xlu0 %4308
  %v4311 = vld [vmem:[#allocation3 + $0x10] sm:$0x8]
  %v4312 = vsel %vm3463, %v4309, %v4311
  %4313 = vst [vmem:[#allocation3 + $0x10] sm:$0x8] %v4312
  %v4314 = vld [vmem:[#allocation2 + $0x38] sm:$0x2]
  %v4316 = vrot.slane %v4314, 6
  %v4318 = vld [vmem:[#allocation3 + $0x10] sm:$0x8]
  %v4319 = vsel %vm3474, %v4316, %v4318
  %4320 = vst [vmem:[#allocation3 + $0x10] sm:$0x8] %v4319
  %v4321 = vld [vmem:[#allocation2 + $0x38] sm:$0x4]
  %v4323 = vrot.slane %v4321, 5
  %v4324 = vrot.slane %v4323, 4
  %4325 = vrot.lane.b32.xlu0 %v4324, 96
  %v4326 = vpop.permute.xlu0 %4325
  %v4328 = vld [vmem:[#allocation3 + $0x10] sm:$0x2]
  %v4329 = vsel %vm3414, %v4326, %v4328
  %4330 = vst [vmem:[#allocation3 + $0x10] sm:$0x2] %v4329
  %v4331 = vld [vmem:[#allocation2 + $0x38] sm:$0x8]
  %v4333 = vrot.slane %v4331, 5
  %v4334 = vrot.slane %v4333, 4
  %4335 = vrot.lane.b32.xlu0 %v4334, 64
  %v4336 = vpop.permute.xlu0 %4335
  %v4338 = vld [vmem:[#allocation3 + $0x10] sm:$0x4]
  %v4339 = vsel %vm3429, %v4336, %v4338
  %4340 = vst [vmem:[#allocation3 + $0x10] sm:$0x4] %v4339
  %v4341 = vld [vmem:[#allocation2 + $0x38] sm:$0x8]
  %v4343 = vshrl.u32 %v4341, 16
  %v4345 = vrot.slane %v4343, 5
  %v4346 = vrot.slane %v4345, 4
  %4347 = vrot.lane.b32.xlu0 %v4346, 96
  %v4348 = vpop.permute.xlu0 %4347
  %v4350 = vld [vmem:[#allocation3 + $0x10] sm:$0x4]
  %v4351 = vsel %vm3744, %v4348, %v4350
  %4352 = vst [vmem:[#allocation3 + $0x10] sm:$0x4] %v4351
  %v4353 = vld [vmem:[#allocation2 + $0x3c] sm:$0x1]
  %v4355 = vshll.u32 %v4353, 16
  %v4357 = vrot.slane %v4355, 6
  %4358 = vrot.lane.b32.xlu0 %v4357, 64
  %v4359 = vpop.permute.xlu0 %4358
  %v4361 = vld [vmem:[#allocation3 + $0x10] sm:$0x4]
  %v4362 = vsel %vm3754, %v4359, %v4361
  %4363 = vst [vmem:[#allocation3 + $0x10] sm:$0x4] %v4362
  %v4364 = vld [vmem:[#allocation2 + $0x3c] sm:$0x1]
  %v4366 = vrot.slane %v4364, 6
  %4367 = vrot.lane.b32.xlu0 %v4366, 96
  %v4368 = vpop.permute.xlu0 %4367
  %v4370 = vld [vmem:[#allocation3 + $0x10] sm:$0x4]
  %v4371 = vsel %vm3530, %v4368, %v4370
  %4372 = vst [vmem:[#allocation3 + $0x10] sm:$0x4] %v4371
  %v4373 = vld [vmem:[#allocation2 + $0x3c] sm:$0x2]
  %v4375 = vrot.slane %v4373, 6
  %4376 = vrot.lane.b32.xlu0 %v4375, 64
  %v4377 = vpop.permute.xlu0 %4376
  %v4379 = vld [vmem:[#allocation3 + $0x10] sm:$0x8]
  %v4380 = vsel %vm3543, %v4377, %v4379
  %4381 = vst [vmem:[#allocation3 + $0x10] sm:$0x8] %v4380
  %v4382 = vld [vmem:[#allocation2 + $0x3c] sm:$0x2]
  %v4384 = vshrl.u32 %v4382, 16
  %v4386 = vrot.slane %v4384, 6
  %4387 = vrot.lane.b32.xlu0 %v4386, 96
  %v4388 = vpop.permute.xlu0 %4387
  %v4390 = vld [vmem:[#allocation3 + $0x10] sm:$0x8]
  %v4391 = vsel %vm3554, %v4388, %v4390
  %4392 = vst [vmem:[#allocation3 + $0x10] sm:$0x8] %v4391
  %v4393 = vld [vmem:[#allocation2 + $0x3c] sm:$0x4]
  %v4395 = vshll.u32 %v4393, 16
  %v4397 = vrot.slane %v4395, 7
  %4398 = vrot.lane.b32.xlu0 %v4397, 64
  %v4399 = vpop.permute.xlu0 %4398
  %v4401 = vld [vmem:[#allocation3 + $0x10] sm:$0x8]
  %v4402 = vsel %vm3564, %v4399, %v4401
  %4403 = vst [vmem:[#allocation3 + $0x10] sm:$0x8] %v4402
  %v4404 = vld [vmem:[#allocation2 + $0x3c] sm:$0x8]
  %v4406 = vrot.slane %v4404, 7
  %v4407 = vrot.slane %v4406, 4
  %4408 = vrot.lane.b32.xlu0 %v4407, 32
  %v4409 = vpop.permute.xlu0 %4408
  %v4411 = vld [vmem:[#allocation3 + $0x14] sm:$0x1]
  %v4412 = vsel %vm3508, %v4409, %v4411
  %4413 = vst [vmem:[#allocation3 + $0x14] sm:$0x1] %v4412
  %v4414 = vld [vmem:[#allocation2 + $0x3c] sm:$0x8]
  %v4416 = vrot.slane %v4414, 7
  %v4417 = vrot.slane %v4416, 4
  %v4419 = vld [vmem:[#allocation3 + $0x14] sm:$0x1]
  %v4420 = vsel %vm3517, %v4417, %v4419
  %4421 = vst [vmem:[#allocation3 + $0x14] sm:$0x1] %v4420
  %v4422 = vld [vmem:[#allocation2 + $0x40] sm:$0x1]
  %v4424 = vshll.u32 %v4422, 16
  %4426 = vrot.lane.b32.xlu0 %v4424, 32
  %v4427 = vpop.permute.xlu0 %4426
  %v4429 = vld [vmem:[#allocation3 + $0x14] sm:$0x1]
  %v4430 = vsel %vm3822, %v4427, %v4429
  %4431 = vst [vmem:[#allocation3 + $0x14] sm:$0x1] %v4430
  %v4432 = vld [vmem:[#allocation2 + $0x40] sm:$0x1]
  %v4434 = vshrl.u32 %v4432, 16
  %v4436 = vrot.slane %v4434, 7
  %v4438 = vld [vmem:[#allocation3 + $0x14] sm:$0x2]
  %v4439 = vsel %vm3827, %v4436, %v4438
  %4440 = vst [vmem:[#allocation3 + $0x14] sm:$0x2] %v4439
  %v4441 = vld [vmem:[#allocation2 + $0x40] sm:$0x2]
  %4443 = vrot.lane.b32.xlu0 %v4441, 32
  %v4444 = vpop.permute.xlu0 %4443
  %v4446 = vld [vmem:[#allocation3 + $0x14] sm:$0x2]
  %v4447 = vsel %vm3618, %v4444, %v4446
  %4448 = vst [vmem:[#allocation3 + $0x14] sm:$0x2] %v4447
  %v4449 = vld [vmem:[#allocation2 + $0x40] sm:$0x2]
  %v4450 = vld [vmem:[#allocation3 + $0x14] sm:$0x2]
  %v4451 = vsel %vm3630, %v4449, %v4450
  %4452 = vst [vmem:[#allocation3 + $0x14] sm:$0x2] %v4451
  %v4453 = vld [vmem:[#allocation2 + $0x40] sm:$0x4]
  %v4455 = vshll.u32 %v4453, 16
  %v4457 = vrot.slane %v4455, 5
  %v4458 = vrot.slane %v4457, 4
  %4459 = vrot.lane.b32.xlu0 %v4458, 32
  %v4460 = vpop.permute.xlu0 %4459
  %v4462 = vld [vmem:[#allocation3 + $0x14] sm:$0x2]
  %v4463 = vsel %vm3641, %v4460, %v4462
  %4464 = vst [vmem:[#allocation3 + $0x14] sm:$0x2] %v4463
  %v4465 = vld [vmem:[#allocation2 + $0x40] sm:$0x4]
  %v4467 = vshrl.u32 %v4465, 16
  %v4469 = vrot.slane %v4467, 4
  %v4470 = vrot.slane %v4469, 4
  %v4472 = vld [vmem:[#allocation3 + $0x14] sm:$0x4]
  %v4473 = vsel %vm3651, %v4470, %v4472
  %4474 = vst [vmem:[#allocation3 + $0x14] sm:$0x4] %v4473
  %v4475 = vld [vmem:[#allocation2 + $0x40] sm:$0x8]
  %v4477 = vshrl.u32 %v4475, 16
  %v4479 = vrot.slane %v4477, 7
  %v4480 = vrot.slane %v4479, 4
  %4481 = vrot.lane.b32.xlu0 %v4480, 96
  %v4482 = vpop.permute.xlu0 %4481
  %v4484 = vld [vmem:[#allocation3 + $0x14] sm:$0x1]
  %v4485 = vsel %vm3338, %v4482, %v4484
  %4486 = vst [vmem:[#allocation3 + $0x14] sm:$0x1] %v4485
  %v4487 = vld [vmem:[#allocation2 + $0x44] sm:$0x1]
  %v4489 = vshll.u32 %v4487, 16
  %4491 = vrot.lane.b32.xlu0 %v4489, 64
  %v4492 = vpop.permute.xlu0 %4491
  %v4494 = vld [vmem:[#allocation3 + $0x14] sm:$0x1]
  %v4495 = vsel %vm3349, %v4492, %v4494
  %4496 = vst [vmem:[#allocation3 + $0x14] sm:$0x1] %v4495
  %v4497 = vld [vmem:[#allocation2 + $0x44] sm:$0x1]
  %4499 = vrot.lane.b32.xlu0 %v4497, 96
  %v4500 = vpop.permute.xlu0 %4499
  %v4502 = vld [vmem:[#allocation3 + $0x14] sm:$0x1]
  %v4503 = vsel %vm3362, %v4500, %v4502
  %4504 = vst [vmem:[#allocation3 + $0x14] sm:$0x1] %v4503
  %v4505 = vld [vmem:[#allocation2 + $0x44] sm:$0x2]
  %4507 = vrot.lane.b32.xlu0 %v4505, 64
  %v4508 = vpop.permute.xlu0 %4507
  %v4510 = vld [vmem:[#allocation3 + $0x14] sm:$0x2]
  %v4511 = vsel %vm3377, %v4508, %v4510
  %4512 = vst [vmem:[#allocation3 + $0x14] sm:$0x2] %v4511
  %v4513 = vld [vmem:[#allocation2 + $0x44] sm:$0x2]
  %v4515 = vshrl.u32 %v4513, 16
  %v4517 = vrot.slane %v4515, 4
  %v4518 = vrot.slane %v4517, 4
  %4519 = vrot.lane.b32.xlu0 %v4518, 96
  %v4520 = vpop.permute.xlu0 %4519
  %v4522 = vld [vmem:[#allocation3 + $0x14] sm:$0x2]
  %v4523 = vsel %vm3389, %v4520, %v4522
  %4524 = vst [vmem:[#allocation3 + $0x14] sm:$0x2] %v4523
  %v4525 = vld [vmem:[#allocation2 + $0x44] sm:$0x4]
  %v4527 = vshll.u32 %v4525, 16
  %v4529 = vrot.slane %v4527, 5
  %v4530 = vrot.slane %v4529, 4
  %4531 = vrot.lane.b32.xlu0 %v4530, 64
  %v4532 = vpop.permute.xlu0 %4531
  %v4534 = vld [vmem:[#allocation3 + $0x14] sm:$0x2]
  %v4535 = vsel %vm3401, %v4532, %v4534
  %4536 = vst [vmem:[#allocation3 + $0x14] sm:$0x2] %v4535
  %v4537 = vld [vmem:[#allocation2 + $0x44] sm:$0x4]
  %v4539 = vrot.slane %v4537, 5
  %v4540 = vrot.slane %v4539, 4
  %4541 = vrot.lane.b32.xlu0 %v4540, 96
  %v4542 = vpop.permute.xlu0 %4541
  %v4544 = vld [vmem:[#allocation3 + $0x14] sm:$0x2]
  %v4545 = vsel %vm3414, %v4542, %v4544
  %4546 = vst [vmem:[#allocation3 + $0x14] sm:$0x2] %v4545
  %v4547 = vld [vmem:[#allocation2 + $0x44] sm:$0x8]
  %v4549 = vrot.slane %v4547, 5
  %v4550 = vrot.slane %v4549, 4
  %4551 = vrot.lane.b32.xlu0 %v4550, 64
  %v4552 = vpop.permute.xlu0 %4551
  %v4554 = vld [vmem:[#allocation3 + $0x14] sm:$0x4]
  %v4555 = vsel %vm3429, %v4552, %v4554
  %4556 = vst [vmem:[#allocation3 + $0x14] sm:$0x4] %v4555
  %v4557 = vld [vmem:[#allocation2 + $0x48] sm:$0x1]
  %v4559 = vshll.u32 %v4557, 16
  %v4561 = vrot.slane %v4559, 6
  %4562 = vrot.lane.b32.xlu0 %v4561, 32
  %v4563 = vpop.permute.xlu0 %4562
  %v4565 = vld [vmem:[#allocation3 + $0x14] sm:$0x4]
  %v4566 = vsel %vm3441, %v4563, %v4565
  %4567 = vst [vmem:[#allocation3 + $0x14] sm:$0x4] %v4566
  %v4568 = vld [vmem:[#allocation2 + $0x48] sm:$0x1]
  %v4570 = vshrl.u32 %v4568, 16
  %v4572 = vrot.slane %v4570, 5
  %v4574 = vld [vmem:[#allocation3 + $0x14] sm:$0x8]
  %v4575 = vsel %vm3450, %v4572, %v4574
  %4576 = vst [vmem:[#allocation3 + $0x14] sm:$0x8] %v4575
  %v4577 = vld [vmem:[#allocation2 + $0x48] sm:$0x2]
  %v4579 = vrot.slane %v4577, 6
  %4580 = vrot.lane.b32.xlu0 %v4579, 32
  %v4581 = vpop.permute.xlu0 %4580
  %v4583 = vld [vmem:[#allocation3 + $0x14] sm:$0x8]
  %v4584 = vsel %vm3463, %v4581, %v4583
  %4585 = vst [vmem:[#allocation3 + $0x14] sm:$0x8] %v4584
  %v4586 = vld [vmem:[#allocation2 + $0x48] sm:$0x2]
  %v4588 = vrot.slane %v4586, 6
  %v4590 = vld [vmem:[#allocation3 + $0x14] sm:$0x8]
  %v4591 = vsel %vm3474, %v4588, %v4590
  %4592 = vst [vmem:[#allocation3 + $0x14] sm:$0x8] %v4591
  %v4593 = vld [vmem:[#allocation2 + $0x48] sm:$0x4]
  %v4595 = vshll.u32 %v4593, 16
  %v4597 = vrot.slane %v4595, 7
  %4598 = vrot.lane.b32.xlu0 %v4597, 32
  %v4599 = vpop.permute.xlu0 %4598
  %v4601 = vld [vmem:[#allocation3 + $0x14] sm:$0x8]
  %v4602 = vsel %vm3484, %v4599, %v4601
  %4603 = vst [vmem:[#allocation3 + $0x14] sm:$0x8] %v4602
  %v4604 = vld [vmem:[#allocation2 + $0x48] sm:$0x4]
  %v4606 = vshrl.u32 %v4604, 16
  %v4608 = vrot.slane %v4606, 6
  %v4609 = vrot.slane %v4608, 4
  %v4611 = vld [vmem:[#allocation3 + $0x18] sm:$0x1]
  %v4612 = vsel %vm3494, %v4609, %v4611
  %4613 = vst [vmem:[#allocation3 + $0x18] sm:$0x1] %v4612
  %v4614 = vld [vmem:[#allocation2 + $0x48] sm:$0x8]
  %v4616 = vrot.slane %v4614, 7
  %v4617 = vrot.slane %v4616, 4
  %4618 = vrot.lane.b32.xlu0 %v4617, 32
  %v4619 = vpop.permute.xlu0 %4618
  %v4621 = vld [vmem:[#allocation3 + $0x18] sm:$0x1]
  %v4622 = vsel %vm3508, %v4619, %v4621
  %4623 = vst [vmem:[#allocation3 + $0x18] sm:$0x1] %v4622
  %v4624 = vld [vmem:[#allocation2 + $0x48] sm:$0x8]
  %v4626 = vrot.slane %v4624, 7
  %v4627 = vrot.slane %v4626, 4
  %v4629 = vld [vmem:[#allocation3 + $0x18] sm:$0x1]
  %v4630 = vsel %vm3517, %v4627, %v4629
  %4631 = vst [vmem:[#allocation3 + $0x18] sm:$0x1] %v4630
  %v4632 = vld [vmem:[#allocation3] sm:$0xf]
  %v4633 = vld [vmem:[#allocation3 + $0x4] sm:$0xf]
  %v4634 = vld [vmem:[#allocation3 + $0x8] sm:$0xf]
  %v4635 = vld [vmem:[#allocation3 + $0xc] sm:$0xf]
  %v4636 = vld [vmem:[#allocation3 + $0x10] sm:$0xf]
  %v4637 = vld [vmem:[#allocation3 + $0x14] sm:$0xf]
  %v4638 = vld [vmem:[#allocation3 + $0x18] sm:$0xf]
  %v4639 = vld [vmem:[#allocation3 + $0x1c] sm:$0xf]
  %4640 = vst [vmem:[#allocation8] sm:$0xf] %v4632
  %4641 = vst [vmem:[#allocation8 + $0x20] sm:$0xf] %v4633
  %4642 = vst [vmem:[#allocation8 + $0x40] sm:$0xf] %v4634
  %4643 = vst [vmem:[#allocation8 + $0x60] sm:$0xf] %v4635
  %4644 = vst [vmem:[#allocation8 + $0x80] sm:$0xf] %v4636
  %4645 = vst [vmem:[#allocation8 + $0xa0] sm:$0xf] %v4637
  %4646 = vst [vmem:[#allocation8 + $0xc0] sm:$0xf] %v4638
  %4647 = vst [vmem:[#allocation8 + $0xe0] sm:$0xf] %v4639
  %v4648 = vld [vmem:[#allocation3] sm:$0xf]
  %v4649 = vld [vmem:[#allocation3 + $0x4] sm:$0xf]
  %v4650 = vld [vmem:[#allocation3 + $0x8] sm:$0xf]
  %v4651 = vld [vmem:[#allocation3 + $0xc] sm:$0xf]
  %v4652 = vld [vmem:[#allocation3 + $0x10] sm:$0xf]
  %v4653 = vld [vmem:[#allocation3 + $0x14] sm:$0xf]
  %v4654 = vld [vmem:[#allocation3 + $0x18] sm:$0xf]
  %v4655 = vld [vmem:[#allocation3 + $0x1c] sm:$0xf]
  %v4656 = vld [vmem:[#allocation3 + $0x20] sm:$0x1]
  %v4658 = vshrl.u32 %v4648, 16
  %v4660 = vrot.slane %v4658, 4
  %v4661 = vshll.u32 %v4648, 16
  %v4663 = vrot.slane %v4661, 5
  %v4664 = vor.u32 %v4660, %v4663
  %v4665 = vrot.slane %v4664, 4
  %v4667 = vshll.u32 %v4649, 16
  %v4669 = vrot.slane %v4667, 5
  %v4670 = vsel %vm124, %v4665, %v4669
  %v4671 = vshrl.u32 %v4649, 16
  %v4673 = vrot.slane %v4671, 4
  %v4674 = vor.u32 %v4673, %v4669
  %v4675 = vrot.slane %v4674, 4
  %v4677 = vshll.u32 %v4650, 16
  %v4679 = vrot.slane %v4677, 5
  %v4680 = vsel %vm124, %v4675, %v4679
  %v4681 = vshrl.u32 %v4650, 16
  %v4683 = vrot.slane %v4681, 4
  %v4684 = vor.u32 %v4683, %v4679
  %v4685 = vrot.slane %v4684, 4
  %v4687 = vshll.u32 %v4651, 16
  %v4689 = vrot.slane %v4687, 5
  %v4690 = vsel %vm124, %v4685, %v4689
  %v4691 = vshrl.u32 %v4651, 16
  %v4693 = vrot.slane %v4691, 4
  %v4694 = vor.u32 %v4693, %v4689
  %v4695 = vrot.slane %v4694, 4
  %v4697 = vshll.u32 %v4652, 16
  %v4699 = vrot.slane %v4697, 5
  %v4700 = vsel %vm124, %v4695, %v4699
  %v4701 = vshrl.u32 %v4652, 16
  %v4703 = vrot.slane %v4701, 4
  %v4704 = vor.u32 %v4703, %v4699
  %v4705 = vrot.slane %v4704, 4
  %v4707 = vshll.u32 %v4653, 16
  %v4709 = vrot.slane %v4707, 5
  %v4710 = vsel %vm124, %v4705, %v4709
  %v4711 = vshrl.u32 %v4653, 16
  %v4713 = vrot.slane %v4711, 4
  %v4714 = vor.u32 %v4713, %v4709
  %v4715 = vrot.slane %v4714, 4
  %v4717 = vshll.u32 %v4654, 16
  %v4719 = vrot.slane %v4717, 5
  %v4720 = vsel %vm124, %v4715, %v4719
  %v4721 = vshrl.u32 %v4654, 16
  %v4723 = vrot.slane %v4721, 4
  %v4724 = vor.u32 %v4723, %v4719
  %v4725 = vrot.slane %v4724, 4
  %v4727 = vshll.u32 %v4655, 16
  %v4729 = vrot.slane %v4727, 5
  %v4730 = vsel %vm124, %v4725, %v4729
  %v4731 = vshrl.u32 %v4655, 16
  %v4733 = vrot.slane %v4731, 4
  %v4734 = vor.u32 %v4733, %v4729
  %v4735 = vrot.slane %v4734, 4
  %v4737 = vshll.u32 %v4656, 16
  %v4739 = vrot.slane %v4737, 5
  %v4740 = vsel %vm124, %v4735, %v4739
  %4749 = vst [vmem:[#allocation8 + $0x4] sm:$0xf] %v4670
  %4750 = vst [vmem:[#allocation8 + $0x24] sm:$0xf] %v4680
  %4751 = vst [vmem:[#allocation8 + $0x44] sm:$0xf] %v4690
  %4752 = vst [vmem:[#allocation8 + $0x64] sm:$0xf] %v4700
  %4753 = vst [vmem:[#allocation8 + $0x84] sm:$0xf] %v4710
  %4754 = vst [vmem:[#allocation8 + $0xa4] sm:$0xf] %v4720
  %4755 = vst [vmem:[#allocation8 + $0xc4] sm:$0xf] %v4730
  %4756 = vst [vmem:[#allocation8 + $0xe4] sm:$0xf] %v4740
  %v4757 = vld [vmem:[#allocation3] sm:$0xc]
  %v4758 = vld [vmem:[#allocation3 + $0x4] sm:$0xf]
  %v4759 = vld [vmem:[#allocation3 + $0x8] sm:$0xf]
  %v4760 = vld [vmem:[#allocation3 + $0xc] sm:$0xf]
  %v4761 = vld [vmem:[#allocation3 + $0x10] sm:$0xf]
  %v4762 = vld [vmem:[#allocation3 + $0x14] sm:$0xf]
  %v4763 = vld [vmem:[#allocation3 + $0x18] sm:$0xf]
  %v4764 = vld [vmem:[#allocation3 + $0x1c] sm:$0xf]
  %v4765 = vld [vmem:[#allocation3 + $0x20] sm:$0x7]
  %vm4766 = vsmask.f32 5392
  %vm4767 = vmor %vm3376, %vm4766
  %v4769 = vshrl.u32 %v4757, 16
  %v4771 = vrot.slane %v4769, 6
  %v4772 = vshll.u32 %v4757, 16
  %v4774 = vrot.slane %v4772, 7
  %v4775 = vor.u32 %v4771, %v4774
  %v4776 = vrot.slane %v4775, 4
  %v4778 = vshrl.u32 %v4758, 16
  %v4780 = vrot.slane %v4778, 6
  %v4781 = vshll.u32 %v4758, 16
  %v4783 = vrot.slane %v4781, 7
  %v4784 = vor.u32 %v4780, %v4783
  %v4785 = vsel %vm4767, %v4776, %v4784
  %v4786 = vrot.slane %v4784, 4
  %v4788 = vshrl.u32 %v4759, 16
  %v4790 = vrot.slane %v4788, 6
  %v4791 = vshll.u32 %v4759, 16
  %v4793 = vrot.slane %v4791, 7
  %v4794 = vor.u32 %v4790, %v4793
  %v4795 = vsel %vm4767, %v4786, %v4794
  %v4796 = vrot.slane %v4794, 4
  %v4798 = vshrl.u32 %v4760, 16
  %v4800 = vrot.slane %v4798, 6
  %v4801 = vshll.u32 %v4760, 16
  %v4803 = vrot.slane %v4801, 7
  %v4804 = vor.u32 %v4800, %v4803
  %v4805 = vsel %vm4767, %v4796, %v4804
  %v4806 = vrot.slane %v4804, 4
  %v4808 = vshrl.u32 %v4761, 16
  %v4810 = vrot.slane %v4808, 6
  %v4811 = vshll.u32 %v4761, 16
  %v4813 = vrot.slane %v4811, 7
  %v4814 = vor.u32 %v4810, %v4813
  %v4815 = vsel %vm4767, %v4806, %v4814
  %v4816 = vrot.slane %v4814, 4
  %v4818 = vshrl.u32 %v4762, 16
  %v4820 = vrot.slane %v4818, 6
  %v4821 = vshll.u32 %v4762, 16
  %v4823 = vrot.slane %v4821, 7
  %v4824 = vor.u32 %v4820, %v4823
  %v4825 = vsel %vm4767, %v4816, %v4824
  %v4826 = vrot.slane %v4824, 4
  %v4828 = vshrl.u32 %v4763, 16
  %v4830 = vrot.slane %v4828, 6
  %v4831 = vshll.u32 %v4763, 16
  %v4833 = vrot.slane %v4831, 7
  %v4834 = vor.u32 %v4830, %v4833
  %v4835 = vsel %vm4767, %v4826, %v4834
  %v4836 = vrot.slane %v4834, 4
  %v4838 = vshrl.u32 %v4764, 16
  %v4840 = vrot.slane %v4838, 6
  %v4841 = vshll.u32 %v4764, 16
  %v4843 = vrot.slane %v4841, 7
  %v4844 = vor.u32 %v4840, %v4843
  %v4845 = vsel %vm4767, %v4836, %v4844
  %v4846 = vrot.slane %v4844, 4
  %v4848 = vshrl.u32 %v4765, 16
  %v4850 = vrot.slane %v4848, 6
  %v4851 = vshll.u32 %v4765, 16
  %v4853 = vrot.slane %v4851, 7
  %v4854 = vor.u32 %v4850, %v4853
  %v4855 = vsel %vm4767, %v4846, %v4854
  %4864 = vst [vmem:[#allocation8 + $0x8] sm:$0xf] %v4785
  %4865 = vst [vmem:[#allocation8 + $0x28] sm:$0xf] %v4795
  %4866 = vst [vmem:[#allocation8 + $0x48] sm:$0xf] %v4805
  %4867 = vst [vmem:[#allocation8 + $0x68] sm:$0xf] %v4815
  %4868 = vst [vmem:[#allocation8 + $0x88] sm:$0xf] %v4825
  %4869 = vst [vmem:[#allocation8 + $0xa8] sm:$0xf] %v4835
  %4870 = vst [vmem:[#allocation8 + $0xc8] sm:$0xf] %v4845
  %4871 = vst [vmem:[#allocation8 + $0xe8] sm:$0xf] %v4855
  %v4872 = vld [vmem:[#allocation3] sm:$0x8]
  %v4873 = vld [vmem:[#allocation3 + $0x4] sm:$0xf]
  %v4874 = vld [vmem:[#allocation3 + $0x8] sm:$0xf]
  %v4875 = vld [vmem:[#allocation3 + $0xc] sm:$0xf]
  %v4876 = vld [vmem:[#allocation3 + $0x10] sm:$0xf]
  %v4877 = vld [vmem:[#allocation3 + $0x14] sm:$0xf]
  %v4878 = vld [vmem:[#allocation3 + $0x18] sm:$0xf]
  %v4879 = vld [vmem:[#allocation3 + $0x1c] sm:$0xf]
  %v4880 = vld [vmem:[#allocation3 + $0x20] sm:$0x7]
  %vm4890 = vcmask 1040384
  %vm4891 = vcmask 1044484
  %vm4892 = vmor %vm4890, %vm4891
  %v4893 = vrot.slane %v4872, 7
  %v4894 = vrot.slane %v4893, 4
  %v4895 = vrot.slane %v4873, 7
  %v4896 = vsel %vm4892, %v4894, %v4895
  %v4897 = vrot.slane %v4895, 4
  %v4898 = vrot.slane %v4874, 7
  %v4899 = vsel %vm4892, %v4897, %v4898
  %v4900 = vrot.slane %v4898, 4
  %v4901 = vrot.slane %v4875, 7
  %v4902 = vsel %vm4892, %v4900, %v4901
  %v4903 = vrot.slane %v4901, 4
  %v4904 = vrot.slane %v4876, 7
  %v4905 = vsel %vm4892, %v4903, %v4904
  %v4906 = vrot.slane %v4904, 4
  %v4907 = vrot.slane %v4877, 7
  %v4908 = vsel %vm4892, %v4906, %v4907
  %v4909 = vrot.slane %v4907, 4
  %v4910 = vrot.slane %v4878, 7
  %v4911 = vsel %vm4892, %v4909, %v4910
  %v4912 = vrot.slane %v4910, 4
  %v4913 = vrot.slane %v4879, 7
  %v4914 = vsel %vm4892, %v4912, %v4913
  %v4915 = vrot.slane %v4913, 4
  %v4916 = vrot.slane %v4880, 7
  %v4917 = vsel %vm4892, %v4915, %v4916
  %4926 = vst [vmem:[#allocation8 + $0xc] sm:$0xf] %v4896
  %4927 = vst [vmem:[#allocation8 + $0x2c] sm:$0xf] %v4899
  %4928 = vst [vmem:[#allocation8 + $0x4c] sm:$0xf] %v4902
  %4929 = vst [vmem:[#allocation8 + $0x6c] sm:$0xf] %v4905
  %4930 = vst [vmem:[#allocation8 + $0x8c] sm:$0xf] %v4908
  %4931 = vst [vmem:[#allocation8 + $0xac] sm:$0xf] %v4911
  %4932 = vst [vmem:[#allocation8 + $0xcc] sm:$0xf] %v4914
  %4933 = vst [vmem:[#allocation8 + $0xec] sm:$0xf] %v4917
  %v4934 = vld [vmem:[#allocation8] sm:$0xff]
  %v4935 = vld [vmem:[#allocation8 + $0x8] sm:$0xff]
  %v4936 = vld [vmem:[#allocation8 + $0x20] sm:$0xff]
  %v4937 = vld [vmem:[#allocation8 + $0x28] sm:$0xff]
  %v4938 = vld [vmem:[#allocation8 + $0x40] sm:$0xff]
  %v4939 = vld [vmem:[#allocation8 + $0x48] sm:$0xff]
  %v4940 = vld [vmem:[#allocation8 + $0x60] sm:$0xff]
  %v4941 = vld [vmem:[#allocation8 + $0x68] sm:$0xff]
  %v4942 = vld [vmem:[#allocation8 + $0x80] sm:$0xff]
  %v4943 = vld [vmem:[#allocation8 + $0x88] sm:$0xff]
  %v4944 = vld [vmem:[#allocation8 + $0xa0] sm:$0xff]
  %v4945 = vld [vmem:[#allocation8 + $0xa8] sm:$0xff]
  %v4946 = vld [vmem:[#allocation8 + $0xc0] sm:$0xff]
  %v4947 = vld [vmem:[#allocation8 + $0xc8] sm:$0xff]
  %v4948 = vld [vmem:[#allocation8 + $0xe0] sm:$0xff]
  %v4949 = vld [vmem:[#allocation8 + $0xe8] sm:$0xff]
  %v4950 = vld [vmem:[%s3] sm:$0xf]
  %v4951 = vld [vmem:[%s3 + $0x4] sm:$0xf]
  %v4952 = vld [vmem:[%s3 + $0x8] sm:$0xf]
  %v4953 = vld [vmem:[%s3 + $0xc] sm:$0xf]
  %v4954 = vld [vmem:[%s3 + $0x10] sm:$0xf]
  %v4955 = vld [vmem:[%s3 + $0x14] sm:$0xf]
  %v4956 = vld [vmem:[%s3 + $0x18] sm:$0xf]
  %v4957 = vld [vmem:[%s3 + $0x1c] sm:$0xf]
  %v4958 = vld [vmem:[%s3 + $0x20] sm:$0xf]
  %v4959 = vld [vmem:[%s3 + $0x24] sm:$0xf]
  %v4960 = vld [vmem:[%s3 + $0x28] sm:$0xf]
  %v4961 = vld [vmem:[%s3 + $0x2c] sm:$0xf]
  %v4962 = vld [vmem:[%s3 + $0x30] sm:$0xf]
  %v4963 = vld [vmem:[%s3 + $0x34] sm:$0xf]
  %v4964 = vld [vmem:[%s3 + $0x38] sm:$0xf]
  %v4965 = vld [vmem:[%s3 + $0x3c] sm:$0xf]
  %v4966 = vld [vmem:[%s3 + $0x40] sm:$0xf]
  %v4967 = vld [vmem:[%s3 + $0x44] sm:$0xf]
  %v4968 = vld [vmem:[%s3 + $0x48] sm:$0xf]
  %v4969 = vld [vmem:[%s3 + $0x4c] sm:$0xf]
  %v4970 = vld [vmem:[%s3 + $0x50] sm:$0xf]
  %v4971 = vld [vmem:[%s3 + $0x54] sm:$0xf]
  %v4972 = vld [vmem:[%s3 + $0x58] sm:$0xf]
  %v4973 = vld [vmem:[%s3 + $0x5c] sm:$0xf]
  %v4974 = vld [vmem:[%s3 + $0x60] sm:$0xf]
  %v4975 = vld [vmem:[%s3 + $0x64] sm:$0xf]
  %v4976 = vld [vmem:[%s3 + $0x68] sm:$0xf]
  %v4977 = vld [vmem:[%s3 + $0x6c] sm:$0xf]
  %v4978 = vld [vmem:[%s3 + $0x70] sm:$0xf]
  %v4979 = vld [vmem:[%s3 + $0x74] sm:$0xf]
  %v4980 = vld [vmem:[%s3 + $0x78] sm:$0xf]
  %v4981 = vld [vmem:[%s3 + $0x7c] sm:$0xf]
  %v4982 = vld [vmem:[%s3 + $0x80] sm:$0xf]
  %v4983 = vld [vmem:[%s3 + $0x84] sm:$0xf]
  %v4984 = vld [vmem:[%s3 + $0x88] sm:$0xf]
  %v4985 = vld [vmem:[%s3 + $0x8c] sm:$0xf]
  %v4986 = vld [vmem:[%s3 + $0x90] sm:$0xf]
  %v4987 = vld [vmem:[%s3 + $0x94] sm:$0xf]
  %v4988 = vld [vmem:[%s3 + $0x98] sm:$0xf]
  %v4989 = vld [vmem:[%s3 + $0x9c] sm:$0xf]
  %v4990 = vld [vmem:[%s3 + $0xa0] sm:$0xf]
  %v4991 = vld [vmem:[%s3 + $0xa4] sm:$0xf]
  %v4992 = vld [vmem:[%s3 + $0xa8] sm:$0xf]
  %v4993 = vld [vmem:[%s3 + $0xac] sm:$0xf]
  %v4994 = vld [vmem:[%s3 + $0xb0] sm:$0xf]
  %v4995 = vld [vmem:[%s3 + $0xb4] sm:$0xf]
  %v4996 = vld [vmem:[%s3 + $0xb8] sm:$0xf]
  %v4997 = vld [vmem:[%s3 + $0xbc] sm:$0xf]
  %v4998 = vld [vmem:[%s3 + $0xc0] sm:$0xf]
  %v4999 = vld [vmem:[%s3 + $0xc4] sm:$0xf]
  %v5000 = vld [vmem:[%s3 + $0xc8] sm:$0xf]
  %v5001 = vld [vmem:[%s3 + $0xcc] sm:$0xf]
  %v5002 = vld [vmem:[%s3 + $0xd0] sm:$0xf]
  %v5003 = vld [vmem:[%s3 + $0xd4] sm:$0xf]
  %v5004 = vld [vmem:[%s3 + $0xd8] sm:$0xf]
  %v5005 = vld [vmem:[%s3 + $0xdc] sm:$0xf]
  %v5006 = vld [vmem:[%s3 + $0xe0] sm:$0xf]
  %v5007 = vld [vmem:[%s3 + $0xe4] sm:$0xf]
  %v5008 = vld [vmem:[%s3 + $0xe8] sm:$0xf]
  %v5009 = vld [vmem:[%s3 + $0xec] sm:$0xf]
  %v5010 = vld [vmem:[%s3 + $0xf0] sm:$0xf]
  %v5011 = vld [vmem:[%s3 + $0xf4] sm:$0xf]
  %v5012 = vld [vmem:[%s3 + $0xf8] sm:$0xf]
  %v5013 = vld [vmem:[%s3 + $0xfc] sm:$0xf]
  %v5030 = vunpack.c.l.b16 %v4934
  %v5031 = vunpack.c.h.b16 %v4934
  %v5032 = vunpack.c.l.b16 %v4935
  %v5033 = vunpack.c.h.b16 %v4935
  %v5034 = vunpack.c.l.b16 %v4936
  %v5035 = vunpack.c.h.b16 %v4936
  %v5036 = vunpack.c.l.b16 %v4937
  %v5037 = vunpack.c.h.b16 %v4937
  %v5038 = vunpack.c.l.b16 %v4938
  %v5039 = vunpack.c.h.b16 %v4938
  %v5040 = vunpack.c.l.b16 %v4939
  %v5041 = vunpack.c.h.b16 %v4939
  %v5042 = vunpack.c.l.b16 %v4940
  %v5043 = vunpack.c.h.b16 %v4940
  %v5044 = vunpack.c.l.b16 %v4941
  %v5045 = vunpack.c.h.b16 %v4941
  %v5046 = vunpack.c.l.b16 %v4942
  %v5047 = vunpack.c.h.b16 %v4942
  %v5048 = vunpack.c.l.b16 %v4943
  %v5049 = vunpack.c.h.b16 %v4943
  %v5050 = vunpack.c.l.b16 %v4944
  %v5051 = vunpack.c.h.b16 %v4944
  %v5052 = vunpack.c.l.b16 %v4945
  %v5053 = vunpack.c.h.b16 %v4945
  %v5054 = vunpack.c.l.b16 %v4946
  %v5055 = vunpack.c.h.b16 %v4946
  %v5056 = vunpack.c.l.b16 %v4947
  %v5057 = vunpack.c.h.b16 %v4947
  %v5058 = vunpack.c.l.b16 %v4948
  %v5059 = vunpack.c.h.b16 %v4948
  %v5060 = vunpack.c.l.b16 %v4949
  %v5061 = vunpack.c.h.b16 %v4949
  %v5062 = vpack.c.b16 %v5034, %v5030
  %v5063 = vpack.c.b16 %v5035, %v5031
  %v5064 = vpack.c.b16 %v5036, %v5032
  %v5065 = vpack.c.b16 %v5037, %v5033
  %v5066 = vpack.c.b16 %v5042, %v5038
  %v5067 = vpack.c.b16 %v5043, %v5039
  %v5068 = vpack.c.b16 %v5044, %v5040
  %v5069 = vpack.c.b16 %v5045, %v5041
  %v5070 = vpack.c.b16 %v5050, %v5046
  %v5071 = vpack.c.b16 %v5051, %v5047
  %v5072 = vpack.c.b16 %v5052, %v5048
  %v5073 = vpack.c.b16 %v5053, %v5049
  %v5074 = vpack.c.b16 %v5058, %v5054
  %v5075 = vpack.c.b16 %v5059, %v5055
  %v5076 = vpack.c.b16 %v5060, %v5056
  %v5077 = vpack.c.b16 %v5061, %v5057
  %v5158 = vunpack.c.l.b16 %v4950
  %v5159 = vunpack.c.l.b16 %v4951
  %v5160 = vunpack.c.l.b16 %v4952
  %v5161 = vunpack.c.l.b16 %v4953
  %v5162 = vunpack.c.l.b16 %v4954
  %v5163 = vunpack.c.l.b16 %v4955
  %v5164 = vunpack.c.l.b16 %v4956
  %v5165 = vunpack.c.l.b16 %v4957
  %v5166 = vunpack.c.l.b16 %v4958
  %v5167 = vunpack.c.l.b16 %v4959
  %v5168 = vunpack.c.l.b16 %v4960
  %v5169 = vunpack.c.l.b16 %v4961
  %v5170 = vunpack.c.l.b16 %v4962
  %v5171 = vunpack.c.l.b16 %v4963
  %v5172 = vunpack.c.l.b16 %v4964
  %v5173 = vunpack.c.l.b16 %v4965
  %v5174 = vunpack.c.l.b16 %v4966
  %v5175 = vunpack.c.l.b16 %v4967
  %v5176 = vunpack.c.l.b16 %v4968
  %v5177 = vunpack.c.l.b16 %v4969
  %v5178 = vunpack.c.l.b16 %v4970
  %v5179 = vunpack.c.l.b16 %v4971
  %v5180 = vunpack.c.l.b16 %v4972
  %v5181 = vunpack.c.l.b16 %v4973
  %v5182 = vunpack.c.l.b16 %v4974
  %v5183 = vunpack.c.l.b16 %v4975
  %v5184 = vunpack.c.l.b16 %v4976
  %v5185 = vunpack.c.l.b16 %v4977
  %v5186 = vunpack.c.l.b16 %v4978
  %v5187 = vunpack.c.l.b16 %v4979
  %v5188 = vunpack.c.l.b16 %v4980
  %v5189 = vunpack.c.l.b16 %v4981
  %v5190 = vunpack.c.l.b16 %v4982
  %v5191 = vunpack.c.l.b16 %v4983
  %v5192 = vunpack.c.l.b16 %v4984
  %v5193 = vunpack.c.l.b16 %v4985
  %v5194 = vunpack.c.l.b16 %v4986
  %v5195 = vunpack.c.l.b16 %v4987
  %v5196 = vunpack.c.l.b16 %v4988
  %v5197 = vunpack.c.l.b16 %v4989
  %v5198 = vunpack.c.l.b16 %v4990
  %v5199 = vunpack.c.l.b16 %v4991
  %v5200 = vunpack.c.l.b16 %v4992
  %v5201 = vunpack.c.l.b16 %v4993
  %v5202 = vunpack.c.l.b16 %v4994
  %v5203 = vunpack.c.l.b16 %v4995
  %v5204 = vunpack.c.l.b16 %v4996
  %v5205 = vunpack.c.l.b16 %v4997
  %v5206 = vunpack.c.l.b16 %v4998
  %v5207 = vunpack.c.l.b16 %v4999
  %v5208 = vunpack.c.l.b16 %v5000
  %v5209 = vunpack.c.l.b16 %v5001
  %v5210 = vunpack.c.l.b16 %v5002
  %v5211 = vunpack.c.l.b16 %v5003
  %v5212 = vunpack.c.l.b16 %v5004
  %v5213 = vunpack.c.l.b16 %v5005
  %v5214 = vunpack.c.l.b16 %v5006
  %v5215 = vunpack.c.l.b16 %v5007
  %v5216 = vunpack.c.l.b16 %v5008
  %v5217 = vunpack.c.l.b16 %v5009
  %v5218 = vunpack.c.l.b16 %v5010
  %v5219 = vunpack.c.l.b16 %v5011
  %v5220 = vunpack.c.l.b16 %v5012
  %v5221 = vunpack.c.l.b16 %v5013
  %v5222 = vpack.c.b16 %v5159, %v5158
  %v5223 = vpack.c.b16 %v5161, %v5160
  %v5224 = vpack.c.b16 %v5163, %v5162
  %v5225 = vpack.c.b16 %v5165, %v5164
  %v5226 = vpack.c.b16 %v5167, %v5166
  %v5227 = vpack.c.b16 %v5169, %v5168
  %v5228 = vpack.c.b16 %v5171, %v5170
  %v5229 = vpack.c.b16 %v5173, %v5172
  %v5230 = vpack.c.b16 %v5175, %v5174
  %v5231 = vpack.c.b16 %v5177, %v5176
  %v5232 = vpack.c.b16 %v5179, %v5178
  %v5233 = vpack.c.b16 %v5181, %v5180
  %v5234 = vpack.c.b16 %v5183, %v5182
  %v5235 = vpack.c.b16 %v5185, %v5184
  %v5236 = vpack.c.b16 %v5187, %v5186
  %v5237 = vpack.c.b16 %v5189, %v5188
  %v5238 = vpack.c.b16 %v5191, %v5190
  %v5239 = vpack.c.b16 %v5193, %v5192
  %v5240 = vpack.c.b16 %v5195, %v5194
  %v5241 = vpack.c.b16 %v5197, %v5196
  %v5242 = vpack.c.b16 %v5199, %v5198
  %v5243 = vpack.c.b16 %v5201, %v5200
  %v5244 = vpack.c.b16 %v5203, %v5202
  %v5245 = vpack.c.b16 %v5205, %v5204
  %v5246 = vpack.c.b16 %v5207, %v5206
  %v5247 = vpack.c.b16 %v5209, %v5208
  %v5248 = vpack.c.b16 %v5211, %v5210
  %v5249 = vpack.c.b16 %v5213, %v5212
  %v5250 = vpack.c.b16 %v5215, %v5214
  %v5251 = vpack.c.b16 %v5217, %v5216
  %v5252 = vpack.c.b16 %v5219, %v5218
  %v5253 = vpack.c.b16 %v5221, %v5220
  %5286 = vmatprep.subr.bf16.mxu0 0
  %5287 = vmatpush1.bf16.msra.mxu0 %v5229
  %5288 = vmatprep.subr.bf16.mxu0 0
  %5289 = vmatpush1.bf16.msra.mxu0 %v5228
  %5290 = vmatprep.subr.bf16.mxu0 0
  %5291 = vmatpush1.bf16.msra.mxu0 %v5227
  %5292 = vmatprep.subr.bf16.mxu0 0
  %5293 = vmatpush1.bf16.msra.mxu0 %v5226
  %5294 = vmatprep.subr.bf16.mxu0 0
  %5295 = vmatpush1.bf16.msra.mxu0 %v5225
  %5296 = vmatprep.subr.bf16.mxu0 0
  %5297 = vmatpush1.bf16.msra.mxu0 %v5224
  %5298 = vmatprep.subr.bf16.mxu0 0
  %5299 = vmatpush1.bf16.msra.mxu0 %v5223
  %5300 = vmatprep.subr.bf16.mxu0 0
  %5301 = vmatpush1.bf16.msra.mxu0 %v5222
  %5302 = vmatprep.subr.bf16.mxu0 0
  %5303 = vmatpush2.bf16.msra.mxu0 %v5237
  %5304 = vmatprep.subr.bf16.mxu0 0
  %5305 = vmatpush2.bf16.msra.mxu0 %v5236
  %5306 = vmatprep.subr.bf16.mxu0 0
  %5307 = vmatpush2.bf16.msra.mxu0 %v5235
  %5308 = vmatprep.subr.bf16.mxu0 0
  %5309 = vmatpush2.bf16.msra.mxu0 %v5234
  %5310 = vmatprep.subr.bf16.mxu0 0
  %5311 = vmatpush2.bf16.msra.mxu0 %v5233
  %5312 = vmatprep.subr.bf16.mxu0 0
  %5313 = vmatpush2.bf16.msra.mxu0 %v5232
  %5314 = vmatprep.subr.bf16.mxu0 0
  %5315 = vmatpush2.bf16.msra.mxu0 %v5231
  %5316 = vmatprep.subr.bf16.mxu0 0
  %5317 = vmatpush2.bf16.msra.mxu0 %v5230
  %5318 = vmatprep.mubr.bf16.mxu0 %v5063
  %5319 = vmatmul.mubr.bf16.gmra.mxu0 %v5062
  %v5320 = vpop.f32.mrf.mxu0
  %v5321 = vadd.f32 0.0, %v5320
  %v5322 = vpop.f32.mrf.mxu0
  %v5323 = vpop.f32.mrf.mxu0
  %v5324 = vadd.f32 0.0, %v5323
  %v5325 = vpop.f32.mrf.mxu0
  %5326 = vmatprep.mubr.bf16.mxu0 %v5067
  %5327 = vmatmul.mubr.bf16.gmra.mxu0 %v5066
  %v5328 = vpop.f32.mrf.mxu0
  %v5329 = vadd.f32 0.0, %v5328
  %v5330 = vpop.f32.mrf.mxu0
  %v5331 = vpop.f32.mrf.mxu0
  %v5332 = vadd.f32 0.0, %v5331
  %v5333 = vpop.f32.mrf.mxu0
  %5334 = vmatprep.mubr.bf16.mxu0 %v5071
  %5335 = vmatmul.mubr.bf16.gmra.mxu0 %v5070
  %v5336 = vpop.f32.mrf.mxu0
  %v5337 = vadd.f32 0.0, %v5336
  %v5338 = vpop.f32.mrf.mxu0
  %v5339 = vpop.f32.mrf.mxu0
  %v5340 = vadd.f32 0.0, %v5339
  %v5341 = vpop.f32.mrf.mxu0
  %5342 = vmatprep.mubr.bf16.mxu0 %v5075
  %5343 = vmatmul.mubr.bf16.gmra.mxu0 %v5074
  %v5344 = vpop.f32.mrf.mxu0
  %v5345 = vadd.f32 0.0, %v5344
  %v5346 = vpop.f32.mrf.mxu0
  %v5347 = vpop.f32.mrf.mxu0
  %v5348 = vadd.f32 0.0, %v5347
  %v5349 = vpop.f32.mrf.mxu0
  %5350 = vdwg.mxu0
  %5351 = vmatprep.subr.bf16.mxu0 0
  %5352 = vmatpush1.bf16.msra.mxu0 %v5245
  %5353 = vmatprep.subr.bf16.mxu0 0
  %5354 = vmatpush1.bf16.msra.mxu0 %v5244
  %5355 = vmatprep.subr.bf16.mxu0 0
  %5356 = vmatpush1.bf16.msra.mxu0 %v5243
  %5357 = vmatprep.subr.bf16.mxu0 0
  %5358 = vmatpush1.bf16.msra.mxu0 %v5242
  %5359 = vmatprep.subr.bf16.mxu0 0
  %5360 = vmatpush1.bf16.msra.mxu0 %v5241
  %5361 = vmatprep.subr.bf16.mxu0 0
  %5362 = vmatpush1.bf16.msra.mxu0 %v5240
  %5363 = vmatprep.subr.bf16.mxu0 0
  %5364 = vmatpush1.bf16.msra.mxu0 %v5239
  %5365 = vmatprep.subr.bf16.mxu0 0
  %5366 = vmatpush1.bf16.msra.mxu0 %v5238
  %5367 = vmatprep.subr.bf16.mxu0 0
  %5368 = vmatpush2.bf16.msra.mxu0 %v5253
  %5369 = vmatprep.subr.bf16.mxu0 0
  %5370 = vmatpush2.bf16.msra.mxu0 %v5252
  %5371 = vmatprep.subr.bf16.mxu0 0
  %5372 = vmatpush2.bf16.msra.mxu0 %v5251
  %5373 = vmatprep.subr.bf16.mxu0 0
  %5374 = vmatpush2.bf16.msra.mxu0 %v5250
  %5375 = vmatprep.subr.bf16.mxu0 0
  %5376 = vmatpush2.bf16.msra.mxu0 %v5249
  %5377 = vmatprep.subr.bf16.mxu0 0
  %5378 = vmatpush2.bf16.msra.mxu0 %v5248
  %5379 = vmatprep.subr.bf16.mxu0 0
  %5380 = vmatpush2.bf16.msra.mxu0 %v5247
  %5381 = vmatprep.subr.bf16.mxu0 0
  %5382 = vmatpush2.bf16.msra.mxu0 %v5246
  %5383 = vmatprep.mubr.bf16.mxu0 %v5065
  %5384 = vmatmul.mubr.bf16.gmra.mxu0 %v5064
  %v5385 = vpop.f32.mrf.mxu0
  %v5386 = vadd.f32 %v5321, %v5385
  %v5387 = vpop.f32.mrf.mxu0
  %v5388 = vpop.f32.mrf.mxu0
  %v5389 = vadd.f32 %v5324, %v5388
  %v5390 = vpop.f32.mrf.mxu0
  %5391 = vmatprep.mubr.bf16.mxu0 %v5069
  %5392 = vmatmul.mubr.bf16.gmra.mxu0 %v5068
  %v5393 = vpop.f32.mrf.mxu0
  %v5394 = vadd.f32 %v5329, %v5393
  %v5395 = vpop.f32.mrf.mxu0
  %v5396 = vpop.f32.mrf.mxu0
  %v5397 = vadd.f32 %v5332, %v5396
  %v5398 = vpop.f32.mrf.mxu0
  %5399 = vmatprep.mubr.bf16.mxu0 %v5073
  %5400 = vmatmul.mubr.bf16.gmra.mxu0 %v5072
  %v5401 = vpop.f32.mrf.mxu0
  %v5402 = vadd.f32 %v5337, %v5401
  %v5403 = vpop.f32.mrf.mxu0
  %v5404 = vpop.f32.mrf.mxu0
  %v5405 = vadd.f32 %v5340, %v5404
  %v5406 = vpop.f32.mrf.mxu0
  %5407 = vmatprep.mubr.bf16.mxu0 %v5077
  %5408 = vmatmul.mubr.bf16.gmra.mxu0 %v5076
  %v5409 = vpop.f32.mrf.mxu0
  %v5410 = vadd.f32 %v5345, %v5409
  %v5411 = vpop.f32.mrf.mxu0
  %v5412 = vpop.f32.mrf.mxu0
  %v5413 = vadd.f32 %v5348, %v5412
  %v5414 = vpop.f32.mrf.mxu0
  %5415 = vdwg.mxu0
  %s5416 = scalar_lea.vmem %s3, 256
  %v5417 = vld [vmem:[%s5416] sm:$0xf]
  %v5418 = vld [vmem:[%s5416 + $0x4] sm:$0xf]
  %v5419 = vld [vmem:[%s5416 + $0x8] sm:$0xf]
  %v5420 = vld [vmem:[%s5416 + $0xc] sm:$0xf]
  %v5421 = vld [vmem:[%s5416 + $0x10] sm:$0xf]
  %v5422 = vld [vmem:[%s5416 + $0x14] sm:$0xf]
  %v5423 = vld [vmem:[%s5416 + $0x18] sm:$0xf]
  %v5424 = vld [vmem:[%s5416 + $0x1c] sm:$0xf]
  %v5425 = vld [vmem:[%s5416 + $0x20] sm:$0xf]
  %v5426 = vld [vmem:[%s5416 + $0x24] sm:$0xf]
  %v5427 = vld [vmem:[%s5416 + $0x28] sm:$0xf]
  %v5428 = vld [vmem:[%s5416 + $0x2c] sm:$0xf]
  %v5429 = vld [vmem:[%s5416 + $0x30] sm:$0xf]
  %v5430 = vld [vmem:[%s5416 + $0x34] sm:$0xf]
  %v5431 = vld [vmem:[%s5416 + $0x38] sm:$0xf]
  %v5432 = vld [vmem:[%s5416 + $0x3c] sm:$0xf]
  %v5433 = vld [vmem:[%s5416 + $0x40] sm:$0xf]
  %v5434 = vld [vmem:[%s5416 + $0x44] sm:$0xf]
  %v5435 = vld [vmem:[%s5416 + $0x48] sm:$0xf]
  %v5436 = vld [vmem:[%s5416 + $0x4c] sm:$0xf]
  %v5437 = vld [vmem:[%s5416 + $0x50] sm:$0xf]
  %v5438 = vld [vmem:[%s5416 + $0x54] sm:$0xf]
  %v5439 = vld [vmem:[%s5416 + $0x58] sm:$0xf]
  %v5440 = vld [vmem:[%s5416 + $0x5c] sm:$0xf]
  %v5441 = vld [vmem:[%s5416 + $0x60] sm:$0xf]
  %v5442 = vld [vmem:[%s5416 + $0x64] sm:$0xf]
  %v5443 = vld [vmem:[%s5416 + $0x68] sm:$0xf]
  %v5444 = vld [vmem:[%s5416 + $0x6c] sm:$0xf]
  %v5445 = vld [vmem:[%s5416 + $0x70] sm:$0xf]
  %v5446 = vld [vmem:[%s5416 + $0x74] sm:$0xf]
  %v5447 = vld [vmem:[%s5416 + $0x78] sm:$0xf]
  %v5448 = vld [vmem:[%s5416 + $0x7c] sm:$0xf]
  %v5449 = vld [vmem:[%s5416 + $0x80] sm:$0xf]
  %v5450 = vld [vmem:[%s5416 + $0x84] sm:$0xf]
  %v5451 = vld [vmem:[%s5416 + $0x88] sm:$0xf]
  %v5452 = vld [vmem:[%s5416 + $0x8c] sm:$0xf]
  %v5453 = vld [vmem:[%s5416 + $0x90] sm:$0xf]
  %v5454 = vld [vmem:[%s5416 + $0x94] sm:$0xf]
  %v5455 = vld [vmem:[%s5416 + $0x98] sm:$0xf]
  %v5456 = vld [vmem:[%s5416 + $0x9c] sm:$0xf]
  %v5457 = vld [vmem:[%s5416 + $0xa0] sm:$0xf]
  %v5458 = vld [vmem:[%s5416 + $0xa4] sm:$0xf]
  %v5459 = vld [vmem:[%s5416 + $0xa8] sm:$0xf]
  %v5460 = vld [vmem:[%s5416 + $0xac] sm:$0xf]
  %v5461 = vld [vmem:[%s5416 + $0xb0] sm:$0xf]
  %v5462 = vld [vmem:[%s5416 + $0xb4] sm:$0xf]
  %v5463 = vld [vmem:[%s5416 + $0xb8] sm:$0xf]
  %v5464 = vld [vmem:[%s5416 + $0xbc] sm:$0xf]
  %v5465 = vld [vmem:[%s5416 + $0xc0] sm:$0xf]
  %v5466 = vld [vmem:[%s5416 + $0xc4] sm:$0xf]
  %v5467 = vld [vmem:[%s5416 + $0xc8] sm:$0xf]
  %v5468 = vld [vmem:[%s5416 + $0xcc] sm:$0xf]
  %v5469 = vld [vmem:[%s5416 + $0xd0] sm:$0xf]
  %v5470 = vld [vmem:[%s5416 + $0xd4] sm:$0xf]
  %v5471 = vld [vmem:[%s5416 + $0xd8] sm:$0xf]
  %v5472 = vld [vmem:[%s5416 + $0xdc] sm:$0xf]
  %v5473 = vld [vmem:[%s5416 + $0xe0] sm:$0xf]
  %v5474 = vld [vmem:[%s5416 + $0xe4] sm:$0xf]
  %v5475 = vld [vmem:[%s5416 + $0xe8] sm:$0xf]
  %v5476 = vld [vmem:[%s5416 + $0xec] sm:$0xf]
  %v5477 = vld [vmem:[%s5416 + $0xf0] sm:$0xf]
  %v5478 = vld [vmem:[%s5416 + $0xf4] sm:$0xf]
  %v5479 = vld [vmem:[%s5416 + $0xf8] sm:$0xf]
  %v5480 = vld [vmem:[%s5416 + $0xfc] sm:$0xf]
  %v5545 = vunpack.c.l.b16 %v5417
  %v5546 = vunpack.c.l.b16 %v5418
  %v5547 = vunpack.c.l.b16 %v5419
  %v5548 = vunpack.c.l.b16 %v5420
  %v5549 = vunpack.c.l.b16 %v5421
  %v5550 = vunpack.c.l.b16 %v5422
  %v5551 = vunpack.c.l.b16 %v5423
  %v5552 = vunpack.c.l.b16 %v5424
  %v5553 = vunpack.c.l.b16 %v5425
  %v5554 = vunpack.c.l.b16 %v5426
  %v5555 = vunpack.c.l.b16 %v5427
  %v5556 = vunpack.c.l.b16 %v5428
  %v5557 = vunpack.c.l.b16 %v5429
  %v5558 = vunpack.c.l.b16 %v5430
  %v5559 = vunpack.c.l.b16 %v5431
  %v5560 = vunpack.c.l.b16 %v5432
  %v5561 = vunpack.c.l.b16 %v5433
  %v5562 = vunpack.c.l.b16 %v5434
  %v5563 = vunpack.c.l.b16 %v5435
  %v5564 = vunpack.c.l.b16 %v5436
  %v5565 = vunpack.c.l.b16 %v5437
  %v5566 = vunpack.c.l.b16 %v5438
  %v5567 = vunpack.c.l.b16 %v5439
  %v5568 = vunpack.c.l.b16 %v5440
  %v5569 = vunpack.c.l.b16 %v5441
  %v5570 = vunpack.c.l.b16 %v5442
  %v5571 = vunpack.c.l.b16 %v5443
  %v5572 = vunpack.c.l.b16 %v5444
  %v5573 = vunpack.c.l.b16 %v5445
  %v5574 = vunpack.c.l.b16 %v5446
  %v5575 = vunpack.c.l.b16 %v5447
  %v5576 = vunpack.c.l.b16 %v5448
  %v5577 = vunpack.c.l.b16 %v5449
  %v5578 = vunpack.c.l.b16 %v5450
  %v5579 = vunpack.c.l.b16 %v5451
  %v5580 = vunpack.c.l.b16 %v5452
  %v5581 = vunpack.c.l.b16 %v5453
  %v5582 = vunpack.c.l.b16 %v5454
  %v5583 = vunpack.c.l.b16 %v5455
  %v5584 = vunpack.c.l.b16 %v5456
  %v5585 = vunpack.c.l.b16 %v5457
  %v5586 = vunpack.c.l.b16 %v5458
  %v5587 = vunpack.c.l.b16 %v5459
  %v5588 = vunpack.c.l.b16 %v5460
  %v5589 = vunpack.c.l.b16 %v5461
  %v5590 = vunpack.c.l.b16 %v5462
  %v5591 = vunpack.c.l.b16 %v5463
  %v5592 = vunpack.c.l.b16 %v5464
  %v5593 = vunpack.c.l.b16 %v5465
  %v5594 = vunpack.c.l.b16 %v5466
  %v5595 = vunpack.c.l.b16 %v5467
  %v5596 = vunpack.c.l.b16 %v5468
  %v5597 = vunpack.c.l.b16 %v5469
  %v5598 = vunpack.c.l.b16 %v5470
  %v5599 = vunpack.c.l.b16 %v5471
  %v5600 = vunpack.c.l.b16 %v5472
  %v5601 = vunpack.c.l.b16 %v5473
  %v5602 = vunpack.c.l.b16 %v5474
  %v5603 = vunpack.c.l.b16 %v5475
  %v5604 = vunpack.c.l.b16 %v5476
  %v5605 = vunpack.c.l.b16 %v5477
  %v5606 = vunpack.c.l.b16 %v5478
  %v5607 = vunpack.c.l.b16 %v5479
  %v5608 = vunpack.c.l.b16 %v5480
  %v5609 = vpack.c.b16 %v5546, %v5545
  %v5610 = vpack.c.b16 %v5548, %v5547
  %v5611 = vpack.c.b16 %v5550, %v5549
  %v5612 = vpack.c.b16 %v5552, %v5551
  %v5613 = vpack.c.b16 %v5554, %v5553
  %v5614 = vpack.c.b16 %v5556, %v5555
  %v5615 = vpack.c.b16 %v5558, %v5557
  %v5616 = vpack.c.b16 %v5560, %v5559
  %v5617 = vpack.c.b16 %v5562, %v5561
  %v5618 = vpack.c.b16 %v5564, %v5563
  %v5619 = vpack.c.b16 %v5566, %v5565
  %v5620 = vpack.c.b16 %v5568, %v5567
  %v5621 = vpack.c.b16 %v5570, %v5569
  %v5622 = vpack.c.b16 %v5572, %v5571
  %v5623 = vpack.c.b16 %v5574, %v5573
  %v5624 = vpack.c.b16 %v5576, %v5575
  %v5625 = vpack.c.b16 %v5578, %v5577
  %v5626 = vpack.c.b16 %v5580, %v5579
  %v5627 = vpack.c.b16 %v5582, %v5581
  %v5628 = vpack.c.b16 %v5584, %v5583
  %v5629 = vpack.c.b16 %v5586, %v5585
  %v5630 = vpack.c.b16 %v5588, %v5587
  %v5631 = vpack.c.b16 %v5590, %v5589
  %v5632 = vpack.c.b16 %v5592, %v5591
  %v5633 = vpack.c.b16 %v5594, %v5593
  %v5634 = vpack.c.b16 %v5596, %v5595
  %v5635 = vpack.c.b16 %v5598, %v5597
  %v5636 = vpack.c.b16 %v5600, %v5599
  %v5637 = vpack.c.b16 %v5602, %v5601
  %v5638 = vpack.c.b16 %v5604, %v5603
  %v5639 = vpack.c.b16 %v5606, %v5605
  %v5640 = vpack.c.b16 %v5608, %v5607
  %5673 = vmatprep.subr.bf16.mxu0 0
  %5674 = vmatpush1.bf16.msra.mxu0 %v5616
  %5675 = vmatprep.subr.bf16.mxu0 0
  %5676 = vmatpush1.bf16.msra.mxu0 %v5615
  %5677 = vmatprep.subr.bf16.mxu0 0
  %5678 = vmatpush1.bf16.msra.mxu0 %v5614
  %5679 = vmatprep.subr.bf16.mxu0 0
  %5680 = vmatpush1.bf16.msra.mxu0 %v5613
  %5681 = vmatprep.subr.bf16.mxu0 0
  %5682 = vmatpush1.bf16.msra.mxu0 %v5612
  %5683 = vmatprep.subr.bf16.mxu0 0
  %5684 = vmatpush1.bf16.msra.mxu0 %v5611
  %5685 = vmatprep.subr.bf16.mxu0 0
  %5686 = vmatpush1.bf16.msra.mxu0 %v5610
  %5687 = vmatprep.subr.bf16.mxu0 0
  %5688 = vmatpush1.bf16.msra.mxu0 %v5609
  %5689 = vmatprep.subr.bf16.mxu0 0
  %5690 = vmatpush2.bf16.msra.mxu0 %v5624
  %5691 = vmatprep.subr.bf16.mxu0 0
  %5692 = vmatpush2.bf16.msra.mxu0 %v5623
  %5693 = vmatprep.subr.bf16.mxu0 0
  %5694 = vmatpush2.bf16.msra.mxu0 %v5622
  %5695 = vmatprep.subr.bf16.mxu0 0
  %5696 = vmatpush2.bf16.msra.mxu0 %v5621
  %5697 = vmatprep.subr.bf16.mxu0 0
  %5698 = vmatpush2.bf16.msra.mxu0 %v5620
  %5699 = vmatprep.subr.bf16.mxu0 0
  %5700 = vmatpush2.bf16.msra.mxu0 %v5619
  %5701 = vmatprep.subr.bf16.mxu0 0
  %5702 = vmatpush2.bf16.msra.mxu0 %v5618
  %5703 = vmatprep.subr.bf16.mxu0 0
  %5704 = vmatpush2.bf16.msra.mxu0 %v5617
  %5705 = vmatprep.mubr.bf16.mxu0 %v5063
  %5706 = vmatmul.mubr.bf16.gmra.mxu0 %v5062
  %v5707 = vpop.f32.mrf.mxu0
  %v5708 = vadd.f32 0.0, %v5707
  %v5709 = vpop.f32.mrf.mxu0
  %v5710 = vpop.f32.mrf.mxu0
  %v5711 = vadd.f32 0.0, %v5710
  %v5712 = vpop.f32.mrf.mxu0
  %5713 = vmatprep.mubr.bf16.mxu0 %v5067
  %5714 = vmatmul.mubr.bf16.gmra.mxu0 %v5066
  %v5715 = vpop.f32.mrf.mxu0
  %v5716 = vadd.f32 0.0, %v5715
  %v5717 = vpop.f32.mrf.mxu0
  %v5718 = vpop.f32.mrf.mxu0
  %v5719 = vadd.f32 0.0, %v5718
  %v5720 = vpop.f32.mrf.mxu0
  %5721 = vmatprep.mubr.bf16.mxu0 %v5071
  %5722 = vmatmul.mubr.bf16.gmra.mxu0 %v5070
  %v5723 = vpop.f32.mrf.mxu0
  %v5724 = vadd.f32 0.0, %v5723
  %v5725 = vpop.f32.mrf.mxu0
  %v5726 = vpop.f32.mrf.mxu0
  %v5727 = vadd.f32 0.0, %v5726
  %v5728 = vpop.f32.mrf.mxu0
  %5729 = vmatprep.mubr.bf16.mxu0 %v5075
  %5730 = vmatmul.mubr.bf16.gmra.mxu0 %v5074
  %v5731 = vpop.f32.mrf.mxu0
  %v5732 = vadd.f32 0.0, %v5731
  %v5733 = vpop.f32.mrf.mxu0
  %v5734 = vpop.f32.mrf.mxu0
  %v5735 = vadd.f32 0.0, %v5734
  %v5736 = vpop.f32.mrf.mxu0
  %5737 = vdwg.mxu0
  %5738 = vmatprep.subr.bf16.mxu0 0
  %5739 = vmatpush1.bf16.msra.mxu0 %v5632
  %5740 = vmatprep.subr.bf16.mxu0 0
  %5741 = vmatpush1.bf16.msra.mxu0 %v5631
  %5742 = vmatprep.subr.bf16.mxu0 0
  %5743 = vmatpush1.bf16.msra.mxu0 %v5630
  %5744 = vmatprep.subr.bf16.mxu0 0
  %5745 = vmatpush1.bf16.msra.mxu0 %v5629
  %5746 = vmatprep.subr.bf16.mxu0 0
  %5747 = vmatpush1.bf16.msra.mxu0 %v5628
  %5748 = vmatprep.subr.bf16.mxu0 0
  %5749 = vmatpush1.bf16.msra.mxu0 %v5627
  %5750 = vmatprep.subr.bf16.mxu0 0
  %5751 = vmatpush1.bf16.msra.mxu0 %v5626
  %5752 = vmatprep.subr.bf16.mxu0 0
  %5753 = vmatpush1.bf16.msra.mxu0 %v5625
  %5754 = vmatprep.subr.bf16.mxu0 0
  %5755 = vmatpush2.bf16.msra.mxu0 %v5640
  %5756 = vmatprep.subr.bf16.mxu0 0
  %5757 = vmatpush2.bf16.msra.mxu0 %v5639
  %5758 = vmatprep.subr.bf16.mxu0 0
  %5759 = vmatpush2.bf16.msra.mxu0 %v5638
  %5760 = vmatprep.subr.bf16.mxu0 0
  %5761 = vmatpush2.bf16.msra.mxu0 %v5637
  %5762 = vmatprep.subr.bf16.mxu0 0
  %5763 = vmatpush2.bf16.msra.mxu0 %v5636
  %5764 = vmatprep.subr.bf16.mxu0 0
  %5765 = vmatpush2.bf16.msra.mxu0 %v5635
  %5766 = vmatprep.subr.bf16.mxu0 0
  %5767 = vmatpush2.bf16.msra.mxu0 %v5634
  %5768 = vmatprep.subr.bf16.mxu0 0
  %5769 = vmatpush2.bf16.msra.mxu0 %v5633
  %5770 = vmatprep.mubr.bf16.mxu0 %v5065
  %5771 = vmatmul.mubr.bf16.gmra.mxu0 %v5064
  %v5772 = vpop.f32.mrf.mxu0
  %v5773 = vadd.f32 %v5708, %v5772
  %v5774 = vpop.f32.mrf.mxu0
  %v5775 = vpop.f32.mrf.mxu0
  %v5776 = vadd.f32 %v5711, %v5775
  %v5777 = vpop.f32.mrf.mxu0
  %5778 = vmatprep.mubr.bf16.mxu0 %v5069
  %5779 = vmatmul.mubr.bf16.gmra.mxu0 %v5068
  %v5780 = vpop.f32.mrf.mxu0
  %v5781 = vadd.f32 %v5716, %v5780
  %v5782 = vpop.f32.mrf.mxu0
  %v5783 = vpop.f32.mrf.mxu0
  %v5784 = vadd.f32 %v5719, %v5783
  %v5785 = vpop.f32.mrf.mxu0
  %5786 = vmatprep.mubr.bf16.mxu0 %v5073
  %5787 = vmatmul.mubr.bf16.gmra.mxu0 %v5072
  %v5788 = vpop.f32.mrf.mxu0
  %v5789 = vadd.f32 %v5724, %v5788
  %v5790 = vpop.f32.mrf.mxu0
  %v5791 = vpop.f32.mrf.mxu0
  %v5792 = vadd.f32 %v5727, %v5791
  %v5793 = vpop.f32.mrf.mxu0
  %5794 = vmatprep.mubr.bf16.mxu0 %v5077
  %5795 = vmatmul.mubr.bf16.gmra.mxu0 %v5076
  %v5796 = vpop.f32.mrf.mxu0
  %v5797 = vadd.f32 %v5732, %v5796
  %v5798 = vpop.f32.mrf.mxu0
  %v5799 = vpop.f32.mrf.mxu0
  %v5800 = vadd.f32 %v5735, %v5799
  %v5801 = vpop.f32.mrf.mxu0
  %5802 = vdwg.mxu0
  %s5803 = scalar_lea.vmem %s3, 512
  %v5804 = vld [vmem:[%s5803] sm:$0xf]
  %v5805 = vld [vmem:[%s5803 + $0x4] sm:$0xf]
  %v5806 = vld [vmem:[%s5803 + $0x8] sm:$0xf]
  %v5807 = vld [vmem:[%s5803 + $0xc] sm:$0xf]
  %v5808 = vld [vmem:[%s5803 + $0x10] sm:$0xf]
  %v5809 = vld [vmem:[%s5803 + $0x14] sm:$0xf]
  %v5810 = vld [vmem:[%s5803 + $0x18] sm:$0xf]
  %v5811 = vld [vmem:[%s5803 + $0x1c] sm:$0xf]
  %v5812 = vld [vmem:[%s5803 + $0x20] sm:$0xf]
  %v5813 = vld [vmem:[%s5803 + $0x24] sm:$0xf]
  %v5814 = vld [vmem:[%s5803 + $0x28] sm:$0xf]
  %v5815 = vld [vmem:[%s5803 + $0x2c] sm:$0xf]
  %v5816 = vld [vmem:[%s5803 + $0x30] sm:$0xf]
  %v5817 = vld [vmem:[%s5803 + $0x34] sm:$0xf]
  %v5818 = vld [vmem:[%s5803 + $0x38] sm:$0xf]
  %v5819 = vld [vmem:[%s5803 + $0x3c] sm:$0xf]
  %v5820 = vld [vmem:[%s5803 + $0x40] sm:$0xf]
  %v5821 = vld [vmem:[%s5803 + $0x44] sm:$0xf]
  %v5822 = vld [vmem:[%s5803 + $0x48] sm:$0xf]
  %v5823 = vld [vmem:[%s5803 + $0x4c] sm:$0xf]
  %v5824 = vld [vmem:[%s5803 + $0x50] sm:$0xf]
  %v5825 = vld [vmem:[%s5803 + $0x54] sm:$0xf]
  %v5826 = vld [vmem:[%s5803 + $0x58] sm:$0xf]
  %v5827 = vld [vmem:[%s5803 + $0x5c] sm:$0xf]
  %v5828 = vld [vmem:[%s5803 + $0x60] sm:$0xf]
  %v5829 = vld [vmem:[%s5803 + $0x64] sm:$0xf]
  %v5830 = vld [vmem:[%s5803 + $0x68] sm:$0xf]
  %v5831 = vld [vmem:[%s5803 + $0x6c] sm:$0xf]
  %v5832 = vld [vmem:[%s5803 + $0x70] sm:$0xf]
  %v5833 = vld [vmem:[%s5803 + $0x74] sm:$0xf]
  %v5834 = vld [vmem:[%s5803 + $0x78] sm:$0xf]
  %v5835 = vld [vmem:[%s5803 + $0x7c] sm:$0xf]
  %v5836 = vld [vmem:[%s5803 + $0x80] sm:$0xf]
  %v5837 = vld [vmem:[%s5803 + $0x84] sm:$0xf]
  %v5838 = vld [vmem:[%s5803 + $0x88] sm:$0xf]
  %v5839 = vld [vmem:[%s5803 + $0x8c] sm:$0xf]
  %v5840 = vld [vmem:[%s5803 + $0x90] sm:$0xf]
  %v5841 = vld [vmem:[%s5803 + $0x94] sm:$0xf]
  %v5842 = vld [vmem:[%s5803 + $0x98] sm:$0xf]
  %v5843 = vld [vmem:[%s5803 + $0x9c] sm:$0xf]
  %v5844 = vld [vmem:[%s5803 + $0xa0] sm:$0xf]
  %v5845 = vld [vmem:[%s5803 + $0xa4] sm:$0xf]
  %v5846 = vld [vmem:[%s5803 + $0xa8] sm:$0xf]
  %v5847 = vld [vmem:[%s5803 + $0xac] sm:$0xf]
  %v5848 = vld [vmem:[%s5803 + $0xb0] sm:$0xf]
  %v5849 = vld [vmem:[%s5803 + $0xb4] sm:$0xf]
  %v5850 = vld [vmem:[%s5803 + $0xb8] sm:$0xf]
  %v5851 = vld [vmem:[%s5803 + $0xbc] sm:$0xf]
  %v5852 = vld [vmem:[%s5803 + $0xc0] sm:$0xf]
  %v5853 = vld [vmem:[%s5803 + $0xc4] sm:$0xf]
  %v5854 = vld [vmem:[%s5803 + $0xc8] sm:$0xf]
  %v5855 = vld [vmem:[%s5803 + $0xcc] sm:$0xf]
  %v5856 = vld [vmem:[%s5803 + $0xd0] sm:$0xf]
  %v5857 = vld [vmem:[%s5803 + $0xd4] sm:$0xf]
  %v5858 = vld [vmem:[%s5803 + $0xd8] sm:$0xf]
  %v5859 = vld [vmem:[%s5803 + $0xdc] sm:$0xf]
  %v5860 = vld [vmem:[%s5803 + $0xe0] sm:$0xf]
  %v5861 = vld [vmem:[%s5803 + $0xe4] sm:$0xf]
  %v5862 = vld [vmem:[%s5803 + $0xe8] sm:$0xf]
  %v5863 = vld [vmem:[%s5803 + $0xec] sm:$0xf]
  %v5864 = vld [vmem:[%s5803 + $0xf0] sm:$0xf]
  %v5865 = vld [vmem:[%s5803 + $0xf4] sm:$0xf]
  %v5866 = vld [vmem:[%s5803 + $0xf8] sm:$0xf]
  %v5867 = vld [vmem:[%s5803 + $0xfc] sm:$0xf]
  %v5932 = vunpack.c.l.b16 %v5804
  %v5933 = vunpack.c.l.b16 %v5805
  %v5934 = vunpack.c.l.b16 %v5806
  %v5935 = vunpack.c.l.b16 %v5807
  %v5936 = vunpack.c.l.b16 %v5808
  %v5937 = vunpack.c.l.b16 %v5809
  %v5938 = vunpack.c.l.b16 %v5810
  %v5939 = vunpack.c.l.b16 %v5811
  %v5940 = vunpack.c.l.b16 %v5812
  %v5941 = vunpack.c.l.b16 %v5813
  %v5942 = vunpack.c.l.b16 %v5814
  %v5943 = vunpack.c.l.b16 %v5815
  %v5944 = vunpack.c.l.b16 %v5816
  %v5945 = vunpack.c.l.b16 %v5817
  %v5946 = vunpack.c.l.b16 %v5818
  %v5947 = vunpack.c.l.b16 %v5819
  %v5948 = vunpack.c.l.b16 %v5820
  %v5949 = vunpack.c.l.b16 %v5821
  %v5950 = vunpack.c.l.b16 %v5822
  %v5951 = vunpack.c.l.b16 %v5823
  %v5952 = vunpack.c.l.b16 %v5824
  %v5953 = vunpack.c.l.b16 %v5825
  %v5954 = vunpack.c.l.b16 %v5826
  %v5955 = vunpack.c.l.b16 %v5827
  %v5956 = vunpack.c.l.b16 %v5828
  %v5957 = vunpack.c.l.b16 %v5829
  %v5958 = vunpack.c.l.b16 %v5830
  %v5959 = vunpack.c.l.b16 %v5831
  %v5960 = vunpack.c.l.b16 %v5832
  %v5961 = vunpack.c.l.b16 %v5833
  %v5962 = vunpack.c.l.b16 %v5834
  %v5963 = vunpack.c.l.b16 %v5835
  %v5964 = vunpack.c.l.b16 %v5836
  %v5965 = vunpack.c.l.b16 %v5837
  %v5966 = vunpack.c.l.b16 %v5838
  %v5967 = vunpack.c.l.b16 %v5839
  %v5968 = vunpack.c.l.b16 %v5840
  %v5969 = vunpack.c.l.b16 %v5841
  %v5970 = vunpack.c.l.b16 %v5842
  %v5971 = vunpack.c.l.b16 %v5843
  %v5972 = vunpack.c.l.b16 %v5844
  %v5973 = vunpack.c.l.b16 %v5845
  %v5974 = vunpack.c.l.b16 %v5846
  %v5975 = vunpack.c.l.b16 %v5847
  %v5976 = vunpack.c.l.b16 %v5848
  %v5977 = vunpack.c.l.b16 %v5849
  %v5978 = vunpack.c.l.b16 %v5850
  %v5979 = vunpack.c.l.b16 %v5851
  %v5980 = vunpack.c.l.b16 %v5852
  %v5981 = vunpack.c.l.b16 %v5853
  %v5982 = vunpack.c.l.b16 %v5854
  %v5983 = vunpack.c.l.b16 %v5855
  %v5984 = vunpack.c.l.b16 %v5856
  %v5985 = vunpack.c.l.b16 %v5857
  %v5986 = vunpack.c.l.b16 %v5858
  %v5987 = vunpack.c.l.b16 %v5859
  %v5988 = vunpack.c.l.b16 %v5860
  %v5989 = vunpack.c.l.b16 %v5861
  %v5990 = vunpack.c.l.b16 %v5862
  %v5991 = vunpack.c.l.b16 %v5863
  %v5992 = vunpack.c.l.b16 %v5864
  %v5993 = vunpack.c.l.b16 %v5865
  %v5994 = vunpack.c.l.b16 %v5866
  %v5995 = vunpack.c.l.b16 %v5867
  %v5996 = vpack.c.b16 %v5933, %v5932
  %v5997 = vpack.c.b16 %v5935, %v5934
  %v5998 = vpack.c.b16 %v5937, %v5936
  %v5999 = vpack.c.b16 %v5939, %v5938
  %v6000 = vpack.c.b16 %v5941, %v5940
  %v6001 = vpack.c.b16 %v5943, %v5942
  %v6002 = vpack.c.b16 %v5945, %v5944
  %v6003 = vpack.c.b16 %v5947, %v5946
  %v6004 = vpack.c.b16 %v5949, %v5948
  %v6005 = vpack.c.b16 %v5951, %v5950
  %v6006 = vpack.c.b16 %v5953, %v5952
  %v6007 = vpack.c.b16 %v5955, %v5954
  %v6008 = vpack.c.b16 %v5957, %v5956
  %v6009 = vpack.c.b16 %v5959, %v5958
  %v6010 = vpack.c.b16 %v5961, %v5960
  %v6011 = vpack.c.b16 %v5963, %v5962
  %v6012 = vpack.c.b16 %v5965, %v5964
  %v6013 = vpack.c.b16 %v5967, %v5966
  %v6014 = vpack.c.b16 %v5969, %v5968
  %v6015 = vpack.c.b16 %v5971, %v5970
  %v6016 = vpack.c.b16 %v5973, %v5972
  %v6017 = vpack.c.b16 %v5975, %v5974
  %v6018 = vpack.c.b16 %v5977, %v5976
  %v6019 = vpack.c.b16 %v5979, %v5978
  %v6020 = vpack.c.b16 %v5981, %v5980
  %v6021 = vpack.c.b16 %v5983, %v5982
  %v6022 = vpack.c.b16 %v5985, %v5984
  %v6023 = vpack.c.b16 %v5987, %v5986
  %v6024 = vpack.c.b16 %v5989, %v5988
  %v6025 = vpack.c.b16 %v5991, %v5990
  %v6026 = vpack.c.b16 %v5993, %v5992
  %v6027 = vpack.c.b16 %v5995, %v5994
  %6060 = vmatprep.subr.bf16.mxu0 0
  %6061 = vmatpush1.bf16.msra.mxu0 %v6003
  %6062 = vmatprep.subr.bf16.mxu0 0
  %6063 = vmatpush1.bf16.msra.mxu0 %v6002
  %6064 = vmatprep.subr.bf16.mxu0 0
  %6065 = vmatpush1.bf16.msra.mxu0 %v6001
  %6066 = vmatprep.subr.bf16.mxu0 0
  %6067 = vmatpush1.bf16.msra.mxu0 %v6000
  %6068 = vmatprep.subr.bf16.mxu0 0
  %6069 = vmatpush1.bf16.msra.mxu0 %v5999
  %6070 = vmatprep.subr.bf16.mxu0 0
  %6071 = vmatpush1.bf16.msra.mxu0 %v5998
  %6072 = vmatprep.subr.bf16.mxu0 0
  %6073 = vmatpush1.bf16.msra.mxu0 %v5997
  %6074 = vmatprep.subr.bf16.mxu0 0
  %6075 = vmatpush1.bf16.msra.mxu0 %v5996
  %6076 = vmatprep.subr.bf16.mxu0 0
  %6077 = vmatpush2.bf16.msra.mxu0 %v6011
  %6078 = vmatprep.subr.bf16.mxu0 0
  %6079 = vmatpush2.bf16.msra.mxu0 %v6010
  %6080 = vmatprep.subr.bf16.mxu0 0
  %6081 = vmatpush2.bf16.msra.mxu0 %v6009
  %6082 = vmatprep.subr.bf16.mxu0 0
  %6083 = vmatpush2.bf16.msra.mxu0 %v6008
  %6084 = vmatprep.subr.bf16.mxu0 0
  %6085 = vmatpush2.bf16.msra.mxu0 %v6007
  %6086 = vmatprep.subr.bf16.mxu0 0
  %6087 = vmatpush2.bf16.msra.mxu0 %v6006
  %6088 = vmatprep.subr.bf16.mxu0 0
  %6089 = vmatpush2.bf16.msra.mxu0 %v6005
  %6090 = vmatprep.subr.bf16.mxu0 0
  %6091 = vmatpush2.bf16.msra.mxu0 %v6004
  %6092 = vmatprep.mubr.bf16.mxu0 %v5063
  %6093 = vmatmul.mubr.bf16.gmra.mxu0 %v5062
  %v6094 = vpop.f32.mrf.mxu0
  %v6095 = vadd.f32 0.0, %v6094
  %v6096 = vpop.f32.mrf.mxu0
  %v6097 = vpop.f32.mrf.mxu0
  %v6098 = vadd.f32 0.0, %v6097
  %v6099 = vpop.f32.mrf.mxu0
  %6100 = vmatprep.mubr.bf16.mxu0 %v5067
  %6101 = vmatmul.mubr.bf16.gmra.mxu0 %v5066
  %v6102 = vpop.f32.mrf.mxu0
  %v6103 = vadd.f32 0.0, %v6102
  %v6104 = vpop.f32.mrf.mxu0
  %v6105 = vpop.f32.mrf.mxu0
  %v6106 = vadd.f32 0.0, %v6105
  %v6107 = vpop.f32.mrf.mxu0
  %6108 = vmatprep.mubr.bf16.mxu0 %v5071
  %6109 = vmatmul.mubr.bf16.gmra.mxu0 %v5070
  %v6110 = vpop.f32.mrf.mxu0
  %v6111 = vadd.f32 0.0, %v6110
  %v6112 = vpop.f32.mrf.mxu0
  %v6113 = vpop.f32.mrf.mxu0
  %v6114 = vadd.f32 0.0, %v6113
  %v6115 = vpop.f32.mrf.mxu0
  %6116 = vmatprep.mubr.bf16.mxu0 %v5075
  %6117 = vmatmul.mubr.bf16.gmra.mxu0 %v5074
  %v6118 = vpop.f32.mrf.mxu0
  %v6119 = vadd.f32 0.0, %v6118
  %v6120 = vpop.f32.mrf.mxu0
  %v6121 = vpop.f32.mrf.mxu0
  %v6122 = vadd.f32 0.0, %v6121
  %v6123 = vpop.f32.mrf.mxu0
  %6124 = vdwg.mxu0
  %6125 = vmatprep.subr.bf16.mxu0 0
  %6126 = vmatpush1.bf16.msra.mxu0 %v6019
  %6127 = vmatprep.subr.bf16.mxu0 0
  %6128 = vmatpush1.bf16.msra.mxu0 %v6018
  %6129 = vmatprep.subr.bf16.mxu0 0
  %6130 = vmatpush1.bf16.msra.mxu0 %v6017
  %6131 = vmatprep.subr.bf16.mxu0 0
  %6132 = vmatpush1.bf16.msra.mxu0 %v6016
  %6133 = vmatprep.subr.bf16.mxu0 0
  %6134 = vmatpush1.bf16.msra.mxu0 %v6015
  %6135 = vmatprep.subr.bf16.mxu0 0
  %6136 = vmatpush1.bf16.msra.mxu0 %v6014
  %6137 = vmatprep.subr.bf16.mxu0 0
  %6138 = vmatpush1.bf16.msra.mxu0 %v6013
  %6139 = vmatprep.subr.bf16.mxu0 0
  %6140 = vmatpush1.bf16.msra.mxu0 %v6012
  %6141 = vmatprep.subr.bf16.mxu0 0
  %6142 = vmatpush2.bf16.msra.mxu0 %v6027
  %6143 = vmatprep.subr.bf16.mxu0 0
  %6144 = vmatpush2.bf16.msra.mxu0 %v6026
  %6145 = vmatprep.subr.bf16.mxu0 0
  %6146 = vmatpush2.bf16.msra.mxu0 %v6025
  %6147 = vmatprep.subr.bf16.mxu0 0
  %6148 = vmatpush2.bf16.msra.mxu0 %v6024
  %6149 = vmatprep.subr.bf16.mxu0 0
  %6150 = vmatpush2.bf16.msra.mxu0 %v6023
  %6151 = vmatprep.subr.bf16.mxu0 0
  %6152 = vmatpush2.bf16.msra.mxu0 %v6022
  %6153 = vmatprep.subr.bf16.mxu0 0
  %6154 = vmatpush2.bf16.msra.mxu0 %v6021
  %6155 = vmatprep.subr.bf16.mxu0 0
  %6156 = vmatpush2.bf16.msra.mxu0 %v6020
  %6157 = vmatprep.mubr.bf16.mxu0 %v5065
  %6158 = vmatmul.mubr.bf16.gmra.mxu0 %v5064
  %v6159 = vpop.f32.mrf.mxu0
  %v6160 = vadd.f32 %v6095, %v6159
  %v6161 = vpop.f32.mrf.mxu0
  %v6162 = vpop.f32.mrf.mxu0
  %v6163 = vadd.f32 %v6098, %v6162
  %v6164 = vpop.f32.mrf.mxu0
  %6165 = vmatprep.mubr.bf16.mxu0 %v5069
  %6166 = vmatmul.mubr.bf16.gmra.mxu0 %v5068
  %v6167 = vpop.f32.mrf.mxu0
  %v6168 = vadd.f32 %v6103, %v6167
  %v6169 = vpop.f32.mrf.mxu0
  %v6170 = vpop.f32.mrf.mxu0
  %v6171 = vadd.f32 %v6106, %v6170
  %v6172 = vpop.f32.mrf.mxu0
  %6173 = vmatprep.mubr.bf16.mxu0 %v5073
  %6174 = vmatmul.mubr.bf16.gmra.mxu0 %v5072
  %v6175 = vpop.f32.mrf.mxu0
  %v6176 = vadd.f32 %v6111, %v6175
  %v6177 = vpop.f32.mrf.mxu0
  %v6178 = vpop.f32.mrf.mxu0
  %v6179 = vadd.f32 %v6114, %v6178
  %v6180 = vpop.f32.mrf.mxu0
  %6181 = vmatprep.mubr.bf16.mxu0 %v5077
  %6182 = vmatmul.mubr.bf16.gmra.mxu0 %v5076
  %v6183 = vpop.f32.mrf.mxu0
  %v6184 = vadd.f32 %v6119, %v6183
  %v6185 = vpop.f32.mrf.mxu0
  %v6186 = vpop.f32.mrf.mxu0
  %v6187 = vadd.f32 %v6122, %v6186
  %v6188 = vpop.f32.mrf.mxu0
  %6189 = vdwg.mxu0
  %s6190 = scalar_lea.vmem %s3, 768
  %v6191 = vld [vmem:[%s6190] sm:$0xf]
  %v6192 = vld [vmem:[%s6190 + $0x4] sm:$0xf]
  %v6193 = vld [vmem:[%s6190 + $0x8] sm:$0xf]
  %v6194 = vld [vmem:[%s6190 + $0xc] sm:$0xf]
  %v6195 = vld [vmem:[%s6190 + $0x10] sm:$0xf]
  %v6196 = vld [vmem:[%s6190 + $0x14] sm:$0xf]
  %v6197 = vld [vmem:[%s6190 + $0x18] sm:$0xf]
  %v6198 = vld [vmem:[%s6190 + $0x1c] sm:$0xf]
  %v6199 = vld [vmem:[%s6190 + $0x20] sm:$0xf]
  %v6200 = vld [vmem:[%s6190 + $0x24] sm:$0xf]
  %v6201 = vld [vmem:[%s6190 + $0x28] sm:$0xf]
  %v6202 = vld [vmem:[%s6190 + $0x2c] sm:$0xf]
  %v6203 = vld [vmem:[%s6190 + $0x30] sm:$0xf]
  %v6204 = vld [vmem:[%s6190 + $0x34] sm:$0xf]
  %v6205 = vld [vmem:[%s6190 + $0x38] sm:$0xf]
  %v6206 = vld [vmem:[%s6190 + $0x3c] sm:$0xf]
  %v6207 = vld [vmem:[%s6190 + $0x40] sm:$0xf]
  %v6208 = vld [vmem:[%s6190 + $0x44] sm:$0xf]
  %v6209 = vld [vmem:[%s6190 + $0x48] sm:$0xf]
  %v6210 = vld [vmem:[%s6190 + $0x4c] sm:$0xf]
  %v6211 = vld [vmem:[%s6190 + $0x50] sm:$0xf]
  %v6212 = vld [vmem:[%s6190 + $0x54] sm:$0xf]
  %v6213 = vld [vmem:[%s6190 + $0x58] sm:$0xf]
  %v6214 = vld [vmem:[%s6190 + $0x5c] sm:$0xf]
  %v6215 = vld [vmem:[%s6190 + $0x60] sm:$0xf]
  %v6216 = vld [vmem:[%s6190 + $0x64] sm:$0xf]
  %v6217 = vld [vmem:[%s6190 + $0x68] sm:$0xf]
  %v6218 = vld [vmem:[%s6190 + $0x6c] sm:$0xf]
  %v6219 = vld [vmem:[%s6190 + $0x70] sm:$0xf]
  %v6220 = vld [vmem:[%s6190 + $0x74] sm:$0xf]
  %v6221 = vld [vmem:[%s6190 + $0x78] sm:$0xf]
  %v6222 = vld [vmem:[%s6190 + $0x7c] sm:$0xf]
  %v6223 = vld [vmem:[%s6190 + $0x80] sm:$0xf]
  %v6224 = vld [vmem:[%s6190 + $0x84] sm:$0xf]
  %v6225 = vld [vmem:[%s6190 + $0x88] sm:$0xf]
  %v6226 = vld [vmem:[%s6190 + $0x8c] sm:$0xf]
  %v6227 = vld [vmem:[%s6190 + $0x90] sm:$0xf]
  %v6228 = vld [vmem:[%s6190 + $0x94] sm:$0xf]
  %v6229 = vld [vmem:[%s6190 + $0x98] sm:$0xf]
  %v6230 = vld [vmem:[%s6190 + $0x9c] sm:$0xf]
  %v6231 = vld [vmem:[%s6190 + $0xa0] sm:$0xf]
  %v6232 = vld [vmem:[%s6190 + $0xa4] sm:$0xf]
  %v6233 = vld [vmem:[%s6190 + $0xa8] sm:$0xf]
  %v6234 = vld [vmem:[%s6190 + $0xac] sm:$0xf]
  %v6235 = vld [vmem:[%s6190 + $0xb0] sm:$0xf]
  %v6236 = vld [vmem:[%s6190 + $0xb4] sm:$0xf]
  %v6237 = vld [vmem:[%s6190 + $0xb8] sm:$0xf]
  %v6238 = vld [vmem:[%s6190 + $0xbc] sm:$0xf]
  %v6239 = vld [vmem:[%s6190 + $0xc0] sm:$0xf]
  %v6240 = vld [vmem:[%s6190 + $0xc4] sm:$0xf]
  %v6241 = vld [vmem:[%s6190 + $0xc8] sm:$0xf]
  %v6242 = vld [vmem:[%s6190 + $0xcc] sm:$0xf]
  %v6243 = vld [vmem:[%s6190 + $0xd0] sm:$0xf]
  %v6244 = vld [vmem:[%s6190 + $0xd4] sm:$0xf]
  %v6245 = vld [vmem:[%s6190 + $0xd8] sm:$0xf]
  %v6246 = vld [vmem:[%s6190 + $0xdc] sm:$0xf]
  %v6247 = vld [vmem:[%s6190 + $0xe0] sm:$0xf]
  %v6248 = vld [vmem:[%s6190 + $0xe4] sm:$0xf]
  %v6249 = vld [vmem:[%s6190 + $0xe8] sm:$0xf]
  %v6250 = vld [vmem:[%s6190 + $0xec] sm:$0xf]
  %v6251 = vld [vmem:[%s6190 + $0xf0] sm:$0xf]
  %v6252 = vld [vmem:[%s6190 + $0xf4] sm:$0xf]
  %v6253 = vld [vmem:[%s6190 + $0xf8] sm:$0xf]
  %v6254 = vld [vmem:[%s6190 + $0xfc] sm:$0xf]
  %v6319 = vunpack.c.l.b16 %v6191
  %v6320 = vunpack.c.l.b16 %v6192
  %v6321 = vunpack.c.l.b16 %v6193
  %v6322 = vunpack.c.l.b16 %v6194
  %v6323 = vunpack.c.l.b16 %v6195
  %v6324 = vunpack.c.l.b16 %v6196
  %v6325 = vunpack.c.l.b16 %v6197
  %v6326 = vunpack.c.l.b16 %v6198
  %v6327 = vunpack.c.l.b16 %v6199
  %v6328 = vunpack.c.l.b16 %v6200
  %v6329 = vunpack.c.l.b16 %v6201
  %v6330 = vunpack.c.l.b16 %v6202
  %v6331 = vunpack.c.l.b16 %v6203
  %v6332 = vunpack.c.l.b16 %v6204
  %v6333 = vunpack.c.l.b16 %v6205
  %v6334 = vunpack.c.l.b16 %v6206
  %v6335 = vunpack.c.l.b16 %v6207
  %v6336 = vunpack.c.l.b16 %v6208
  %v6337 = vunpack.c.l.b16 %v6209
  %v6338 = vunpack.c.l.b16 %v6210
  %v6339 = vunpack.c.l.b16 %v6211
  %v6340 = vunpack.c.l.b16 %v6212
  %v6341 = vunpack.c.l.b16 %v6213
  %v6342 = vunpack.c.l.b16 %v6214
  %v6343 = vunpack.c.l.b16 %v6215
  %v6344 = vunpack.c.l.b16 %v6216
  %v6345 = vunpack.c.l.b16 %v6217
  %v6346 = vunpack.c.l.b16 %v6218
  %v6347 = vunpack.c.l.b16 %v6219
  %v6348 = vunpack.c.l.b16 %v6220
  %v6349 = vunpack.c.l.b16 %v6221
  %v6350 = vunpack.c.l.b16 %v6222
  %v6351 = vunpack.c.l.b16 %v6223
  %v6352 = vunpack.c.l.b16 %v6224
  %v6353 = vunpack.c.l.b16 %v6225
  %v6354 = vunpack.c.l.b16 %v6226
  %v6355 = vunpack.c.l.b16 %v6227
  %v6356 = vunpack.c.l.b16 %v6228
  %v6357 = vunpack.c.l.b16 %v6229
  %v6358 = vunpack.c.l.b16 %v6230
  %v6359 = vunpack.c.l.b16 %v6231
  %v6360 = vunpack.c.l.b16 %v6232
  %v6361 = vunpack.c.l.b16 %v6233
  %v6362 = vunpack.c.l.b16 %v6234
  %v6363 = vunpack.c.l.b16 %v6235
  %v6364 = vunpack.c.l.b16 %v6236
  %v6365 = vunpack.c.l.b16 %v6237
  %v6366 = vunpack.c.l.b16 %v6238
  %v6367 = vunpack.c.l.b16 %v6239
  %v6368 = vunpack.c.l.b16 %v6240
  %v6369 = vunpack.c.l.b16 %v6241
  %v6370 = vunpack.c.l.b16 %v6242
  %v6371 = vunpack.c.l.b16 %v6243
  %v6372 = vunpack.c.l.b16 %v6244
  %v6373 = vunpack.c.l.b16 %v6245
  %v6374 = vunpack.c.l.b16 %v6246
  %v6375 = vunpack.c.l.b16 %v6247
  %v6376 = vunpack.c.l.b16 %v6248
  %v6377 = vunpack.c.l.b16 %v6249
  %v6378 = vunpack.c.l.b16 %v6250
  %v6379 = vunpack.c.l.b16 %v6251
  %v6380 = vunpack.c.l.b16 %v6252
  %v6381 = vunpack.c.l.b16 %v6253
  %v6382 = vunpack.c.l.b16 %v6254
  %v6383 = vpack.c.b16 %v6320, %v6319
  %v6384 = vpack.c.b16 %v6322, %v6321
  %v6385 = vpack.c.b16 %v6324, %v6323
  %v6386 = vpack.c.b16 %v6326, %v6325
  %v6387 = vpack.c.b16 %v6328, %v6327
  %v6388 = vpack.c.b16 %v6330, %v6329
  %v6389 = vpack.c.b16 %v6332, %v6331
  %v6390 = vpack.c.b16 %v6334, %v6333
  %v6391 = vpack.c.b16 %v6336, %v6335
  %v6392 = vpack.c.b16 %v6338, %v6337
  %v6393 = vpack.c.b16 %v6340, %v6339
  %v6394 = vpack.c.b16 %v6342, %v6341
  %v6395 = vpack.c.b16 %v6344, %v6343
  %v6396 = vpack.c.b16 %v6346, %v6345
  %v6397 = vpack.c.b16 %v6348, %v6347
  %v6398 = vpack.c.b16 %v6350, %v6349
  %v6399 = vpack.c.b16 %v6352, %v6351
  %v6400 = vpack.c.b16 %v6354, %v6353
  %v6401 = vpack.c.b16 %v6356, %v6355
  %v6402 = vpack.c.b16 %v6358, %v6357
  %v6403 = vpack.c.b16 %v6360, %v6359
  %v6404 = vpack.c.b16 %v6362, %v6361
  %v6405 = vpack.c.b16 %v6364, %v6363
  %v6406 = vpack.c.b16 %v6366, %v6365
  %v6407 = vpack.c.b16 %v6368, %v6367
  %v6408 = vpack.c.b16 %v6370, %v6369
  %v6409 = vpack.c.b16 %v6372, %v6371
  %v6410 = vpack.c.b16 %v6374, %v6373
  %v6411 = vpack.c.b16 %v6376, %v6375
  %v6412 = vpack.c.b16 %v6378, %v6377
  %v6413 = vpack.c.b16 %v6380, %v6379
  %v6414 = vpack.c.b16 %v6382, %v6381
  %6447 = vmatprep.subr.bf16.mxu0 0
  %6448 = vmatpush1.bf16.msra.mxu0 %v6390
  %6449 = vmatprep.subr.bf16.mxu0 0
  %6450 = vmatpush1.bf16.msra.mxu0 %v6389
  %6451 = vmatprep.subr.bf16.mxu0 0
  %6452 = vmatpush1.bf16.msra.mxu0 %v6388
  %6453 = vmatprep.subr.bf16.mxu0 0
  %6454 = vmatpush1.bf16.msra.mxu0 %v6387
  %6455 = vmatprep.subr.bf16.mxu0 0
  %6456 = vmatpush1.bf16.msra.mxu0 %v6386
  %6457 = vmatprep.subr.bf16.mxu0 0
  %6458 = vmatpush1.bf16.msra.mxu0 %v6385
  %6459 = vmatprep.subr.bf16.mxu0 0
  %6460 = vmatpush1.bf16.msra.mxu0 %v6384
  %6461 = vmatprep.subr.bf16.mxu0 0
  %6462 = vmatpush1.bf16.msra.mxu0 %v6383
  %6463 = vmatprep.subr.bf16.mxu0 0
  %6464 = vmatpush2.bf16.msra.mxu0 %v6398
  %6465 = vmatprep.subr.bf16.mxu0 0
  %6466 = vmatpush2.bf16.msra.mxu0 %v6397
  %6467 = vmatprep.subr.bf16.mxu0 0
  %6468 = vmatpush2.bf16.msra.mxu0 %v6396
  %6469 = vmatprep.subr.bf16.mxu0 0
  %6470 = vmatpush2.bf16.msra.mxu0 %v6395
  %6471 = vmatprep.subr.bf16.mxu0 0
  %6472 = vmatpush2.bf16.msra.mxu0 %v6394
  %6473 = vmatprep.subr.bf16.mxu0 0
  %6474 = vmatpush2.bf16.msra.mxu0 %v6393
  %6475 = vmatprep.subr.bf16.mxu0 0
  %6476 = vmatpush2.bf16.msra.mxu0 %v6392
  %6477 = vmatprep.subr.bf16.mxu0 0
  %6478 = vmatpush2.bf16.msra.mxu0 %v6391
  %6479 = vmatprep.mubr.bf16.mxu0 %v5063
  %6480 = vmatmul.mubr.bf16.gmra.mxu0 %v5062
  %v6481 = vpop.f32.mrf.mxu0
  %v6482 = vadd.f32 0.0, %v6481
  %v6483 = vpop.f32.mrf.mxu0
  %v6484 = vpop.f32.mrf.mxu0
  %v6485 = vadd.f32 0.0, %v6484
  %v6486 = vpop.f32.mrf.mxu0
  %6487 = vmatprep.mubr.bf16.mxu0 %v5067
  %6488 = vmatmul.mubr.bf16.gmra.mxu0 %v5066
  %v6489 = vpop.f32.mrf.mxu0
  %v6490 = vadd.f32 0.0, %v6489
  %v6491 = vpop.f32.mrf.mxu0
  %v6492 = vpop.f32.mrf.mxu0
  %v6493 = vadd.f32 0.0, %v6492
  %v6494 = vpop.f32.mrf.mxu0
  %6495 = vmatprep.mubr.bf16.mxu0 %v5071
  %6496 = vmatmul.mubr.bf16.gmra.mxu0 %v5070
  %v6497 = vpop.f32.mrf.mxu0
  %v6498 = vadd.f32 0.0, %v6497
  %v6499 = vpop.f32.mrf.mxu0
  %v6500 = vpop.f32.mrf.mxu0
  %v6501 = vadd.f32 0.0, %v6500
  %v6502 = vpop.f32.mrf.mxu0
  %6503 = vmatprep.mubr.bf16.mxu0 %v5075
  %6504 = vmatmul.mubr.bf16.gmra.mxu0 %v5074
  %v6505 = vpop.f32.mrf.mxu0
  %v6506 = vadd.f32 0.0, %v6505
  %v6507 = vpop.f32.mrf.mxu0
  %v6508 = vpop.f32.mrf.mxu0
  %v6509 = vadd.f32 0.0, %v6508
  %v6510 = vpop.f32.mrf.mxu0
  %6511 = vdwg.mxu0
  %6512 = vmatprep.subr.bf16.mxu0 0
  %6513 = vmatpush1.bf16.msra.mxu0 %v6406
  %6514 = vmatprep.subr.bf16.mxu0 0
  %6515 = vmatpush1.bf16.msra.mxu0 %v6405
  %6516 = vmatprep.subr.bf16.mxu0 0
  %6517 = vmatpush1.bf16.msra.mxu0 %v6404
  %6518 = vmatprep.subr.bf16.mxu0 0
  %6519 = vmatpush1.bf16.msra.mxu0 %v6403
  %6520 = vmatprep.subr.bf16.mxu0 0
  %6521 = vmatpush1.bf16.msra.mxu0 %v6402
  %6522 = vmatprep.subr.bf16.mxu0 0
  %6523 = vmatpush1.bf16.msra.mxu0 %v6401
  %6524 = vmatprep.subr.bf16.mxu0 0
  %6525 = vmatpush1.bf16.msra.mxu0 %v6400
  %6526 = vmatprep.subr.bf16.mxu0 0
  %6527 = vmatpush1.bf16.msra.mxu0 %v6399
  %6528 = vmatprep.subr.bf16.mxu0 0
  %6529 = vmatpush2.bf16.msra.mxu0 %v6414
  %6530 = vmatprep.subr.bf16.mxu0 0
  %6531 = vmatpush2.bf16.msra.mxu0 %v6413
  %6532 = vmatprep.subr.bf16.mxu0 0
  %6533 = vmatpush2.bf16.msra.mxu0 %v6412
  %6534 = vmatprep.subr.bf16.mxu0 0
  %6535 = vmatpush2.bf16.msra.mxu0 %v6411
  %6536 = vmatprep.subr.bf16.mxu0 0
  %6537 = vmatpush2.bf16.msra.mxu0 %v6410
  %6538 = vmatprep.subr.bf16.mxu0 0
  %6539 = vmatpush2.bf16.msra.mxu0 %v6409
  %6540 = vmatprep.subr.bf16.mxu0 0
  %6541 = vmatpush2.bf16.msra.mxu0 %v6408
  %6542 = vmatprep.subr.bf16.mxu0 0
  %6543 = vmatpush2.bf16.msra.mxu0 %v6407
  %6544 = vmatprep.mubr.bf16.mxu0 %v5065
  %6545 = vmatmul.mubr.bf16.gmra.mxu0 %v5064
  %v6546 = vpop.f32.mrf.mxu0
  %v6547 = vadd.f32 %v6482, %v6546
  %v6548 = vpop.f32.mrf.mxu0
  %v6549 = vpop.f32.mrf.mxu0
  %v6550 = vadd.f32 %v6485, %v6549
  %v6551 = vpop.f32.mrf.mxu0
  %6552 = vmatprep.mubr.bf16.mxu0 %v5069
  %6553 = vmatmul.mubr.bf16.gmra.mxu0 %v5068
  %v6554 = vpop.f32.mrf.mxu0
  %v6555 = vadd.f32 %v6490, %v6554
  %v6556 = vpop.f32.mrf.mxu0
  %v6557 = vpop.f32.mrf.mxu0
  %v6558 = vadd.f32 %v6493, %v6557
  %v6559 = vpop.f32.mrf.mxu0
  %6560 = vmatprep.mubr.bf16.mxu0 %v5073
  %6561 = vmatmul.mubr.bf16.gmra.mxu0 %v5072
  %v6562 = vpop.f32.mrf.mxu0
  %v6563 = vadd.f32 %v6498, %v6562
  %v6564 = vpop.f32.mrf.mxu0
  %v6565 = vpop.f32.mrf.mxu0
  %v6566 = vadd.f32 %v6501, %v6565
  %v6567 = vpop.f32.mrf.mxu0
  %6568 = vmatprep.mubr.bf16.mxu0 %v5077
  %6569 = vmatmul.mubr.bf16.gmra.mxu0 %v5076
  %v6570 = vpop.f32.mrf.mxu0
  %v6571 = vadd.f32 %v6506, %v6570
  %v6572 = vpop.f32.mrf.mxu0
  %v6573 = vpop.f32.mrf.mxu0
  %v6574 = vadd.f32 %v6509, %v6573
  %v6575 = vpop.f32.mrf.mxu0
  %6576 = vdwg.mxu0
  %v6577 = vmax.f32 %v5386, %v5773
  %v6578 = vmax.f32 %v5389, %v5776
  %v6579 = vmax.f32 %v5394, %v5781
  %v6580 = vmax.f32 %v5397, %v5784
  %v6581 = vmax.f32 %v5402, %v5789
  %v6582 = vmax.f32 %v5405, %v5792
  %v6583 = vmax.f32 %v5410, %v5797
  %v6584 = vmax.f32 %v5413, %v5800
  %v6585 = vmax.f32 %v6160, %v6547
  %v6586 = vmax.f32 %v6163, %v6550
  %v6587 = vmax.f32 %v6168, %v6555
  %v6588 = vmax.f32 %v6171, %v6558
  %v6589 = vmax.f32 %v6176, %v6563
  %v6590 = vmax.f32 %v6179, %v6566
  %v6591 = vmax.f32 %v6184, %v6571
  %v6592 = vmax.f32 %v6187, %v6574
  %v6593 = vmax.f32 %v6577, %v6585
  %v6594 = vmax.f32 %v6578, %v6586
  %v6595 = vmax.f32 %v6579, %v6587
  %v6596 = vmax.f32 %v6580, %v6588
  %v6597 = vmax.f32 %v6581, %v6589
  %v6598 = vmax.f32 %v6582, %v6590
  %v6599 = vmax.f32 %v6583, %v6591
  %v6600 = vmax.f32 %v6584, %v6592
  %v6601 = vld [vmem:[%s4] sm:$0x1]
  %v6603 = vlaneseq
  %v6604 = vshrl.u32 %v6603, 7
  %v6605 = vsub.s32 0, %v6604
  %v6606 = vrot.slane %v6601, %v6605
  %v6608 = vadd.f32 %v6593, %v6606
  %v6609 = vadd.f32 %v6594, %v6606
  %v6610 = vadd.f32 %v6595, %v6606
  %v6611 = vadd.f32 %v6596, %v6606
  %v6612 = vadd.f32 %v6597, %v6606
  %v6613 = vadd.f32 %v6598, %v6606
  %v6614 = vadd.f32 %v6599, %v6606
  %v6615 = vadd.f32 %v6600, %v6606
  %v6616 = vmax.f32 %v6608, 0.0
  %v6617 = vmax.f32 %v6609, 0.0
  %v6618 = vmax.f32 %v6610, 0.0
  %v6619 = vmax.f32 %v6611, 0.0
  %v6620 = vmax.f32 %v6612, 0.0
  %v6621 = vmax.f32 %v6613, 0.0
  %v6622 = vmax.f32 %v6614, 0.0
  %v6623 = vmax.f32 %v6615, 0.0
  %v6624 = vpack.c.bf16 %v6617, %v6616
  %v6625 = vpack.c.bf16 %v6619, %v6618
  %v6626 = vpack.c.bf16 %v6621, %v6620
  %v6627 = vpack.c.bf16 %v6623, %v6622
  %v6632 = vunpack.c.l.b16 %v6624
  %v6633 = vunpack.c.h.b16 %v6624
  %v6634 = vunpack.c.l.b16 %v6625
  %v6635 = vunpack.c.h.b16 %v6625
  %v6636 = vunpack.c.l.b16 %v6626
  %v6637 = vunpack.c.h.b16 %v6626
  %v6638 = vunpack.c.l.b16 %v6627
  %v6639 = vunpack.c.h.b16 %v6627
  %v6640 = vpack.c.b16 %v6632, %v6632
  %v6641 = vpack.c.b16 %v6633, %v6633
  %v6642 = vpack.c.b16 %v6634, %v6634
  %v6643 = vpack.c.b16 %v6635, %v6635
  %v6644 = vpack.c.b16 %v6636, %v6636
  %v6645 = vpack.c.b16 %v6637, %v6637
  %v6646 = vpack.c.b16 %v6638, %v6638
  %v6647 = vpack.c.b16 %v6639, %v6639
  %vm6656 = vcmask 519168
  %6657 = vst.msk [vmem:[#allocation4] sm:$0xf] %vm6656, %v6640
  %6658 = vst.msk [vmem:[#allocation4 + $0x4] sm:$0xf] %vm6656, %v6641
  %6659 = vst.msk [vmem:[#allocation4 + $0x8] sm:$0xf] %vm6656, %v6642
  %6660 = vst.msk [vmem:[#allocation4 + $0xc] sm:$0xf] %vm6656, %v6643
  %6661 = vst.msk [vmem:[#allocation4 + $0x10] sm:$0xf] %vm6656, %v6644
  %6662 = vst.msk [vmem:[#allocation4 + $0x14] sm:$0xf] %vm6656, %v6645
  %6663 = vst.msk [vmem:[#allocation4 + $0x18] sm:$0xf] %vm6656, %v6646
  %6664 = vst.msk [vmem:[#allocation4 + $0x1c] sm:$0xf] %vm6656, %v6647
  %v6665 = vld [vmem:[#allocation4] sm:$0x1]
  %6667 = vrot.lane.b32.xlu0 %v6665, 64
  %v6668 = vpop.permute.xlu0 %6667
  %vm6670 = vcmask 1040896
  %vm6671 = vmand %vm6670, %vm3337
  %v6672 = vld [vmem:[#allocation5 + $0x4] sm:$0x1]
  %v6673 = vsel %vm6671, %v6668, %v6672
  %6674 = vst [vmem:[#allocation5 + $0x4] sm:$0x1] %v6673
  %v6675 = vld [vmem:[#allocation4] sm:$0x1]
  %vm6676 = vcmask 516096
  %vm6677 = vmand %vm6676, %vm3348
  %v6678 = vld [vmem:[#allocation5 + $0x4] sm:$0x1]
  %v6679 = vsel %vm6677, %v6675, %v6678
  %6680 = vst [vmem:[#allocation5 + $0x4] sm:$0x1] %v6679
  %v6681 = vld [vmem:[#allocation4] sm:$0x2]
  %v6683 = vshll.u32 %v6681, 16
  %v6685 = vrot.slane %v6683, 5
  %v6686 = vrot.slane %v6685, 4
  %6687 = vrot.lane.b32.xlu0 %v6686, 64
  %v6688 = vpop.permute.xlu0 %6687
  %vm6690 = vmand %vm6670, %vm3348
  %v6691 = vld [vmem:[#allocation5 + $0x4] sm:$0x1]
  %v6692 = vsel %vm6690, %v6688, %v6691
  %6693 = vst [vmem:[#allocation5 + $0x4] sm:$0x1] %v6692
  %v6694 = vld [vmem:[#allocation4] sm:$0x2]
  %v6696 = vshrl.u32 %v6694, 16
  %v6698 = vrot.slane %v6696, 4
  %v6699 = vrot.slane %v6698, 4
  %vm6701 = vcmask 517121
  %vm6702 = vmand %vm6701, %vm3376
  %v6703 = vld [vmem:[#allocation5 + $0x4] sm:$0x2]
  %v6704 = vsel %vm6702, %v6699, %v6703
  %6705 = vst [vmem:[#allocation5 + $0x4] sm:$0x2] %v6704
  %v6706 = vld [vmem:[#allocation4] sm:$0x4]
  %v6708 = vrot.slane %v6706, 5
  %v6709 = vrot.slane %v6708, 4
  %6710 = vrot.lane.b32.xlu0 %v6709, 64
  %v6711 = vpop.permute.xlu0 %6710
  %vm6713 = vcmask 1041921
  %vm6714 = vmand %vm6713, %vm3400
  %v6715 = vld [vmem:[#allocation5] sm:$0x2]
  %v6716 = vsel %vm6714, %v6711, %v6715
  %6717 = vst [vmem:[#allocation5] sm:$0x2] %v6716
  %v6718 = vld [vmem:[#allocation4] sm:$0x8]
  %v6720 = vrot.slane %v6718, 5
  %v6721 = vrot.slane %v6720, 4
  %vm6723 = vcmask 518146
  %vm6724 = vmand %vm6723, %vm3428
  %v6725 = vld [vmem:[#allocation5] sm:$0x4]
  %v6726 = vsel %vm6724, %v6721, %v6725
  %6727 = vst [vmem:[#allocation5] sm:$0x4] %v6726
  %v6728 = vld [vmem:[#allocation4] sm:$0x8]
  %v6730 = vshrl.u32 %v6728, 16
  %v6732 = vrot.slane %v6730, 5
  %v6733 = vrot.slane %v6732, 4
  %6734 = vrot.lane.b32.xlu0 %v6733, 64
  %v6735 = vpop.permute.xlu0 %6734
  %vm6737 = vcmask 1042946
  %vm6738 = vmand %vm6737, %vm3428
  %v6739 = vld [vmem:[#allocation5] sm:$0x4]
  %v6740 = vsel %vm6738, %v6735, %v6739
  %6741 = vst [vmem:[#allocation5] sm:$0x4] %v6740
  %v6742 = vld [vmem:[#allocation4 + $0x4] sm:$0x1]
  %v6744 = vshll.u32 %v6742, 16
  %v6746 = vrot.slane %v6744, 6
  %vm6748 = vmand %vm6723, %vm3440
  %v6749 = vld [vmem:[#allocation5] sm:$0x4]
  %v6750 = vsel %vm6748, %v6746, %v6749
  %6751 = vst [vmem:[#allocation5] sm:$0x4] %v6750
  %v6752 = vld [vmem:[#allocation4 + $0x4] sm:$0x2]
  %v6754 = vshll.u32 %v6752, 16
  %6756 = vrot.lane.b32.xlu0 %v6754, 64
  %v6757 = vpop.permute.xlu0 %6756
  %v6759 = vld [vmem:[#allocation5 + $0x4] sm:$0x2]
  %v6760 = vsel %vm6714, %v6757, %v6759
  %6761 = vst [vmem:[#allocation5 + $0x4] sm:$0x2] %v6760
  %v6762 = vld [vmem:[#allocation4 + $0x4] sm:$0x2]
  %v6764 = vshrl.u32 %v6762, 16
  %v6766 = vrot.slane %v6764, 7
  %v6768 = vld [vmem:[#allocation5 + $0x4] sm:$0x4]
  %v6769 = vsel %vm6724, %v6766, %v6768
  %6770 = vst [vmem:[#allocation5 + $0x4] sm:$0x4] %v6769
  %v6771 = vld [vmem:[#allocation4 + $0x4] sm:$0x4]
  %6773 = vrot.lane.b32.xlu0 %v6771, 64
  %v6774 = vpop.permute.xlu0 %6773
  %v6776 = vld [vmem:[#allocation5 + $0x4] sm:$0x4]
  %v6777 = vsel %vm6738, %v6774, %v6776
  %6778 = vst [vmem:[#allocation5 + $0x4] sm:$0x4] %v6777
  %v6779 = vld [vmem:[#allocation4 + $0x4] sm:$0x4]
  %v6780 = vld [vmem:[#allocation5 + $0x4] sm:$0x4]
  %v6781 = vsel %vm6748, %v6779, %v6780
  %6782 = vst [vmem:[#allocation5 + $0x4] sm:$0x4] %v6781
  %v6783 = vld [vmem:[#allocation4 + $0x4] sm:$0x8]
  %v6785 = vshrl.u32 %v6783, 16
  %v6787 = vrot.slane %v6785, 4
  %v6788 = vrot.slane %v6787, 4
  %6789 = vrot.lane.b32.xlu0 %v6788, 64
  %v6790 = vpop.permute.xlu0 %6789
  %vm6792 = vcmask 1043971
  %vm6793 = vmand %vm6792, %vm122
  %v6794 = vld [vmem:[#allocation5] sm:$0x8]
  %v6795 = vsel %vm6793, %v6790, %v6794
  %6796 = vst [vmem:[#allocation5] sm:$0x8] %v6795
  %v6797 = vld [vmem:[#allocation4 + $0x8] sm:$0x1]
  %v6799 = vshll.u32 %v6797, 16
  %v6801 = vrot.slane %v6799, 5
  %vm6803 = vcmask 519171
  %vm6804 = vmand %vm6803, %vm3473
  %v6805 = vld [vmem:[#allocation5] sm:$0x8]
  %v6806 = vsel %vm6804, %v6801, %v6805
  %6807 = vst [vmem:[#allocation5] sm:$0x8] %v6806
  %v6808 = vld [vmem:[#allocation4 + $0x8] sm:$0x1]
  %v6810 = vrot.slane %v6808, 5
  %6811 = vrot.lane.b32.xlu0 %v6810, 64
  %v6812 = vpop.permute.xlu0 %6811
  %vm6814 = vmand %vm6792, %vm3473
  %v6815 = vld [vmem:[#allocation5] sm:$0x8]
  %v6816 = vsel %vm6814, %v6812, %v6815
  %6817 = vst [vmem:[#allocation5] sm:$0x8] %v6816
  %v6818 = vld [vmem:[#allocation4 + $0x8] sm:$0x2]
  %v6820 = vrot.slane %v6818, 5
  %v6821 = vrot.slane %v6820, 4
  %vm6823 = vmand %vm6676, %vm3337
  %v6824 = vld [vmem:[#allocation5 + $0x8] sm:$0x1]
  %v6825 = vsel %vm6823, %v6821, %v6824
  %6826 = vst [vmem:[#allocation5 + $0x8] sm:$0x1] %v6825
  %v6827 = vld [vmem:[#allocation4 + $0xc] sm:$0x1]
  %6829 = vrot.lane.b32.xlu0 %v6827, 64
  %v6830 = vpop.permute.xlu0 %6829
  %v6832 = vld [vmem:[#allocation5 + $0xc] sm:$0x1]
  %v6833 = vsel %vm6690, %v6830, %v6832
  %6834 = vst [vmem:[#allocation5 + $0xc] sm:$0x1] %v6833
  %v6835 = vld [vmem:[#allocation4 + $0xc] sm:$0x2]
  %v6836 = vld [vmem:[#allocation5 + $0xc] sm:$0x2]
  %v6837 = vsel %vm6702, %v6835, %v6836
  %6838 = vst [vmem:[#allocation5 + $0xc] sm:$0x2] %v6837
  %v6839 = vld [vmem:[#allocation4 + $0xc] sm:$0x2]
  %v6841 = vshrl.u32 %v6839, 16
  %v6843 = vrot.slane %v6841, 4
  %v6844 = vrot.slane %v6843, 4
  %6845 = vrot.lane.b32.xlu0 %v6844, 64
  %v6846 = vpop.permute.xlu0 %6845
  %vm6848 = vmand %vm6713, %vm3376
  %v6849 = vld [vmem:[#allocation5 + $0xc] sm:$0x2]
  %v6850 = vsel %vm6848, %v6846, %v6849
  %6851 = vst [vmem:[#allocation5 + $0xc] sm:$0x2] %v6850
  %v6852 = vld [vmem:[#allocation4 + $0xc] sm:$0x4]
  %v6854 = vshll.u32 %v6852, 16
  %v6856 = vrot.slane %v6854, 5
  %v6857 = vrot.slane %v6856, 4
  %vm6859 = vmand %vm6701, %vm3400
  %v6860 = vld [vmem:[#allocation5 + $0xc] sm:$0x2]
  %v6861 = vsel %vm6859, %v6857, %v6860
  %6862 = vst [vmem:[#allocation5 + $0xc] sm:$0x2] %v6861
  %v6863 = vld [vmem:[#allocation4 + $0xc] sm:$0x8]
  %v6865 = vrot.slane %v6863, 5
  %v6866 = vrot.slane %v6865, 4
  %6867 = vrot.lane.b32.xlu0 %v6866, 64
  %v6868 = vpop.permute.xlu0 %6867
  %v6870 = vld [vmem:[#allocation5 + $0x8] sm:$0x4]
  %v6871 = vsel %vm6738, %v6868, %v6870
  %6872 = vst [vmem:[#allocation5 + $0x8] sm:$0x4] %v6871
  %v6873 = vld [vmem:[#allocation4 + $0xc] sm:$0x8]
  %v6875 = vrot.slane %v6873, 5
  %v6876 = vrot.slane %v6875, 4
  %v6878 = vld [vmem:[#allocation5 + $0x8] sm:$0x4]
  %v6879 = vsel %vm6748, %v6876, %v6878
  %6880 = vst [vmem:[#allocation5 + $0x8] sm:$0x4] %v6879
  %v6881 = vld [vmem:[#allocation4 + $0x10] sm:$0x1]
  %v6883 = vshll.u32 %v6881, 16
  %v6885 = vrot.slane %v6883, 6
  %6886 = vrot.lane.b32.xlu0 %v6885, 64
  %v6887 = vpop.permute.xlu0 %6886
  %vm6889 = vmand %vm6737, %vm3440
  %v6890 = vld [vmem:[#allocation5 + $0x8] sm:$0x4]
  %v6891 = vsel %vm6889, %v6887, %v6890
  %6892 = vst [vmem:[#allocation5 + $0x8] sm:$0x4] %v6891
  %v6893 = vld [vmem:[#allocation4 + $0x10] sm:$0x1]
  %v6895 = vshrl.u32 %v6893, 16
  %v6897 = vrot.slane %v6895, 5
  %vm6899 = vmand %vm6803, %vm122
  %v6900 = vld [vmem:[#allocation5 + $0x8] sm:$0x8]
  %v6901 = vsel %vm6899, %v6897, %v6900
  %6902 = vst [vmem:[#allocation5 + $0x8] sm:$0x8] %v6901
  %v6903 = vld [vmem:[#allocation4 + $0x10] sm:$0x2]
  %v6905 = vshrl.u32 %v6903, 16
  %v6907 = vrot.slane %v6905, 7
  %6908 = vrot.lane.b32.xlu0 %v6907, 64
  %v6909 = vpop.permute.xlu0 %6908
  %v6911 = vld [vmem:[#allocation5 + $0xc] sm:$0x4]
  %v6912 = vsel %vm6738, %v6909, %v6911
  %6913 = vst [vmem:[#allocation5 + $0xc] sm:$0x4] %v6912
  %v6914 = vld [vmem:[#allocation4 + $0x10] sm:$0x4]
  %v6916 = vshll.u32 %v6914, 16
  %v6919 = vld [vmem:[#allocation5 + $0xc] sm:$0x4]
  %v6920 = vsel %vm6748, %v6916, %v6919
  %6921 = vst [vmem:[#allocation5 + $0xc] sm:$0x4] %v6920
  %v6922 = vld [vmem:[#allocation4 + $0x10] sm:$0x4]
  %6924 = vrot.lane.b32.xlu0 %v6922, 64
  %v6925 = vpop.permute.xlu0 %6924
  %v6927 = vld [vmem:[#allocation5 + $0xc] sm:$0x4]
  %v6928 = vsel %vm6889, %v6925, %v6927
  %6929 = vst [vmem:[#allocation5 + $0xc] sm:$0x4] %v6928
  %v6930 = vld [vmem:[#allocation4 + $0x10] sm:$0x8]
  %v6931 = vld [vmem:[#allocation5 + $0xc] sm:$0x8]
  %v6932 = vsel %vm6899, %v6930, %v6931
  %6933 = vst [vmem:[#allocation5 + $0xc] sm:$0x8] %v6932
  %v6934 = vld [vmem:[#allocation4 + $0x14] sm:$0x1]
  %v6936 = vshll.u32 %v6934, 16
  %v6938 = vrot.slane %v6936, 5
  %6939 = vrot.lane.b32.xlu0 %v6938, 64
  %v6940 = vpop.permute.xlu0 %6939
  %v6942 = vld [vmem:[#allocation5 + $0x8] sm:$0x8]
  %v6943 = vsel %vm6814, %v6940, %v6942
  %6944 = vst [vmem:[#allocation5 + $0x8] sm:$0x8] %v6943
  %v6945 = vld [vmem:[#allocation4 + $0x14] sm:$0x1]
  %v6947 = vshrl.u32 %v6945, 16
  %v6949 = vrot.slane %v6947, 4
  %v6950 = vrot.slane %v6949, 4
  %v6952 = vld [vmem:[#allocation5 + $0x10] sm:$0x1]
  %v6953 = vsel %vm6823, %v6950, %v6952
  %6954 = vst [vmem:[#allocation5 + $0x10] sm:$0x1] %v6953
  %v6955 = vld [vmem:[#allocation4 + $0x14] sm:$0x2]
  %v6957 = vrot.slane %v6955, 5
  %v6958 = vrot.slane %v6957, 4
  %6959 = vrot.lane.b32.xlu0 %v6958, 64
  %v6960 = vpop.permute.xlu0 %6959
  %v6962 = vld [vmem:[#allocation5 + $0x10] sm:$0x1]
  %v6963 = vsel %vm6671, %v6960, %v6962
  %6964 = vst [vmem:[#allocation5 + $0x10] sm:$0x1] %v6963
  %v6965 = vld [vmem:[#allocation4 + $0x14] sm:$0x2]
  %v6967 = vrot.slane %v6965, 5
  %v6968 = vrot.slane %v6967, 4
  %v6970 = vld [vmem:[#allocation5 + $0x10] sm:$0x1]
  %v6971 = vsel %vm6677, %v6968, %v6970
  %6972 = vst [vmem:[#allocation5 + $0x10] sm:$0x1] %v6971
  %v6973 = vld [vmem:[#allocation5] sm:$0xff]
  %v6974 = vld [vmem:[#allocation5 + $0x8] sm:$0xff]
  %v6975 = vld [vmem:[#allocation5 + $0x10] sm:$0xff]
  %v6976 = vld [vmem:[#allocation5 + $0x18] sm:$0xff]
  %6977 = vst [vmem:[#allocation8] sm:$0xff] %v6973
  %6978 = vst [vmem:[#allocation8 + $0x20] sm:$0xff] %v6974
  %6979 = vst [vmem:[#allocation8 + $0x40] sm:$0xff] %v6975
  %6980 = vst [vmem:[#allocation8 + $0x60] sm:$0xff] %v6976
  %v6981 = vld [vmem:[#allocation5] sm:$0xff]
  %v6982 = vld [vmem:[#allocation5 + $0x8] sm:$0xff]
  %v6983 = vld [vmem:[#allocation5 + $0x10] sm:$0xff]
  %v6984 = vld [vmem:[#allocation5 + $0x18] sm:$0xff]
  %v6985 = vld [vmem:[#allocation5 + $0x20] sm:$0x11]
  %v6987 = vshrl.u32 %v6981, 16
  %v6989 = vrot.slane %v6987, 4
  %v6990 = vshll.u32 %v6981, 16
  %v6992 = vrot.slane %v6990, 5
  %v6993 = vor.u32 %v6989, %v6992
  %v6994 = vrot.slane %v6993, 4
  %v6996 = vshll.u32 %v6982, 16
  %v6998 = vrot.slane %v6996, 5
  %v6999 = vsel %vm124, %v6994, %v6998
  %v7000 = vshrl.u32 %v6982, 16
  %v7002 = vrot.slane %v7000, 4
  %v7003 = vor.u32 %v7002, %v6998
  %v7004 = vrot.slane %v7003, 4
  %v7006 = vshll.u32 %v6983, 16
  %v7008 = vrot.slane %v7006, 5
  %v7009 = vsel %vm124, %v7004, %v7008
  %v7010 = vshrl.u32 %v6983, 16
  %v7012 = vrot.slane %v7010, 4
  %v7013 = vor.u32 %v7012, %v7008
  %v7014 = vrot.slane %v7013, 4
  %v7016 = vshll.u32 %v6984, 16
  %v7018 = vrot.slane %v7016, 5
  %v7019 = vsel %vm124, %v7014, %v7018
  %v7020 = vshrl.u32 %v6984, 16
  %v7022 = vrot.slane %v7020, 4
  %v7023 = vor.u32 %v7022, %v7018
  %v7024 = vrot.slane %v7023, 4
  %v7026 = vshll.u32 %v6985, 16
  %v7028 = vrot.slane %v7026, 5
  %v7029 = vsel %vm124, %v7024, %v7028
  %7034 = vst [vmem:[#allocation8 + $0x8] sm:$0xff] %v6999
  %7035 = vst [vmem:[#allocation8 + $0x28] sm:$0xff] %v7009
  %7036 = vst [vmem:[#allocation8 + $0x48] sm:$0xff] %v7019
  %7037 = vst [vmem:[#allocation8 + $0x68] sm:$0xff] %v7029
  %v7038 = vld [vmem:[#allocation5] sm:$0xee]
  %v7039 = vld [vmem:[#allocation5 + $0x8] sm:$0xff]
  %v7040 = vld [vmem:[#allocation5 + $0x10] sm:$0xff]
  %v7041 = vld [vmem:[#allocation5 + $0x18] sm:$0xff]
  %v7042 = vld [vmem:[#allocation5 + $0x20] sm:$0x33]
  %vm7043 = vsmask.f32 6416
  %vm7044 = vmor %vm3428, %vm7043
  %v7046 = vshrl.u32 %v7038, 16
  %v7048 = vrot.slane %v7046, 5
  %v7049 = vshll.u32 %v7038, 16
  %v7051 = vrot.slane %v7049, 6
  %v7052 = vor.u32 %v7048, %v7051
  %v7053 = vrot.slane %v7052, 4
  %v7055 = vshrl.u32 %v7039, 16
  %v7057 = vrot.slane %v7055, 5
  %v7058 = vshll.u32 %v7039, 16
  %v7060 = vrot.slane %v7058, 6
  %v7061 = vor.u32 %v7057, %v7060
  %v7062 = vsel %vm7044, %v7053, %v7061
  %v7063 = vrot.slane %v7061, 4
  %v7065 = vshrl.u32 %v7040, 16
  %v7067 = vrot.slane %v7065, 5
  %v7068 = vshll.u32 %v7040, 16
  %v7070 = vrot.slane %v7068, 6
  %v7071 = vor.u32 %v7067, %v7070
  %v7072 = vsel %vm7044, %v7063, %v7071
  %v7073 = vrot.slane %v7071, 4
  %v7075 = vshrl.u32 %v7041, 16
  %v7077 = vrot.slane %v7075, 5
  %v7078 = vshll.u32 %v7041, 16
  %v7080 = vrot.slane %v7078, 6
  %v7081 = vor.u32 %v7077, %v7080
  %v7082 = vsel %vm7044, %v7073, %v7081
  %v7083 = vrot.slane %v7081, 4
  %v7085 = vshrl.u32 %v7042, 16
  %v7087 = vrot.slane %v7085, 5
  %v7088 = vshll.u32 %v7042, 16
  %v7090 = vrot.slane %v7088, 6
  %v7091 = vor.u32 %v7087, %v7090
  %v7092 = vsel %vm7044, %v7083, %v7091
  %7097 = vst [vmem:[#allocation8 + $0x10] sm:$0xff] %v7062
  %7098 = vst [vmem:[#allocation8 + $0x30] sm:$0xff] %v7072
  %7099 = vst [vmem:[#allocation8 + $0x50] sm:$0xff] %v7082
  %7100 = vst [vmem:[#allocation8 + $0x70] sm:$0xff] %v7092
  %v7101 = vld [vmem:[#allocation5] sm:$0xcc]
  %v7102 = vld [vmem:[#allocation5 + $0x8] sm:$0xff]
  %v7103 = vld [vmem:[#allocation5 + $0x10] sm:$0xff]
  %v7104 = vld [vmem:[#allocation5 + $0x18] sm:$0xff]
  %v7105 = vld [vmem:[#allocation5 + $0x20] sm:$0x33]
  %vm7111 = vcmask 1041408
  %vm7112 = vcmask 1045508
  %vm7113 = vmor %vm7111, %vm7112
  %v7114 = vrot.slane %v7101, 6
  %v7115 = vrot.slane %v7114, 4
  %v7116 = vrot.slane %v7102, 6
  %v7117 = vsel %vm7113, %v7115, %v7116
  %v7118 = vrot.slane %v7116, 4
  %v7119 = vrot.slane %v7103, 6
  %v7120 = vsel %vm7113, %v7118, %v7119
  %v7121 = vrot.slane %v7119, 4
  %v7122 = vrot.slane %v7104, 6
  %v7123 = vsel %vm7113, %v7121, %v7122
  %v7124 = vrot.slane %v7122, 4
  %v7125 = vrot.slane %v7105, 6
  %v7126 = vsel %vm7113, %v7124, %v7125
  %7131 = vst [vmem:[#allocation8 + $0x18] sm:$0xff] %v7117
  %7132 = vst [vmem:[#allocation8 + $0x38] sm:$0xff] %v7120
  %7133 = vst [vmem:[#allocation8 + $0x58] sm:$0xff] %v7123
  %7134 = vst [vmem:[#allocation8 + $0x78] sm:$0xff] %v7126
  %v7135 = vld [vmem:[#allocation8] sm:$0xff]
  %v7136 = vld [vmem:[#allocation8 + $0x8] sm:$0xff]
  %v7137 = vld [vmem:[#allocation8 + $0x10] sm:$0xff]
  %v7138 = vld [vmem:[#allocation8 + $0x18] sm:$0xff]
  %v7139 = vld [vmem:[#allocation8 + $0x20] sm:$0xff]
  %v7140 = vld [vmem:[#allocation8 + $0x28] sm:$0xff]
  %v7141 = vld [vmem:[#allocation8 + $0x30] sm:$0xff]
  %v7142 = vld [vmem:[#allocation8 + $0x38] sm:$0xff]
  %v7143 = vld [vmem:[#allocation8 + $0x40] sm:$0xff]
  %v7144 = vld [vmem:[#allocation8 + $0x48] sm:$0xff]
  %v7145 = vld [vmem:[#allocation8 + $0x50] sm:$0xff]
  %v7146 = vld [vmem:[#allocation8 + $0x58] sm:$0xff]
  %v7147 = vld [vmem:[#allocation8 + $0x60] sm:$0xff]
  %v7148 = vld [vmem:[#allocation8 + $0x68] sm:$0xff]
  %v7149 = vld [vmem:[#allocation8 + $0x70] sm:$0xff]
  %v7150 = vld [vmem:[#allocation8 + $0x78] sm:$0xff]
  %v7151 = vld [vmem:[%s5] sm:$0xf]
  %v7152 = vld [vmem:[%s5 + $0x4] sm:$0xf]
  %v7153 = vld [vmem:[%s5 + $0x8] sm:$0xf]
  %v7154 = vld [vmem:[%s5 + $0xc] sm:$0xf]
  %v7155 = vld [vmem:[%s5 + $0x10] sm:$0xf]
  %v7156 = vld [vmem:[%s5 + $0x14] sm:$0xf]
  %v7157 = vld [vmem:[%s5 + $0x18] sm:$0xf]
  %v7158 = vld [vmem:[%s5 + $0x1c] sm:$0xf]
  %v7159 = vld [vmem:[%s5 + $0x20] sm:$0xf]
  %v7160 = vld [vmem:[%s5 + $0x24] sm:$0xf]
  %v7161 = vld [vmem:[%s5 + $0x28] sm:$0xf]
  %v7162 = vld [vmem:[%s5 + $0x2c] sm:$0xf]
  %v7163 = vld [vmem:[%s5 + $0x30] sm:$0xf]
  %v7164 = vld [vmem:[%s5 + $0x34] sm:$0xf]
  %v7165 = vld [vmem:[%s5 + $0x38] sm:$0xf]
  %v7166 = vld [vmem:[%s5 + $0x3c] sm:$0xf]
  %v7167 = vld [vmem:[%s5 + $0x40] sm:$0xf]
  %v7168 = vld [vmem:[%s5 + $0x44] sm:$0xf]
  %v7169 = vld [vmem:[%s5 + $0x48] sm:$0xf]
  %v7170 = vld [vmem:[%s5 + $0x4c] sm:$0xf]
  %v7171 = vld [vmem:[%s5 + $0x50] sm:$0xf]
  %v7172 = vld [vmem:[%s5 + $0x54] sm:$0xf]
  %v7173 = vld [vmem:[%s5 + $0x58] sm:$0xf]
  %v7174 = vld [vmem:[%s5 + $0x5c] sm:$0xf]
  %v7175 = vld [vmem:[%s5 + $0x60] sm:$0xf]
  %v7176 = vld [vmem:[%s5 + $0x64] sm:$0xf]
  %v7177 = vld [vmem:[%s5 + $0x68] sm:$0xf]
  %v7178 = vld [vmem:[%s5 + $0x6c] sm:$0xf]
  %v7179 = vld [vmem:[%s5 + $0x70] sm:$0xf]
  %v7180 = vld [vmem:[%s5 + $0x74] sm:$0xf]
  %v7181 = vld [vmem:[%s5 + $0x78] sm:$0xf]
  %v7182 = vld [vmem:[%s5 + $0x7c] sm:$0xf]
  %v7183 = vld [vmem:[%s5 + $0x80] sm:$0xf]
  %v7184 = vld [vmem:[%s5 + $0x84] sm:$0xf]
  %v7185 = vld [vmem:[%s5 + $0x88] sm:$0xf]
  %v7186 = vld [vmem:[%s5 + $0x8c] sm:$0xf]
  %v7187 = vld [vmem:[%s5 + $0x90] sm:$0xf]
  %v7188 = vld [vmem:[%s5 + $0x94] sm:$0xf]
  %v7189 = vld [vmem:[%s5 + $0x98] sm:$0xf]
  %v7190 = vld [vmem:[%s5 + $0x9c] sm:$0xf]
  %v7191 = vld [vmem:[%s5 + $0xa0] sm:$0xf]
  %v7192 = vld [vmem:[%s5 + $0xa4] sm:$0xf]
  %v7193 = vld [vmem:[%s5 + $0xa8] sm:$0xf]
  %v7194 = vld [vmem:[%s5 + $0xac] sm:$0xf]
  %v7195 = vld [vmem:[%s5 + $0xb0] sm:$0xf]
  %v7196 = vld [vmem:[%s5 + $0xb4] sm:$0xf]
  %v7197 = vld [vmem:[%s5 + $0xb8] sm:$0xf]
  %v7198 = vld [vmem:[%s5 + $0xbc] sm:$0xf]
  %v7199 = vld [vmem:[%s5 + $0xc0] sm:$0xf]
  %v7200 = vld [vmem:[%s5 + $0xc4] sm:$0xf]
  %v7201 = vld [vmem:[%s5 + $0xc8] sm:$0xf]
  %v7202 = vld [vmem:[%s5 + $0xcc] sm:$0xf]
  %v7203 = vld [vmem:[%s5 + $0xd0] sm:$0xf]
  %v7204 = vld [vmem:[%s5 + $0xd4] sm:$0xf]
  %v7205 = vld [vmem:[%s5 + $0xd8] sm:$0xf]
  %v7206 = vld [vmem:[%s5 + $0xdc] sm:$0xf]
  %v7207 = vld [vmem:[%s5 + $0xe0] sm:$0xf]
  %v7208 = vld [vmem:[%s5 + $0xe4] sm:$0xf]
  %v7209 = vld [vmem:[%s5 + $0xe8] sm:$0xf]
  %v7210 = vld [vmem:[%s5 + $0xec] sm:$0xf]
  %v7211 = vld [vmem:[%s5 + $0xf0] sm:$0xf]
  %v7212 = vld [vmem:[%s5 + $0xf4] sm:$0xf]
  %v7213 = vld [vmem:[%s5 + $0xf8] sm:$0xf]
  %v7214 = vld [vmem:[%s5 + $0xfc] sm:$0xf]
  %v7215 = vld [vmem:[%s5 + $0x100] sm:$0xf]
  %v7216 = vld [vmem:[%s5 + $0x104] sm:$0xf]
  %v7217 = vld [vmem:[%s5 + $0x108] sm:$0xf]
  %v7218 = vld [vmem:[%s5 + $0x10c] sm:$0xf]
  %v7219 = vld [vmem:[%s5 + $0x110] sm:$0xf]
  %v7220 = vld [vmem:[%s5 + $0x114] sm:$0xf]
  %v7221 = vld [vmem:[%s5 + $0x118] sm:$0xf]
  %v7222 = vld [vmem:[%s5 + $0x11c] sm:$0xf]
  %v7223 = vld [vmem:[%s5 + $0x120] sm:$0xf]
  %v7224 = vld [vmem:[%s5 + $0x124] sm:$0xf]
  %v7225 = vld [vmem:[%s5 + $0x128] sm:$0xf]
  %v7226 = vld [vmem:[%s5 + $0x12c] sm:$0xf]
  %v7227 = vld [vmem:[%s5 + $0x130] sm:$0xf]
  %v7228 = vld [vmem:[%s5 + $0x134] sm:$0xf]
  %v7229 = vld [vmem:[%s5 + $0x138] sm:$0xf]
  %v7230 = vld [vmem:[%s5 + $0x13c] sm:$0xf]
  %v7231 = vld [vmem:[%s5 + $0x140] sm:$0xf]
  %v7232 = vld [vmem:[%s5 + $0x144] sm:$0xf]
  %v7233 = vld [vmem:[%s5 + $0x148] sm:$0xf]
  %v7234 = vld [vmem:[%s5 + $0x14c] sm:$0xf]
  %v7235 = vld [vmem:[%s5 + $0x150] sm:$0xf]
  %v7236 = vld [vmem:[%s5 + $0x154] sm:$0xf]
  %v7237 = vld [vmem:[%s5 + $0x158] sm:$0xf]
  %v7238 = vld [vmem:[%s5 + $0x15c] sm:$0xf]
  %v7239 = vld [vmem:[%s5 + $0x160] sm:$0xf]
  %v7240 = vld [vmem:[%s5 + $0x164] sm:$0xf]
  %v7241 = vld [vmem:[%s5 + $0x168] sm:$0xf]
  %v7242 = vld [vmem:[%s5 + $0x16c] sm:$0xf]
  %v7243 = vld [vmem:[%s5 + $0x170] sm:$0xf]
  %v7244 = vld [vmem:[%s5 + $0x174] sm:$0xf]
  %v7245 = vld [vmem:[%s5 + $0x178] sm:$0xf]
  %v7246 = vld [vmem:[%s5 + $0x17c] sm:$0xf]
  %v7247 = vld [vmem:[%s5 + $0x180] sm:$0xf]
  %v7248 = vld [vmem:[%s5 + $0x184] sm:$0xf]
  %v7249 = vld [vmem:[%s5 + $0x188] sm:$0xf]
  %v7250 = vld [vmem:[%s5 + $0x18c] sm:$0xf]
  %v7251 = vld [vmem:[%s5 + $0x190] sm:$0xf]
  %v7252 = vld [vmem:[%s5 + $0x194] sm:$0xf]
  %v7253 = vld [vmem:[%s5 + $0x198] sm:$0xf]
  %v7254 = vld [vmem:[%s5 + $0x19c] sm:$0xf]
  %v7255 = vld [vmem:[%s5 + $0x1a0] sm:$0xf]
  %v7256 = vld [vmem:[%s5 + $0x1a4] sm:$0xf]
  %v7257 = vld [vmem:[%s5 + $0x1a8] sm:$0xf]
  %v7258 = vld [vmem:[%s5 + $0x1ac] sm:$0xf]
  %v7259 = vld [vmem:[%s5 + $0x1b0] sm:$0xf]
  %v7260 = vld [vmem:[%s5 + $0x1b4] sm:$0xf]
  %v7261 = vld [vmem:[%s5 + $0x1b8] sm:$0xf]
  %v7262 = vld [vmem:[%s5 + $0x1bc] sm:$0xf]
  %v7263 = vld [vmem:[%s5 + $0x1c0] sm:$0xf]
  %v7264 = vld [vmem:[%s5 + $0x1c4] sm:$0xf]
  %v7265 = vld [vmem:[%s5 + $0x1c8] sm:$0xf]
  %v7266 = vld [vmem:[%s5 + $0x1cc] sm:$0xf]
  %v7267 = vld [vmem:[%s5 + $0x1d0] sm:$0xf]
  %v7268 = vld [vmem:[%s5 + $0x1d4] sm:$0xf]
  %v7269 = vld [vmem:[%s5 + $0x1d8] sm:$0xf]
  %v7270 = vld [vmem:[%s5 + $0x1dc] sm:$0xf]
  %v7271 = vld [vmem:[%s5 + $0x1e0] sm:$0xf]
  %v7272 = vld [vmem:[%s5 + $0x1e4] sm:$0xf]
  %v7273 = vld [vmem:[%s5 + $0x1e8] sm:$0xf]
  %v7274 = vld [vmem:[%s5 + $0x1ec] sm:$0xf]
  %v7275 = vld [vmem:[%s5 + $0x1f0] sm:$0xf]
  %v7276 = vld [vmem:[%s5 + $0x1f4] sm:$0xf]
  %v7277 = vld [vmem:[%s5 + $0x1f8] sm:$0xf]
  %v7278 = vld [vmem:[%s5 + $0x1fc] sm:$0xf]
  %v7295 = vunpack.c.l.b16 %v7135
  %v7296 = vunpack.c.h.b16 %v7135
  %v7297 = vunpack.c.l.b16 %v7136
  %v7298 = vunpack.c.h.b16 %v7136
  %v7299 = vunpack.c.l.b16 %v7137
  %v7300 = vunpack.c.h.b16 %v7137
  %v7301 = vunpack.c.l.b16 %v7138
  %v7302 = vunpack.c.h.b16 %v7138
  %v7303 = vunpack.c.l.b16 %v7139
  %v7304 = vunpack.c.h.b16 %v7139
  %v7305 = vunpack.c.l.b16 %v7140
  %v7306 = vunpack.c.h.b16 %v7140
  %v7307 = vunpack.c.l.b16 %v7141
  %v7308 = vunpack.c.h.b16 %v7141
  %v7309 = vunpack.c.l.b16 %v7142
  %v7310 = vunpack.c.h.b16 %v7142
  %v7311 = vunpack.c.l.b16 %v7143
  %v7312 = vunpack.c.h.b16 %v7143
  %v7313 = vunpack.c.l.b16 %v7144
  %v7314 = vunpack.c.h.b16 %v7144
  %v7315 = vunpack.c.l.b16 %v7145
  %v7316 = vunpack.c.h.b16 %v7145
  %v7317 = vunpack.c.l.b16 %v7146
  %v7318 = vunpack.c.h.b16 %v7146
  %v7319 = vunpack.c.l.b16 %v7147
  %v7320 = vunpack.c.h.b16 %v7147
  %v7321 = vunpack.c.l.b16 %v7148
  %v7322 = vunpack.c.h.b16 %v7148
  %v7323 = vunpack.c.l.b16 %v7149
  %v7324 = vunpack.c.h.b16 %v7149
  %v7325 = vunpack.c.l.b16 %v7150
  %v7326 = vunpack.c.h.b16 %v7150
  %v7327 = vpack.c.b16 %v7303, %v7295
  %v7328 = vpack.c.b16 %v7304, %v7296
  %v7329 = vpack.c.b16 %v7305, %v7297
  %v7330 = vpack.c.b16 %v7306, %v7298
  %v7331 = vpack.c.b16 %v7307, %v7299
  %v7332 = vpack.c.b16 %v7308, %v7300
  %v7333 = vpack.c.b16 %v7309, %v7301
  %v7334 = vpack.c.b16 %v7310, %v7302
  %v7335 = vpack.c.b16 %v7319, %v7311
  %v7336 = vpack.c.b16 %v7320, %v7312
  %v7337 = vpack.c.b16 %v7321, %v7313
  %v7338 = vpack.c.b16 %v7322, %v7314
  %v7339 = vpack.c.b16 %v7323, %v7315
  %v7340 = vpack.c.b16 %v7324, %v7316
  %v7341 = vpack.c.b16 %v7325, %v7317
  %v7342 = vpack.c.b16 %v7326, %v7318
  %v7487 = vunpack.c.l.b16 %v7151
  %v7488 = vunpack.c.l.b16 %v7152
  %v7489 = vunpack.c.l.b16 %v7153
  %v7490 = vunpack.c.l.b16 %v7154
  %v7491 = vunpack.c.l.b16 %v7155
  %v7492 = vunpack.c.l.b16 %v7156
  %v7493 = vunpack.c.l.b16 %v7157
  %v7494 = vunpack.c.l.b16 %v7158
  %v7495 = vunpack.c.l.b16 %v7159
  %v7496 = vunpack.c.l.b16 %v7160
  %v7497 = vunpack.c.l.b16 %v7161
  %v7498 = vunpack.c.l.b16 %v7162
  %v7499 = vunpack.c.l.b16 %v7163
  %v7500 = vunpack.c.l.b16 %v7164
  %v7501 = vunpack.c.l.b16 %v7165
  %v7502 = vunpack.c.l.b16 %v7166
  %v7503 = vunpack.c.l.b16 %v7167
  %v7504 = vunpack.c.l.b16 %v7168
  %v7505 = vunpack.c.l.b16 %v7169
  %v7506 = vunpack.c.l.b16 %v7170
  %v7507 = vunpack.c.l.b16 %v7171
  %v7508 = vunpack.c.l.b16 %v7172
  %v7509 = vunpack.c.l.b16 %v7173
  %v7510 = vunpack.c.l.b16 %v7174
  %v7511 = vunpack.c.l.b16 %v7175
  %v7512 = vunpack.c.l.b16 %v7176
  %v7513 = vunpack.c.l.b16 %v7177
  %v7514 = vunpack.c.l.b16 %v7178
  %v7515 = vunpack.c.l.b16 %v7179
  %v7516 = vunpack.c.l.b16 %v7180
  %v7517 = vunpack.c.l.b16 %v7181
  %v7518 = vunpack.c.l.b16 %v7182
  %v7519 = vunpack.c.l.b16 %v7183
  %v7520 = vunpack.c.l.b16 %v7184
  %v7521 = vunpack.c.l.b16 %v7185
  %v7522 = vunpack.c.l.b16 %v7186
  %v7523 = vunpack.c.l.b16 %v7187
  %v7524 = vunpack.c.l.b16 %v7188
  %v7525 = vunpack.c.l.b16 %v7189
  %v7526 = vunpack.c.l.b16 %v7190
  %v7527 = vunpack.c.l.b16 %v7191
  %v7528 = vunpack.c.l.b16 %v7192
  %v7529 = vunpack.c.l.b16 %v7193
  %v7530 = vunpack.c.l.b16 %v7194
  %v7531 = vunpack.c.l.b16 %v7195
  %v7532 = vunpack.c.l.b16 %v7196
  %v7533 = vunpack.c.l.b16 %v7197
  %v7534 = vunpack.c.l.b16 %v7198
  %v7535 = vunpack.c.l.b16 %v7199
  %v7536 = vunpack.c.l.b16 %v7200
  %v7537 = vunpack.c.l.b16 %v7201
  %v7538 = vunpack.c.l.b16 %v7202
  %v7539 = vunpack.c.l.b16 %v7203
  %v7540 = vunpack.c.l.b16 %v7204
  %v7541 = vunpack.c.l.b16 %v7205
  %v7542 = vunpack.c.l.b16 %v7206
  %v7543 = vunpack.c.l.b16 %v7207
  %v7544 = vunpack.c.l.b16 %v7208
  %v7545 = vunpack.c.l.b16 %v7209
  %v7546 = vunpack.c.l.b16 %v7210
  %v7547 = vunpack.c.l.b16 %v7211
  %v7548 = vunpack.c.l.b16 %v7212
  %v7549 = vunpack.c.l.b16 %v7213
  %v7550 = vunpack.c.l.b16 %v7214
  %v7551 = vunpack.c.l.b16 %v7215
  %v7552 = vunpack.c.l.b16 %v7216
  %v7553 = vunpack.c.l.b16 %v7217
  %v7554 = vunpack.c.l.b16 %v7218
  %v7555 = vunpack.c.l.b16 %v7219
  %v7556 = vunpack.c.l.b16 %v7220
  %v7557 = vunpack.c.l.b16 %v7221
  %v7558 = vunpack.c.l.b16 %v7222
  %v7559 = vunpack.c.l.b16 %v7223
  %v7560 = vunpack.c.l.b16 %v7224
  %v7561 = vunpack.c.l.b16 %v7225
  %v7562 = vunpack.c.l.b16 %v7226
  %v7563 = vunpack.c.l.b16 %v7227
  %v7564 = vunpack.c.l.b16 %v7228
  %v7565 = vunpack.c.l.b16 %v7229
  %v7566 = vunpack.c.l.b16 %v7230
  %v7567 = vunpack.c.l.b16 %v7231
  %v7568 = vunpack.c.l.b16 %v7232
  %v7569 = vunpack.c.l.b16 %v7233
  %v7570 = vunpack.c.l.b16 %v7234
  %v7571 = vunpack.c.l.b16 %v7235
  %v7572 = vunpack.c.l.b16 %v7236
  %v7573 = vunpack.c.l.b16 %v7237
  %v7574 = vunpack.c.l.b16 %v7238
  %v7575 = vunpack.c.l.b16 %v7239
  %v7576 = vunpack.c.l.b16 %v7240
  %v7577 = vunpack.c.l.b16 %v7241
  %v7578 = vunpack.c.l.b16 %v7242
  %v7579 = vunpack.c.l.b16 %v7243
  %v7580 = vunpack.c.l.b16 %v7244
  %v7581 = vunpack.c.l.b16 %v7245
  %v7582 = vunpack.c.l.b16 %v7246
  %v7583 = vunpack.c.l.b16 %v7247
  %v7584 = vunpack.c.l.b16 %v7248
  %v7585 = vunpack.c.l.b16 %v7249
  %v7586 = vunpack.c.l.b16 %v7250
  %v7587 = vunpack.c.l.b16 %v7251
  %v7588 = vunpack.c.l.b16 %v7252
  %v7589 = vunpack.c.l.b16 %v7253
  %v7590 = vunpack.c.l.b16 %v7254
  %v7591 = vunpack.c.l.b16 %v7255
  %v7592 = vunpack.c.l.b16 %v7256
  %v7593 = vunpack.c.l.b16 %v7257
  %v7594 = vunpack.c.l.b16 %v7258
  %v7595 = vunpack.c.l.b16 %v7259
  %v7596 = vunpack.c.l.b16 %v7260
  %v7597 = vunpack.c.l.b16 %v7261
  %v7598 = vunpack.c.l.b16 %v7262
  %v7599 = vunpack.c.l.b16 %v7263
  %v7600 = vunpack.c.l.b16 %v7264
  %v7601 = vunpack.c.l.b16 %v7265
  %v7602 = vunpack.c.l.b16 %v7266
  %v7603 = vunpack.c.l.b16 %v7267
  %v7604 = vunpack.c.l.b16 %v7268
  %v7605 = vunpack.c.l.b16 %v7269
  %v7606 = vunpack.c.l.b16 %v7270
  %v7607 = vunpack.c.l.b16 %v7271
  %v7608 = vunpack.c.l.b16 %v7272
  %v7609 = vunpack.c.l.b16 %v7273
  %v7610 = vunpack.c.l.b16 %v7274
  %v7611 = vunpack.c.l.b16 %v7275
  %v7612 = vunpack.c.l.b16 %v7276
  %v7613 = vunpack.c.l.b16 %v7277
  %v7614 = vunpack.c.l.b16 %v7278
  %v7615 = vpack.c.b16 %v7488, %v7487
  %v7616 = vpack.c.b16 %v7490, %v7489
  %v7617 = vpack.c.b16 %v7492, %v7491
  %v7618 = vpack.c.b16 %v7494, %v7493
  %v7619 = vpack.c.b16 %v7496, %v7495
  %v7620 = vpack.c.b16 %v7498, %v7497
  %v7621 = vpack.c.b16 %v7500, %v7499
  %v7622 = vpack.c.b16 %v7502, %v7501
  %v7623 = vpack.c.b16 %v7504, %v7503
  %v7624 = vpack.c.b16 %v7506, %v7505
  %v7625 = vpack.c.b16 %v7508, %v7507
  %v7626 = vpack.c.b16 %v7510, %v7509
  %v7627 = vpack.c.b16 %v7512, %v7511
  %v7628 = vpack.c.b16 %v7514, %v7513
  %v7629 = vpack.c.b16 %v7516, %v7515
  %v7630 = vpack.c.b16 %v7518, %v7517
  %v7631 = vpack.c.b16 %v7520, %v7519
  %v7632 = vpack.c.b16 %v7522, %v7521
  %v7633 = vpack.c.b16 %v7524, %v7523
  %v7634 = vpack.c.b16 %v7526, %v7525
  %v7635 = vpack.c.b16 %v7528, %v7527
  %v7636 = vpack.c.b16 %v7530, %v7529
  %v7637 = vpack.c.b16 %v7532, %v7531
  %v7638 = vpack.c.b16 %v7534, %v7533
  %v7639 = vpack.c.b16 %v7536, %v7535
  %v7640 = vpack.c.b16 %v7538, %v7537
  %v7641 = vpack.c.b16 %v7540, %v7539
  %v7642 = vpack.c.b16 %v7542, %v7541
  %v7643 = vpack.c.b16 %v7544, %v7543
  %v7644 = vpack.c.b16 %v7546, %v7545
  %v7645 = vpack.c.b16 %v7548, %v7547
  %v7646 = vpack.c.b16 %v7550, %v7549
  %v7647 = vpack.c.b16 %v7552, %v7551
  %v7648 = vpack.c.b16 %v7554, %v7553
  %v7649 = vpack.c.b16 %v7556, %v7555
  %v7650 = vpack.c.b16 %v7558, %v7557
  %v7651 = vpack.c.b16 %v7560, %v7559
  %v7652 = vpack.c.b16 %v7562, %v7561
  %v7653 = vpack.c.b16 %v7564, %v7563
  %v7654 = vpack.c.b16 %v7566, %v7565
  %v7655 = vpack.c.b16 %v7568, %v7567
  %v7656 = vpack.c.b16 %v7570, %v7569
  %v7657 = vpack.c.b16 %v7572, %v7571
  %v7658 = vpack.c.b16 %v7574, %v7573
  %v7659 = vpack.c.b16 %v7576, %v7575
  %v7660 = vpack.c.b16 %v7578, %v7577
  %v7661 = vpack.c.b16 %v7580, %v7579
  %v7662 = vpack.c.b16 %v7582, %v7581
  %v7663 = vpack.c.b16 %v7584, %v7583
  %v7664 = vpack.c.b16 %v7586, %v7585
  %v7665 = vpack.c.b16 %v7588, %v7587
  %v7666 = vpack.c.b16 %v7590, %v7589
  %v7667 = vpack.c.b16 %v7592, %v7591
  %v7668 = vpack.c.b16 %v7594, %v7593
  %v7669 = vpack.c.b16 %v7596, %v7595
  %v7670 = vpack.c.b16 %v7598, %v7597
  %v7671 = vpack.c.b16 %v7600, %v7599
  %v7672 = vpack.c.b16 %v7602, %v7601
  %v7673 = vpack.c.b16 %v7604, %v7603
  %v7674 = vpack.c.b16 %v7606, %v7605
  %v7675 = vpack.c.b16 %v7608, %v7607
  %v7676 = vpack.c.b16 %v7610, %v7609
  %v7677 = vpack.c.b16 %v7612, %v7611
  %v7678 = vpack.c.b16 %v7614, %v7613
  %7743 = vmatprep.subr.bf16.mxu0 0
  %7744 = vmatpush1.bf16.msra.mxu0 %v7622
  %7745 = vmatprep.subr.bf16.mxu0 0
  %7746 = vmatpush1.bf16.msra.mxu0 %v7621
  %7747 = vmatprep.subr.bf16.mxu0 0
  %7748 = vmatpush1.bf16.msra.mxu0 %v7620
  %7749 = vmatprep.subr.bf16.mxu0 0
  %7750 = vmatpush1.bf16.msra.mxu0 %v7619
  %7751 = vmatprep.subr.bf16.mxu0 0
  %7752 = vmatpush1.bf16.msra.mxu0 %v7618
  %7753 = vmatprep.subr.bf16.mxu0 0
  %7754 = vmatpush1.bf16.msra.mxu0 %v7617
  %7755 = vmatprep.subr.bf16.mxu0 0
  %7756 = vmatpush1.bf16.msra.mxu0 %v7616
  %7757 = vmatprep.subr.bf16.mxu0 0
  %7758 = vmatpush1.bf16.msra.mxu0 %v7615
  %7759 = vmatprep.subr.bf16.mxu0 0
  %7760 = vmatpush2.bf16.msra.mxu0 %v7630
  %7761 = vmatprep.subr.bf16.mxu0 0
  %7762 = vmatpush2.bf16.msra.mxu0 %v7629
  %7763 = vmatprep.subr.bf16.mxu0 0
  %7764 = vmatpush2.bf16.msra.mxu0 %v7628
  %7765 = vmatprep.subr.bf16.mxu0 0
  %7766 = vmatpush2.bf16.msra.mxu0 %v7627
  %7767 = vmatprep.subr.bf16.mxu0 0
  %7768 = vmatpush2.bf16.msra.mxu0 %v7626
  %7769 = vmatprep.subr.bf16.mxu0 0
  %7770 = vmatpush2.bf16.msra.mxu0 %v7625
  %7771 = vmatprep.subr.bf16.mxu0 0
  %7772 = vmatpush2.bf16.msra.mxu0 %v7624
  %7773 = vmatprep.subr.bf16.mxu0 0
  %7774 = vmatpush2.bf16.msra.mxu0 %v7623
  %7775 = vmatprep.mubr.bf16.mxu0 %v7328
  %7776 = vmatmul.mubr.bf16.gmra.mxu0 %v7327
  %v7777 = vpop.f32.mrf.mxu0
  %v7778 = vadd.f32 0.0, %v7777
  %v7779 = vpop.f32.mrf.mxu0
  %v7780 = vpop.f32.mrf.mxu0
  %v7781 = vadd.f32 0.0, %v7780
  %v7782 = vpop.f32.mrf.mxu0
  %7783 = vmatprep.mubr.bf16.mxu0 %v7336
  %7784 = vmatmul.mubr.bf16.gmra.mxu0 %v7335
  %v7785 = vpop.f32.mrf.mxu0
  %v7786 = vadd.f32 0.0, %v7785
  %v7787 = vpop.f32.mrf.mxu0
  %v7788 = vpop.f32.mrf.mxu0
  %v7789 = vadd.f32 0.0, %v7788
  %v7790 = vpop.f32.mrf.mxu0
  %7791 = vdwg.mxu0
  %7792 = vmatprep.subr.bf16.mxu0 0
  %7793 = vmatpush1.bf16.msra.mxu0 %v7638
  %7794 = vmatprep.subr.bf16.mxu0 0
  %7795 = vmatpush1.bf16.msra.mxu0 %v7637
  %7796 = vmatprep.subr.bf16.mxu0 0
  %7797 = vmatpush1.bf16.msra.mxu0 %v7636
  %7798 = vmatprep.subr.bf16.mxu0 0
  %7799 = vmatpush1.bf16.msra.mxu0 %v7635
  %7800 = vmatprep.subr.bf16.mxu0 0
  %7801 = vmatpush1.bf16.msra.mxu0 %v7634
  %7802 = vmatprep.subr.bf16.mxu0 0
  %7803 = vmatpush1.bf16.msra.mxu0 %v7633
  %7804 = vmatprep.subr.bf16.mxu0 0
  %7805 = vmatpush1.bf16.msra.mxu0 %v7632
  %7806 = vmatprep.subr.bf16.mxu0 0
  %7807 = vmatpush1.bf16.msra.mxu0 %v7631
  %7808 = vmatprep.subr.bf16.mxu0 0
  %7809 = vmatpush2.bf16.msra.mxu0 %v7646
  %7810 = vmatprep.subr.bf16.mxu0 0
  %7811 = vmatpush2.bf16.msra.mxu0 %v7645
  %7812 = vmatprep.subr.bf16.mxu0 0
  %7813 = vmatpush2.bf16.msra.mxu0 %v7644
  %7814 = vmatprep.subr.bf16.mxu0 0
  %7815 = vmatpush2.bf16.msra.mxu0 %v7643
  %7816 = vmatprep.subr.bf16.mxu0 0
  %7817 = vmatpush2.bf16.msra.mxu0 %v7642
  %7818 = vmatprep.subr.bf16.mxu0 0
  %7819 = vmatpush2.bf16.msra.mxu0 %v7641
  %7820 = vmatprep.subr.bf16.mxu0 0
  %7821 = vmatpush2.bf16.msra.mxu0 %v7640
  %7822 = vmatprep.subr.bf16.mxu0 0
  %7823 = vmatpush2.bf16.msra.mxu0 %v7639
  %7824 = vmatprep.mubr.bf16.mxu0 %v7330
  %7825 = vmatmul.mubr.bf16.gmra.mxu0 %v7329
  %v7826 = vpop.f32.mrf.mxu0
  %v7827 = vadd.f32 %v7778, %v7826
  %v7828 = vpop.f32.mrf.mxu0
  %v7829 = vpop.f32.mrf.mxu0
  %v7830 = vadd.f32 %v7781, %v7829
  %v7831 = vpop.f32.mrf.mxu0
  %7832 = vmatprep.mubr.bf16.mxu0 %v7338
  %7833 = vmatmul.mubr.bf16.gmra.mxu0 %v7337
  %v7834 = vpop.f32.mrf.mxu0
  %v7835 = vadd.f32 %v7786, %v7834
  %v7836 = vpop.f32.mrf.mxu0
  %v7837 = vpop.f32.mrf.mxu0
  %v7838 = vadd.f32 %v7789, %v7837
  %v7839 = vpop.f32.mrf.mxu0
  %7840 = vdwg.mxu0
  %7841 = vmatprep.subr.bf16.mxu0 0
  %7842 = vmatpush1.bf16.msra.mxu0 %v7654
  %7843 = vmatprep.subr.bf16.mxu0 0
  %7844 = vmatpush1.bf16.msra.mxu0 %v7653
  %7845 = vmatprep.subr.bf16.mxu0 0
  %7846 = vmatpush1.bf16.msra.mxu0 %v7652
  %7847 = vmatprep.subr.bf16.mxu0 0
  %7848 = vmatpush1.bf16.msra.mxu0 %v7651
  %7849 = vmatprep.subr.bf16.mxu0 0
  %7850 = vmatpush1.bf16.msra.mxu0 %v7650
  %7851 = vmatprep.subr.bf16.mxu0 0
  %7852 = vmatpush1.bf16.msra.mxu0 %v7649
  %7853 = vmatprep.subr.bf16.mxu0 0
  %7854 = vmatpush1.bf16.msra.mxu0 %v7648
  %7855 = vmatprep.subr.bf16.mxu0 0
  %7856 = vmatpush1.bf16.msra.mxu0 %v7647
  %7857 = vmatprep.subr.bf16.mxu0 0
  %7858 = vmatpush2.bf16.msra.mxu0 %v7662
  %7859 = vmatprep.subr.bf16.mxu0 0
  %7860 = vmatpush2.bf16.msra.mxu0 %v7661
  %7861 = vmatprep.subr.bf16.mxu0 0
  %7862 = vmatpush2.bf16.msra.mxu0 %v7660
  %7863 = vmatprep.subr.bf16.mxu0 0
  %7864 = vmatpush2.bf16.msra.mxu0 %v7659
  %7865 = vmatprep.subr.bf16.mxu0 0
  %7866 = vmatpush2.bf16.msra.mxu0 %v7658
  %7867 = vmatprep.subr.bf16.mxu0 0
  %7868 = vmatpush2.bf16.msra.mxu0 %v7657
  %7869 = vmatprep.subr.bf16.mxu0 0
  %7870 = vmatpush2.bf16.msra.mxu0 %v7656
  %7871 = vmatprep.subr.bf16.mxu0 0
  %7872 = vmatpush2.bf16.msra.mxu0 %v7655
  %7873 = vmatprep.mubr.bf16.mxu0 %v7332
  %7874 = vmatmul.mubr.bf16.gmra.mxu0 %v7331
  %v7875 = vpop.f32.mrf.mxu0
  %v7876 = vadd.f32 %v7827, %v7875
  %v7877 = vpop.f32.mrf.mxu0
  %v7878 = vpop.f32.mrf.mxu0
  %v7879 = vadd.f32 %v7830, %v7878
  %v7880 = vpop.f32.mrf.mxu0
  %7881 = vmatprep.mubr.bf16.mxu0 %v7340
  %7882 = vmatmul.mubr.bf16.gmra.mxu0 %v7339
  %v7883 = vpop.f32.mrf.mxu0
  %v7884 = vadd.f32 %v7835, %v7883
  %v7885 = vpop.f32.mrf.mxu0
  %v7886 = vpop.f32.mrf.mxu0
  %v7887 = vadd.f32 %v7838, %v7886
  %v7888 = vpop.f32.mrf.mxu0
  %7889 = vdwg.mxu0
  %7890 = vmatprep.subr.bf16.mxu0 0
  %7891 = vmatpush1.bf16.msra.mxu0 %v7670
  %7892 = vmatprep.subr.bf16.mxu0 0
  %7893 = vmatpush1.bf16.msra.mxu0 %v7669
  %7894 = vmatprep.subr.bf16.mxu0 0
  %7895 = vmatpush1.bf16.msra.mxu0 %v7668
  %7896 = vmatprep.subr.bf16.mxu0 0
  %7897 = vmatpush1.bf16.msra.mxu0 %v7667
  %7898 = vmatprep.subr.bf16.mxu0 0
  %7899 = vmatpush1.bf16.msra.mxu0 %v7666
  %7900 = vmatprep.subr.bf16.mxu0 0
  %7901 = vmatpush1.bf16.msra.mxu0 %v7665
  %7902 = vmatprep.subr.bf16.mxu0 0
  %7903 = vmatpush1.bf16.msra.mxu0 %v7664
  %7904 = vmatprep.subr.bf16.mxu0 0
  %7905 = vmatpush1.bf16.msra.mxu0 %v7663
  %7906 = vmatprep.subr.bf16.mxu0 0
  %7907 = vmatpush2.bf16.msra.mxu0 %v7678
  %7908 = vmatprep.subr.bf16.mxu0 0
  %7909 = vmatpush2.bf16.msra.mxu0 %v7677
  %7910 = vmatprep.subr.bf16.mxu0 0
  %7911 = vmatpush2.bf16.msra.mxu0 %v7676
  %7912 = vmatprep.subr.bf16.mxu0 0
  %7913 = vmatpush2.bf16.msra.mxu0 %v7675
  %7914 = vmatprep.subr.bf16.mxu0 0
  %7915 = vmatpush2.bf16.msra.mxu0 %v7674
  %7916 = vmatprep.subr.bf16.mxu0 0
  %7917 = vmatpush2.bf16.msra.mxu0 %v7673
  %7918 = vmatprep.subr.bf16.mxu0 0
  %7919 = vmatpush2.bf16.msra.mxu0 %v7672
  %7920 = vmatprep.subr.bf16.mxu0 0
  %7921 = vmatpush2.bf16.msra.mxu0 %v7671
  %7922 = vmatprep.mubr.bf16.mxu0 %v7334
  %7923 = vmatmul.mubr.bf16.gmra.mxu0 %v7333
  %v7924 = vpop.f32.mrf.mxu0
  %v7925 = vadd.f32 %v7876, %v7924
  %v7926 = vpop.f32.mrf.mxu0
  %v7927 = vpop.f32.mrf.mxu0
  %v7928 = vadd.f32 %v7879, %v7927
  %v7929 = vpop.f32.mrf.mxu0
  %7930 = vmatprep.mubr.bf16.mxu0 %v7342
  %7931 = vmatmul.mubr.bf16.gmra.mxu0 %v7341
  %v7932 = vpop.f32.mrf.mxu0
  %v7933 = vadd.f32 %v7884, %v7932
  %v7934 = vpop.f32.mrf.mxu0
  %v7935 = vpop.f32.mrf.mxu0
  %v7936 = vadd.f32 %v7887, %v7935
  %v7937 = vpop.f32.mrf.mxu0
  %7938 = vdwg.mxu0
  %s7939 = scalar_lea.vmem %s5, 512
  %v7940 = vld [vmem:[%s7939] sm:$0xf]
  %v7941 = vld [vmem:[%s7939 + $0x4] sm:$0xf]
  %v7942 = vld [vmem:[%s7939 + $0x8] sm:$0xf]
  %v7943 = vld [vmem:[%s7939 + $0xc] sm:$0xf]
  %v7944 = vld [vmem:[%s7939 + $0x10] sm:$0xf]
  %v7945 = vld [vmem:[%s7939 + $0x14] sm:$0xf]
  %v7946 = vld [vmem:[%s7939 + $0x18] sm:$0xf]
  %v7947 = vld [vmem:[%s7939 + $0x1c] sm:$0xf]
  %v7948 = vld [vmem:[%s7939 + $0x20] sm:$0xf]
  %v7949 = vld [vmem:[%s7939 + $0x24] sm:$0xf]
  %v7950 = vld [vmem:[%s7939 + $0x28] sm:$0xf]
  %v7951 = vld [vmem:[%s7939 + $0x2c] sm:$0xf]
  %v7952 = vld [vmem:[%s7939 + $0x30] sm:$0xf]
  %v7953 = vld [vmem:[%s7939 + $0x34] sm:$0xf]
  %v7954 = vld [vmem:[%s7939 + $0x38] sm:$0xf]
  %v7955 = vld [vmem:[%s7939 + $0x3c] sm:$0xf]
  %v7956 = vld [vmem:[%s7939 + $0x40] sm:$0xf]
  %v7957 = vld [vmem:[%s7939 + $0x44] sm:$0xf]
  %v7958 = vld [vmem:[%s7939 + $0x48] sm:$0xf]
  %v7959 = vld [vmem:[%s7939 + $0x4c] sm:$0xf]
  %v7960 = vld [vmem:[%s7939 + $0x50] sm:$0xf]
  %v7961 = vld [vmem:[%s7939 + $0x54] sm:$0xf]
  %v7962 = vld [vmem:[%s7939 + $0x58] sm:$0xf]
  %v7963 = vld [vmem:[%s7939 + $0x5c] sm:$0xf]
  %v7964 = vld [vmem:[%s7939 + $0x60] sm:$0xf]
  %v7965 = vld [vmem:[%s7939 + $0x64] sm:$0xf]
  %v7966 = vld [vmem:[%s7939 + $0x68] sm:$0xf]
  %v7967 = vld [vmem:[%s7939 + $0x6c] sm:$0xf]
  %v7968 = vld [vmem:[%s7939 + $0x70] sm:$0xf]
  %v7969 = vld [vmem:[%s7939 + $0x74] sm:$0xf]
  %v7970 = vld [vmem:[%s7939 + $0x78] sm:$0xf]
  %v7971 = vld [vmem:[%s7939 + $0x7c] sm:$0xf]
  %v7972 = vld [vmem:[%s7939 + $0x80] sm:$0xf]
  %v7973 = vld [vmem:[%s7939 + $0x84] sm:$0xf]
  %v7974 = vld [vmem:[%s7939 + $0x88] sm:$0xf]
  %v7975 = vld [vmem:[%s7939 + $0x8c] sm:$0xf]
  %v7976 = vld [vmem:[%s7939 + $0x90] sm:$0xf]
  %v7977 = vld [vmem:[%s7939 + $0x94] sm:$0xf]
  %v7978 = vld [vmem:[%s7939 + $0x98] sm:$0xf]
  %v7979 = vld [vmem:[%s7939 + $0x9c] sm:$0xf]
  %v7980 = vld [vmem:[%s7939 + $0xa0] sm:$0xf]
  %v7981 = vld [vmem:[%s7939 + $0xa4] sm:$0xf]
  %v7982 = vld [vmem:[%s7939 + $0xa8] sm:$0xf]
  %v7983 = vld [vmem:[%s7939 + $0xac] sm:$0xf]
  %v7984 = vld [vmem:[%s7939 + $0xb0] sm:$0xf]
  %v7985 = vld [vmem:[%s7939 + $0xb4] sm:$0xf]
  %v7986 = vld [vmem:[%s7939 + $0xb8] sm:$0xf]
  %v7987 = vld [vmem:[%s7939 + $0xbc] sm:$0xf]
  %v7988 = vld [vmem:[%s7939 + $0xc0] sm:$0xf]
  %v7989 = vld [vmem:[%s7939 + $0xc4] sm:$0xf]
  %v7990 = vld [vmem:[%s7939 + $0xc8] sm:$0xf]
  %v7991 = vld [vmem:[%s7939 + $0xcc] sm:$0xf]
  %v7992 = vld [vmem:[%s7939 + $0xd0] sm:$0xf]
  %v7993 = vld [vmem:[%s7939 + $0xd4] sm:$0xf]
  %v7994 = vld [vmem:[%s7939 + $0xd8] sm:$0xf]
  %v7995 = vld [vmem:[%s7939 + $0xdc] sm:$0xf]
  %v7996 = vld [vmem:[%s7939 + $0xe0] sm:$0xf]
  %v7997 = vld [vmem:[%s7939 + $0xe4] sm:$0xf]
  %v7998 = vld [vmem:[%s7939 + $0xe8] sm:$0xf]
  %v7999 = vld [vmem:[%s7939 + $0xec] sm:$0xf]
  %v8000 = vld [vmem:[%s7939 + $0xf0] sm:$0xf]
  %v8001 = vld [vmem:[%s7939 + $0xf4] sm:$0xf]
  %v8002 = vld [vmem:[%s7939 + $0xf8] sm:$0xf]
  %v8003 = vld [vmem:[%s7939 + $0xfc] sm:$0xf]
  %v8004 = vld [vmem:[%s7939 + $0x100] sm:$0xf]
  %v8005 = vld [vmem:[%s7939 + $0x104] sm:$0xf]
  %v8006 = vld [vmem:[%s7939 + $0x108] sm:$0xf]
  %v8007 = vld [vmem:[%s7939 + $0x10c] sm:$0xf]
  %v8008 = vld [vmem:[%s7939 + $0x110] sm:$0xf]
  %v8009 = vld [vmem:[%s7939 + $0x114] sm:$0xf]
  %v8010 = vld [vmem:[%s7939 + $0x118] sm:$0xf]
  %v8011 = vld [vmem:[%s7939 + $0x11c] sm:$0xf]
  %v8012 = vld [vmem:[%s7939 + $0x120] sm:$0xf]
  %v8013 = vld [vmem:[%s7939 + $0x124] sm:$0xf]
  %v8014 = vld [vmem:[%s7939 + $0x128] sm:$0xf]
  %v8015 = vld [vmem:[%s7939 + $0x12c] sm:$0xf]
  %v8016 = vld [vmem:[%s7939 + $0x130] sm:$0xf]
  %v8017 = vld [vmem:[%s7939 + $0x134] sm:$0xf]
  %v8018 = vld [vmem:[%s7939 + $0x138] sm:$0xf]
  %v8019 = vld [vmem:[%s7939 + $0x13c] sm:$0xf]
  %v8020 = vld [vmem:[%s7939 + $0x140] sm:$0xf]
  %v8021 = vld [vmem:[%s7939 + $0x144] sm:$0xf]
  %v8022 = vld [vmem:[%s7939 + $0x148] sm:$0xf]
  %v8023 = vld [vmem:[%s7939 + $0x14c] sm:$0xf]
  %v8024 = vld [vmem:[%s7939 + $0x150] sm:$0xf]
  %v8025 = vld [vmem:[%s7939 + $0x154] sm:$0xf]
  %v8026 = vld [vmem:[%s7939 + $0x158] sm:$0xf]
  %v8027 = vld [vmem:[%s7939 + $0x15c] sm:$0xf]
  %v8028 = vld [vmem:[%s7939 + $0x160] sm:$0xf]
  %v8029 = vld [vmem:[%s7939 + $0x164] sm:$0xf]
  %v8030 = vld [vmem:[%s7939 + $0x168] sm:$0xf]
  %v8031 = vld [vmem:[%s7939 + $0x16c] sm:$0xf]
  %v8032 = vld [vmem:[%s7939 + $0x170] sm:$0xf]
  %v8033 = vld [vmem:[%s7939 + $0x174] sm:$0xf]
  %v8034 = vld [vmem:[%s7939 + $0x178] sm:$0xf]
  %v8035 = vld [vmem:[%s7939 + $0x17c] sm:$0xf]
  %v8036 = vld [vmem:[%s7939 + $0x180] sm:$0xf]
  %v8037 = vld [vmem:[%s7939 + $0x184] sm:$0xf]
  %v8038 = vld [vmem:[%s7939 + $0x188] sm:$0xf]
  %v8039 = vld [vmem:[%s7939 + $0x18c] sm:$0xf]
  %v8040 = vld [vmem:[%s7939 + $0x190] sm:$0xf]
  %v8041 = vld [vmem:[%s7939 + $0x194] sm:$0xf]
  %v8042 = vld [vmem:[%s7939 + $0x198] sm:$0xf]
  %v8043 = vld [vmem:[%s7939 + $0x19c] sm:$0xf]
  %v8044 = vld [vmem:[%s7939 + $0x1a0] sm:$0xf]
  %v8045 = vld [vmem:[%s7939 + $0x1a4] sm:$0xf]
  %v8046 = vld [vmem:[%s7939 + $0x1a8] sm:$0xf]
  %v8047 = vld [vmem:[%s7939 + $0x1ac] sm:$0xf]
  %v8048 = vld [vmem:[%s7939 + $0x1b0] sm:$0xf]
  %v8049 = vld [vmem:[%s7939 + $0x1b4] sm:$0xf]
  %v8050 = vld [vmem:[%s7939 + $0x1b8] sm:$0xf]
  %v8051 = vld [vmem:[%s7939 + $0x1bc] sm:$0xf]
  %v8052 = vld [vmem:[%s7939 + $0x1c0] sm:$0xf]
  %v8053 = vld [vmem:[%s7939 + $0x1c4] sm:$0xf]
  %v8054 = vld [vmem:[%s7939 + $0x1c8] sm:$0xf]
  %v8055 = vld [vmem:[%s7939 + $0x1cc] sm:$0xf]
  %v8056 = vld [vmem:[%s7939 + $0x1d0] sm:$0xf]
  %v8057 = vld [vmem:[%s7939 + $0x1d4] sm:$0xf]
  %v8058 = vld [vmem:[%s7939 + $0x1d8] sm:$0xf]
  %v8059 = vld [vmem:[%s7939 + $0x1dc] sm:$0xf]
  %v8060 = vld [vmem:[%s7939 + $0x1e0] sm:$0xf]
  %v8061 = vld [vmem:[%s7939 + $0x1e4] sm:$0xf]
  %v8062 = vld [vmem:[%s7939 + $0x1e8] sm:$0xf]
  %v8063 = vld [vmem:[%s7939 + $0x1ec] sm:$0xf]
  %v8064 = vld [vmem:[%s7939 + $0x1f0] sm:$0xf]
  %v8065 = vld [vmem:[%s7939 + $0x1f4] sm:$0xf]
  %v8066 = vld [vmem:[%s7939 + $0x1f8] sm:$0xf]
  %v8067 = vld [vmem:[%s7939 + $0x1fc] sm:$0xf]
  %v8196 = vunpack.c.l.b16 %v7940
  %v8197 = vunpack.c.l.b16 %v7941
  %v8198 = vunpack.c.l.b16 %v7942
  %v8199 = vunpack.c.l.b16 %v7943
  %v8200 = vunpack.c.l.b16 %v7944
  %v8201 = vunpack.c.l.b16 %v7945
  %v8202 = vunpack.c.l.b16 %v7946
  %v8203 = vunpack.c.l.b16 %v7947
  %v8204 = vunpack.c.l.b16 %v7948
  %v8205 = vunpack.c.l.b16 %v7949
  %v8206 = vunpack.c.l.b16 %v7950
  %v8207 = vunpack.c.l.b16 %v7951
  %v8208 = vunpack.c.l.b16 %v7952
  %v8209 = vunpack.c.l.b16 %v7953
  %v8210 = vunpack.c.l.b16 %v7954
  %v8211 = vunpack.c.l.b16 %v7955
  %v8212 = vunpack.c.l.b16 %v7956
  %v8213 = vunpack.c.l.b16 %v7957
  %v8214 = vunpack.c.l.b16 %v7958
  %v8215 = vunpack.c.l.b16 %v7959
  %v8216 = vunpack.c.l.b16 %v7960
  %v8217 = vunpack.c.l.b16 %v7961
  %v8218 = vunpack.c.l.b16 %v7962
  %v8219 = vunpack.c.l.b16 %v7963
  %v8220 = vunpack.c.l.b16 %v7964
  %v8221 = vunpack.c.l.b16 %v7965
  %v8222 = vunpack.c.l.b16 %v7966
  %v8223 = vunpack.c.l.b16 %v7967
  %v8224 = vunpack.c.l.b16 %v7968
  %v8225 = vunpack.c.l.b16 %v7969
  %v8226 = vunpack.c.l.b16 %v7970
  %v8227 = vunpack.c.l.b16 %v7971
  %v8228 = vunpack.c.l.b16 %v7972
  %v8229 = vunpack.c.l.b16 %v7973
  %v8230 = vunpack.c.l.b16 %v7974
  %v8231 = vunpack.c.l.b16 %v7975
  %v8232 = vunpack.c.l.b16 %v7976
  %v8233 = vunpack.c.l.b16 %v7977
  %v8234 = vunpack.c.l.b16 %v7978
  %v8235 = vunpack.c.l.b16 %v7979
  %v8236 = vunpack.c.l.b16 %v7980
  %v8237 = vunpack.c.l.b16 %v7981
  %v8238 = vunpack.c.l.b16 %v7982
  %v8239 = vunpack.c.l.b16 %v7983
  %v8240 = vunpack.c.l.b16 %v7984
  %v8241 = vunpack.c.l.b16 %v7985
  %v8242 = vunpack.c.l.b16 %v7986
  %v8243 = vunpack.c.l.b16 %v7987
  %v8244 = vunpack.c.l.b16 %v7988
  %v8245 = vunpack.c.l.b16 %v7989
  %v8246 = vunpack.c.l.b16 %v7990
  %v8247 = vunpack.c.l.b16 %v7991
  %v8248 = vunpack.c.l.b16 %v7992
  %v8249 = vunpack.c.l.b16 %v7993
  %v8250 = vunpack.c.l.b16 %v7994
  %v8251 = vunpack.c.l.b16 %v7995
  %v8252 = vunpack.c.l.b16 %v7996
  %v8253 = vunpack.c.l.b16 %v7997
  %v8254 = vunpack.c.l.b16 %v7998
  %v8255 = vunpack.c.l.b16 %v7999
  %v8256 = vunpack.c.l.b16 %v8000
  %v8257 = vunpack.c.l.b16 %v8001
  %v8258 = vunpack.c.l.b16 %v8002
  %v8259 = vunpack.c.l.b16 %v8003
  %v8260 = vunpack.c.l.b16 %v8004
  %v8261 = vunpack.c.l.b16 %v8005
  %v8262 = vunpack.c.l.b16 %v8006
  %v8263 = vunpack.c.l.b16 %v8007
  %v8264 = vunpack.c.l.b16 %v8008
  %v8265 = vunpack.c.l.b16 %v8009
  %v8266 = vunpack.c.l.b16 %v8010
  %v8267 = vunpack.c.l.b16 %v8011
  %v8268 = vunpack.c.l.b16 %v8012
  %v8269 = vunpack.c.l.b16 %v8013
  %v8270 = vunpack.c.l.b16 %v8014
  %v8271 = vunpack.c.l.b16 %v8015
  %v8272 = vunpack.c.l.b16 %v8016
  %v8273 = vunpack.c.l.b16 %v8017
  %v8274 = vunpack.c.l.b16 %v8018
  %v8275 = vunpack.c.l.b16 %v8019
  %v8276 = vunpack.c.l.b16 %v8020
  %v8277 = vunpack.c.l.b16 %v8021
  %v8278 = vunpack.c.l.b16 %v8022
  %v8279 = vunpack.c.l.b16 %v8023
  %v8280 = vunpack.c.l.b16 %v8024
  %v8281 = vunpack.c.l.b16 %v8025
  %v8282 = vunpack.c.l.b16 %v8026
  %v8283 = vunpack.c.l.b16 %v8027
  %v8284 = vunpack.c.l.b16 %v8028
  %v8285 = vunpack.c.l.b16 %v8029
  %v8286 = vunpack.c.l.b16 %v8030
  %v8287 = vunpack.c.l.b16 %v8031
  %v8288 = vunpack.c.l.b16 %v8032
  %v8289 = vunpack.c.l.b16 %v8033
  %v8290 = vunpack.c.l.b16 %v8034
  %v8291 = vunpack.c.l.b16 %v8035
  %v8292 = vunpack.c.l.b16 %v8036
  %v8293 = vunpack.c.l.b16 %v8037
  %v8294 = vunpack.c.l.b16 %v8038
  %v8295 = vunpack.c.l.b16 %v8039
  %v8296 = vunpack.c.l.b16 %v8040
  %v8297 = vunpack.c.l.b16 %v8041
  %v8298 = vunpack.c.l.b16 %v8042
  %v8299 = vunpack.c.l.b16 %v8043
  %v8300 = vunpack.c.l.b16 %v8044
  %v8301 = vunpack.c.l.b16 %v8045
  %v8302 = vunpack.c.l.b16 %v8046
  %v8303 = vunpack.c.l.b16 %v8047
  %v8304 = vunpack.c.l.b16 %v8048
  %v8305 = vunpack.c.l.b16 %v8049
  %v8306 = vunpack.c.l.b16 %v8050
  %v8307 = vunpack.c.l.b16 %v8051
  %v8308 = vunpack.c.l.b16 %v8052
  %v8309 = vunpack.c.l.b16 %v8053
  %v8310 = vunpack.c.l.b16 %v8054
  %v8311 = vunpack.c.l.b16 %v8055
  %v8312 = vunpack.c.l.b16 %v8056
  %v8313 = vunpack.c.l.b16 %v8057
  %v8314 = vunpack.c.l.b16 %v8058
  %v8315 = vunpack.c.l.b16 %v8059
  %v8316 = vunpack.c.l.b16 %v8060
  %v8317 = vunpack.c.l.b16 %v8061
  %v8318 = vunpack.c.l.b16 %v8062
  %v8319 = vunpack.c.l.b16 %v8063
  %v8320 = vunpack.c.l.b16 %v8064
  %v8321 = vunpack.c.l.b16 %v8065
  %v8322 = vunpack.c.l.b16 %v8066
  %v8323 = vunpack.c.l.b16 %v8067
  %v8324 = vpack.c.b16 %v8197, %v8196
  %v8325 = vpack.c.b16 %v8199, %v8198
  %v8326 = vpack.c.b16 %v8201, %v8200
  %v8327 = vpack.c.b16 %v8203, %v8202
  %v8328 = vpack.c.b16 %v8205, %v8204
  %v8329 = vpack.c.b16 %v8207, %v8206
  %v8330 = vpack.c.b16 %v8209, %v8208
  %v8331 = vpack.c.b16 %v8211, %v8210
  %v8332 = vpack.c.b16 %v8213, %v8212
  %v8333 = vpack.c.b16 %v8215, %v8214
  %v8334 = vpack.c.b16 %v8217, %v8216
  %v8335 = vpack.c.b16 %v8219, %v8218
  %v8336 = vpack.c.b16 %v8221, %v8220
  %v8337 = vpack.c.b16 %v8223, %v8222
  %v8338 = vpack.c.b16 %v8225, %v8224
  %v8339 = vpack.c.b16 %v8227, %v8226
  %v8340 = vpack.c.b16 %v8229, %v8228
  %v8341 = vpack.c.b16 %v8231, %v8230
  %v8342 = vpack.c.b16 %v8233, %v8232
  %v8343 = vpack.c.b16 %v8235, %v8234
  %v8344 = vpack.c.b16 %v8237, %v8236
  %v8345 = vpack.c.b16 %v8239, %v8238
  %v8346 = vpack.c.b16 %v8241, %v8240
  %v8347 = vpack.c.b16 %v8243, %v8242
  %v8348 = vpack.c.b16 %v8245, %v8244
  %v8349 = vpack.c.b16 %v8247, %v8246
  %v8350 = vpack.c.b16 %v8249, %v8248
  %v8351 = vpack.c.b16 %v8251, %v8250
  %v8352 = vpack.c.b16 %v8253, %v8252
  %v8353 = vpack.c.b16 %v8255, %v8254
  %v8354 = vpack.c.b16 %v8257, %v8256
  %v8355 = vpack.c.b16 %v8259, %v8258
  %v8356 = vpack.c.b16 %v8261, %v8260
  %v8357 = vpack.c.b16 %v8263, %v8262
  %v8358 = vpack.c.b16 %v8265, %v8264
  %v8359 = vpack.c.b16 %v8267, %v8266
  %v8360 = vpack.c.b16 %v8269, %v8268
  %v8361 = vpack.c.b16 %v8271, %v8270
  %v8362 = vpack.c.b16 %v8273, %v8272
  %v8363 = vpack.c.b16 %v8275, %v8274
  %v8364 = vpack.c.b16 %v8277, %v8276
  %v8365 = vpack.c.b16 %v8279, %v8278
  %v8366 = vpack.c.b16 %v8281, %v8280
  %v8367 = vpack.c.b16 %v8283, %v8282
  %v8368 = vpack.c.b16 %v8285, %v8284
  %v8369 = vpack.c.b16 %v8287, %v8286
  %v8370 = vpack.c.b16 %v8289, %v8288
  %v8371 = vpack.c.b16 %v8291, %v8290
  %v8372 = vpack.c.b16 %v8293, %v8292
  %v8373 = vpack.c.b16 %v8295, %v8294
  %v8374 = vpack.c.b16 %v8297, %v8296
  %v8375 = vpack.c.b16 %v8299, %v8298
  %v8376 = vpack.c.b16 %v8301, %v8300
  %v8377 = vpack.c.b16 %v8303, %v8302
  %v8378 = vpack.c.b16 %v8305, %v8304
  %v8379 = vpack.c.b16 %v8307, %v8306
  %v8380 = vpack.c.b16 %v8309, %v8308
  %v8381 = vpack.c.b16 %v8311, %v8310
  %v8382 = vpack.c.b16 %v8313, %v8312
  %v8383 = vpack.c.b16 %v8315, %v8314
  %v8384 = vpack.c.b16 %v8317, %v8316
  %v8385 = vpack.c.b16 %v8319, %v8318
  %v8386 = vpack.c.b16 %v8321, %v8320
  %v8387 = vpack.c.b16 %v8323, %v8322
  %8452 = vmatprep.subr.bf16.mxu0 0
  %8453 = vmatpush1.bf16.msra.mxu0 %v8331
  %8454 = vmatprep.subr.bf16.mxu0 0
  %8455 = vmatpush1.bf16.msra.mxu0 %v8330
  %8456 = vmatprep.subr.bf16.mxu0 0
  %8457 = vmatpush1.bf16.msra.mxu0 %v8329
  %8458 = vmatprep.subr.bf16.mxu0 0
  %8459 = vmatpush1.bf16.msra.mxu0 %v8328
  %8460 = vmatprep.subr.bf16.mxu0 0
  %8461 = vmatpush1.bf16.msra.mxu0 %v8327
  %8462 = vmatprep.subr.bf16.mxu0 0
  %8463 = vmatpush1.bf16.msra.mxu0 %v8326
  %8464 = vmatprep.subr.bf16.mxu0 0
  %8465 = vmatpush1.bf16.msra.mxu0 %v8325
  %8466 = vmatprep.subr.bf16.mxu0 0
  %8467 = vmatpush1.bf16.msra.mxu0 %v8324
  %8468 = vmatprep.subr.bf16.mxu0 0
  %8469 = vmatpush2.bf16.msra.mxu0 %v8339
  %8470 = vmatprep.subr.bf16.mxu0 0
  %8471 = vmatpush2.bf16.msra.mxu0 %v8338
  %8472 = vmatprep.subr.bf16.mxu0 0
  %8473 = vmatpush2.bf16.msra.mxu0 %v8337
  %8474 = vmatprep.subr.bf16.mxu0 0
  %8475 = vmatpush2.bf16.msra.mxu0 %v8336
  %8476 = vmatprep.subr.bf16.mxu0 0
  %8477 = vmatpush2.bf16.msra.mxu0 %v8335
  %8478 = vmatprep.subr.bf16.mxu0 0
  %8479 = vmatpush2.bf16.msra.mxu0 %v8334
  %8480 = vmatprep.subr.bf16.mxu0 0
  %8481 = vmatpush2.bf16.msra.mxu0 %v8333
  %8482 = vmatprep.subr.bf16.mxu0 0
  %8483 = vmatpush2.bf16.msra.mxu0 %v8332
  %8484 = vmatprep.mubr.bf16.mxu0 %v7328
  %8485 = vmatmul.mubr.bf16.gmra.mxu0 %v7327
  %v8486 = vpop.f32.mrf.mxu0
  %v8487 = vadd.f32 0.0, %v8486
  %v8488 = vpop.f32.mrf.mxu0
  %v8489 = vpop.f32.mrf.mxu0
  %v8490 = vadd.f32 0.0, %v8489
  %v8491 = vpop.f32.mrf.mxu0
  %8492 = vmatprep.mubr.bf16.mxu0 %v7336
  %8493 = vmatmul.mubr.bf16.gmra.mxu0 %v7335
  %v8494 = vpop.f32.mrf.mxu0
  %v8495 = vadd.f32 0.0, %v8494
  %v8496 = vpop.f32.mrf.mxu0
  %v8497 = vpop.f32.mrf.mxu0
  %v8498 = vadd.f32 0.0, %v8497
  %v8499 = vpop.f32.mrf.mxu0
  %8500 = vdwg.mxu0
  %8501 = vmatprep.subr.bf16.mxu0 0
  %8502 = vmatpush1.bf16.msra.mxu0 %v8347
  %8503 = vmatprep.subr.bf16.mxu0 0
  %8504 = vmatpush1.bf16.msra.mxu0 %v8346
  %8505 = vmatprep.subr.bf16.mxu0 0
  %8506 = vmatpush1.bf16.msra.mxu0 %v8345
  %8507 = vmatprep.subr.bf16.mxu0 0
  %8508 = vmatpush1.bf16.msra.mxu0 %v8344
  %8509 = vmatprep.subr.bf16.mxu0 0
  %8510 = vmatpush1.bf16.msra.mxu0 %v8343
  %8511 = vmatprep.subr.bf16.mxu0 0
  %8512 = vmatpush1.bf16.msra.mxu0 %v8342
  %8513 = vmatprep.subr.bf16.mxu0 0
  %8514 = vmatpush1.bf16.msra.mxu0 %v8341
  %8515 = vmatprep.subr.bf16.mxu0 0
  %8516 = vmatpush1.bf16.msra.mxu0 %v8340
  %8517 = vmatprep.subr.bf16.mxu0 0
  %8518 = vmatpush2.bf16.msra.mxu0 %v8355
  %8519 = vmatprep.subr.bf16.mxu0 0
  %8520 = vmatpush2.bf16.msra.mxu0 %v8354
  %8521 = vmatprep.subr.bf16.mxu0 0
  %8522 = vmatpush2.bf16.msra.mxu0 %v8353
  %8523 = vmatprep.subr.bf16.mxu0 0
  %8524 = vmatpush2.bf16.msra.mxu0 %v8352
  %8525 = vmatprep.subr.bf16.mxu0 0
  %8526 = vmatpush2.bf16.msra.mxu0 %v8351
  %8527 = vmatprep.subr.bf16.mxu0 0
  %8528 = vmatpush2.bf16.msra.mxu0 %v8350
  %8529 = vmatprep.subr.bf16.mxu0 0
  %8530 = vmatpush2.bf16.msra.mxu0 %v8349
  %8531 = vmatprep.subr.bf16.mxu0 0
  %8532 = vmatpush2.bf16.msra.mxu0 %v8348
  %8533 = vmatprep.mubr.bf16.mxu0 %v7330
  %8534 = vmatmul.mubr.bf16.gmra.mxu0 %v7329
  %v8535 = vpop.f32.mrf.mxu0
  %v8536 = vadd.f32 %v8487, %v8535
  %v8537 = vpop.f32.mrf.mxu0
  %v8538 = vpop.f32.mrf.mxu0
  %v8539 = vadd.f32 %v8490, %v8538
  %v8540 = vpop.f32.mrf.mxu0
  %8541 = vmatprep.mubr.bf16.mxu0 %v7338
  %8542 = vmatmul.mubr.bf16.gmra.mxu0 %v7337
  %v8543 = vpop.f32.mrf.mxu0
  %v8544 = vadd.f32 %v8495, %v8543
  %v8545 = vpop.f32.mrf.mxu0
  %v8546 = vpop.f32.mrf.mxu0
  %v8547 = vadd.f32 %v8498, %v8546
  %v8548 = vpop.f32.mrf.mxu0
  %8549 = vdwg.mxu0
  %8550 = vmatprep.subr.bf16.mxu0 0
  %8551 = vmatpush1.bf16.msra.mxu0 %v8363
  %8552 = vmatprep.subr.bf16.mxu0 0
  %8553 = vmatpush1.bf16.msra.mxu0 %v8362
  %8554 = vmatprep.subr.bf16.mxu0 0
  %8555 = vmatpush1.bf16.msra.mxu0 %v8361
  %8556 = vmatprep.subr.bf16.mxu0 0
  %8557 = vmatpush1.bf16.msra.mxu0 %v8360
  %8558 = vmatprep.subr.bf16.mxu0 0
  %8559 = vmatpush1.bf16.msra.mxu0 %v8359
  %8560 = vmatprep.subr.bf16.mxu0 0
  %8561 = vmatpush1.bf16.msra.mxu0 %v8358
  %8562 = vmatprep.subr.bf16.mxu0 0
  %8563 = vmatpush1.bf16.msra.mxu0 %v8357
  %8564 = vmatprep.subr.bf16.mxu0 0
  %8565 = vmatpush1.bf16.msra.mxu0 %v8356
  %8566 = vmatprep.subr.bf16.mxu0 0
  %8567 = vmatpush2.bf16.msra.mxu0 %v8371
  %8568 = vmatprep.subr.bf16.mxu0 0
  %8569 = vmatpush2.bf16.msra.mxu0 %v8370
  %8570 = vmatprep.subr.bf16.mxu0 0
  %8571 = vmatpush2.bf16.msra.mxu0 %v8369
  %8572 = vmatprep.subr.bf16.mxu0 0
  %8573 = vmatpush2.bf16.msra.mxu0 %v8368
  %8574 = vmatprep.subr.bf16.mxu0 0
  %8575 = vmatpush2.bf16.msra.mxu0 %v8367
  %8576 = vmatprep.subr.bf16.mxu0 0
  %8577 = vmatpush2.bf16.msra.mxu0 %v8366
  %8578 = vmatprep.subr.bf16.mxu0 0
  %8579 = vmatpush2.bf16.msra.mxu0 %v8365
  %8580 = vmatprep.subr.bf16.mxu0 0
  %8581 = vmatpush2.bf16.msra.mxu0 %v8364
  %8582 = vmatprep.mubr.bf16.mxu0 %v7332
  %8583 = vmatmul.mubr.bf16.gmra.mxu0 %v7331
  %v8584 = vpop.f32.mrf.mxu0
  %v8585 = vadd.f32 %v8536, %v8584
  %v8586 = vpop.f32.mrf.mxu0
  %v8587 = vpop.f32.mrf.mxu0
  %v8588 = vadd.f32 %v8539, %v8587
  %v8589 = vpop.f32.mrf.mxu0
  %8590 = vmatprep.mubr.bf16.mxu0 %v7340
  %8591 = vmatmul.mubr.bf16.gmra.mxu0 %v7339
  %v8592 = vpop.f32.mrf.mxu0
  %v8593 = vadd.f32 %v8544, %v8592
  %v8594 = vpop.f32.mrf.mxu0
  %v8595 = vpop.f32.mrf.mxu0
  %v8596 = vadd.f32 %v8547, %v8595
  %v8597 = vpop.f32.mrf.mxu0
  %8598 = vdwg.mxu0
  %8599 = vmatprep.subr.bf16.mxu0 0
  %8600 = vmatpush1.bf16.msra.mxu0 %v8379
  %8601 = vmatprep.subr.bf16.mxu0 0
  %8602 = vmatpush1.bf16.msra.mxu0 %v8378
  %8603 = vmatprep.subr.bf16.mxu0 0
  %8604 = vmatpush1.bf16.msra.mxu0 %v8377
  %8605 = vmatprep.subr.bf16.mxu0 0
  %8606 = vmatpush1.bf16.msra.mxu0 %v8376
  %8607 = vmatprep.subr.bf16.mxu0 0
  %8608 = vmatpush1.bf16.msra.mxu0 %v8375
  %8609 = vmatprep.subr.bf16.mxu0 0
  %8610 = vmatpush1.bf16.msra.mxu0 %v8374
  %8611 = vmatprep.subr.bf16.mxu0 0
  %8612 = vmatpush1.bf16.msra.mxu0 %v8373
  %8613 = vmatprep.subr.bf16.mxu0 0
  %8614 = vmatpush1.bf16.msra.mxu0 %v8372
  %8615 = vmatprep.subr.bf16.mxu0 0
  %8616 = vmatpush2.bf16.msra.mxu0 %v8387
  %8617 = vmatprep.subr.bf16.mxu0 0
  %8618 = vmatpush2.bf16.msra.mxu0 %v8386
  %8619 = vmatprep.subr.bf16.mxu0 0
  %8620 = vmatpush2.bf16.msra.mxu0 %v8385
  %8621 = vmatprep.subr.bf16.mxu0 0
  %8622 = vmatpush2.bf16.msra.mxu0 %v8384
  %8623 = vmatprep.subr.bf16.mxu0 0
  %8624 = vmatpush2.bf16.msra.mxu0 %v8383
  %8625 = vmatprep.subr.bf16.mxu0 0
  %8626 = vmatpush2.bf16.msra.mxu0 %v8382
  %8627 = vmatprep.subr.bf16.mxu0 0
  %8628 = vmatpush2.bf16.msra.mxu0 %v8381
  %8629 = vmatprep.subr.bf16.mxu0 0
  %8630 = vmatpush2.bf16.msra.mxu0 %v8380
  %8631 = vmatprep.mubr.bf16.mxu0 %v7334
  %8632 = vmatmul.mubr.bf16.gmra.mxu0 %v7333
  %v8633 = vpop.f32.mrf.mxu0
  %v8634 = vadd.f32 %v8585, %v8633
  %v8635 = vpop.f32.mrf.mxu0
  %v8636 = vpop.f32.mrf.mxu0
  %v8637 = vadd.f32 %v8588, %v8636
  %v8638 = vpop.f32.mrf.mxu0
  %8639 = vmatprep.mubr.bf16.mxu0 %v7342
  %8640 = vmatmul.mubr.bf16.gmra.mxu0 %v7341
  %v8641 = vpop.f32.mrf.mxu0
  %v8642 = vadd.f32 %v8593, %v8641
  %v8643 = vpop.f32.mrf.mxu0
  %v8644 = vpop.f32.mrf.mxu0
  %v8645 = vadd.f32 %v8596, %v8644
  %v8646 = vpop.f32.mrf.mxu0
  %8647 = vdwg.mxu0
  %s8648 = scalar_lea.vmem %s5, 1024
  %v8649 = vld [vmem:[%s8648] sm:$0xf]
  %v8650 = vld [vmem:[%s8648 + $0x4] sm:$0xf]
  %v8651 = vld [vmem:[%s8648 + $0x8] sm:$0xf]
  %v8652 = vld [vmem:[%s8648 + $0xc] sm:$0xf]
  %v8653 = vld [vmem:[%s8648 + $0x10] sm:$0xf]
  %v8654 = vld [vmem:[%s8648 + $0x14] sm:$0xf]
  %v8655 = vld [vmem:[%s8648 + $0x18] sm:$0xf]
  %v8656 = vld [vmem:[%s8648 + $0x1c] sm:$0xf]
  %v8657 = vld [vmem:[%s8648 + $0x20] sm:$0xf]
  %v8658 = vld [vmem:[%s8648 + $0x24] sm:$0xf]
  %v8659 = vld [vmem:[%s8648 + $0x28] sm:$0xf]
  %v8660 = vld [vmem:[%s8648 + $0x2c] sm:$0xf]
  %v8661 = vld [vmem:[%s8648 + $0x30] sm:$0xf]
  %v8662 = vld [vmem:[%s8648 + $0x34] sm:$0xf]
  %v8663 = vld [vmem:[%s8648 + $0x38] sm:$0xf]
  %v8664 = vld [vmem:[%s8648 + $0x3c] sm:$0xf]
  %v8665 = vld [vmem:[%s8648 + $0x40] sm:$0xf]
  %v8666 = vld [vmem:[%s8648 + $0x44] sm:$0xf]
  %v8667 = vld [vmem:[%s8648 + $0x48] sm:$0xf]
  %v8668 = vld [vmem:[%s8648 + $0x4c] sm:$0xf]
  %v8669 = vld [vmem:[%s8648 + $0x50] sm:$0xf]
  %v8670 = vld [vmem:[%s8648 + $0x54] sm:$0xf]
  %v8671 = vld [vmem:[%s8648 + $0x58] sm:$0xf]
  %v8672 = vld [vmem:[%s8648 + $0x5c] sm:$0xf]
  %v8673 = vld [vmem:[%s8648 + $0x60] sm:$0xf]
  %v8674 = vld [vmem:[%s8648 + $0x64] sm:$0xf]
  %v8675 = vld [vmem:[%s8648 + $0x68] sm:$0xf]
  %v8676 = vld [vmem:[%s8648 + $0x6c] sm:$0xf]
  %v8677 = vld [vmem:[%s8648 + $0x70] sm:$0xf]
  %v8678 = vld [vmem:[%s8648 + $0x74] sm:$0xf]
  %v8679 = vld [vmem:[%s8648 + $0x78] sm:$0xf]
  %v8680 = vld [vmem:[%s8648 + $0x7c] sm:$0xf]
  %v8681 = vld [vmem:[%s8648 + $0x80] sm:$0xf]
  %v8682 = vld [vmem:[%s8648 + $0x84] sm:$0xf]
  %v8683 = vld [vmem:[%s8648 + $0x88] sm:$0xf]
  %v8684 = vld [vmem:[%s8648 + $0x8c] sm:$0xf]
  %v8685 = vld [vmem:[%s8648 + $0x90] sm:$0xf]
  %v8686 = vld [vmem:[%s8648 + $0x94] sm:$0xf]
  %v8687 = vld [vmem:[%s8648 + $0x98] sm:$0xf]
  %v8688 = vld [vmem:[%s8648 + $0x9c] sm:$0xf]
  %v8689 = vld [vmem:[%s8648 + $0xa0] sm:$0xf]
  %v8690 = vld [vmem:[%s8648 + $0xa4] sm:$0xf]
  %v8691 = vld [vmem:[%s8648 + $0xa8] sm:$0xf]
  %v8692 = vld [vmem:[%s8648 + $0xac] sm:$0xf]
  %v8693 = vld [vmem:[%s8648 + $0xb0] sm:$0xf]
  %v8694 = vld [vmem:[%s8648 + $0xb4] sm:$0xf]
  %v8695 = vld [vmem:[%s8648 + $0xb8] sm:$0xf]
  %v8696 = vld [vmem:[%s8648 + $0xbc] sm:$0xf]
  %v8697 = vld [vmem:[%s8648 + $0xc0] sm:$0xf]
  %v8698 = vld [vmem:[%s8648 + $0xc4] sm:$0xf]
  %v8699 = vld [vmem:[%s8648 + $0xc8] sm:$0xf]
  %v8700 = vld [vmem:[%s8648 + $0xcc] sm:$0xf]
  %v8701 = vld [vmem:[%s8648 + $0xd0] sm:$0xf]
  %v8702 = vld [vmem:[%s8648 + $0xd4] sm:$0xf]
  %v8703 = vld [vmem:[%s8648 + $0xd8] sm:$0xf]
  %v8704 = vld [vmem:[%s8648 + $0xdc] sm:$0xf]
  %v8705 = vld [vmem:[%s8648 + $0xe0] sm:$0xf]
  %v8706 = vld [vmem:[%s8648 + $0xe4] sm:$0xf]
  %v8707 = vld [vmem:[%s8648 + $0xe8] sm:$0xf]
  %v8708 = vld [vmem:[%s8648 + $0xec] sm:$0xf]
  %v8709 = vld [vmem:[%s8648 + $0xf0] sm:$0xf]
  %v8710 = vld [vmem:[%s8648 + $0xf4] sm:$0xf]
  %v8711 = vld [vmem:[%s8648 + $0xf8] sm:$0xf]
  %v8712 = vld [vmem:[%s8648 + $0xfc] sm:$0xf]
  %v8713 = vld [vmem:[%s8648 + $0x100] sm:$0xf]
  %v8714 = vld [vmem:[%s8648 + $0x104] sm:$0xf]
  %v8715 = vld [vmem:[%s8648 + $0x108] sm:$0xf]
  %v8716 = vld [vmem:[%s8648 + $0x10c] sm:$0xf]
  %v8717 = vld [vmem:[%s8648 + $0x110] sm:$0xf]
  %v8718 = vld [vmem:[%s8648 + $0x114] sm:$0xf]
  %v8719 = vld [vmem:[%s8648 + $0x118] sm:$0xf]
  %v8720 = vld [vmem:[%s8648 + $0x11c] sm:$0xf]
  %v8721 = vld [vmem:[%s8648 + $0x120] sm:$0xf]
  %v8722 = vld [vmem:[%s8648 + $0x124] sm:$0xf]
  %v8723 = vld [vmem:[%s8648 + $0x128] sm:$0xf]
  %v8724 = vld [vmem:[%s8648 + $0x12c] sm:$0xf]
  %v8725 = vld [vmem:[%s8648 + $0x130] sm:$0xf]
  %v8726 = vld [vmem:[%s8648 + $0x134] sm:$0xf]
  %v8727 = vld [vmem:[%s8648 + $0x138] sm:$0xf]
  %v8728 = vld [vmem:[%s8648 + $0x13c] sm:$0xf]
  %v8729 = vld [vmem:[%s8648 + $0x140] sm:$0xf]
  %v8730 = vld [vmem:[%s8648 + $0x144] sm:$0xf]
  %v8731 = vld [vmem:[%s8648 + $0x148] sm:$0xf]
  %v8732 = vld [vmem:[%s8648 + $0x14c] sm:$0xf]
  %v8733 = vld [vmem:[%s8648 + $0x150] sm:$0xf]
  %v8734 = vld [vmem:[%s8648 + $0x154] sm:$0xf]
  %v8735 = vld [vmem:[%s8648 + $0x158] sm:$0xf]
  %v8736 = vld [vmem:[%s8648 + $0x15c] sm:$0xf]
  %v8737 = vld [vmem:[%s8648 + $0x160] sm:$0xf]
  %v8738 = vld [vmem:[%s8648 + $0x164] sm:$0xf]
  %v8739 = vld [vmem:[%s8648 + $0x168] sm:$0xf]
  %v8740 = vld [vmem:[%s8648 + $0x16c] sm:$0xf]
  %v8741 = vld [vmem:[%s8648 + $0x170] sm:$0xf]
  %v8742 = vld [vmem:[%s8648 + $0x174] sm:$0xf]
  %v8743 = vld [vmem:[%s8648 + $0x178] sm:$0xf]
  %v8744 = vld [vmem:[%s8648 + $0x17c] sm:$0xf]
  %v8745 = vld [vmem:[%s8648 + $0x180] sm:$0xf]
  %v8746 = vld [vmem:[%s8648 + $0x184] sm:$0xf]
  %v8747 = vld [vmem:[%s8648 + $0x188] sm:$0xf]
  %v8748 = vld [vmem:[%s8648 + $0x18c] sm:$0xf]
  %v8749 = vld [vmem:[%s8648 + $0x190] sm:$0xf]
  %v8750 = vld [vmem:[%s8648 + $0x194] sm:$0xf]
  %v8751 = vld [vmem:[%s8648 + $0x198] sm:$0xf]
  %v8752 = vld [vmem:[%s8648 + $0x19c] sm:$0xf]
  %v8753 = vld [vmem:[%s8648 + $0x1a0] sm:$0xf]
  %v8754 = vld [vmem:[%s8648 + $0x1a4] sm:$0xf]
  %v8755 = vld [vmem:[%s8648 + $0x1a8] sm:$0xf]
  %v8756 = vld [vmem:[%s8648 + $0x1ac] sm:$0xf]
  %v8757 = vld [vmem:[%s8648 + $0x1b0] sm:$0xf]
  %v8758 = vld [vmem:[%s8648 + $0x1b4] sm:$0xf]
  %v8759 = vld [vmem:[%s8648 + $0x1b8] sm:$0xf]
  %v8760 = vld [vmem:[%s8648 + $0x1bc] sm:$0xf]
  %v8761 = vld [vmem:[%s8648 + $0x1c0] sm:$0xf]
  %v8762 = vld [vmem:[%s8648 + $0x1c4] sm:$0xf]
  %v8763 = vld [vmem:[%s8648 + $0x1c8] sm:$0xf]
  %v8764 = vld [vmem:[%s8648 + $0x1cc] sm:$0xf]
  %v8765 = vld [vmem:[%s8648 + $0x1d0] sm:$0xf]
  %v8766 = vld [vmem:[%s8648 + $0x1d4] sm:$0xf]
  %v8767 = vld [vmem:[%s8648 + $0x1d8] sm:$0xf]
  %v8768 = vld [vmem:[%s8648 + $0x1dc] sm:$0xf]
  %v8769 = vld [vmem:[%s8648 + $0x1e0] sm:$0xf]
  %v8770 = vld [vmem:[%s8648 + $0x1e4] sm:$0xf]
  %v8771 = vld [vmem:[%s8648 + $0x1e8] sm:$0xf]
  %v8772 = vld [vmem:[%s8648 + $0x1ec] sm:$0xf]
  %v8773 = vld [vmem:[%s8648 + $0x1f0] sm:$0xf]
  %v8774 = vld [vmem:[%s8648 + $0x1f4] sm:$0xf]
  %v8775 = vld [vmem:[%s8648 + $0x1f8] sm:$0xf]
  %v8776 = vld [vmem:[%s8648 + $0x1fc] sm:$0xf]
  %v8905 = vunpack.c.l.b16 %v8649
  %v8906 = vunpack.c.l.b16 %v8650
  %v8907 = vunpack.c.l.b16 %v8651
  %v8908 = vunpack.c.l.b16 %v8652
  %v8909 = vunpack.c.l.b16 %v8653
  %v8910 = vunpack.c.l.b16 %v8654
  %v8911 = vunpack.c.l.b16 %v8655
  %v8912 = vunpack.c.l.b16 %v8656
  %v8913 = vunpack.c.l.b16 %v8657
  %v8914 = vunpack.c.l.b16 %v8658
  %v8915 = vunpack.c.l.b16 %v8659
  %v8916 = vunpack.c.l.b16 %v8660
  %v8917 = vunpack.c.l.b16 %v8661
  %v8918 = vunpack.c.l.b16 %v8662
  %v8919 = vunpack.c.l.b16 %v8663
  %v8920 = vunpack.c.l.b16 %v8664
  %v8921 = vunpack.c.l.b16 %v8665
  %v8922 = vunpack.c.l.b16 %v8666
  %v8923 = vunpack.c.l.b16 %v8667
  %v8924 = vunpack.c.l.b16 %v8668
  %v8925 = vunpack.c.l.b16 %v8669
  %v8926 = vunpack.c.l.b16 %v8670
  %v8927 = vunpack.c.l.b16 %v8671
  %v8928 = vunpack.c.l.b16 %v8672
  %v8929 = vunpack.c.l.b16 %v8673
  %v8930 = vunpack.c.l.b16 %v8674
  %v8931 = vunpack.c.l.b16 %v8675
  %v8932 = vunpack.c.l.b16 %v8676
  %v8933 = vunpack.c.l.b16 %v8677
  %v8934 = vunpack.c.l.b16 %v8678
  %v8935 = vunpack.c.l.b16 %v8679
  %v8936 = vunpack.c.l.b16 %v8680
  %v8937 = vunpack.c.l.b16 %v8681
  %v8938 = vunpack.c.l.b16 %v8682
  %v8939 = vunpack.c.l.b16 %v8683
  %v8940 = vunpack.c.l.b16 %v8684
  %v8941 = vunpack.c.l.b16 %v8685
  %v8942 = vunpack.c.l.b16 %v8686
  %v8943 = vunpack.c.l.b16 %v8687
  %v8944 = vunpack.c.l.b16 %v8688
  %v8945 = vunpack.c.l.b16 %v8689
  %v8946 = vunpack.c.l.b16 %v8690
  %v8947 = vunpack.c.l.b16 %v8691
  %v8948 = vunpack.c.l.b16 %v8692
  %v8949 = vunpack.c.l.b16 %v8693
  %v8950 = vunpack.c.l.b16 %v8694
  %v8951 = vunpack.c.l.b16 %v8695
  %v8952 = vunpack.c.l.b16 %v8696
  %v8953 = vunpack.c.l.b16 %v8697
  %v8954 = vunpack.c.l.b16 %v8698
  %v8955 = vunpack.c.l.b16 %v8699
  %v8956 = vunpack.c.l.b16 %v8700
  %v8957 = vunpack.c.l.b16 %v8701
  %v8958 = vunpack.c.l.b16 %v8702
  %v8959 = vunpack.c.l.b16 %v8703
  %v8960 = vunpack.c.l.b16 %v8704
  %v8961 = vunpack.c.l.b16 %v8705
  %v8962 = vunpack.c.l.b16 %v8706
  %v8963 = vunpack.c.l.b16 %v8707
  %v8964 = vunpack.c.l.b16 %v8708
  %v8965 = vunpack.c.l.b16 %v8709
  %v8966 = vunpack.c.l.b16 %v8710
  %v8967 = vunpack.c.l.b16 %v8711
  %v8968 = vunpack.c.l.b16 %v8712
  %v8969 = vunpack.c.l.b16 %v8713
  %v8970 = vunpack.c.l.b16 %v8714
  %v8971 = vunpack.c.l.b16 %v8715
  %v8972 = vunpack.c.l.b16 %v8716
  %v8973 = vunpack.c.l.b16 %v8717
  %v8974 = vunpack.c.l.b16 %v8718
  %v8975 = vunpack.c.l.b16 %v8719
  %v8976 = vunpack.c.l.b16 %v8720
  %v8977 = vunpack.c.l.b16 %v8721
  %v8978 = vunpack.c.l.b16 %v8722
  %v8979 = vunpack.c.l.b16 %v8723
  %v8980 = vunpack.c.l.b16 %v8724
  %v8981 = vunpack.c.l.b16 %v8725
  %v8982 = vunpack.c.l.b16 %v8726
  %v8983 = vunpack.c.l.b16 %v8727
  %v8984 = vunpack.c.l.b16 %v8728
  %v8985 = vunpack.c.l.b16 %v8729
  %v8986 = vunpack.c.l.b16 %v8730
  %v8987 = vunpack.c.l.b16 %v8731
  %v8988 = vunpack.c.l.b16 %v8732
  %v8989 = vunpack.c.l.b16 %v8733
  %v8990 = vunpack.c.l.b16 %v8734
  %v8991 = vunpack.c.l.b16 %v8735
  %v8992 = vunpack.c.l.b16 %v8736
  %v8993 = vunpack.c.l.b16 %v8737
  %v8994 = vunpack.c.l.b16 %v8738
  %v8995 = vunpack.c.l.b16 %v8739
  %v8996 = vunpack.c.l.b16 %v8740
  %v8997 = vunpack.c.l.b16 %v8741
  %v8998 = vunpack.c.l.b16 %v8742
  %v8999 = vunpack.c.l.b16 %v8743
  %v9000 = vunpack.c.l.b16 %v8744
  %v9001 = vunpack.c.l.b16 %v8745
  %v9002 = vunpack.c.l.b16 %v8746
  %v9003 = vunpack.c.l.b16 %v8747
  %v9004 = vunpack.c.l.b16 %v8748
  %v9005 = vunpack.c.l.b16 %v8749
  %v9006 = vunpack.c.l.b16 %v8750
  %v9007 = vunpack.c.l.b16 %v8751
  %v9008 = vunpack.c.l.b16 %v8752
  %v9009 = vunpack.c.l.b16 %v8753
  %v9010 = vunpack.c.l.b16 %v8754
  %v9011 = vunpack.c.l.b16 %v8755
  %v9012 = vunpack.c.l.b16 %v8756
  %v9013 = vunpack.c.l.b16 %v8757
  %v9014 = vunpack.c.l.b16 %v8758
  %v9015 = vunpack.c.l.b16 %v8759
  %v9016 = vunpack.c.l.b16 %v8760
  %v9017 = vunpack.c.l.b16 %v8761
  %v9018 = vunpack.c.l.b16 %v8762
  %v9019 = vunpack.c.l.b16 %v8763
  %v9020 = vunpack.c.l.b16 %v8764
  %v9021 = vunpack.c.l.b16 %v8765
  %v9022 = vunpack.c.l.b16 %v8766
  %v9023 = vunpack.c.l.b16 %v8767
  %v9024 = vunpack.c.l.b16 %v8768
  %v9025 = vunpack.c.l.b16 %v8769
  %v9026 = vunpack.c.l.b16 %v8770
  %v9027 = vunpack.c.l.b16 %v8771
  %v9028 = vunpack.c.l.b16 %v8772
  %v9029 = vunpack.c.l.b16 %v8773
  %v9030 = vunpack.c.l.b16 %v8774
  %v9031 = vunpack.c.l.b16 %v8775
  %v9032 = vunpack.c.l.b16 %v8776
  %v9033 = vpack.c.b16 %v8906, %v8905
  %v9034 = vpack.c.b16 %v8908, %v8907
  %v9035 = vpack.c.b16 %v8910, %v8909
  %v9036 = vpack.c.b16 %v8912, %v8911
  %v9037 = vpack.c.b16 %v8914, %v8913
  %v9038 = vpack.c.b16 %v8916, %v8915
  %v9039 = vpack.c.b16 %v8918, %v8917
  %v9040 = vpack.c.b16 %v8920, %v8919
  %v9041 = vpack.c.b16 %v8922, %v8921
  %v9042 = vpack.c.b16 %v8924, %v8923
  %v9043 = vpack.c.b16 %v8926, %v8925
  %v9044 = vpack.c.b16 %v8928, %v8927
  %v9045 = vpack.c.b16 %v8930, %v8929
  %v9046 = vpack.c.b16 %v8932, %v8931
  %v9047 = vpack.c.b16 %v8934, %v8933
  %v9048 = vpack.c.b16 %v8936, %v8935
  %v9049 = vpack.c.b16 %v8938, %v8937
  %v9050 = vpack.c.b16 %v8940, %v8939
  %v9051 = vpack.c.b16 %v8942, %v8941
  %v9052 = vpack.c.b16 %v8944, %v8943
  %v9053 = vpack.c.b16 %v8946, %v8945
  %v9054 = vpack.c.b16 %v8948, %v8947
  %v9055 = vpack.c.b16 %v8950, %v8949
  %v9056 = vpack.c.b16 %v8952, %v8951
  %v9057 = vpack.c.b16 %v8954, %v8953
  %v9058 = vpack.c.b16 %v8956, %v8955
  %v9059 = vpack.c.b16 %v8958, %v8957
  %v9060 = vpack.c.b16 %v8960, %v8959
  %v9061 = vpack.c.b16 %v8962, %v8961
  %v9062 = vpack.c.b16 %v8964, %v8963
  %v9063 = vpack.c.b16 %v8966, %v8965
  %v9064 = vpack.c.b16 %v8968, %v8967
  %v9065 = vpack.c.b16 %v8970, %v8969
  %v9066 = vpack.c.b16 %v8972, %v8971
  %v9067 = vpack.c.b16 %v8974, %v8973
  %v9068 = vpack.c.b16 %v8976, %v8975
  %v9069 = vpack.c.b16 %v8978, %v8977
  %v9070 = vpack.c.b16 %v8980, %v8979
  %v9071 = vpack.c.b16 %v8982, %v8981
  %v9072 = vpack.c.b16 %v8984, %v8983
  %v9073 = vpack.c.b16 %v8986, %v8985
  %v9074 = vpack.c.b16 %v8988, %v8987
  %v9075 = vpack.c.b16 %v8990, %v8989
  %v9076 = vpack.c.b16 %v8992, %v8991
  %v9077 = vpack.c.b16 %v8994, %v8993
  %v9078 = vpack.c.b16 %v8996, %v8995
  %v9079 = vpack.c.b16 %v8998, %v8997
  %v9080 = vpack.c.b16 %v9000, %v8999
  %v9081 = vpack.c.b16 %v9002, %v9001
  %v9082 = vpack.c.b16 %v9004, %v9003
  %v9083 = vpack.c.b16 %v9006, %v9005
  %v9084 = vpack.c.b16 %v9008, %v9007
  %v9085 = vpack.c.b16 %v9010, %v9009
  %v9086 = vpack.c.b16 %v9012, %v9011
  %v9087 = vpack.c.b16 %v9014, %v9013
  %v9088 = vpack.c.b16 %v9016, %v9015
  %v9089 = vpack.c.b16 %v9018, %v9017
  %v9090 = vpack.c.b16 %v9020, %v9019
  %v9091 = vpack.c.b16 %v9022, %v9021
  %v9092 = vpack.c.b16 %v9024, %v9023
  %v9093 = vpack.c.b16 %v9026, %v9025
  %v9094 = vpack.c.b16 %v9028, %v9027
  %v9095 = vpack.c.b16 %v9030, %v9029
  %v9096 = vpack.c.b16 %v9032, %v9031
  %9161 = vmatprep.subr.bf16.mxu0 0
  %9162 = vmatpush1.bf16.msra.mxu0 %v9040
  %9163 = vmatprep.subr.bf16.mxu0 0
  %9164 = vmatpush1.bf16.msra.mxu0 %v9039
  %9165 = vmatprep.subr.bf16.mxu0 0
  %9166 = vmatpush1.bf16.msra.mxu0 %v9038
  %9167 = vmatprep.subr.bf16.mxu0 0
  %9168 = vmatpush1.bf16.msra.mxu0 %v9037
  %9169 = vmatprep.subr.bf16.mxu0 0
  %9170 = vmatpush1.bf16.msra.mxu0 %v9036
  %9171 = vmatprep.subr.bf16.mxu0 0
  %9172 = vmatpush1.bf16.msra.mxu0 %v9035
  %9173 = vmatprep.subr.bf16.mxu0 0
  %9174 = vmatpush1.bf16.msra.mxu0 %v9034
  %9175 = vmatprep.subr.bf16.mxu0 0
  %9176 = vmatpush1.bf16.msra.mxu0 %v9033
  %9177 = vmatprep.subr.bf16.mxu0 0
  %9178 = vmatpush2.bf16.msra.mxu0 %v9048
  %9179 = vmatprep.subr.bf16.mxu0 0
  %9180 = vmatpush2.bf16.msra.mxu0 %v9047
  %9181 = vmatprep.subr.bf16.mxu0 0
  %9182 = vmatpush2.bf16.msra.mxu0 %v9046
  %9183 = vmatprep.subr.bf16.mxu0 0
  %9184 = vmatpush2.bf16.msra.mxu0 %v9045
  %9185 = vmatprep.subr.bf16.mxu0 0
  %9186 = vmatpush2.bf16.msra.mxu0 %v9044
  %9187 = vmatprep.subr.bf16.mxu0 0
  %9188 = vmatpush2.bf16.msra.mxu0 %v9043
  %9189 = vmatprep.subr.bf16.mxu0 0
  %9190 = vmatpush2.bf16.msra.mxu0 %v9042
  %9191 = vmatprep.subr.bf16.mxu0 0
  %9192 = vmatpush2.bf16.msra.mxu0 %v9041
  %9193 = vmatprep.mubr.bf16.mxu0 %v7328
  %9194 = vmatmul.mubr.bf16.gmra.mxu0 %v7327
  %v9195 = vpop.f32.mrf.mxu0
  %v9196 = vadd.f32 0.0, %v9195
  %v9197 = vpop.f32.mrf.mxu0
  %v9198 = vpop.f32.mrf.mxu0
  %v9199 = vadd.f32 0.0, %v9198
  %v9200 = vpop.f32.mrf.mxu0
  %9201 = vmatprep.mubr.bf16.mxu0 %v7336
  %9202 = vmatmul.mubr.bf16.gmra.mxu0 %v7335
  %v9203 = vpop.f32.mrf.mxu0
  %v9204 = vadd.f32 0.0, %v9203
  %v9205 = vpop.f32.mrf.mxu0
  %v9206 = vpop.f32.mrf.mxu0
  %v9207 = vadd.f32 0.0, %v9206
  %v9208 = vpop.f32.mrf.mxu0
  %9209 = vdwg.mxu0
  %9210 = vmatprep.subr.bf16.mxu0 0
  %9211 = vmatpush1.bf16.msra.mxu0 %v9056
  %9212 = vmatprep.subr.bf16.mxu0 0
  %9213 = vmatpush1.bf16.msra.mxu0 %v9055
  %9214 = vmatprep.subr.bf16.mxu0 0
  %9215 = vmatpush1.bf16.msra.mxu0 %v9054
  %9216 = vmatprep.subr.bf16.mxu0 0
  %9217 = vmatpush1.bf16.msra.mxu0 %v9053
  %9218 = vmatprep.subr.bf16.mxu0 0
  %9219 = vmatpush1.bf16.msra.mxu0 %v9052
  %9220 = vmatprep.subr.bf16.mxu0 0
  %9221 = vmatpush1.bf16.msra.mxu0 %v9051
  %9222 = vmatprep.subr.bf16.mxu0 0
  %9223 = vmatpush1.bf16.msra.mxu0 %v9050
  %9224 = vmatprep.subr.bf16.mxu0 0
  %9225 = vmatpush1.bf16.msra.mxu0 %v9049
  %9226 = vmatprep.subr.bf16.mxu0 0
  %9227 = vmatpush2.bf16.msra.mxu0 %v9064
  %9228 = vmatprep.subr.bf16.mxu0 0
  %9229 = vmatpush2.bf16.msra.mxu0 %v9063
  %9230 = vmatprep.subr.bf16.mxu0 0
  %9231 = vmatpush2.bf16.msra.mxu0 %v9062
  %9232 = vmatprep.subr.bf16.mxu0 0
  %9233 = vmatpush2.bf16.msra.mxu0 %v9061
  %9234 = vmatprep.subr.bf16.mxu0 0
  %9235 = vmatpush2.bf16.msra.mxu0 %v9060
  %9236 = vmatprep.subr.bf16.mxu0 0
  %9237 = vmatpush2.bf16.msra.mxu0 %v9059
  %9238 = vmatprep.subr.bf16.mxu0 0
  %9239 = vmatpush2.bf16.msra.mxu0 %v9058
  %9240 = vmatprep.subr.bf16.mxu0 0
  %9241 = vmatpush2.bf16.msra.mxu0 %v9057
  %9242 = vmatprep.mubr.bf16.mxu0 %v7330
  %9243 = vmatmul.mubr.bf16.gmra.mxu0 %v7329
  %v9244 = vpop.f32.mrf.mxu0
  %v9245 = vadd.f32 %v9196, %v9244
  %v9246 = vpop.f32.mrf.mxu0
  %v9247 = vpop.f32.mrf.mxu0
  %v9248 = vadd.f32 %v9199, %v9247
  %v9249 = vpop.f32.mrf.mxu0
  %9250 = vmatprep.mubr.bf16.mxu0 %v7338
  %9251 = vmatmul.mubr.bf16.gmra.mxu0 %v7337
  %v9252 = vpop.f32.mrf.mxu0
  %v9253 = vadd.f32 %v9204, %v9252
  %v9254 = vpop.f32.mrf.mxu0
  %v9255 = vpop.f32.mrf.mxu0
  %v9256 = vadd.f32 %v9207, %v9255
  %v9257 = vpop.f32.mrf.mxu0
  %9258 = vdwg.mxu0
  %9259 = vmatprep.subr.bf16.mxu0 0
  %9260 = vmatpush1.bf16.msra.mxu0 %v9072
  %9261 = vmatprep.subr.bf16.mxu0 0
  %9262 = vmatpush1.bf16.msra.mxu0 %v9071
  %9263 = vmatprep.subr.bf16.mxu0 0
  %9264 = vmatpush1.bf16.msra.mxu0 %v9070
  %9265 = vmatprep.subr.bf16.mxu0 0
  %9266 = vmatpush1.bf16.msra.mxu0 %v9069
  %9267 = vmatprep.subr.bf16.mxu0 0
  %9268 = vmatpush1.bf16.msra.mxu0 %v9068
  %9269 = vmatprep.subr.bf16.mxu0 0
  %9270 = vmatpush1.bf16.msra.mxu0 %v9067
  %9271 = vmatprep.subr.bf16.mxu0 0
  %9272 = vmatpush1.bf16.msra.mxu0 %v9066
  %9273 = vmatprep.subr.bf16.mxu0 0
  %9274 = vmatpush1.bf16.msra.mxu0 %v9065
  %9275 = vmatprep.subr.bf16.mxu0 0
  %9276 = vmatpush2.bf16.msra.mxu0 %v9080
  %9277 = vmatprep.subr.bf16.mxu0 0
  %9278 = vmatpush2.bf16.msra.mxu0 %v9079
  %9279 = vmatprep.subr.bf16.mxu0 0
  %9280 = vmatpush2.bf16.msra.mxu0 %v9078
  %9281 = vmatprep.subr.bf16.mxu0 0
  %9282 = vmatpush2.bf16.msra.mxu0 %v9077
  %9283 = vmatprep.subr.bf16.mxu0 0
  %9284 = vmatpush2.bf16.msra.mxu0 %v9076
  %9285 = vmatprep.subr.bf16.mxu0 0
  %9286 = vmatpush2.bf16.msra.mxu0 %v9075
  %9287 = vmatprep.subr.bf16.mxu0 0
  %9288 = vmatpush2.bf16.msra.mxu0 %v9074
  %9289 = vmatprep.subr.bf16.mxu0 0
  %9290 = vmatpush2.bf16.msra.mxu0 %v9073
  %9291 = vmatprep.mubr.bf16.mxu0 %v7332
  %9292 = vmatmul.mubr.bf16.gmra.mxu0 %v7331
  %v9293 = vpop.f32.mrf.mxu0
  %v9294 = vadd.f32 %v9245, %v9293
  %v9295 = vpop.f32.mrf.mxu0
  %v9296 = vpop.f32.mrf.mxu0
  %v9297 = vadd.f32 %v9248, %v9296
  %v9298 = vpop.f32.mrf.mxu0
  %9299 = vmatprep.mubr.bf16.mxu0 %v7340
  %9300 = vmatmul.mubr.bf16.gmra.mxu0 %v7339
  %v9301 = vpop.f32.mrf.mxu0
  %v9302 = vadd.f32 %v9253, %v9301
  %v9303 = vpop.f32.mrf.mxu0
  %v9304 = vpop.f32.mrf.mxu0
  %v9305 = vadd.f32 %v9256, %v9304
  %v9306 = vpop.f32.mrf.mxu0
  %9307 = vdwg.mxu0
  %9308 = vmatprep.subr.bf16.mxu0 0
  %9309 = vmatpush1.bf16.msra.mxu0 %v9088
  %9310 = vmatprep.subr.bf16.mxu0 0
  %9311 = vmatpush1.bf16.msra.mxu0 %v9087
  %9312 = vmatprep.subr.bf16.mxu0 0
  %9313 = vmatpush1.bf16.msra.mxu0 %v9086
  %9314 = vmatprep.subr.bf16.mxu0 0
  %9315 = vmatpush1.bf16.msra.mxu0 %v9085
  %9316 = vmatprep.subr.bf16.mxu0 0
  %9317 = vmatpush1.bf16.msra.mxu0 %v9084
  %9318 = vmatprep.subr.bf16.mxu0 0
  %9319 = vmatpush1.bf16.msra.mxu0 %v9083
  %9320 = vmatprep.subr.bf16.mxu0 0
  %9321 = vmatpush1.bf16.msra.mxu0 %v9082
  %9322 = vmatprep.subr.bf16.mxu0 0
  %9323 = vmatpush1.bf16.msra.mxu0 %v9081
  %9324 = vmatprep.subr.bf16.mxu0 0
  %9325 = vmatpush2.bf16.msra.mxu0 %v9096
  %9326 = vmatprep.subr.bf16.mxu0 0
  %9327 = vmatpush2.bf16.msra.mxu0 %v9095
  %9328 = vmatprep.subr.bf16.mxu0 0
  %9329 = vmatpush2.bf16.msra.mxu0 %v9094
  %9330 = vmatprep.subr.bf16.mxu0 0
  %9331 = vmatpush2.bf16.msra.mxu0 %v9093
  %9332 = vmatprep.subr.bf16.mxu0 0
  %9333 = vmatpush2.bf16.msra.mxu0 %v9092
  %9334 = vmatprep.subr.bf16.mxu0 0
  %9335 = vmatpush2.bf16.msra.mxu0 %v9091
  %9336 = vmatprep.subr.bf16.mxu0 0
  %9337 = vmatpush2.bf16.msra.mxu0 %v9090
  %9338 = vmatprep.subr.bf16.mxu0 0
  %9339 = vmatpush2.bf16.msra.mxu0 %v9089
  %9340 = vmatprep.mubr.bf16.mxu0 %v7334
  %9341 = vmatmul.mubr.bf16.gmra.mxu0 %v7333
  %v9342 = vpop.f32.mrf.mxu0
  %v9343 = vadd.f32 %v9294, %v9342
  %v9344 = vpop.f32.mrf.mxu0
  %v9345 = vpop.f32.mrf.mxu0
  %v9346 = vadd.f32 %v9297, %v9345
  %v9347 = vpop.f32.mrf.mxu0
  %9348 = vmatprep.mubr.bf16.mxu0 %v7342
  %9349 = vmatmul.mubr.bf16.gmra.mxu0 %v7341
  %v9350 = vpop.f32.mrf.mxu0
  %v9351 = vadd.f32 %v9302, %v9350
  %v9352 = vpop.f32.mrf.mxu0
  %v9353 = vpop.f32.mrf.mxu0
  %v9354 = vadd.f32 %v9305, %v9353
  %v9355 = vpop.f32.mrf.mxu0
  %9356 = vdwg.mxu0
  %s9357 = scalar_lea.vmem %s5, 1536
  %v9358 = vld [vmem:[%s9357] sm:$0xf]
  %v9359 = vld [vmem:[%s9357 + $0x4] sm:$0xf]
  %v9360 = vld [vmem:[%s9357 + $0x8] sm:$0xf]
  %v9361 = vld [vmem:[%s9357 + $0xc] sm:$0xf]
  %v9362 = vld [vmem:[%s9357 + $0x10] sm:$0xf]
  %v9363 = vld [vmem:[%s9357 + $0x14] sm:$0xf]
  %v9364 = vld [vmem:[%s9357 + $0x18] sm:$0xf]
  %v9365 = vld [vmem:[%s9357 + $0x1c] sm:$0xf]
  %v9366 = vld [vmem:[%s9357 + $0x20] sm:$0xf]
  %v9367 = vld [vmem:[%s9357 + $0x24] sm:$0xf]
  %v9368 = vld [vmem:[%s9357 + $0x28] sm:$0xf]
  %v9369 = vld [vmem:[%s9357 + $0x2c] sm:$0xf]
  %v9370 = vld [vmem:[%s9357 + $0x30] sm:$0xf]
  %v9371 = vld [vmem:[%s9357 + $0x34] sm:$0xf]
  %v9372 = vld [vmem:[%s9357 + $0x38] sm:$0xf]
  %v9373 = vld [vmem:[%s9357 + $0x3c] sm:$0xf]
  %v9374 = vld [vmem:[%s9357 + $0x40] sm:$0xf]
  %v9375 = vld [vmem:[%s9357 + $0x44] sm:$0xf]
  %v9376 = vld [vmem:[%s9357 + $0x48] sm:$0xf]
  %v9377 = vld [vmem:[%s9357 + $0x4c] sm:$0xf]
  %v9378 = vld [vmem:[%s9357 + $0x50] sm:$0xf]
  %v9379 = vld [vmem:[%s9357 + $0x54] sm:$0xf]
  %v9380 = vld [vmem:[%s9357 + $0x58] sm:$0xf]
  %v9381 = vld [vmem:[%s9357 + $0x5c] sm:$0xf]
  %v9382 = vld [vmem:[%s9357 + $0x60] sm:$0xf]
  %v9383 = vld [vmem:[%s9357 + $0x64] sm:$0xf]
  %v9384 = vld [vmem:[%s9357 + $0x68] sm:$0xf]
  %v9385 = vld [vmem:[%s9357 + $0x6c] sm:$0xf]
  %v9386 = vld [vmem:[%s9357 + $0x70] sm:$0xf]
  %v9387 = vld [vmem:[%s9357 + $0x74] sm:$0xf]
  %v9388 = vld [vmem:[%s9357 + $0x78] sm:$0xf]
  %v9389 = vld [vmem:[%s9357 + $0x7c] sm:$0xf]
  %v9390 = vld [vmem:[%s9357 + $0x80] sm:$0xf]
  %v9391 = vld [vmem:[%s9357 + $0x84] sm:$0xf]
  %v9392 = vld [vmem:[%s9357 + $0x88] sm:$0xf]
  %v9393 = vld [vmem:[%s9357 + $0x8c] sm:$0xf]
  %v9394 = vld [vmem:[%s9357 + $0x90] sm:$0xf]
  %v9395 = vld [vmem:[%s9357 + $0x94] sm:$0xf]
  %v9396 = vld [vmem:[%s9357 + $0x98] sm:$0xf]
  %v9397 = vld [vmem:[%s9357 + $0x9c] sm:$0xf]
  %v9398 = vld [vmem:[%s9357 + $0xa0] sm:$0xf]
  %v9399 = vld [vmem:[%s9357 + $0xa4] sm:$0xf]
  %v9400 = vld [vmem:[%s9357 + $0xa8] sm:$0xf]
  %v9401 = vld [vmem:[%s9357 + $0xac] sm:$0xf]
  %v9402 = vld [vmem:[%s9357 + $0xb0] sm:$0xf]
  %v9403 = vld [vmem:[%s9357 + $0xb4] sm:$0xf]
  %v9404 = vld [vmem:[%s9357 + $0xb8] sm:$0xf]
  %v9405 = vld [vmem:[%s9357 + $0xbc] sm:$0xf]
  %v9406 = vld [vmem:[%s9357 + $0xc0] sm:$0xf]
  %v9407 = vld [vmem:[%s9357 + $0xc4] sm:$0xf]
  %v9408 = vld [vmem:[%s9357 + $0xc8] sm:$0xf]
  %v9409 = vld [vmem:[%s9357 + $0xcc] sm:$0xf]
  %v9410 = vld [vmem:[%s9357 + $0xd0] sm:$0xf]
  %v9411 = vld [vmem:[%s9357 + $0xd4] sm:$0xf]
  %v9412 = vld [vmem:[%s9357 + $0xd8] sm:$0xf]
  %v9413 = vld [vmem:[%s9357 + $0xdc] sm:$0xf]
  %v9414 = vld [vmem:[%s9357 + $0xe0] sm:$0xf]
  %v9415 = vld [vmem:[%s9357 + $0xe4] sm:$0xf]
  %v9416 = vld [vmem:[%s9357 + $0xe8] sm:$0xf]
  %v9417 = vld [vmem:[%s9357 + $0xec] sm:$0xf]
  %v9418 = vld [vmem:[%s9357 + $0xf0] sm:$0xf]
  %v9419 = vld [vmem:[%s9357 + $0xf4] sm:$0xf]
  %v9420 = vld [vmem:[%s9357 + $0xf8] sm:$0xf]
  %v9421 = vld [vmem:[%s9357 + $0xfc] sm:$0xf]
  %v9422 = vld [vmem:[%s9357 + $0x100] sm:$0xf]
  %v9423 = vld [vmem:[%s9357 + $0x104] sm:$0xf]
  %v9424 = vld [vmem:[%s9357 + $0x108] sm:$0xf]
  %v9425 = vld [vmem:[%s9357 + $0x10c] sm:$0xf]
  %v9426 = vld [vmem:[%s9357 + $0x110] sm:$0xf]
  %v9427 = vld [vmem:[%s9357 + $0x114] sm:$0xf]
  %v9428 = vld [vmem:[%s9357 + $0x118] sm:$0xf]
  %v9429 = vld [vmem:[%s9357 + $0x11c] sm:$0xf]
  %v9430 = vld [vmem:[%s9357 + $0x120] sm:$0xf]
  %v9431 = vld [vmem:[%s9357 + $0x124] sm:$0xf]
  %v9432 = vld [vmem:[%s9357 + $0x128] sm:$0xf]
  %v9433 = vld [vmem:[%s9357 + $0x12c] sm:$0xf]
  %v9434 = vld [vmem:[%s9357 + $0x130] sm:$0xf]
  %v9435 = vld [vmem:[%s9357 + $0x134] sm:$0xf]
  %v9436 = vld [vmem:[%s9357 + $0x138] sm:$0xf]
  %v9437 = vld [vmem:[%s9357 + $0x13c] sm:$0xf]
  %v9438 = vld [vmem:[%s9357 + $0x140] sm:$0xf]
  %v9439 = vld [vmem:[%s9357 + $0x144] sm:$0xf]
  %v9440 = vld [vmem:[%s9357 + $0x148] sm:$0xf]
  %v9441 = vld [vmem:[%s9357 + $0x14c] sm:$0xf]
  %v9442 = vld [vmem:[%s9357 + $0x150] sm:$0xf]
  %v9443 = vld [vmem:[%s9357 + $0x154] sm:$0xf]
  %v9444 = vld [vmem:[%s9357 + $0x158] sm:$0xf]
  %v9445 = vld [vmem:[%s9357 + $0x15c] sm:$0xf]
  %v9446 = vld [vmem:[%s9357 + $0x160] sm:$0xf]
  %v9447 = vld [vmem:[%s9357 + $0x164] sm:$0xf]
  %v9448 = vld [vmem:[%s9357 + $0x168] sm:$0xf]
  %v9449 = vld [vmem:[%s9357 + $0x16c] sm:$0xf]
  %v9450 = vld [vmem:[%s9357 + $0x170] sm:$0xf]
  %v9451 = vld [vmem:[%s9357 + $0x174] sm:$0xf]
  %v9452 = vld [vmem:[%s9357 + $0x178] sm:$0xf]
  %v9453 = vld [vmem:[%s9357 + $0x17c] sm:$0xf]
  %v9454 = vld [vmem:[%s9357 + $0x180] sm:$0xf]
  %v9455 = vld [vmem:[%s9357 + $0x184] sm:$0xf]
  %v9456 = vld [vmem:[%s9357 + $0x188] sm:$0xf]
  %v9457 = vld [vmem:[%s9357 + $0x18c] sm:$0xf]
  %v9458 = vld [vmem:[%s9357 + $0x190] sm:$0xf]
  %v9459 = vld [vmem:[%s9357 + $0x194] sm:$0xf]
  %v9460 = vld [vmem:[%s9357 + $0x198] sm:$0xf]
  %v9461 = vld [vmem:[%s9357 + $0x19c] sm:$0xf]
  %v9462 = vld [vmem:[%s9357 + $0x1a0] sm:$0xf]
  %v9463 = vld [vmem:[%s9357 + $0x1a4] sm:$0xf]
  %v9464 = vld [vmem:[%s9357 + $0x1a8] sm:$0xf]
  %v9465 = vld [vmem:[%s9357 + $0x1ac] sm:$0xf]
  %v9466 = vld [vmem:[%s9357 + $0x1b0] sm:$0xf]
  %v9467 = vld [vmem:[%s9357 + $0x1b4] sm:$0xf]
  %v9468 = vld [vmem:[%s9357 + $0x1b8] sm:$0xf]
  %v9469 = vld [vmem:[%s9357 + $0x1bc] sm:$0xf]
  %v9470 = vld [vmem:[%s9357 + $0x1c0] sm:$0xf]
  %v9471 = vld [vmem:[%s9357 + $0x1c4] sm:$0xf]
  %v9472 = vld [vmem:[%s9357 + $0x1c8] sm:$0xf]
  %v9473 = vld [vmem:[%s9357 + $0x1cc] sm:$0xf]
  %v9474 = vld [vmem:[%s9357 + $0x1d0] sm:$0xf]
  %v9475 = vld [vmem:[%s9357 + $0x1d4] sm:$0xf]
  %v9476 = vld [vmem:[%s9357 + $0x1d8] sm:$0xf]
  %v9477 = vld [vmem:[%s9357 + $0x1dc] sm:$0xf]
  %v9478 = vld [vmem:[%s9357 + $0x1e0] sm:$0xf]
  %v9479 = vld [vmem:[%s9357 + $0x1e4] sm:$0xf]
  %v9480 = vld [vmem:[%s9357 + $0x1e8] sm:$0xf]
  %v9481 = vld [vmem:[%s9357 + $0x1ec] sm:$0xf]
  %v9482 = vld [vmem:[%s9357 + $0x1f0] sm:$0xf]
  %v9483 = vld [vmem:[%s9357 + $0x1f4] sm:$0xf]
  %v9484 = vld [vmem:[%s9357 + $0x1f8] sm:$0xf]
  %v9485 = vld [vmem:[%s9357 + $0x1fc] sm:$0xf]
  %v9614 = vunpack.c.l.b16 %v9358
  %v9615 = vunpack.c.l.b16 %v9359
  %v9616 = vunpack.c.l.b16 %v9360
  %v9617 = vunpack.c.l.b16 %v9361
  %v9618 = vunpack.c.l.b16 %v9362
  %v9619 = vunpack.c.l.b16 %v9363
  %v9620 = vunpack.c.l.b16 %v9364
  %v9621 = vunpack.c.l.b16 %v9365
  %v9622 = vunpack.c.l.b16 %v9366
  %v9623 = vunpack.c.l.b16 %v9367
  %v9624 = vunpack.c.l.b16 %v9368
  %v9625 = vunpack.c.l.b16 %v9369
  %v9626 = vunpack.c.l.b16 %v9370
  %v9627 = vunpack.c.l.b16 %v9371
  %v9628 = vunpack.c.l.b16 %v9372
  %v9629 = vunpack.c.l.b16 %v9373
  %v9630 = vunpack.c.l.b16 %v9374
  %v9631 = vunpack.c.l.b16 %v9375
  %v9632 = vunpack.c.l.b16 %v9376
  %v9633 = vunpack.c.l.b16 %v9377
  %v9634 = vunpack.c.l.b16 %v9378
  %v9635 = vunpack.c.l.b16 %v9379
  %v9636 = vunpack.c.l.b16 %v9380
  %v9637 = vunpack.c.l.b16 %v9381
  %v9638 = vunpack.c.l.b16 %v9382
  %v9639 = vunpack.c.l.b16 %v9383
  %v9640 = vunpack.c.l.b16 %v9384
  %v9641 = vunpack.c.l.b16 %v9385
  %v9642 = vunpack.c.l.b16 %v9386
  %v9643 = vunpack.c.l.b16 %v9387
  %v9644 = vunpack.c.l.b16 %v9388
  %v9645 = vunpack.c.l.b16 %v9389
  %v9646 = vunpack.c.l.b16 %v9390
  %v9647 = vunpack.c.l.b16 %v9391
  %v9648 = vunpack.c.l.b16 %v9392
  %v9649 = vunpack.c.l.b16 %v9393
  %v9650 = vunpack.c.l.b16 %v9394
  %v9651 = vunpack.c.l.b16 %v9395
  %v9652 = vunpack.c.l.b16 %v9396
  %v9653 = vunpack.c.l.b16 %v9397
  %v9654 = vunpack.c.l.b16 %v9398
  %v9655 = vunpack.c.l.b16 %v9399
  %v9656 = vunpack.c.l.b16 %v9400
  %v9657 = vunpack.c.l.b16 %v9401
  %v9658 = vunpack.c.l.b16 %v9402
  %v9659 = vunpack.c.l.b16 %v9403
  %v9660 = vunpack.c.l.b16 %v9404
  %v9661 = vunpack.c.l.b16 %v9405
  %v9662 = vunpack.c.l.b16 %v9406
  %v9663 = vunpack.c.l.b16 %v9407
  %v9664 = vunpack.c.l.b16 %v9408
  %v9665 = vunpack.c.l.b16 %v9409
  %v9666 = vunpack.c.l.b16 %v9410
  %v9667 = vunpack.c.l.b16 %v9411
  %v9668 = vunpack.c.l.b16 %v9412
  %v9669 = vunpack.c.l.b16 %v9413
  %v9670 = vunpack.c.l.b16 %v9414
  %v9671 = vunpack.c.l.b16 %v9415
  %v9672 = vunpack.c.l.b16 %v9416
  %v9673 = vunpack.c.l.b16 %v9417
  %v9674 = vunpack.c.l.b16 %v9418
  %v9675 = vunpack.c.l.b16 %v9419
  %v9676 = vunpack.c.l.b16 %v9420
  %v9677 = vunpack.c.l.b16 %v9421
  %v9678 = vunpack.c.l.b16 %v9422
  %v9679 = vunpack.c.l.b16 %v9423
  %v9680 = vunpack.c.l.b16 %v9424
  %v9681 = vunpack.c.l.b16 %v9425
  %v9682 = vunpack.c.l.b16 %v9426
  %v9683 = vunpack.c.l.b16 %v9427
  %v9684 = vunpack.c.l.b16 %v9428
  %v9685 = vunpack.c.l.b16 %v9429
  %v9686 = vunpack.c.l.b16 %v9430
  %v9687 = vunpack.c.l.b16 %v9431
  %v9688 = vunpack.c.l.b16 %v9432
  %v9689 = vunpack.c.l.b16 %v9433
  %v9690 = vunpack.c.l.b16 %v9434
  %v9691 = vunpack.c.l.b16 %v9435
  %v9692 = vunpack.c.l.b16 %v9436
  %v9693 = vunpack.c.l.b16 %v9437
  %v9694 = vunpack.c.l.b16 %v9438
  %v9695 = vunpack.c.l.b16 %v9439
  %v9696 = vunpack.c.l.b16 %v9440
  %v9697 = vunpack.c.l.b16 %v9441
  %v9698 = vunpack.c.l.b16 %v9442
  %v9699 = vunpack.c.l.b16 %v9443
  %v9700 = vunpack.c.l.b16 %v9444
  %v9701 = vunpack.c.l.b16 %v9445
  %v9702 = vunpack.c.l.b16 %v9446
  %v9703 = vunpack.c.l.b16 %v9447
  %v9704 = vunpack.c.l.b16 %v9448
  %v9705 = vunpack.c.l.b16 %v9449
  %v9706 = vunpack.c.l.b16 %v9450
  %v9707 = vunpack.c.l.b16 %v9451
  %v9708 = vunpack.c.l.b16 %v9452
  %v9709 = vunpack.c.l.b16 %v9453
  %v9710 = vunpack.c.l.b16 %v9454
  %v9711 = vunpack.c.l.b16 %v9455
  %v9712 = vunpack.c.l.b16 %v9456
  %v9713 = vunpack.c.l.b16 %v9457
  %v9714 = vunpack.c.l.b16 %v9458
  %v9715 = vunpack.c.l.b16 %v9459
  %v9716 = vunpack.c.l.b16 %v9460
  %v9717 = vunpack.c.l.b16 %v9461
  %v9718 = vunpack.c.l.b16 %v9462
  %v9719 = vunpack.c.l.b16 %v9463
  %v9720 = vunpack.c.l.b16 %v9464
  %v9721 = vunpack.c.l.b16 %v9465
  %v9722 = vunpack.c.l.b16 %v9466
  %v9723 = vunpack.c.l.b16 %v9467
  %v9724 = vunpack.c.l.b16 %v9468
  %v9725 = vunpack.c.l.b16 %v9469
  %v9726 = vunpack.c.l.b16 %v9470
  %v9727 = vunpack.c.l.b16 %v9471
  %v9728 = vunpack.c.l.b16 %v9472
  %v9729 = vunpack.c.l.b16 %v9473
  %v9730 = vunpack.c.l.b16 %v9474
  %v9731 = vunpack.c.l.b16 %v9475
  %v9732 = vunpack.c.l.b16 %v9476
  %v9733 = vunpack.c.l.b16 %v9477
  %v9734 = vunpack.c.l.b16 %v9478
  %v9735 = vunpack.c.l.b16 %v9479
  %v9736 = vunpack.c.l.b16 %v9480
  %v9737 = vunpack.c.l.b16 %v9481
  %v9738 = vunpack.c.l.b16 %v9482
  %v9739 = vunpack.c.l.b16 %v9483
  %v9740 = vunpack.c.l.b16 %v9484
  %v9741 = vunpack.c.l.b16 %v9485
  %v9742 = vpack.c.b16 %v9615, %v9614
  %v9743 = vpack.c.b16 %v9617, %v9616
  %v9744 = vpack.c.b16 %v9619, %v9618
  %v9745 = vpack.c.b16 %v9621, %v9620
  %v9746 = vpack.c.b16 %v9623, %v9622
  %v9747 = vpack.c.b16 %v9625, %v9624
  %v9748 = vpack.c.b16 %v9627, %v9626
  %v9749 = vpack.c.b16 %v9629, %v9628
  %v9750 = vpack.c.b16 %v9631, %v9630
  %v9751 = vpack.c.b16 %v9633, %v9632
  %v9752 = vpack.c.b16 %v9635, %v9634
  %v9753 = vpack.c.b16 %v9637, %v9636
  %v9754 = vpack.c.b16 %v9639, %v9638
  %v9755 = vpack.c.b16 %v9641, %v9640
  %v9756 = vpack.c.b16 %v9643, %v9642
  %v9757 = vpack.c.b16 %v9645, %v9644
  %v9758 = vpack.c.b16 %v9647, %v9646
  %v9759 = vpack.c.b16 %v9649, %v9648
  %v9760 = vpack.c.b16 %v9651, %v9650
  %v9761 = vpack.c.b16 %v9653, %v9652
  %v9762 = vpack.c.b16 %v9655, %v9654
  %v9763 = vpack.c.b16 %v9657, %v9656
  %v9764 = vpack.c.b16 %v9659, %v9658
  %v9765 = vpack.c.b16 %v9661, %v9660
  %v9766 = vpack.c.b16 %v9663, %v9662
  %v9767 = vpack.c.b16 %v9665, %v9664
  %v9768 = vpack.c.b16 %v9667, %v9666
  %v9769 = vpack.c.b16 %v9669, %v9668
  %v9770 = vpack.c.b16 %v9671, %v9670
  %v9771 = vpack.c.b16 %v9673, %v9672
  %v9772 = vpack.c.b16 %v9675, %v9674
  %v9773 = vpack.c.b16 %v9677, %v9676
  %v9774 = vpack.c.b16 %v9679, %v9678
  %v9775 = vpack.c.b16 %v9681, %v9680
  %v9776 = vpack.c.b16 %v9683, %v9682
  %v9777 = vpack.c.b16 %v9685, %v9684
  %v9778 = vpack.c.b16 %v9687, %v9686
  %v9779 = vpack.c.b16 %v9689, %v9688
  %v9780 = vpack.c.b16 %v9691, %v9690
  %v9781 = vpack.c.b16 %v9693, %v9692
  %v9782 = vpack.c.b16 %v9695, %v9694
  %v9783 = vpack.c.b16 %v9697, %v9696
  %v9784 = vpack.c.b16 %v9699, %v9698
  %v9785 = vpack.c.b16 %v9701, %v9700
  %v9786 = vpack.c.b16 %v9703, %v9702
  %v9787 = vpack.c.b16 %v9705, %v9704
  %v9788 = vpack.c.b16 %v9707, %v9706
  %v9789 = vpack.c.b16 %v9709, %v9708
  %v9790 = vpack.c.b16 %v9711, %v9710
  %v9791 = vpack.c.b16 %v9713, %v9712
  %v9792 = vpack.c.b16 %v9715, %v9714
  %v9793 = vpack.c.b16 %v9717, %v9716
  %v9794 = vpack.c.b16 %v9719, %v9718
  %v9795 = vpack.c.b16 %v9721, %v9720
  %v9796 = vpack.c.b16 %v9723, %v9722
  %v9797 = vpack.c.b16 %v9725, %v9724
  %v9798 = vpack.c.b16 %v9727, %v9726
  %v9799 = vpack.c.b16 %v9729, %v9728
  %v9800 = vpack.c.b16 %v9731, %v9730
  %v9801 = vpack.c.b16 %v9733, %v9732
  %v9802 = vpack.c.b16 %v9735, %v9734
  %v9803 = vpack.c.b16 %v9737, %v9736
  %v9804 = vpack.c.b16 %v9739, %v9738
  %v9805 = vpack.c.b16 %v9741, %v9740
  %9870 = vmatprep.subr.bf16.mxu0 0
  %9871 = vmatpush1.bf16.msra.mxu0 %v9749
  %9872 = vmatprep.subr.bf16.mxu0 0
  %9873 = vmatpush1.bf16.msra.mxu0 %v9748
  %9874 = vmatprep.subr.bf16.mxu0 0
  %9875 = vmatpush1.bf16.msra.mxu0 %v9747
  %9876 = vmatprep.subr.bf16.mxu0 0
  %9877 = vmatpush1.bf16.msra.mxu0 %v9746
  %9878 = vmatprep.subr.bf16.mxu0 0
  %9879 = vmatpush1.bf16.msra.mxu0 %v9745
  %9880 = vmatprep.subr.bf16.mxu0 0
  %9881 = vmatpush1.bf16.msra.mxu0 %v9744
  %9882 = vmatprep.subr.bf16.mxu0 0
  %9883 = vmatpush1.bf16.msra.mxu0 %v9743
  %9884 = vmatprep.subr.bf16.mxu0 0
  %9885 = vmatpush1.bf16.msra.mxu0 %v9742
  %9886 = vmatprep.subr.bf16.mxu0 0
  %9887 = vmatpush2.bf16.msra.mxu0 %v9757
  %9888 = vmatprep.subr.bf16.mxu0 0
  %9889 = vmatpush2.bf16.msra.mxu0 %v9756
  %9890 = vmatprep.subr.bf16.mxu0 0
  %9891 = vmatpush2.bf16.msra.mxu0 %v9755
  %9892 = vmatprep.subr.bf16.mxu0 0
  %9893 = vmatpush2.bf16.msra.mxu0 %v9754
  %9894 = vmatprep.subr.bf16.mxu0 0
  %9895 = vmatpush2.bf16.msra.mxu0 %v9753
  %9896 = vmatprep.subr.bf16.mxu0 0
  %9897 = vmatpush2.bf16.msra.mxu0 %v9752
  %9898 = vmatprep.subr.bf16.mxu0 0
  %9899 = vmatpush2.bf16.msra.mxu0 %v9751
  %9900 = vmatprep.subr.bf16.mxu0 0
  %9901 = vmatpush2.bf16.msra.mxu0 %v9750
  %9902 = vmatprep.mubr.bf16.mxu0 %v7328
  %9903 = vmatmul.mubr.bf16.gmra.mxu0 %v7327
  %v9904 = vpop.f32.mrf.mxu0
  %v9905 = vadd.f32 0.0, %v9904
  %v9906 = vpop.f32.mrf.mxu0
  %v9907 = vpop.f32.mrf.mxu0
  %v9908 = vadd.f32 0.0, %v9907
  %v9909 = vpop.f32.mrf.mxu0
  %9910 = vmatprep.mubr.bf16.mxu0 %v7336
  %9911 = vmatmul.mubr.bf16.gmra.mxu0 %v7335
  %v9912 = vpop.f32.mrf.mxu0
  %v9913 = vadd.f32 0.0, %v9912
  %v9914 = vpop.f32.mrf.mxu0
  %v9915 = vpop.f32.mrf.mxu0
  %v9916 = vadd.f32 0.0, %v9915
  %v9917 = vpop.f32.mrf.mxu0
  %9918 = vdwg.mxu0
  %9919 = vmatprep.subr.bf16.mxu0 0
  %9920 = vmatpush1.bf16.msra.mxu0 %v9765
  %9921 = vmatprep.subr.bf16.mxu0 0
  %9922 = vmatpush1.bf16.msra.mxu0 %v9764
  %9923 = vmatprep.subr.bf16.mxu0 0
  %9924 = vmatpush1.bf16.msra.mxu0 %v9763
  %9925 = vmatprep.subr.bf16.mxu0 0
  %9926 = vmatpush1.bf16.msra.mxu0 %v9762
  %9927 = vmatprep.subr.bf16.mxu0 0
  %9928 = vmatpush1.bf16.msra.mxu0 %v9761
  %9929 = vmatprep.subr.bf16.mxu0 0
  %9930 = vmatpush1.bf16.msra.mxu0 %v9760
  %9931 = vmatprep.subr.bf16.mxu0 0
  %9932 = vmatpush1.bf16.msra.mxu0 %v9759
  %9933 = vmatprep.subr.bf16.mxu0 0
  %9934 = vmatpush1.bf16.msra.mxu0 %v9758
  %9935 = vmatprep.subr.bf16.mxu0 0
  %9936 = vmatpush2.bf16.msra.mxu0 %v9773
  %9937 = vmatprep.subr.bf16.mxu0 0
  %9938 = vmatpush2.bf16.msra.mxu0 %v9772
  %9939 = vmatprep.subr.bf16.mxu0 0
  %9940 = vmatpush2.bf16.msra.mxu0 %v9771
  %9941 = vmatprep.subr.bf16.mxu0 0
  %9942 = vmatpush2.bf16.msra.mxu0 %v9770
  %9943 = vmatprep.subr.bf16.mxu0 0
  %9944 = vmatpush2.bf16.msra.mxu0 %v9769
  %9945 = vmatprep.subr.bf16.mxu0 0
  %9946 = vmatpush2.bf16.msra.mxu0 %v9768
  %9947 = vmatprep.subr.bf16.mxu0 0
  %9948 = vmatpush2.bf16.msra.mxu0 %v9767
  %9949 = vmatprep.subr.bf16.mxu0 0
  %9950 = vmatpush2.bf16.msra.mxu0 %v9766
  %9951 = vmatprep.mubr.bf16.mxu0 %v7330
  %9952 = vmatmul.mubr.bf16.gmra.mxu0 %v7329
  %v9953 = vpop.f32.mrf.mxu0
  %v9954 = vadd.f32 %v9905, %v9953
  %v9955 = vpop.f32.mrf.mxu0
  %v9956 = vpop.f32.mrf.mxu0
  %v9957 = vadd.f32 %v9908, %v9956
  %v9958 = vpop.f32.mrf.mxu0
  %9959 = vmatprep.mubr.bf16.mxu0 %v7338
  %9960 = vmatmul.mubr.bf16.gmra.mxu0 %v7337
  %v9961 = vpop.f32.mrf.mxu0
  %v9962 = vadd.f32 %v9913, %v9961
  %v9963 = vpop.f32.mrf.mxu0
  %v9964 = vpop.f32.mrf.mxu0
  %v9965 = vadd.f32 %v9916, %v9964
  %v9966 = vpop.f32.mrf.mxu0
  %9967 = vdwg.mxu0
  %9968 = vmatprep.subr.bf16.mxu0 0
  %9969 = vmatpush1.bf16.msra.mxu0 %v9781
  %9970 = vmatprep.subr.bf16.mxu0 0
  %9971 = vmatpush1.bf16.msra.mxu0 %v9780
  %9972 = vmatprep.subr.bf16.mxu0 0
  %9973 = vmatpush1.bf16.msra.mxu0 %v9779
  %9974 = vmatprep.subr.bf16.mxu0 0
  %9975 = vmatpush1.bf16.msra.mxu0 %v9778
  %9976 = vmatprep.subr.bf16.mxu0 0
  %9977 = vmatpush1.bf16.msra.mxu0 %v9777
  %9978 = vmatprep.subr.bf16.mxu0 0
  %9979 = vmatpush1.bf16.msra.mxu0 %v9776
  %9980 = vmatprep.subr.bf16.mxu0 0
  %9981 = vmatpush1.bf16.msra.mxu0 %v9775
  %9982 = vmatprep.subr.bf16.mxu0 0
  %9983 = vmatpush1.bf16.msra.mxu0 %v9774
  %9984 = vmatprep.subr.bf16.mxu0 0
  %9985 = vmatpush2.bf16.msra.mxu0 %v9789
  %9986 = vmatprep.subr.bf16.mxu0 0
  %9987 = vmatpush2.bf16.msra.mxu0 %v9788
  %9988 = vmatprep.subr.bf16.mxu0 0
  %9989 = vmatpush2.bf16.msra.mxu0 %v9787
  %9990 = vmatprep.subr.bf16.mxu0 0
  %9991 = vmatpush2.bf16.msra.mxu0 %v9786
  %9992 = vmatprep.subr.bf16.mxu0 0
  %9993 = vmatpush2.bf16.msra.mxu0 %v9785
  %9994 = vmatprep.subr.bf16.mxu0 0
  %9995 = vmatpush2.bf16.msra.mxu0 %v9784
  %9996 = vmatprep.subr.bf16.mxu0 0
  %9997 = vmatpush2.bf16.msra.mxu0 %v9783
  %9998 = vmatprep.subr.bf16.mxu0 0
  %9999 = vmatpush2.bf16.msra.mxu0 %v9782
  %10000 = vmatprep.mubr.bf16.mxu0 %v7332
  %10001 = vmatmul.mubr.bf16.gmra.mxu0 %v7331
  %v10002 = vpop.f32.mrf.mxu0
  %v10003 = vadd.f32 %v9954, %v10002
  %v10004 = vpop.f32.mrf.mxu0
  %v10005 = vpop.f32.mrf.mxu0
  %v10006 = vadd.f32 %v9957, %v10005
  %v10007 = vpop.f32.mrf.mxu0
  %10008 = vmatprep.mubr.bf16.mxu0 %v7340
  %10009 = vmatmul.mubr.bf16.gmra.mxu0 %v7339
  %v10010 = vpop.f32.mrf.mxu0
  %v10011 = vadd.f32 %v9962, %v10010
  %v10012 = vpop.f32.mrf.mxu0
  %v10013 = vpop.f32.mrf.mxu0
  %v10014 = vadd.f32 %v9965, %v10013
  %v10015 = vpop.f32.mrf.mxu0
  %10016 = vdwg.mxu0
  %10017 = vmatprep.subr.bf16.mxu0 0
  %10018 = vmatpush1.bf16.msra.mxu0 %v9797
  %10019 = vmatprep.subr.bf16.mxu0 0
  %10020 = vmatpush1.bf16.msra.mxu0 %v9796
  %10021 = vmatprep.subr.bf16.mxu0 0
  %10022 = vmatpush1.bf16.msra.mxu0 %v9795
  %10023 = vmatprep.subr.bf16.mxu0 0
  %10024 = vmatpush1.bf16.msra.mxu0 %v9794
  %10025 = vmatprep.subr.bf16.mxu0 0
  %10026 = vmatpush1.bf16.msra.mxu0 %v9793
  %10027 = vmatprep.subr.bf16.mxu0 0
  %10028 = vmatpush1.bf16.msra.mxu0 %v9792
  %10029 = vmatprep.subr.bf16.mxu0 0
  %10030 = vmatpush1.bf16.msra.mxu0 %v9791
  %10031 = vmatprep.subr.bf16.mxu0 0
  %10032 = vmatpush1.bf16.msra.mxu0 %v9790
  %10033 = vmatprep.subr.bf16.mxu0 0
  %10034 = vmatpush2.bf16.msra.mxu0 %v9805
  %10035 = vmatprep.subr.bf16.mxu0 0
  %10036 = vmatpush2.bf16.msra.mxu0 %v9804
  %10037 = vmatprep.subr.bf16.mxu0 0
  %10038 = vmatpush2.bf16.msra.mxu0 %v9803
  %10039 = vmatprep.subr.bf16.mxu0 0
  %10040 = vmatpush2.bf16.msra.mxu0 %v9802
  %10041 = vmatprep.subr.bf16.mxu0 0
  %10042 = vmatpush2.bf16.msra.mxu0 %v9801
  %10043 = vmatprep.subr.bf16.mxu0 0
  %10044 = vmatpush2.bf16.msra.mxu0 %v9800
  %10045 = vmatprep.subr.bf16.mxu0 0
  %10046 = vmatpush2.bf16.msra.mxu0 %v9799
  %10047 = vmatprep.subr.bf16.mxu0 0
  %10048 = vmatpush2.bf16.msra.mxu0 %v9798
  %10049 = vmatprep.mubr.bf16.mxu0 %v7334
  %10050 = vmatmul.mubr.bf16.gmra.mxu0 %v7333
  %v10051 = vpop.f32.mrf.mxu0
  %v10052 = vadd.f32 %v10003, %v10051
  %v10053 = vpop.f32.mrf.mxu0
  %v10054 = vpop.f32.mrf.mxu0
  %v10055 = vadd.f32 %v10006, %v10054
  %v10056 = vpop.f32.mrf.mxu0
  %10057 = vmatprep.mubr.bf16.mxu0 %v7342
  %10058 = vmatmul.mubr.bf16.gmra.mxu0 %v7341
  %v10059 = vpop.f32.mrf.mxu0
  %v10060 = vadd.f32 %v10011, %v10059
  %v10061 = vpop.f32.mrf.mxu0
  %v10062 = vpop.f32.mrf.mxu0
  %v10063 = vadd.f32 %v10014, %v10062
  %v10064 = vpop.f32.mrf.mxu0
  %10065 = vdwg.mxu0
  %v10066 = vmax.f32 %v7925, %v8634
  %v10067 = vmax.f32 %v7928, %v8637
  %v10068 = vmax.f32 %v7933, %v8642
  %v10069 = vmax.f32 %v7936, %v8645
  %v10070 = vmax.f32 %v9343, %v10052
  %v10071 = vmax.f32 %v9346, %v10055
  %v10072 = vmax.f32 %v9351, %v10060
  %v10073 = vmax.f32 %v9354, %v10063
  %v10074 = vmax.f32 %v10066, %v10070
  %v10075 = vmax.f32 %v10067, %v10071
  %v10076 = vmax.f32 %v10068, %v10072
  %v10077 = vmax.f32 %v10069, %v10073
  %v10078 = vld [vmem:[%s6] sm:$0x1]
  %v10080 = vlaneseq
  %v10081 = vshrl.u32 %v10080, 7
  %v10082 = vsub.s32 0, %v10081
  %v10083 = vrot.slane %v10078, %v10082
  %v10085 = vadd.f32 %v10074, %v10083
  %v10086 = vadd.f32 %v10075, %v10083
  %v10087 = vadd.f32 %v10076, %v10083
  %v10088 = vadd.f32 %v10077, %v10083
  %v10089 = vmax.f32 %v10085, 0.0
  %v10090 = vmax.f32 %v10086, 0.0
  %v10091 = vmax.f32 %v10087, 0.0
  %v10092 = vmax.f32 %v10088, 0.0
  %v10093 = vpack.c.bf16 %v10090, %v10089
  %v10094 = vpack.c.bf16 %v10092, %v10091
  %v10097 = vunpack.c.l.b16 %v10093
  %v10098 = vunpack.c.h.b16 %v10093
  %v10099 = vunpack.c.l.b16 %v10094
  %v10100 = vunpack.c.h.b16 %v10094
  %v10101 = vpack.c.b16 %v10097, %v10097
  %v10102 = vpack.c.b16 %v10098, %v10098
  %v10103 = vpack.c.b16 %v10099, %v10099
  %v10104 = vpack.c.b16 %v10100, %v10100
  %10109 = vst [vmem:[#allocation6] sm:$0xf] %v10101
  %10110 = vst [vmem:[#allocation6 + $0x4] sm:$0xf] %v10102
  %10111 = vst [vmem:[#allocation6 + $0x8] sm:$0xf] %v10103
  %10112 = vst [vmem:[#allocation6 + $0xc] sm:$0xf] %v10104
  %v10113 = vld [vmem:[#allocation6] sm:$0x1]
  %vm10114 = vmand %vm4890, %vm3337
  %v10115 = vld [vmem:[#allocation7] sm:$0x1]
  %v10116 = vsel %vm10114, %v10113, %v10115
  %10117 = vst [vmem:[#allocation7] sm:$0x1] %v10116
  %v10118 = vld [vmem:[#allocation6] sm:$0x1]
  %v10120 = vshrl.u32 %v10118, 16
  %v10122 = vrot.slane %v10120, 4
  %v10123 = vrot.slane %v10122, 4
  %v10125 = vld [vmem:[#allocation7 + $0x4] sm:$0x1]
  %v10126 = vsel %vm10114, %v10123, %v10125
  %10127 = vst [vmem:[#allocation7 + $0x4] sm:$0x1] %v10126
  %v10128 = vld [vmem:[#allocation6] sm:$0x2]
  %v10130 = vshrl.u32 %v10128, 16
  %v10132 = vrot.slane %v10130, 5
  %v10133 = vrot.slane %v10132, 4
  %v10135 = vld [vmem:[#allocation7 + $0x8] sm:$0x1]
  %v10136 = vsel %vm10114, %v10133, %v10135
  %10137 = vst [vmem:[#allocation7 + $0x8] sm:$0x1] %v10136
  %v10138 = vld [vmem:[#allocation6] sm:$0x4]
  %v10140 = vrot.slane %v10138, 6
  %v10141 = vrot.slane %v10140, 4
  %v10143 = vld [vmem:[#allocation7 + $0xc] sm:$0x1]
  %v10144 = vsel %vm10114, %v10141, %v10143
  %10145 = vst [vmem:[#allocation7 + $0xc] sm:$0x1] %v10144
  %v10146 = vld [vmem:[#allocation6 + $0x4] sm:$0x1]
  %vm10147 = vmand %vm4890, %vm3348
  %v10148 = vld [vmem:[#allocation7] sm:$0x1]
  %v10149 = vsel %vm10147, %v10146, %v10148
  %10150 = vst [vmem:[#allocation7] sm:$0x1] %v10149
  %v10151 = vld [vmem:[#allocation6 + $0x4] sm:$0x2]
  %v10153 = vshll.u32 %v10151, 16
  %v10155 = vrot.slane %v10153, 5
  %v10156 = vrot.slane %v10155, 4
  %v10158 = vld [vmem:[#allocation7 + $0x4] sm:$0x1]
  %v10159 = vsel %vm10147, %v10156, %v10158
  %10160 = vst [vmem:[#allocation7 + $0x4] sm:$0x1] %v10159
  %v10161 = vld [vmem:[#allocation6 + $0x4] sm:$0x4]
  %v10163 = vshll.u32 %v10161, 16
  %v10165 = vrot.slane %v10163, 6
  %v10166 = vrot.slane %v10165, 4
  %v10168 = vld [vmem:[#allocation7 + $0x8] sm:$0x1]
  %v10169 = vsel %vm10147, %v10166, %v10168
  %10170 = vst [vmem:[#allocation7 + $0x8] sm:$0x1] %v10169
  %v10171 = vld [vmem:[#allocation6 + $0x4] sm:$0x4]
  %v10173 = vrot.slane %v10171, 6
  %v10174 = vrot.slane %v10173, 4
  %v10176 = vld [vmem:[#allocation7 + $0xc] sm:$0x1]
  %v10177 = vsel %vm10147, %v10174, %v10176
  %10178 = vst [vmem:[#allocation7 + $0xc] sm:$0x1] %v10177
  %v10179 = vld [vmem:[#allocation7] sm:$0xff]
  %v10180 = vld [vmem:[#allocation7 + $0x8] sm:$0xff]
  %v10181 = vld [vmem:[%s7] sm:$0xff]
  %v10182 = vld [vmem:[%s7 + $0x8] sm:$0xff]
  %v10183 = vld [vmem:[%s7 + $0x10] sm:$0xff]
  %v10184 = vld [vmem:[%s7 + $0x18] sm:$0xff]
  %v10185 = vld [vmem:[%s7 + $0x20] sm:$0xff]
  %v10186 = vld [vmem:[%s7 + $0x28] sm:$0xff]
  %v10187 = vld [vmem:[%s7 + $0x30] sm:$0xff]
  %v10188 = vld [vmem:[%s7 + $0x38] sm:$0xff]
  %v10189 = vld [vmem:[%s7 + $0x40] sm:$0xff]
  %v10190 = vld [vmem:[%s7 + $0x48] sm:$0xff]
  %v10191 = vld [vmem:[%s7 + $0x50] sm:$0xff]
  %v10192 = vld [vmem:[%s7 + $0x58] sm:$0xff]
  %v10193 = vld [vmem:[%s7 + $0x60] sm:$0xff]
  %v10194 = vld [vmem:[%s7 + $0x68] sm:$0xff]
  %v10195 = vld [vmem:[%s7 + $0x70] sm:$0xff]
  %v10196 = vld [vmem:[%s7 + $0x78] sm:$0xff]
  %v10197 = vld [vmem:[%s7 + $0x80] sm:$0xff]
  %v10198 = vld [vmem:[%s7 + $0x88] sm:$0xff]
  %v10199 = vld [vmem:[%s7 + $0x90] sm:$0xff]
  %v10200 = vld [vmem:[%s7 + $0x98] sm:$0xff]
  %v10201 = vld [vmem:[%s7 + $0xa0] sm:$0xff]
  %v10202 = vld [vmem:[%s7 + $0xa8] sm:$0xff]
  %v10203 = vld [vmem:[%s7 + $0xb0] sm:$0xff]
  %v10204 = vld [vmem:[%s7 + $0xb8] sm:$0xff]
  %v10205 = vld [vmem:[%s7 + $0xc0] sm:$0xff]
  %v10206 = vld [vmem:[%s7 + $0xc8] sm:$0xff]
  %v10207 = vld [vmem:[%s7 + $0xd0] sm:$0xff]
  %v10208 = vld [vmem:[%s7 + $0xd8] sm:$0xff]
  %v10209 = vld [vmem:[%s7 + $0xe0] sm:$0xff]
  %v10210 = vld [vmem:[%s7 + $0xe8] sm:$0xff]
  %v10211 = vld [vmem:[%s7 + $0xf0] sm:$0xff]
  %v10212 = vld [vmem:[%s7 + $0xf8] sm:$0xff]
  %v10213 = vld [vmem:[%s7 + $0x100] sm:$0xff]
  %v10214 = vld [vmem:[%s7 + $0x108] sm:$0xff]
  %v10215 = vld [vmem:[%s7 + $0x110] sm:$0xff]
  %v10216 = vld [vmem:[%s7 + $0x118] sm:$0xff]
  %v10217 = vld [vmem:[%s7 + $0x120] sm:$0xff]
  %v10218 = vld [vmem:[%s7 + $0x128] sm:$0xff]
  %v10219 = vld [vmem:[%s7 + $0x130] sm:$0xff]
  %v10220 = vld [vmem:[%s7 + $0x138] sm:$0xff]
  %v10221 = vld [vmem:[%s7 + $0x140] sm:$0xff]
  %v10222 = vld [vmem:[%s7 + $0x148] sm:$0xff]
  %v10223 = vld [vmem:[%s7 + $0x150] sm:$0xff]
  %v10224 = vld [vmem:[%s7 + $0x158] sm:$0xff]
  %v10225 = vld [vmem:[%s7 + $0x160] sm:$0xff]
  %v10226 = vld [vmem:[%s7 + $0x168] sm:$0xff]
  %v10227 = vld [vmem:[%s7 + $0x170] sm:$0xff]
  %v10228 = vld [vmem:[%s7 + $0x178] sm:$0xff]
  %v10229 = vld [vmem:[%s7 + $0x180] sm:$0xff]
  %v10230 = vld [vmem:[%s7 + $0x188] sm:$0xff]
  %v10231 = vld [vmem:[%s7 + $0x190] sm:$0xff]
  %v10232 = vld [vmem:[%s7 + $0x198] sm:$0xff]
  %v10233 = vld [vmem:[%s7 + $0x1a0] sm:$0xff]
  %v10234 = vld [vmem:[%s7 + $0x1a8] sm:$0xff]
  %v10235 = vld [vmem:[%s7 + $0x1b0] sm:$0xff]
  %v10236 = vld [vmem:[%s7 + $0x1b8] sm:$0xff]
  %v10237 = vld [vmem:[%s7 + $0x1c0] sm:$0xff]
  %v10238 = vld [vmem:[%s7 + $0x1c8] sm:$0xff]
  %v10239 = vld [vmem:[%s7 + $0x1d0] sm:$0xff]
  %v10240 = vld [vmem:[%s7 + $0x1d8] sm:$0xff]
  %v10241 = vld [vmem:[%s7 + $0x1e0] sm:$0xff]
  %v10242 = vld [vmem:[%s7 + $0x1e8] sm:$0xff]
  %v10243 = vld [vmem:[%s7 + $0x1f0] sm:$0xff]
  %v10244 = vld [vmem:[%s7 + $0x1f8] sm:$0xff]
  %v10245 = vld [vmem:[%s7 + $0x200] sm:$0xff]
  %v10246 = vld [vmem:[%s7 + $0x208] sm:$0xff]
  %v10247 = vld [vmem:[%s7 + $0x210] sm:$0xff]
  %v10248 = vld [vmem:[%s7 + $0x218] sm:$0xff]
  %v10249 = vld [vmem:[%s7 + $0x220] sm:$0xff]
  %v10250 = vld [vmem:[%s7 + $0x228] sm:$0xff]
  %v10251 = vld [vmem:[%s7 + $0x230] sm:$0xff]
  %v10252 = vld [vmem:[%s7 + $0x238] sm:$0xff]
  %v10253 = vld [vmem:[%s7 + $0x240] sm:$0xff]
  %v10254 = vld [vmem:[%s7 + $0x248] sm:$0xff]
  %v10255 = vld [vmem:[%s7 + $0x250] sm:$0xff]
  %v10256 = vld [vmem:[%s7 + $0x258] sm:$0xff]
  %v10257 = vld [vmem:[%s7 + $0x260] sm:$0xff]
  %v10258 = vld [vmem:[%s7 + $0x268] sm:$0xff]
  %v10259 = vld [vmem:[%s7 + $0x270] sm:$0xff]
  %v10260 = vld [vmem:[%s7 + $0x278] sm:$0xff]
  %v10261 = vld [vmem:[%s7 + $0x280] sm:$0xff]
  %v10262 = vld [vmem:[%s7 + $0x288] sm:$0xff]
  %v10263 = vld [vmem:[%s7 + $0x290] sm:$0xff]
  %v10264 = vld [vmem:[%s7 + $0x298] sm:$0xff]
  %v10265 = vld [vmem:[%s7 + $0x2a0] sm:$0xff]
  %v10266 = vld [vmem:[%s7 + $0x2a8] sm:$0xff]
  %v10267 = vld [vmem:[%s7 + $0x2b0] sm:$0xff]
  %v10268 = vld [vmem:[%s7 + $0x2b8] sm:$0xff]
  %v10269 = vld [vmem:[%s7 + $0x2c0] sm:$0xff]
  %v10270 = vld [vmem:[%s7 + $0x2c8] sm:$0xff]
  %v10271 = vld [vmem:[%s7 + $0x2d0] sm:$0xff]
  %v10272 = vld [vmem:[%s7 + $0x2d8] sm:$0xff]
  %v10273 = vld [vmem:[%s7 + $0x2e0] sm:$0xff]
  %v10274 = vld [vmem:[%s7 + $0x2e8] sm:$0xff]
  %v10275 = vld [vmem:[%s7 + $0x2f0] sm:$0xff]
  %v10276 = vld [vmem:[%s7 + $0x2f8] sm:$0xff]
  %v10277 = vld [vmem:[%s7 + $0x300] sm:$0xff]
  %v10278 = vld [vmem:[%s7 + $0x308] sm:$0xff]
  %v10279 = vld [vmem:[%s7 + $0x310] sm:$0xff]
  %v10280 = vld [vmem:[%s7 + $0x318] sm:$0xff]
  %v10281 = vld [vmem:[%s7 + $0x320] sm:$0xff]
  %v10282 = vld [vmem:[%s7 + $0x328] sm:$0xff]
  %v10283 = vld [vmem:[%s7 + $0x330] sm:$0xff]
  %v10284 = vld [vmem:[%s7 + $0x338] sm:$0xff]
  %v10285 = vld [vmem:[%s7 + $0x340] sm:$0xff]
  %v10286 = vld [vmem:[%s7 + $0x348] sm:$0xff]
  %v10287 = vld [vmem:[%s7 + $0x350] sm:$0xff]
  %v10288 = vld [vmem:[%s7 + $0x358] sm:$0xff]
  %v10289 = vld [vmem:[%s7 + $0x360] sm:$0xff]
  %v10290 = vld [vmem:[%s7 + $0x368] sm:$0xff]
  %v10291 = vld [vmem:[%s7 + $0x370] sm:$0xff]
  %v10292 = vld [vmem:[%s7 + $0x378] sm:$0xff]
  %v10293 = vld [vmem:[%s7 + $0x380] sm:$0xff]
  %v10294 = vld [vmem:[%s7 + $0x388] sm:$0xff]
  %v10295 = vld [vmem:[%s7 + $0x390] sm:$0xff]
  %v10296 = vld [vmem:[%s7 + $0x398] sm:$0xff]
  %v10297 = vld [vmem:[%s7 + $0x3a0] sm:$0xff]
  %v10298 = vld [vmem:[%s7 + $0x3a8] sm:$0xff]
  %v10299 = vld [vmem:[%s7 + $0x3b0] sm:$0xff]
  %v10300 = vld [vmem:[%s7 + $0x3b8] sm:$0xff]
  %v10301 = vld [vmem:[%s7 + $0x3c0] sm:$0xff]
  %v10302 = vld [vmem:[%s7 + $0x3c8] sm:$0xff]
  %v10303 = vld [vmem:[%s7 + $0x3d0] sm:$0xff]
  %v10304 = vld [vmem:[%s7 + $0x3d8] sm:$0xff]
  %v10305 = vld [vmem:[%s7 + $0x3e0] sm:$0xff]
  %v10306 = vld [vmem:[%s7 + $0x3e8] sm:$0xff]
  %v10307 = vld [vmem:[%s7 + $0x3f0] sm:$0xff]
  %v10308 = vld [vmem:[%s7 + $0x3f8] sm:$0xff]
  %v10309 = vld [vmem:[%s8] sm:$0xf]
  %v10311 = vlaneseq
  %v10312 = vshrl.u32 %v10311, 7
  %v10313 = vsub.s32 0, %v10312
  %v10314 = vrot.slane %v10309, %v10313
  %v10315 = vlaneseq
  %v10316 = vshrl.u32 %v10315, 7
  %v10317 = vsub.s32 1, %v10316
  %v10318 = vrot.slane %v10309, %v10317
  %v10319 = vlaneseq
  %v10320 = vshrl.u32 %v10319, 7
  %v10321 = vsub.s32 2, %v10320
  %v10322 = vrot.slane %v10309, %v10321
  %v10323 = vlaneseq
  %v10324 = vshrl.u32 %v10323, 7
  %v10325 = vsub.s32 3, %v10324
  %v10326 = vrot.slane %v10309, %v10325
  %v10333 = vunpack.c.l.b16 %v10179
  %v10334 = vunpack.c.h.b16 %v10179
  %v10335 = vunpack.c.l.b16 %v10180
  %v10336 = vunpack.c.h.b16 %v10180
  %v10337 = vpack.c.b16 %v10333, %v10333
  %v10338 = vpack.c.b16 %v10334, %v10334
  %v10339 = vpack.c.b16 %v10335, %v10335
  %v10340 = vpack.c.b16 %v10336, %v10336
  %v10473 = vunpack.c.l.b16 %v10181
  %v10474 = vunpack.c.h.b16 %v10181
  %v10475 = vunpack.c.l.b16 %v10182
  %v10476 = vunpack.c.h.b16 %v10182
  %v10477 = vunpack.c.l.b16 %v10183
  %v10478 = vunpack.c.h.b16 %v10183
  %v10479 = vunpack.c.l.b16 %v10184
  %v10480 = vunpack.c.h.b16 %v10184
  %v10481 = vunpack.c.l.b16 %v10185
  %v10482 = vunpack.c.h.b16 %v10185
  %v10483 = vunpack.c.l.b16 %v10186
  %v10484 = vunpack.c.h.b16 %v10186
  %v10485 = vunpack.c.l.b16 %v10187
  %v10486 = vunpack.c.h.b16 %v10187
  %v10487 = vunpack.c.l.b16 %v10188
  %v10488 = vunpack.c.h.b16 %v10188
  %v10489 = vunpack.c.l.b16 %v10189
  %v10490 = vunpack.c.h.b16 %v10189
  %v10491 = vunpack.c.l.b16 %v10190
  %v10492 = vunpack.c.h.b16 %v10190
  %v10493 = vunpack.c.l.b16 %v10191
  %v10494 = vunpack.c.h.b16 %v10191
  %v10495 = vunpack.c.l.b16 %v10192
  %v10496 = vunpack.c.h.b16 %v10192
  %v10497 = vunpack.c.l.b16 %v10193
  %v10498 = vunpack.c.h.b16 %v10193
  %v10499 = vunpack.c.l.b16 %v10194
  %v10500 = vunpack.c.h.b16 %v10194
  %v10501 = vunpack.c.l.b16 %v10195
  %v10502 = vunpack.c.h.b16 %v10195
  %v10503 = vunpack.c.l.b16 %v10196
  %v10504 = vunpack.c.h.b16 %v10196
  %v10505 = vunpack.c.l.b16 %v10197
  %v10506 = vunpack.c.h.b16 %v10197
  %v10507 = vunpack.c.l.b16 %v10198
  %v10508 = vunpack.c.h.b16 %v10198
  %v10509 = vunpack.c.l.b16 %v10199
  %v10510 = vunpack.c.h.b16 %v10199
  %v10511 = vunpack.c.l.b16 %v10200
  %v10512 = vunpack.c.h.b16 %v10200
  %v10513 = vunpack.c.l.b16 %v10201
  %v10514 = vunpack.c.h.b16 %v10201
  %v10515 = vunpack.c.l.b16 %v10202
  %v10516 = vunpack.c.h.b16 %v10202
  %v10517 = vunpack.c.l.b16 %v10203
  %v10518 = vunpack.c.h.b16 %v10203
  %v10519 = vunpack.c.l.b16 %v10204
  %v10520 = vunpack.c.h.b16 %v10204
  %v10521 = vunpack.c.l.b16 %v10205
  %v10522 = vunpack.c.h.b16 %v10205
  %v10523 = vunpack.c.l.b16 %v10206
  %v10524 = vunpack.c.h.b16 %v10206
  %v10525 = vunpack.c.l.b16 %v10207
  %v10526 = vunpack.c.h.b16 %v10207
  %v10527 = vunpack.c.l.b16 %v10208
  %v10528 = vunpack.c.h.b16 %v10208
  %v10529 = vunpack.c.l.b16 %v10209
  %v10530 = vunpack.c.h.b16 %v10209
  %v10531 = vunpack.c.l.b16 %v10210
  %v10532 = vunpack.c.h.b16 %v10210
  %v10533 = vunpack.c.l.b16 %v10211
  %v10534 = vunpack.c.h.b16 %v10211
  %v10535 = vunpack.c.l.b16 %v10212
  %v10536 = vunpack.c.h.b16 %v10212
  %v10537 = vunpack.c.l.b16 %v10213
  %v10538 = vunpack.c.h.b16 %v10213
  %v10539 = vunpack.c.l.b16 %v10214
  %v10540 = vunpack.c.h.b16 %v10214
  %v10541 = vunpack.c.l.b16 %v10215
  %v10542 = vunpack.c.h.b16 %v10215
  %v10543 = vunpack.c.l.b16 %v10216
  %v10544 = vunpack.c.h.b16 %v10216
  %v10545 = vunpack.c.l.b16 %v10217
  %v10546 = vunpack.c.h.b16 %v10217
  %v10547 = vunpack.c.l.b16 %v10218
  %v10548 = vunpack.c.h.b16 %v10218
  %v10549 = vunpack.c.l.b16 %v10219
  %v10550 = vunpack.c.h.b16 %v10219
  %v10551 = vunpack.c.l.b16 %v10220
  %v10552 = vunpack.c.h.b16 %v10220
  %v10553 = vunpack.c.l.b16 %v10221
  %v10554 = vunpack.c.h.b16 %v10221
  %v10555 = vunpack.c.l.b16 %v10222
  %v10556 = vunpack.c.h.b16 %v10222
  %v10557 = vunpack.c.l.b16 %v10223
  %v10558 = vunpack.c.h.b16 %v10223
  %v10559 = vunpack.c.l.b16 %v10224
  %v10560 = vunpack.c.h.b16 %v10224
  %v10561 = vunpack.c.l.b16 %v10225
  %v10562 = vunpack.c.h.b16 %v10225
  %v10563 = vunpack.c.l.b16 %v10226
  %v10564 = vunpack.c.h.b16 %v10226
  %v10565 = vunpack.c.l.b16 %v10227
  %v10566 = vunpack.c.h.b16 %v10227
  %v10567 = vunpack.c.l.b16 %v10228
  %v10568 = vunpack.c.h.b16 %v10228
  %v10569 = vunpack.c.l.b16 %v10229
  %v10570 = vunpack.c.h.b16 %v10229
  %v10571 = vunpack.c.l.b16 %v10230
  %v10572 = vunpack.c.h.b16 %v10230
  %v10573 = vunpack.c.l.b16 %v10231
  %v10574 = vunpack.c.h.b16 %v10231
  %v10575 = vunpack.c.l.b16 %v10232
  %v10576 = vunpack.c.h.b16 %v10232
  %v10577 = vunpack.c.l.b16 %v10233
  %v10578 = vunpack.c.h.b16 %v10233
  %v10579 = vunpack.c.l.b16 %v10234
  %v10580 = vunpack.c.h.b16 %v10234
  %v10581 = vunpack.c.l.b16 %v10235
  %v10582 = vunpack.c.h.b16 %v10235
  %v10583 = vunpack.c.l.b16 %v10236
  %v10584 = vunpack.c.h.b16 %v10236
  %v10585 = vunpack.c.l.b16 %v10237
  %v10586 = vunpack.c.h.b16 %v10237
  %v10587 = vunpack.c.l.b16 %v10238
  %v10588 = vunpack.c.h.b16 %v10238
  %v10589 = vunpack.c.l.b16 %v10239
  %v10590 = vunpack.c.h.b16 %v10239
  %v10591 = vunpack.c.l.b16 %v10240
  %v10592 = vunpack.c.h.b16 %v10240
  %v10593 = vunpack.c.l.b16 %v10241
  %v10594 = vunpack.c.h.b16 %v10241
  %v10595 = vunpack.c.l.b16 %v10242
  %v10596 = vunpack.c.h.b16 %v10242
  %v10597 = vunpack.c.l.b16 %v10243
  %v10598 = vunpack.c.h.b16 %v10243
  %v10599 = vunpack.c.l.b16 %v10244
  %v10600 = vunpack.c.h.b16 %v10244
  %v10601 = vunpack.c.l.b16 %v10245
  %v10602 = vunpack.c.h.b16 %v10245
  %v10603 = vunpack.c.l.b16 %v10246
  %v10604 = vunpack.c.h.b16 %v10246
  %v10605 = vunpack.c.l.b16 %v10247
  %v10606 = vunpack.c.h.b16 %v10247
  %v10607 = vunpack.c.l.b16 %v10248
  %v10608 = vunpack.c.h.b16 %v10248
  %v10609 = vunpack.c.l.b16 %v10249
  %v10610 = vunpack.c.h.b16 %v10249
  %v10611 = vunpack.c.l.b16 %v10250
  %v10612 = vunpack.c.h.b16 %v10250
  %v10613 = vunpack.c.l.b16 %v10251
  %v10614 = vunpack.c.h.b16 %v10251
  %v10615 = vunpack.c.l.b16 %v10252
  %v10616 = vunpack.c.h.b16 %v10252
  %v10617 = vunpack.c.l.b16 %v10253
  %v10618 = vunpack.c.h.b16 %v10253
  %v10619 = vunpack.c.l.b16 %v10254
  %v10620 = vunpack.c.h.b16 %v10254
  %v10621 = vunpack.c.l.b16 %v10255
  %v10622 = vunpack.c.h.b16 %v10255
  %v10623 = vunpack.c.l.b16 %v10256
  %v10624 = vunpack.c.h.b16 %v10256
  %v10625 = vunpack.c.l.b16 %v10257
  %v10626 = vunpack.c.h.b16 %v10257
  %v10627 = vunpack.c.l.b16 %v10258
  %v10628 = vunpack.c.h.b16 %v10258
  %v10629 = vunpack.c.l.b16 %v10259
  %v10630 = vunpack.c.h.b16 %v10259
  %v10631 = vunpack.c.l.b16 %v10260
  %v10632 = vunpack.c.h.b16 %v10260
  %v10633 = vunpack.c.l.b16 %v10261
  %v10634 = vunpack.c.h.b16 %v10261
  %v10635 = vunpack.c.l.b16 %v10262
  %v10636 = vunpack.c.h.b16 %v10262
  %v10637 = vunpack.c.l.b16 %v10263
  %v10638 = vunpack.c.h.b16 %v10263
  %v10639 = vunpack.c.l.b16 %v10264
  %v10640 = vunpack.c.h.b16 %v10264
  %v10641 = vunpack.c.l.b16 %v10265
  %v10642 = vunpack.c.h.b16 %v10265
  %v10643 = vunpack.c.l.b16 %v10266
  %v10644 = vunpack.c.h.b16 %v10266
  %v10645 = vunpack.c.l.b16 %v10267
  %v10646 = vunpack.c.h.b16 %v10267
  %v10647 = vunpack.c.l.b16 %v10268
  %v10648 = vunpack.c.h.b16 %v10268
  %v10649 = vunpack.c.l.b16 %v10269
  %v10650 = vunpack.c.h.b16 %v10269
  %v10651 = vunpack.c.l.b16 %v10270
  %v10652 = vunpack.c.h.b16 %v10270
  %v10653 = vunpack.c.l.b16 %v10271
  %v10654 = vunpack.c.h.b16 %v10271
  %v10655 = vunpack.c.l.b16 %v10272
  %v10656 = vunpack.c.h.b16 %v10272
  %v10657 = vunpack.c.l.b16 %v10273
  %v10658 = vunpack.c.h.b16 %v10273
  %v10659 = vunpack.c.l.b16 %v10274
  %v10660 = vunpack.c.h.b16 %v10274
  %v10661 = vunpack.c.l.b16 %v10275
  %v10662 = vunpack.c.h.b16 %v10275
  %v10663 = vunpack.c.l.b16 %v10276
  %v10664 = vunpack.c.h.b16 %v10276
  %v10665 = vunpack.c.l.b16 %v10277
  %v10666 = vunpack.c.h.b16 %v10277
  %v10667 = vunpack.c.l.b16 %v10278
  %v10668 = vunpack.c.h.b16 %v10278
  %v10669 = vunpack.c.l.b16 %v10279
  %v10670 = vunpack.c.h.b16 %v10279
  %v10671 = vunpack.c.l.b16 %v10280
  %v10672 = vunpack.c.h.b16 %v10280
  %v10673 = vunpack.c.l.b16 %v10281
  %v10674 = vunpack.c.h.b16 %v10281
  %v10675 = vunpack.c.l.b16 %v10282
  %v10676 = vunpack.c.h.b16 %v10282
  %v10677 = vunpack.c.l.b16 %v10283
  %v10678 = vunpack.c.h.b16 %v10283
  %v10679 = vunpack.c.l.b16 %v10284
  %v10680 = vunpack.c.h.b16 %v10284
  %v10681 = vunpack.c.l.b16 %v10285
  %v10682 = vunpack.c.h.b16 %v10285
  %v10683 = vunpack.c.l.b16 %v10286
  %v10684 = vunpack.c.h.b16 %v10286
  %v10685 = vunpack.c.l.b16 %v10287
  %v10686 = vunpack.c.h.b16 %v10287
  %v10687 = vunpack.c.l.b16 %v10288
  %v10688 = vunpack.c.h.b16 %v10288
  %v10689 = vunpack.c.l.b16 %v10289
  %v10690 = vunpack.c.h.b16 %v10289
  %v10691 = vunpack.c.l.b16 %v10290
  %v10692 = vunpack.c.h.b16 %v10290
  %v10693 = vunpack.c.l.b16 %v10291
  %v10694 = vunpack.c.h.b16 %v10291
  %v10695 = vunpack.c.l.b16 %v10292
  %v10696 = vunpack.c.h.b16 %v10292
  %v10697 = vunpack.c.l.b16 %v10293
  %v10698 = vunpack.c.h.b16 %v10293
  %v10699 = vunpack.c.l.b16 %v10294
  %v10700 = vunpack.c.h.b16 %v10294
  %v10701 = vunpack.c.l.b16 %v10295
  %v10702 = vunpack.c.h.b16 %v10295
  %v10703 = vunpack.c.l.b16 %v10296
  %v10704 = vunpack.c.h.b16 %v10296
  %v10705 = vunpack.c.l.b16 %v10297
  %v10706 = vunpack.c.h.b16 %v10297
  %v10707 = vunpack.c.l.b16 %v10298
  %v10708 = vunpack.c.h.b16 %v10298
  %v10709 = vunpack.c.l.b16 %v10299
  %v10710 = vunpack.c.h.b16 %v10299
  %v10711 = vunpack.c.l.b16 %v10300
  %v10712 = vunpack.c.h.b16 %v10300
  %v10713 = vunpack.c.l.b16 %v10301
  %v10714 = vunpack.c.h.b16 %v10301
  %v10715 = vunpack.c.l.b16 %v10302
  %v10716 = vunpack.c.h.b16 %v10302
  %v10717 = vunpack.c.l.b16 %v10303
  %v10718 = vunpack.c.h.b16 %v10303
  %v10719 = vunpack.c.l.b16 %v10304
  %v10720 = vunpack.c.h.b16 %v10304
  %v10721 = vunpack.c.l.b16 %v10305
  %v10722 = vunpack.c.h.b16 %v10305
  %v10723 = vunpack.c.l.b16 %v10306
  %v10724 = vunpack.c.h.b16 %v10306
  %v10725 = vunpack.c.l.b16 %v10307
  %v10726 = vunpack.c.h.b16 %v10307
  %v10727 = vunpack.c.l.b16 %v10308
  %v10728 = vunpack.c.h.b16 %v10308
  %v10729 = vpack.c.b16 %v10477, %v10473
  %v10730 = vpack.c.b16 %v10478, %v10474
  %v10731 = vpack.c.b16 %v10479, %v10475
  %v10732 = vpack.c.b16 %v10480, %v10476
  %v10733 = vpack.c.b16 %v10485, %v10481
  %v10734 = vpack.c.b16 %v10486, %v10482
  %v10735 = vpack.c.b16 %v10487, %v10483
  %v10736 = vpack.c.b16 %v10488, %v10484
  %v10737 = vpack.c.b16 %v10493, %v10489
  %v10738 = vpack.c.b16 %v10494, %v10490
  %v10739 = vpack.c.b16 %v10495, %v10491
  %v10740 = vpack.c.b16 %v10496, %v10492
  %v10741 = vpack.c.b16 %v10501, %v10497
  %v10742 = vpack.c.b16 %v10502, %v10498
  %v10743 = vpack.c.b16 %v10503, %v10499
  %v10744 = vpack.c.b16 %v10504, %v10500
  %v10745 = vpack.c.b16 %v10509, %v10505
  %v10746 = vpack.c.b16 %v10510, %v10506
  %v10747 = vpack.c.b16 %v10511, %v10507
  %v10748 = vpack.c.b16 %v10512, %v10508
  %v10749 = vpack.c.b16 %v10517, %v10513
  %v10750 = vpack.c.b16 %v10518, %v10514
  %v10751 = vpack.c.b16 %v10519, %v10515
  %v10752 = vpack.c.b16 %v10520, %v10516
  %v10753 = vpack.c.b16 %v10525, %v10521
  %v10754 = vpack.c.b16 %v10526, %v10522
  %v10755 = vpack.c.b16 %v10527, %v10523
  %v10756 = vpack.c.b16 %v10528, %v10524
  %v10757 = vpack.c.b16 %v10533, %v10529
  %v10758 = vpack.c.b16 %v10534, %v10530
  %v10759 = vpack.c.b16 %v10535, %v10531
  %v10760 = vpack.c.b16 %v10536, %v10532
  %v10761 = vpack.c.b16 %v10541, %v10537
  %v10762 = vpack.c.b16 %v10542, %v10538
  %v10763 = vpack.c.b16 %v10543, %v10539
  %v10764 = vpack.c.b16 %v10544, %v10540
  %v10765 = vpack.c.b16 %v10549, %v10545
  %v10766 = vpack.c.b16 %v10550, %v10546
  %v10767 = vpack.c.b16 %v10551, %v10547
  %v10768 = vpack.c.b16 %v10552, %v10548
  %v10769 = vpack.c.b16 %v10557, %v10553
  %v10770 = vpack.c.b16 %v10558, %v10554
  %v10771 = vpack.c.b16 %v10559, %v10555
  %v10772 = vpack.c.b16 %v10560, %v10556
  %v10773 = vpack.c.b16 %v10565, %v10561
  %v10774 = vpack.c.b16 %v10566, %v10562
  %v10775 = vpack.c.b16 %v10567, %v10563
  %v10776 = vpack.c.b16 %v10568, %v10564
  %v10777 = vpack.c.b16 %v10573, %v10569
  %v10778 = vpack.c.b16 %v10574, %v10570
  %v10779 = vpack.c.b16 %v10575, %v10571
  %v10780 = vpack.c.b16 %v10576, %v10572
  %v10781 = vpack.c.b16 %v10581, %v10577
  %v10782 = vpack.c.b16 %v10582, %v10578
  %v10783 = vpack.c.b16 %v10583, %v10579
  %v10784 = vpack.c.b16 %v10584, %v10580
  %v10785 = vpack.c.b16 %v10589, %v10585
  %v10786 = vpack.c.b16 %v10590, %v10586
  %v10787 = vpack.c.b16 %v10591, %v10587
  %v10788 = vpack.c.b16 %v10592, %v10588
  %v10789 = vpack.c.b16 %v10597, %v10593
  %v10790 = vpack.c.b16 %v10598, %v10594
  %v10791 = vpack.c.b16 %v10599, %v10595
  %v10792 = vpack.c.b16 %v10600, %v10596
  %v10793 = vpack.c.b16 %v10605, %v10601
  %v10794 = vpack.c.b16 %v10606, %v10602
  %v10795 = vpack.c.b16 %v10607, %v10603
  %v10796 = vpack.c.b16 %v10608, %v10604
  %v10797 = vpack.c.b16 %v10613, %v10609
  %v10798 = vpack.c.b16 %v10614, %v10610
  %v10799 = vpack.c.b16 %v10615, %v10611
  %v10800 = vpack.c.b16 %v10616, %v10612
  %v10801 = vpack.c.b16 %v10621, %v10617
  %v10802 = vpack.c.b16 %v10622, %v10618
  %v10803 = vpack.c.b16 %v10623, %v10619
  %v10804 = vpack.c.b16 %v10624, %v10620
  %v10805 = vpack.c.b16 %v10629, %v10625
  %v10806 = vpack.c.b16 %v10630, %v10626
  %v10807 = vpack.c.b16 %v10631, %v10627
  %v10808 = vpack.c.b16 %v10632, %v10628
  %v10809 = vpack.c.b16 %v10637, %v10633
  %v10810 = vpack.c.b16 %v10638, %v10634
  %v10811 = vpack.c.b16 %v10639, %v10635
  %v10812 = vpack.c.b16 %v10640, %v10636
  %v10813 = vpack.c.b16 %v10645, %v10641
  %v10814 = vpack.c.b16 %v10646, %v10642
  %v10815 = vpack.c.b16 %v10647, %v10643
  %v10816 = vpack.c.b16 %v10648, %v10644
  %v10817 = vpack.c.b16 %v10653, %v10649
  %v10818 = vpack.c.b16 %v10654, %v10650
  %v10819 = vpack.c.b16 %v10655, %v10651
  %v10820 = vpack.c.b16 %v10656, %v10652
  %v10821 = vpack.c.b16 %v10661, %v10657
  %v10822 = vpack.c.b16 %v10662, %v10658
  %v10823 = vpack.c.b16 %v10663, %v10659
  %v10824 = vpack.c.b16 %v10664, %v10660
  %v10825 = vpack.c.b16 %v10669, %v10665
  %v10826 = vpack.c.b16 %v10670, %v10666
  %v10827 = vpack.c.b16 %v10671, %v10667
  %v10828 = vpack.c.b16 %v10672, %v10668
  %v10829 = vpack.c.b16 %v10677, %v10673
  %v10830 = vpack.c.b16 %v10678, %v10674
  %v10831 = vpack.c.b16 %v10679, %v10675
  %v10832 = vpack.c.b16 %v10680, %v10676
  %v10833 = vpack.c.b16 %v10685, %v10681
  %v10834 = vpack.c.b16 %v10686, %v10682
  %v10835 = vpack.c.b16 %v10687, %v10683
  %v10836 = vpack.c.b16 %v10688, %v10684
  %v10837 = vpack.c.b16 %v10693, %v10689
  %v10838 = vpack.c.b16 %v10694, %v10690
  %v10839 = vpack.c.b16 %v10695, %v10691
  %v10840 = vpack.c.b16 %v10696, %v10692
  %v10841 = vpack.c.b16 %v10701, %v10697
  %v10842 = vpack.c.b16 %v10702, %v10698
  %v10843 = vpack.c.b16 %v10703, %v10699
  %v10844 = vpack.c.b16 %v10704, %v10700
  %v10845 = vpack.c.b16 %v10709, %v10705
  %v10846 = vpack.c.b16 %v10710, %v10706
  %v10847 = vpack.c.b16 %v10711, %v10707
  %v10848 = vpack.c.b16 %v10712, %v10708
  %v10849 = vpack.c.b16 %v10717, %v10713
  %v10850 = vpack.c.b16 %v10718, %v10714
  %v10851 = vpack.c.b16 %v10719, %v10715
  %v10852 = vpack.c.b16 %v10720, %v10716
  %v10853 = vpack.c.b16 %v10725, %v10721
  %v10854 = vpack.c.b16 %v10726, %v10722
  %v10855 = vpack.c.b16 %v10727, %v10723
  %v10856 = vpack.c.b16 %v10728, %v10724
  %10985 = vmatprep.subr.bf16.mxu0 %v10758
  %10986 = vmatpush1.bf16.msra.mxu0 %v10757
  %10987 = vmatprep.subr.bf16.mxu0 %v10754
  %10988 = vmatpush1.bf16.msra.mxu0 %v10753
  %10989 = vmatprep.subr.bf16.mxu0 %v10750
  %10990 = vmatpush1.bf16.msra.mxu0 %v10749
  %10991 = vmatprep.subr.bf16.mxu0 %v10746
  %10992 = vmatpush1.bf16.msra.mxu0 %v10745
  %10993 = vmatprep.subr.bf16.mxu0 %v10742
  %10994 = vmatpush1.bf16.msra.mxu0 %v10741
  %10995 = vmatprep.subr.bf16.mxu0 %v10738
  %10996 = vmatpush1.bf16.msra.mxu0 %v10737
  %10997 = vmatprep.subr.bf16.mxu0 %v10734
  %10998 = vmatpush1.bf16.msra.mxu0 %v10733
  %10999 = vmatprep.subr.bf16.mxu0 %v10730
  %11000 = vmatpush1.bf16.msra.mxu0 %v10729
  %11001 = vmatprep.subr.bf16.mxu0 %v10790
  %11002 = vmatpush2.bf16.msra.mxu0 %v10789
  %11003 = vmatprep.subr.bf16.mxu0 %v10786
  %11004 = vmatpush2.bf16.msra.mxu0 %v10785
  %11005 = vmatprep.subr.bf16.mxu0 %v10782
  %11006 = vmatpush2.bf16.msra.mxu0 %v10781
  %11007 = vmatprep.subr.bf16.mxu0 %v10778
  %11008 = vmatpush2.bf16.msra.mxu0 %v10777
  %11009 = vmatprep.subr.bf16.mxu0 %v10774
  %11010 = vmatpush2.bf16.msra.mxu0 %v10773
  %11011 = vmatprep.subr.bf16.mxu0 %v10770
  %11012 = vmatpush2.bf16.msra.mxu0 %v10769
  %11013 = vmatprep.subr.bf16.mxu0 %v10766
  %11014 = vmatpush2.bf16.msra.mxu0 %v10765
  %11015 = vmatprep.subr.bf16.mxu0 %v10762
  %11016 = vmatpush2.bf16.msra.mxu0 %v10761
  %11017 = vmatprep.mubr.bf16.mxu0 %v10338
  %11018 = vmatmul.mubr.bf16.gmra.mxu0 %v10337
  %v11019 = vpop.f32.mrf.mxu0
  %v11020 = vadd.f32 %v10314, %v11019
  %v11021 = vpop.f32.mrf.mxu0
  %v11022 = vadd.f32 %v10318, %v11021
  %v11023 = vpop.f32.mrf.mxu0
  %v11024 = vpop.f32.mrf.mxu0
  %11025 = vdwg.mxu0
  %11026 = vmatprep.subr.bf16.mxu0 %v10822
  %11027 = vmatpush1.bf16.msra.mxu0 %v10821
  %11028 = vmatprep.subr.bf16.mxu0 %v10818
  %11029 = vmatpush1.bf16.msra.mxu0 %v10817
  %11030 = vmatprep.subr.bf16.mxu0 %v10814
  %11031 = vmatpush1.bf16.msra.mxu0 %v10813
  %11032 = vmatprep.subr.bf16.mxu0 %v10810
  %11033 = vmatpush1.bf16.msra.mxu0 %v10809
  %11034 = vmatprep.subr.bf16.mxu0 %v10806
  %11035 = vmatpush1.bf16.msra.mxu0 %v10805
  %11036 = vmatprep.subr.bf16.mxu0 %v10802
  %11037 = vmatpush1.bf16.msra.mxu0 %v10801
  %11038 = vmatprep.subr.bf16.mxu0 %v10798
  %11039 = vmatpush1.bf16.msra.mxu0 %v10797
  %11040 = vmatprep.subr.bf16.mxu0 %v10794
  %11041 = vmatpush1.bf16.msra.mxu0 %v10793
  %11042 = vmatprep.subr.bf16.mxu0 %v10854
  %11043 = vmatpush2.bf16.msra.mxu0 %v10853
  %11044 = vmatprep.subr.bf16.mxu0 %v10850
  %11045 = vmatpush2.bf16.msra.mxu0 %v10849
  %11046 = vmatprep.subr.bf16.mxu0 %v10846
  %11047 = vmatpush2.bf16.msra.mxu0 %v10845
  %11048 = vmatprep.subr.bf16.mxu0 %v10842
  %11049 = vmatpush2.bf16.msra.mxu0 %v10841
  %11050 = vmatprep.subr.bf16.mxu0 %v10838
  %11051 = vmatpush2.bf16.msra.mxu0 %v10837
  %11052 = vmatprep.subr.bf16.mxu0 %v10834
  %11053 = vmatpush2.bf16.msra.mxu0 %v10833
  %11054 = vmatprep.subr.bf16.mxu0 %v10830
  %11055 = vmatpush2.bf16.msra.mxu0 %v10829
  %11056 = vmatprep.subr.bf16.mxu0 %v10826
  %11057 = vmatpush2.bf16.msra.mxu0 %v10825
  %11058 = vmatprep.mubr.bf16.mxu0 %v10340
  %11059 = vmatmul.mubr.bf16.gmra.mxu0 %v10339
  %v11060 = vpop.f32.mrf.mxu0
  %v11061 = vadd.f32 %v11020, %v11060
  %v11062 = vpop.f32.mrf.mxu0
  %v11063 = vadd.f32 %v11022, %v11062
  %v11064 = vpop.f32.mrf.mxu0
  %v11065 = vpop.f32.mrf.mxu0
  %11066 = vdwg.mxu0
  %11067 = vmatprep.subr.bf16.mxu0 %v10760
  %11068 = vmatpush1.bf16.msra.mxu0 %v10759
  %11069 = vmatprep.subr.bf16.mxu0 %v10756
  %11070 = vmatpush1.bf16.msra.mxu0 %v10755
  %11071 = vmatprep.subr.bf16.mxu0 %v10752
  %11072 = vmatpush1.bf16.msra.mxu0 %v10751
  %11073 = vmatprep.subr.bf16.mxu0 %v10748
  %11074 = vmatpush1.bf16.msra.mxu0 %v10747
  %11075 = vmatprep.subr.bf16.mxu0 %v10744
  %11076 = vmatpush1.bf16.msra.mxu0 %v10743
  %11077 = vmatprep.subr.bf16.mxu0 %v10740
  %11078 = vmatpush1.bf16.msra.mxu0 %v10739
  %11079 = vmatprep.subr.bf16.mxu0 %v10736
  %11080 = vmatpush1.bf16.msra.mxu0 %v10735
  %11081 = vmatprep.subr.bf16.mxu0 %v10732
  %11082 = vmatpush1.bf16.msra.mxu0 %v10731
  %11083 = vmatprep.subr.bf16.mxu0 %v10792
  %11084 = vmatpush2.bf16.msra.mxu0 %v10791
  %11085 = vmatprep.subr.bf16.mxu0 %v10788
  %11086 = vmatpush2.bf16.msra.mxu0 %v10787
  %11087 = vmatprep.subr.bf16.mxu0 %v10784
  %11088 = vmatpush2.bf16.msra.mxu0 %v10783
  %11089 = vmatprep.subr.bf16.mxu0 %v10780
  %11090 = vmatpush2.bf16.msra.mxu0 %v10779
  %11091 = vmatprep.subr.bf16.mxu0 %v10776
  %11092 = vmatpush2.bf16.msra.mxu0 %v10775
  %11093 = vmatprep.subr.bf16.mxu0 %v10772
  %11094 = vmatpush2.bf16.msra.mxu0 %v10771
  %11095 = vmatprep.subr.bf16.mxu0 %v10768
  %11096 = vmatpush2.bf16.msra.mxu0 %v10767
  %11097 = vmatprep.subr.bf16.mxu0 %v10764
  %11098 = vmatpush2.bf16.msra.mxu0 %v10763
  %11099 = vmatprep.mubr.bf16.mxu0 %v10338
  %11100 = vmatmul.mubr.bf16.gmra.mxu0 %v10337
  %v11101 = vpop.f32.mrf.mxu0
  %v11102 = vadd.f32 %v10322, %v11101
  %v11103 = vpop.f32.mrf.mxu0
  %v11104 = vadd.f32 %v10326, %v11103
  %v11105 = vpop.f32.mrf.mxu0
  %v11106 = vpop.f32.mrf.mxu0
  %11107 = vdwg.mxu0
  %11108 = vmatprep.subr.bf16.mxu0 %v10824
  %11109 = vmatpush1.bf16.msra.mxu0 %v10823
  %11110 = vmatprep.subr.bf16.mxu0 %v10820
  %11111 = vmatpush1.bf16.msra.mxu0 %v10819
  %11112 = vmatprep.subr.bf16.mxu0 %v10816
  %11113 = vmatpush1.bf16.msra.mxu0 %v10815
  %11114 = vmatprep.subr.bf16.mxu0 %v10812
  %11115 = vmatpush1.bf16.msra.mxu0 %v10811
  %11116 = vmatprep.subr.bf16.mxu0 %v10808
  %11117 = vmatpush1.bf16.msra.mxu0 %v10807
  %11118 = vmatprep.subr.bf16.mxu0 %v10804
  %11119 = vmatpush1.bf16.msra.mxu0 %v10803
  %11120 = vmatprep.subr.bf16.mxu0 %v10800
  %11121 = vmatpush1.bf16.msra.mxu0 %v10799
  %11122 = vmatprep.subr.bf16.mxu0 %v10796
  %11123 = vmatpush1.bf16.msra.mxu0 %v10795
  %11124 = vmatprep.subr.bf16.mxu0 %v10856
  %11125 = vmatpush2.bf16.msra.mxu0 %v10855
  %11126 = vmatprep.subr.bf16.mxu0 %v10852
  %11127 = vmatpush2.bf16.msra.mxu0 %v10851
  %11128 = vmatprep.subr.bf16.mxu0 %v10848
  %11129 = vmatpush2.bf16.msra.mxu0 %v10847
  %11130 = vmatprep.subr.bf16.mxu0 %v10844
  %11131 = vmatpush2.bf16.msra.mxu0 %v10843
  %11132 = vmatprep.subr.bf16.mxu0 %v10840
  %11133 = vmatpush2.bf16.msra.mxu0 %v10839
  %11134 = vmatprep.subr.bf16.mxu0 %v10836
  %11135 = vmatpush2.bf16.msra.mxu0 %v10835
  %11136 = vmatprep.subr.bf16.mxu0 %v10832
  %11137 = vmatpush2.bf16.msra.mxu0 %v10831
  %11138 = vmatprep.subr.bf16.mxu0 %v10828
  %11139 = vmatpush2.bf16.msra.mxu0 %v10827
  %11140 = vmatprep.mubr.bf16.mxu0 %v10340
  %11141 = vmatmul.mubr.bf16.gmra.mxu0 %v10339
  %v11142 = vpop.f32.mrf.mxu0
  %v11143 = vadd.f32 %v11102, %v11142
  %v11144 = vpop.f32.mrf.mxu0
  %v11145 = vadd.f32 %v11104, %v11144
  %v11146 = vpop.f32.mrf.mxu0
  %v11147 = vpop.f32.mrf.mxu0
  %11148 = vdwg.mxu0
  %v11149 = vmax.f32 %v11061, 0.0
  %v11150 = vmax.f32 %v11063, 0.0
  %v11151 = vmax.f32 %v11143, 0.0
  %v11152 = vmax.f32 %v11145, 0.0
  %v11153 = vpack.c.bf16 %v11149, %v11149
  %v11154 = vpack.c.bf16 %v11150, %v11150
  %v11155 = vpack.c.bf16 %v11151, %v11151
  %v11156 = vpack.c.bf16 %v11152, %v11152
  %v11157 = vld [vmem:[%s9] sm:$0xf]
  %v11158 = vld [vmem:[%s9 + $0x4] sm:$0xf]
  %v11159 = vld [vmem:[%s9 + $0x8] sm:$0xf]
  %v11160 = vld [vmem:[%s9 + $0xc] sm:$0xf]
  %v11161 = vld [vmem:[%s9 + $0x10] sm:$0xf]
  %v11162 = vld [vmem:[%s9 + $0x14] sm:$0xf]
  %v11163 = vld [vmem:[%s9 + $0x18] sm:$0xf]
  %v11164 = vld [vmem:[%s9 + $0x1c] sm:$0xf]
  %v11165 = vld [vmem:[%s9 + $0x20] sm:$0xf]
  %v11166 = vld [vmem:[%s9 + $0x24] sm:$0xf]
  %v11167 = vld [vmem:[%s9 + $0x28] sm:$0xf]
  %v11168 = vld [vmem:[%s9 + $0x2c] sm:$0xf]
  %v11169 = vld [vmem:[%s9 + $0x30] sm:$0xf]
  %v11170 = vld [vmem:[%s9 + $0x34] sm:$0xf]
  %v11171 = vld [vmem:[%s9 + $0x38] sm:$0xf]
  %v11172 = vld [vmem:[%s9 + $0x3c] sm:$0xf]
  %v11173 = vld [vmem:[%s9 + $0x40] sm:$0xf]
  %v11174 = vld [vmem:[%s9 + $0x44] sm:$0xf]
  %v11175 = vld [vmem:[%s9 + $0x48] sm:$0xf]
  %v11176 = vld [vmem:[%s9 + $0x4c] sm:$0xf]
  %v11177 = vld [vmem:[%s9 + $0x50] sm:$0xf]
  %v11178 = vld [vmem:[%s9 + $0x54] sm:$0xf]
  %v11179 = vld [vmem:[%s9 + $0x58] sm:$0xf]
  %v11180 = vld [vmem:[%s9 + $0x5c] sm:$0xf]
  %v11181 = vld [vmem:[%s9 + $0x60] sm:$0xf]
  %v11182 = vld [vmem:[%s9 + $0x64] sm:$0xf]
  %v11183 = vld [vmem:[%s9 + $0x68] sm:$0xf]
  %v11184 = vld [vmem:[%s9 + $0x6c] sm:$0xf]
  %v11185 = vld [vmem:[%s9 + $0x70] sm:$0xf]
  %v11186 = vld [vmem:[%s9 + $0x74] sm:$0xf]
  %v11187 = vld [vmem:[%s9 + $0x78] sm:$0xf]
  %v11188 = vld [vmem:[%s9 + $0x7c] sm:$0xf]
  %v11189 = vld [vmem:[%s9 + $0x80] sm:$0xf]
  %v11190 = vld [vmem:[%s9 + $0x84] sm:$0xf]
  %v11191 = vld [vmem:[%s9 + $0x88] sm:$0xf]
  %v11192 = vld [vmem:[%s9 + $0x8c] sm:$0xf]
  %v11193 = vld [vmem:[%s9 + $0x90] sm:$0xf]
  %v11194 = vld [vmem:[%s9 + $0x94] sm:$0xf]
  %v11195 = vld [vmem:[%s9 + $0x98] sm:$0xf]
  %v11196 = vld [vmem:[%s9 + $0x9c] sm:$0xf]
  %v11197 = vld [vmem:[%s9 + $0xa0] sm:$0xf]
  %v11198 = vld [vmem:[%s9 + $0xa4] sm:$0xf]
  %v11199 = vld [vmem:[%s9 + $0xa8] sm:$0xf]
  %v11200 = vld [vmem:[%s9 + $0xac] sm:$0xf]
  %v11201 = vld [vmem:[%s9 + $0xb0] sm:$0xf]
  %v11202 = vld [vmem:[%s9 + $0xb4] sm:$0xf]
  %v11203 = vld [vmem:[%s9 + $0xb8] sm:$0xf]
  %v11204 = vld [vmem:[%s9 + $0xbc] sm:$0xf]
  %v11205 = vld [vmem:[%s9 + $0xc0] sm:$0xf]
  %v11206 = vld [vmem:[%s9 + $0xc4] sm:$0xf]
  %v11207 = vld [vmem:[%s9 + $0xc8] sm:$0xf]
  %v11208 = vld [vmem:[%s9 + $0xcc] sm:$0xf]
  %v11209 = vld [vmem:[%s9 + $0xd0] sm:$0xf]
  %v11210 = vld [vmem:[%s9 + $0xd4] sm:$0xf]
  %v11211 = vld [vmem:[%s9 + $0xd8] sm:$0xf]
  %v11212 = vld [vmem:[%s9 + $0xdc] sm:$0xf]
  %v11213 = vld [vmem:[%s9 + $0xe0] sm:$0xf]
  %v11214 = vld [vmem:[%s9 + $0xe4] sm:$0xf]
  %v11215 = vld [vmem:[%s9 + $0xe8] sm:$0xf]
  %v11216 = vld [vmem:[%s9 + $0xec] sm:$0xf]
  %v11217 = vld [vmem:[%s9 + $0xf0] sm:$0xf]
  %v11218 = vld [vmem:[%s9 + $0xf4] sm:$0xf]
  %v11219 = vld [vmem:[%s9 + $0xf8] sm:$0xf]
  %v11220 = vld [vmem:[%s9 + $0xfc] sm:$0xf]
  %v11221 = vld [vmem:[%s10] sm:$0x1]
  %v11223 = vlaneseq
  %v11224 = vshrl.u32 %v11223, 7
  %v11225 = vsub.s32 0, %v11224
  %v11226 = vrot.slane %v11221, %v11225
  %v11292 = vunpack.c.l.b16 %v11157
  %v11293 = vunpack.c.l.b16 %v11158
  %v11294 = vunpack.c.l.b16 %v11159
  %v11295 = vunpack.c.l.b16 %v11160
  %v11296 = vunpack.c.l.b16 %v11161
  %v11297 = vunpack.c.l.b16 %v11162
  %v11298 = vunpack.c.l.b16 %v11163
  %v11299 = vunpack.c.l.b16 %v11164
  %v11300 = vunpack.c.l.b16 %v11165
  %v11301 = vunpack.c.l.b16 %v11166
  %v11302 = vunpack.c.l.b16 %v11167
  %v11303 = vunpack.c.l.b16 %v11168
  %v11304 = vunpack.c.l.b16 %v11169
  %v11305 = vunpack.c.l.b16 %v11170
  %v11306 = vunpack.c.l.b16 %v11171
  %v11307 = vunpack.c.l.b16 %v11172
  %v11308 = vunpack.c.l.b16 %v11173
  %v11309 = vunpack.c.l.b16 %v11174
  %v11310 = vunpack.c.l.b16 %v11175
  %v11311 = vunpack.c.l.b16 %v11176
  %v11312 = vunpack.c.l.b16 %v11177
  %v11313 = vunpack.c.l.b16 %v11178
  %v11314 = vunpack.c.l.b16 %v11179
  %v11315 = vunpack.c.l.b16 %v11180
  %v11316 = vunpack.c.l.b16 %v11181
  %v11317 = vunpack.c.l.b16 %v11182
  %v11318 = vunpack.c.l.b16 %v11183
  %v11319 = vunpack.c.l.b16 %v11184
  %v11320 = vunpack.c.l.b16 %v11185
  %v11321 = vunpack.c.l.b16 %v11186
  %v11322 = vunpack.c.l.b16 %v11187
  %v11323 = vunpack.c.l.b16 %v11188
  %v11324 = vunpack.c.l.b16 %v11189
  %v11325 = vunpack.c.l.b16 %v11190
  %v11326 = vunpack.c.l.b16 %v11191
  %v11327 = vunpack.c.l.b16 %v11192
  %v11328 = vunpack.c.l.b16 %v11193
  %v11329 = vunpack.c.l.b16 %v11194
  %v11330 = vunpack.c.l.b16 %v11195
  %v11331 = vunpack.c.l.b16 %v11196
  %v11332 = vunpack.c.l.b16 %v11197
  %v11333 = vunpack.c.l.b16 %v11198
  %v11334 = vunpack.c.l.b16 %v11199
  %v11335 = vunpack.c.l.b16 %v11200
  %v11336 = vunpack.c.l.b16 %v11201
  %v11337 = vunpack.c.l.b16 %v11202
  %v11338 = vunpack.c.l.b16 %v11203
  %v11339 = vunpack.c.l.b16 %v11204
  %v11340 = vunpack.c.l.b16 %v11205
  %v11341 = vunpack.c.l.b16 %v11206
  %v11342 = vunpack.c.l.b16 %v11207
  %v11343 = vunpack.c.l.b16 %v11208
  %v11344 = vunpack.c.l.b16 %v11209
  %v11345 = vunpack.c.l.b16 %v11210
  %v11346 = vunpack.c.l.b16 %v11211
  %v11347 = vunpack.c.l.b16 %v11212
  %v11348 = vunpack.c.l.b16 %v11213
  %v11349 = vunpack.c.l.b16 %v11214
  %v11350 = vunpack.c.l.b16 %v11215
  %v11351 = vunpack.c.l.b16 %v11216
  %v11352 = vunpack.c.l.b16 %v11217
  %v11353 = vunpack.c.l.b16 %v11218
  %v11354 = vunpack.c.l.b16 %v11219
  %v11355 = vunpack.c.l.b16 %v11220
  %v11356 = vpack.c.b16 %v11293, %v11292
  %v11357 = vpack.c.b16 %v11295, %v11294
  %v11358 = vpack.c.b16 %v11297, %v11296
  %v11359 = vpack.c.b16 %v11299, %v11298
  %v11360 = vpack.c.b16 %v11301, %v11300
  %v11361 = vpack.c.b16 %v11303, %v11302
  %v11362 = vpack.c.b16 %v11305, %v11304
  %v11363 = vpack.c.b16 %v11307, %v11306
  %v11364 = vpack.c.b16 %v11309, %v11308
  %v11365 = vpack.c.b16 %v11311, %v11310
  %v11366 = vpack.c.b16 %v11313, %v11312
  %v11367 = vpack.c.b16 %v11315, %v11314
  %v11368 = vpack.c.b16 %v11317, %v11316
  %v11369 = vpack.c.b16 %v11319, %v11318
  %v11370 = vpack.c.b16 %v11321, %v11320
  %v11371 = vpack.c.b16 %v11323, %v11322
  %v11372 = vpack.c.b16 %v11325, %v11324
  %v11373 = vpack.c.b16 %v11327, %v11326
  %v11374 = vpack.c.b16 %v11329, %v11328
  %v11375 = vpack.c.b16 %v11331, %v11330
  %v11376 = vpack.c.b16 %v11333, %v11332
  %v11377 = vpack.c.b16 %v11335, %v11334
  %v11378 = vpack.c.b16 %v11337, %v11336
  %v11379 = vpack.c.b16 %v11339, %v11338
  %v11380 = vpack.c.b16 %v11341, %v11340
  %v11381 = vpack.c.b16 %v11343, %v11342
  %v11382 = vpack.c.b16 %v11345, %v11344
  %v11383 = vpack.c.b16 %v11347, %v11346
  %v11384 = vpack.c.b16 %v11349, %v11348
  %v11385 = vpack.c.b16 %v11351, %v11350
  %v11386 = vpack.c.b16 %v11353, %v11352
  %v11387 = vpack.c.b16 %v11355, %v11354
  %11420 = vmatprep.subr.bf16.mxu0 0
  %11421 = vmatpush1.bf16.msra.mxu0 %v11363
  %11422 = vmatprep.subr.bf16.mxu0 0
  %11423 = vmatpush1.bf16.msra.mxu0 %v11362
  %11424 = vmatprep.subr.bf16.mxu0 0
  %11425 = vmatpush1.bf16.msra.mxu0 %v11361
  %11426 = vmatprep.subr.bf16.mxu0 0
  %11427 = vmatpush1.bf16.msra.mxu0 %v11360
  %11428 = vmatprep.subr.bf16.mxu0 0
  %11429 = vmatpush1.bf16.msra.mxu0 %v11359
  %11430 = vmatprep.subr.bf16.mxu0 0
  %11431 = vmatpush1.bf16.msra.mxu0 %v11358
  %11432 = vmatprep.subr.bf16.mxu0 0
  %11433 = vmatpush1.bf16.msra.mxu0 %v11357
  %11434 = vmatprep.subr.bf16.mxu0 0
  %11435 = vmatpush1.bf16.msra.mxu0 %v11356
  %11436 = vmatprep.subr.bf16.mxu0 0
  %11437 = vmatpush2.bf16.msra.mxu0 %v11371
  %11438 = vmatprep.subr.bf16.mxu0 0
  %11439 = vmatpush2.bf16.msra.mxu0 %v11370
  %11440 = vmatprep.subr.bf16.mxu0 0
  %11441 = vmatpush2.bf16.msra.mxu0 %v11369
  %11442 = vmatprep.subr.bf16.mxu0 0
  %11443 = vmatpush2.bf16.msra.mxu0 %v11368
  %11444 = vmatprep.subr.bf16.mxu0 0
  %11445 = vmatpush2.bf16.msra.mxu0 %v11367
  %11446 = vmatprep.subr.bf16.mxu0 0
  %11447 = vmatpush2.bf16.msra.mxu0 %v11366
  %11448 = vmatprep.subr.bf16.mxu0 0
  %11449 = vmatpush2.bf16.msra.mxu0 %v11365
  %11450 = vmatprep.subr.bf16.mxu0 0
  %11451 = vmatpush2.bf16.msra.mxu0 %v11364
  %11452 = vmatprep.mubr.bf16.mxu0 %v11154
  %11453 = vmatmul.mubr.bf16.gmra.mxu0 %v11153
  %v11454 = vpop.f32.mrf.mxu0
  %v11455 = vadd.f32 %v11226, %v11454
  %v11456 = vpop.f32.mrf.mxu0
  %v11457 = vpop.f32.mrf.mxu0
  %v11458 = vpop.f32.mrf.mxu0
  %11459 = vdwg.mxu0
  %11460 = vmatprep.subr.bf16.mxu0 0
  %11461 = vmatpush1.bf16.msra.mxu0 %v11379
  %11462 = vmatprep.subr.bf16.mxu0 0
  %11463 = vmatpush1.bf16.msra.mxu0 %v11378
  %11464 = vmatprep.subr.bf16.mxu0 0
  %11465 = vmatpush1.bf16.msra.mxu0 %v11377
  %11466 = vmatprep.subr.bf16.mxu0 0
  %11467 = vmatpush1.bf16.msra.mxu0 %v11376
  %11468 = vmatprep.subr.bf16.mxu0 0
  %11469 = vmatpush1.bf16.msra.mxu0 %v11375
  %11470 = vmatprep.subr.bf16.mxu0 0
  %11471 = vmatpush1.bf16.msra.mxu0 %v11374
  %11472 = vmatprep.subr.bf16.mxu0 0
  %11473 = vmatpush1.bf16.msra.mxu0 %v11373
  %11474 = vmatprep.subr.bf16.mxu0 0
  %11475 = vmatpush1.bf16.msra.mxu0 %v11372
  %11476 = vmatprep.subr.bf16.mxu0 0
  %11477 = vmatpush2.bf16.msra.mxu0 %v11387
  %11478 = vmatprep.subr.bf16.mxu0 0
  %11479 = vmatpush2.bf16.msra.mxu0 %v11386
  %11480 = vmatprep.subr.bf16.mxu0 0
  %11481 = vmatpush2.bf16.msra.mxu0 %v11385
  %11482 = vmatprep.subr.bf16.mxu0 0
  %11483 = vmatpush2.bf16.msra.mxu0 %v11384
  %11484 = vmatprep.subr.bf16.mxu0 0
  %11485 = vmatpush2.bf16.msra.mxu0 %v11383
  %11486 = vmatprep.subr.bf16.mxu0 0
  %11487 = vmatpush2.bf16.msra.mxu0 %v11382
  %11488 = vmatprep.subr.bf16.mxu0 0
  %11489 = vmatpush2.bf16.msra.mxu0 %v11381
  %11490 = vmatprep.subr.bf16.mxu0 0
  %11491 = vmatpush2.bf16.msra.mxu0 %v11380
  %11492 = vmatprep.mubr.bf16.mxu0 %v11156
  %11493 = vmatmul.mubr.bf16.gmra.mxu0 %v11155
  %v11494 = vpop.f32.mrf.mxu0
  %v11495 = vadd.f32 %v11455, %v11494
  %v11496 = vpop.f32.mrf.mxu0
  %v11497 = vpop.f32.mrf.mxu0
  %v11498 = vpop.f32.mrf.mxu0
  %11499 = vdwg.mxu0
  %11500 = vst [vmem:[%s11] sm:$0xff] %v11495
  // Predicated region
  $region46: #{neurological_cnn_forward.1} parent=0 // pred_check
    _
  $region47: #{neurological_cnn_forward.1} parent=0 // pred_check_branch
    %11502 = sbr.rel (0) target = $region49
  $region48: #{neurological_cnn_forward.1} parent=0 // pred_region
    _
  $region49: #{neurological_cnn_forward.1} parent=0 // pred_fallthru
    _
  // Predicated region
  $region50: #{neurological_cnn_forward.1} parent=0 // pred_check
    _
  $region51: #{neurological_cnn_forward.1} parent=0 // pred_check_branch
    %11504 = sbr.rel (0) target = $region53
  $region52: #{neurological_cnn_forward.1} parent=0 // pred_region
    _
  $region53: #{neurological_cnn_forward.1} parent=0 // pred_fallthru
    _

</llo_original>
